<compile_context>
chip_gen: v5e
topology: v5e:2x2
jax: 0.10.0
libtpu: 0.0.40
codegen_flags: <defaults>
</compile_context>

<pallas_src>
import jax
import jax.numpy as jnp
from jax.experimental import pallas as pl
from jax.experimental.pallas import tpu as pltpu

BN_EPS = 1e-5


def _round_up(x, m):
    return (x + m - 1) // m * m


def _tpu_vmem_budget():
    """Generation-aware VMEM limit and max M-tile (review items: v5e/v6e get the
    full headroom, v7x stays under its 64 MiB physical VMEM)."""
    try:
        cap = int(pltpu.get_tpu_info().vmem_capacity_bytes)
    except Exception:
        cap = 64 * 1024 * 1024
    if cap >= 100 * 1024 * 1024:          # v5e / v6e (128 MiB physical)
        return 96 * 1024 * 1024, 1024
    return 48 * 1024 * 1024, 512          # v7x (64 MiB physical)


VMEM_LIMIT, TM_MAX = _tpu_vmem_budget()


def _pad2d(x, rows, cols):
    r, c = x.shape
    if r == rows and c == cols:
        return x
    return jnp.pad(x, ((0, rows - r), (0, cols - c)))


def _tile_m(M):
    if M <= TM_MAX:
        TM = _round_up(M, 8)
        return TM, TM, 1
    TM = TM_MAX
    Mp = _round_up(M, TM)
    return TM, Mp, Mp // TM


# ----------------------------------------------------------------------------
# Kernels
# ----------------------------------------------------------------------------
def _gemm_stats_kernel(x_ref, w_ref, y_ref, st_ref):
    """Single-K-step GEMM (bf16 operands, f32 accumulate) + per-tile BN stats.
    Weight block index is constant -> DMA'd once; output tiles are bf16."""
    acc = jnp.dot(x_ref[...], w_ref[...], preferred_element_type=jnp.float32)
    y_ref[...] = acc.astype(y_ref.dtype)
    st_ref[...] = jnp.zeros_like(st_ref)
    st_ref[0:1, :] = jnp.sum(acc, axis=0, keepdims=True)
    st_ref[1:2, :] = jnp.sum(acc * acc, axis=0, keepdims=True)


def _bn_apply_relu_kernel(y_ref, ms_ref, o_ref):
    """Elementwise y*scale + shift, ReLU (training-mode BN, gamma=1/beta=0)."""
    y = y_ref[...].astype(jnp.float32)
    scale = ms_ref[0:1, :]
    shift = ms_ref[1:2, :]
    o_ref[...] = jnp.maximum(y * scale + shift, 0.0).astype(o_ref.dtype)


def _gemm_bias_tanh_kernel(x_ref, w_ref, b_ref, o_ref):
    """Single-K-step GEMM + bias + tanh (final layer, lane-dense N=128)."""
    acc = jnp.dot(x_ref[...], w_ref[...], preferred_element_type=jnp.float32)
    o_ref[...] = jnp.tanh(acc + b_ref[...]).astype(o_ref.dtype)


# ----------------------------------------------------------------------------
# pallas_call wrappers
# ----------------------------------------------------------------------------
def _gemm_stats(x_mat, w_mat):
    """x(M,K) @ w(K,Np) -> (pre-BN bf16 (Mp,Np), col_sum (Np,), col_sumsq (Np,))."""
    M, K = x_mat.shape
    Kw, Np = w_mat.shape
    assert Kw == K and Np % 128 == 0

    Kp = _round_up(K, 128)
    TM, Mp, nm = _tile_m(M)

    x_p = _pad2d(x_mat, Mp, Kp).astype(jnp.bfloat16)
    w_p = _pad2d(w_mat, Kp, Np).astype(jnp.bfloat16)

    cost = pl.CostEstimate(
        flops=2 * Mp * Kp * Np,
        transcendentals=0,
        bytes_accessed=x_p.size * 2 + w_p.size * 2 + Mp * Np * 2 + nm * 8 * Np * 4)

    y_pre, stats = pl.pallas_call(
        _gemm_stats_kernel,
        out_shape=(jax.ShapeDtypeStruct((Mp, Np), jnp.bfloat16),
                   jax.ShapeDtypeStruct((nm * 8, Np), jnp.float32)),
        grid_spec=pltpu.PrefetchScalarGridSpec(
            num_scalar_prefetch=0,
            grid=(nm,),
            in_specs=[
                pl.BlockSpec((TM, Kp), lambda i: (i, 0)),
                pl.BlockSpec((Kp, Np), lambda i: (0, 0)),   # resident weight
            ],
            out_specs=[
                pl.BlockSpec((TM, Np), lambda i: (i, 0)),
                pl.BlockSpec((8, Np), lambda i: (i, 0)),
            ],
        ),
        compiler_params=pltpu.CompilerParams(
            dimension_semantics=("parallel",),
            vmem_limit_bytes=VMEM_LIMIT),
        cost_estimate=cost,
    )(x_p, w_p)

    st = stats.reshape(nm, 8, Np)
    return y_pre, st[:, 0, :].sum(axis=0), st[:, 1, :].sum(axis=0), TM, nm


def _bn_relu_apply(y_pre, col_sum, col_sumsq, groups, chans, m_real, TM, nm):
    """Reduce per-tile stats (tiny, XLA) -> per-channel scale/shift, then a tiled
    Pallas normalize+ReLU pass over the bf16 pre-BN tiles (M axis parallel)."""
    Mp, Np = y_pre.shape
    assert Np == groups * chans
    count = float(m_real * groups)

    s_c = col_sum.reshape(groups, chans).sum(axis=0)
    ss_c = col_sumsq.reshape(groups, chans).sum(axis=0)
    mean_c = s_c / count
    var_c = jnp.maximum(ss_c / count - mean_c * mean_c, 0.0)   # biased variance
    scale_c = jax.lax.rsqrt(var_c + BN_EPS)
    scale = jnp.tile(scale_c, groups)                          # (Np,)
    shift = jnp.tile(-mean_c * scale_c, groups)                # (Np,)
    ms = jnp.zeros((8, Np), jnp.float32).at[0].set(scale).at[1].set(shift)

    return pl.pallas_call(
        _bn_apply_relu_kernel,
        out_shape=jax.ShapeDtypeStruct((Mp, Np), jnp.bfloat16),
        grid_spec=pltpu.PrefetchScalarGridSpec(
            num_scalar_prefetch=0,
            grid=(nm,),
            in_specs=[
                pl.BlockSpec((TM, Np), lambda i: (i, 0)),
                pl.BlockSpec((8, Np), lambda i: (0, 0)),
            ],
            out_specs=pl.BlockSpec((TM, Np), lambda i: (i, 0)),
        ),
        compiler_params=pltpu.CompilerParams(
            dimension_semantics=("parallel",),
            vmem_limit_bytes=VMEM_LIMIT),
    )(y_pre, ms)


def _gemm_bn_relu(x_mat, w_mat, groups, chans):
    M = x_mat.shape[0]
    y_pre, s, ss, TM, nm = _gemm_stats(x_mat, w_mat)
    out = _bn_relu_apply(y_pre, s, ss, groups, chans, M, TM, nm)
    return out[:M]


def _gemm_bias_tanh(x_mat, w_mat, bias_row):
    M, K = x_mat.shape
    Kw, Np = w_mat.shape
    assert Kw == K and Np % 128 == 0

    Kp = _round_up(K, 128)
    TM, Mp, nm = _tile_m(M)

    x_p = _pad2d(x_mat, Mp, Kp).astype(jnp.bfloat16)
    w_p = _pad2d(w_mat, Kp, Np).astype(jnp.bfloat16)
    b = bias_row.reshape(1, Np).astype(jnp.float32)

    cost = pl.CostEstimate(
        flops=2 * Mp * Kp * Np,
        transcendentals=Mp * Np,
        bytes_accessed=x_p.size * 2 + w_p.size * 2 + Mp * Np * 4)

    out = pl.pallas_call(
        _gemm_bias_tanh_kernel,
        out_shape=jax.ShapeDtypeStruct((Mp, Np), jnp.float32),
        grid_spec=pltpu.PrefetchScalarGridSpec(
            num_scalar_prefetch=0,
            grid=(nm,),
            in_specs=[
                pl.BlockSpec((TM, Kp), lambda i: (i, 0)),
                pl.BlockSpec((Kp, Np), lambda i: (0, 0)),   # resident weight
                pl.BlockSpec((1, Np), lambda i: (0, 0)),
            ],
            out_specs=pl.BlockSpec((TM, Np), lambda i: (i, 0)),
        ),
        compiler_params=pltpu.CompilerParams(
            dimension_semantics=("parallel",),
            vmem_limit_bytes=VMEM_LIMIT),
        cost_estimate=cost,
    )(x_p, w_p, b)
    return out[:M]


# ----------------------------------------------------------------------------
# Layer lowerings
# ----------------------------------------------------------------------------
def _layer1_fused(z, y_onehot, w1, w2, cout_p):
    """Both 1x1-spatial ConvTranspose2d(K=4,s=1,p=0) + training-BN + ReLU in ONE
    GEMM with a block-diagonal weight.  Conv biases cancel in BN and are dropped.
    Returns NHWC (B, 4, 4, 2*Cout) bf16, channel order = [x branch, y branch]
    (matching torch.cat([x, y], 1))."""
    B = z.shape[0]
    Cin1, Cout, K, _ = w1.shape            # (100, d*2, 4, 4)
    Cin2 = w2.shape[0]                     # 10
    Kin = Cin1 + Cin2                      # 110 -> padded to 128 in the GEMM

    x_mat = jnp.concatenate([z, y_onehot], axis=1)            # (B, 110)

    def prep(w):
        wm = jnp.transpose(w, (0, 2, 3, 1))                   # (Cin, 4, 4, Cout)
        return jnp.pad(wm, ((0, 0), (0, 0), (0, 0), (0, cout_p - Cout)))

    w_f = jnp.zeros((Kin, K, K, 2, cout_p), jnp.float32)
    w_f = w_f.at[:Cin1, :, :, 0, :].set(prep(w1))             # z -> x branch
    w_f = w_f.at[Cin1:, :, :, 1, :].set(prep(w2))             # onehot -> y branch
    w_mat = w_f.reshape(Kin, K * K * 2 * cout_p)

    # BN channels = (branch, channel); groups = 16 spatial positions.
    out = _gemm_bn_relu(x_mat, w_mat, groups=K * K, chans=2 * cout_p)
    out = out.reshape(B, K, K, 2, cout_p)[..., :Cout]
    return out.reshape(B, K, K, 2 * Cout)                     # (B,4,4,2*Cout) bf16


def _subpixel_patches(x_nhwc):
    """3x3 neighborhoods of the zero-padded-by-1 input: (B*H*W, 9*C), bf16."""
    B, H, W, C = x_nhwc.shape
    xp = jnp.pad(x_nhwc, ((0, 0), (1, 1), (1, 1), (0, 0)))
    wins = [xp[:, r:r + H, c:c + W, :] for r in range(3) for c in range(3)]
    patches = jnp.stack(wins, axis=3)                         # (B, H, W, 9, C)
    return patches.reshape(B * H * W, 9 * C)


def _subpixel_weight(w_pt, cout_p):
    """ConvTranspose2d weight (Cin,Cout,4,4) -> (9*Cin, 4*cout_p) for the
    stride-2 / pad-1 sub-pixel decomposition (column group = output phase):
    out[2j+ph, 2k+pw] = sum_{dh,dw} xpad[j+ph+dh, k+pw+dw] * wflip[2dh+ph, 2dw+pw]."""
    Cin, Cout, K, _ = w_pt.shape                              # K == 4
    wf = w_pt[:, :, ::-1, ::-1]                               # flipped kernel
    w_mat = jnp.zeros((3, 3, Cin, 2, 2, cout_p), w_pt.dtype)
    for ph in range(2):
        for pw in range(2):
            for dh in range(2):
                for dw in range(2):
                    w_mat = w_mat.at[ph + dh, pw + dw, :, ph, pw, :Cout].set(
                        wf[:, :, 2 * dh + ph, 2 * dw + pw])
    return w_mat.reshape(9 * Cin, 4 * cout_p)


def _depth_to_space(out, B, H, W, cout_p, Cout):
    out = out.reshape(B, H, W, 2, 2, cout_p)
    out = out.transpose(0, 1, 3, 2, 4, 5).reshape(B, 2 * H, 2 * W, cout_p)
    return out[..., :Cout]


def _deconv_s2_bn_relu(x_nhwc, w_pt, cout_p):
    """ConvTranspose2d(K=4,s=2,p=1) + training-BN + ReLU (bias dropped)."""
    B, H, W, _ = x_nhwc.shape
    Cout = w_pt.shape[1]
    patches = _subpixel_patches(x_nhwc)                       # bf16 (B*H*W, 9*Cin)
    w_mat = _subpixel_weight(w_pt, cout_p)                    # (9*Cin, 4*cout_p)
    out = _gemm_bn_relu(patches, w_mat, groups=4, chans=cout_p)
    return _depth_to_space(out, B, H, W, cout_p, Cout)        # bf16 NHWC


def _deconv_s2_tanh(x_nhwc, w_pt, bias, cout_p):
    """Final ConvTranspose2d(K=4,s=2,p=1) + bias + tanh.  N = 4*cout_p lanes."""
    B, H, W, _ = x_nhwc.shape
    Cout = w_pt.shape[1]
    patches = _subpixel_patches(x_nhwc)
    w_mat = _subpixel_weight(w_pt, cout_p)
    bias_full = jnp.tile(jnp.pad(bias, (0, cout_p - Cout)), (4,))
    out = _gemm_bias_tanh(patches, w_mat, bias_full)          # f32
    return _depth_to_space(out, B, H, W, cout_p, Cout)        # f32 NHWC


# ----------------------------------------------------------------------------
# Generator
# ----------------------------------------------------------------------------
def init_params(key, d=128):
    std = 0.02
    ks = jax.random.split(key, 5)

    def conv_t(k, cin, cout):
        return {
            "w": std * jax.random.normal(k, (cin, cout, 4, 4), jnp.float32),
            "b": jnp.zeros((cout,), jnp.float32),
        }

    return {
        "deconv1_1": conv_t(ks[0], 100, d * 2),
        "deconv1_2": conv_t(ks[1], 10, d * 2),
        "deconv2": conv_t(ks[2], d * 4, d * 2),
        "deconv3": conv_t(ks[3], d * 2, d),
        "deconv4": conv_t(ks[4], d, 1),
    }


@jax.jit
def generator_forward(params, inp):
    """inp: (B, 101); column 0 = class label, columns 1:101 = noise z.
    Returns NCHW (B, 1, 32, 32) f32, matching the PyTorch module (training mode)."""
    z = inp[:, 1:]                                            # (B, 100)
    labels = inp[:, 0].astype(jnp.int32)
    y_in = jnp.eye(10, dtype=jnp.float32)[labels]             # (B, 10) one-hot

    p = params
    d2 = p["deconv1_1"]["w"].shape[1]                         # d*2
    d1 = p["deconv3"]["w"].shape[1]                           # d

    x = _layer1_fused(z, y_in, p["deconv1_1"]["w"], p["deconv1_2"]["w"],
                      _round_up(d2, 128))                     # (B,4,4,4d)  bf16
    x = _deconv_s2_bn_relu(x, p["deconv2"]["w"], _round_up(d2, 128))   # (B,8,8,2d)
    x = _deconv_s2_bn_relu(x, p["deconv3"]["w"], _round_up(d1, 128))   # (B,16,16,d)
    x = _deconv_s2_tanh(x, p["deconv4"]["w"], p["deconv4"]["b"],
                        cout_p=32)                            # 4*32 = 128 lanes
    return x.transpose(0, 3, 1, 2)                            # NCHW (B,1,32,32) f32


if __name__ == "__main__":
    key = jax.random.PRNGKey(0)
    k_par, k_z = jax.random.split(key)

    d = 32        # small constructor arg to keep demo shapes small
    B = 2
    params = init_params(k_par, d=d)

    labels = (jnp.arange(B, dtype=jnp.float32) % 10.0).reshape(B, 1)
    z = jax.random.normal(k_z, (B, 100), jnp.float32)
    inp = jnp.concatenate([labels, z], axis=1)                # (B, 101)

    out = generator_forward(params, inp)
    out = jax.block_until_ready(out)
    assert out.shape == (B, 1, 32, 32)
    assert out.dtype == jnp.float32
    assert bool(jnp.all(jnp.isfinite(out)))
    assert bool(jnp.all(jnp.abs(out) <= 1.0 + 1e-6))          # tanh range
    print("KERNEL_OK")
</pallas_src>

<mosaic_0001>
module attributes {stable_mosaic.version = 11 : i64} {
  func.func @_gemm_stats_kernel(%arg0: i32, %arg1: memref<8x128xbf16, #tpu.memory_space<vmem>>, %arg2: memref<128x4096xbf16, #tpu.memory_space<vmem>>, %arg3: memref<8x4096xbf16, #tpu.memory_space<vmem>>, %arg4: memref<8x4096xf32, #tpu.memory_space<vmem>>) attributes {dimension_semantics = [#tpu.dimension_semantics<parallel>], iteration_bounds = array<i64: 1>, scalar_prefetch = 0 : i64, scratch_operands = 0 : i64, tpu.core_type = #tpu.core_type<tc>, window_params = [{transform_indices = @transform_0, window_bounds = array<i64: 8, 128>}, {pipeline_mode = #tpu.pipeline_mode<synchronous>, transform_indices = @transform_1, window_bounds = array<i64: 128, 4096>}, {transform_indices = @transform_2, window_bounds = array<i64: 8, 4096>}, {transform_indices = @transform_3, window_bounds = array<i64: 8, 4096>}]} {
    %c0 = arith.constant 0 : index
    %c0_0 = arith.constant 0 : index
    %0 = vector.load %arg1[%c0, %c0_0] : memref<8x128xbf16, #tpu.memory_space<vmem>>, vector<8x128xbf16>
    %c0_1 = arith.constant 0 : index
    %c0_2 = arith.constant 0 : index
    %1 = vector.load %arg2[%c0_1, %c0_2] : memref<128x4096xbf16, #tpu.memory_space<vmem>>, vector<128x4096xbf16>
    %cst = arith.constant dense<0.000000e+00> : vector<8x4096xf32>
    %2 = tpu.matmul %0, %1, %cst {dimension_numbers = #tpu.dot_dimension_numbers<[1], [0], [0], [1], [0, 0, 1, 1], [], []>} : vector<8x128xbf16>, vector<128x4096xbf16>, vector<8x4096xf32> -> vector<8x4096xf32>
    %3 = arith.truncf %2 : vector<8x4096xf32> to vector<8x4096xbf16>
    %c0_3 = arith.constant 0 : index
    %c0_4 = arith.constant 0 : index
    %4 = vector.load %arg3[%c0_3, %c0_4] : memref<8x4096xbf16, #tpu.memory_space<vmem>>, vector<8x4096xbf16>
    tpu.vector_store %arg3[%c0_3, %c0_4], %3 {strides = array<i32>} : memref<8x4096xbf16, #tpu.memory_space<vmem>>, vector<8x4096xbf16>,
    %cst_5 = arith.constant 0.000000e+00 : f32
    %5 = vector.broadcast %cst_5 : f32 to vector<8x4096xf32>
    %c0_6 = arith.constant 0 : index
    %c0_7 = arith.constant 0 : index
    %6 = vector.load %arg4[%c0_6, %c0_7] : memref<8x4096xf32, #tpu.memory_space<vmem>>, vector<8x4096xf32>
    tpu.vector_store %arg4[%c0_6, %c0_7], %5 {strides = array<i32>} : memref<8x4096xf32, #tpu.memory_space<vmem>>, vector<8x4096xf32>,
    %cst_8 = arith.constant dense<0.000000e+00> : vector<4096xf32>
    %7 = vector.multi_reduction <add>, %2, %cst_8 [0] : vector<8x4096xf32> to vector<4096xf32>
    %8 = vector.shape_cast %7 : vector<4096xf32> to vector<1x4096xf32>
    %c0_9 = arith.constant 0 : index
    %c0_10 = arith.constant 0 : index
    %9 = vector.load %arg4[%c0_9, %c0_10] : memref<8x4096xf32, #tpu.memory_space<vmem>>, vector<1x4096xf32>
    tpu.vector_store %arg4[%c0_9, %c0_10], %8 {strides = array<i32>} : memref<8x4096xf32, #tpu.memory_space<vmem>>, vector<1x4096xf32>,
    %10 = arith.mulf %2, %2 : vector<8x4096xf32>
    %cst_11 = arith.constant dense<0.000000e+00> : vector<4096xf32>
    %11 = vector.multi_reduction <add>, %10, %cst_11 [0] : vector<8x4096xf32> to vector<4096xf32>
    %12 = vector.shape_cast %11 : vector<4096xf32> to vector<1x4096xf32>
    %c1 = arith.constant 1 : index
    %c0_12 = arith.constant 0 : index
    %13 = vector.load %arg4[%c1, %c0_12] : memref<8x4096xf32, #tpu.memory_space<vmem>>, vector<1x4096xf32>
    tpu.vector_store %arg4[%c1, %c0_12], %12 {strides = array<i32>} : memref<8x4096xf32, #tpu.memory_space<vmem>>, vector<1x4096xf32>,
    return
  }
  func.func @transform_0(%arg0: i32) -> (i32, i32) {
    %c0_i32 = arith.constant 0 : i32
    %c0_i32_0 = arith.constant 0 : i32
    return %arg0, %c0_i32 : i32, i32
  }
  func.func @transform_1(%arg0: i32) -> (i32, i32) {
    %c0_i32 = arith.constant 0 : i32
    %c0_i32_0 = arith.constant 0 : i32
    %c0_i32_1 = arith.constant 0 : i32
    return %c0_i32, %c0_i32_0 : i32, i32
  }
  func.func @transform_2(%arg0: i32) -> (i32, i32) {
    %c0_i32 = arith.constant 0 : i32
    %c0_i32_0 = arith.constant 0 : i32
    return %arg0, %c0_i32 : i32, i32
  }
  func.func @transform_3(%arg0: i32) -> (i32, i32) {
    %c0_i32 = arith.constant 0 : i32
    %c0_i32_0 = arith.constant 0 : i32
    return %arg0, %c0_i32 : i32, i32
  }
}

module attributes {stable_mosaic.version = 11 : i64} {
  func.func @_bn_apply_relu_kernel(%arg0: i32, %arg1: memref<8x4096xbf16, #tpu.memory_space<vmem>>, %arg2: memref<8x4096xf32, #tpu.memory_space<vmem>>, %arg3: memref<8x4096xbf16, #tpu.memory_space<vmem>>) attributes {dimension_semantics = [#tpu.dimension_semantics<parallel>], iteration_bounds = array<i64: 1>, scalar_prefetch = 0 : i64, scratch_operands = 0 : i64, tpu.core_type = #tpu.core_type<tc>, window_params = [{transform_indices = @transform_0, window_bounds = array<i64: 8, 4096>}, {pipeline_mode = #tpu.pipeline_mode<synchronous>, transform_indices = @transform_1, window_bounds = array<i64: 8, 4096>}, {transform_indices = @transform_2, window_bounds = array<i64: 8, 4096>}]} {
    %c0 = arith.constant 0 : index
    %c0_0 = arith.constant 0 : index
    %0 = vector.load %arg1[%c0, %c0_0] : memref<8x4096xbf16, #tpu.memory_space<vmem>>, vector<8x4096xbf16>
    %1 = arith.extf %0 : vector<8x4096xbf16> to vector<8x4096xf32>
    %c0_1 = arith.constant 0 : index
    %c0_2 = arith.constant 0 : index
    %2 = vector.load %arg2[%c0_1, %c0_2] : memref<8x4096xf32, #tpu.memory_space<vmem>>, vector<1x4096xf32>
    %c1 = arith.constant 1 : index
    %c0_3 = arith.constant 0 : index
    %3 = vector.load %arg2[%c1, %c0_3] : memref<8x4096xf32, #tpu.memory_space<vmem>>, vector<1x4096xf32>
    %4 = vector.broadcast %2 : vector<1x4096xf32> to vector<8x4096xf32>
    %5 = arith.mulf %1, %4 : vector<8x4096xf32>
    %6 = vector.broadcast %3 : vector<1x4096xf32> to vector<8x4096xf32>
    %7 = arith.addf %5, %6 : vector<8x4096xf32>
    %cst = arith.constant 0.000000e+00 : f32
    %8 = vector.broadcast %cst : f32 to vector<8x4096xf32>
    %9 = arith.maximumf %7, %8 : vector<8x4096xf32>
    %10 = arith.truncf %9 : vector<8x4096xf32> to vector<8x4096xbf16>
    %c0_4 = arith.constant 0 : index
    %c0_5 = arith.constant 0 : index
    %11 = vector.load %arg3[%c0_4, %c0_5] : memref<8x4096xbf16, #tpu.memory_space<vmem>>, vector<8x4096xbf16>
    tpu.vector_store %arg3[%c0_4, %c0_5], %10 {strides = array<i32>} : memref<8x4096xbf16, #tpu.memory_space<vmem>>, vector<8x4096xbf16>,
    return
  }
  func.func @transform_0(%arg0: i32) -> (i32, i32) {
    %c0_i32 = arith.constant 0 : i32
    %c0_i32_0 = arith.constant 0 : i32
    return %arg0, %c0_i32 : i32, i32
  }
  func.func @transform_1(%arg0: i32) -> (i32, i32) {
    %c0_i32 = arith.constant 0 : i32
    %c0_i32_0 = arith.constant 0 : i32
    %c0_i32_1 = arith.constant 0 : i32
    return %c0_i32, %c0_i32_0 : i32, i32
  }
  func.func @transform_2(%arg0: i32) -> (i32, i32) {
    %c0_i32 = arith.constant 0 : i32
    %c0_i32_0 = arith.constant 0 : i32
    return %arg0, %c0_i32 : i32, i32
  }
}

module attributes {stable_mosaic.version = 11 : i64} {
  func.func @_bn_apply_relu_kernel(%arg0: i32, %arg1: memref<32x512xbf16, #tpu.memory_space<vmem>>, %arg2: memref<8x512xf32, #tpu.memory_space<vmem>>, %arg3: memref<32x512xbf16, #tpu.memory_space<vmem>>) attributes {dimension_semantics = [#tpu.dimension_semantics<parallel>], iteration_bounds = array<i64: 1>, scalar_prefetch = 0 : i64, scratch_operands = 0 : i64, tpu.core_type = #tpu.core_type<tc>, window_params = [{transform_indices = @transform_0, window_bounds = array<i64: 32, 512>}, {pipeline_mode = #tpu.pipeline_mode<synchronous>, transform_indices = @transform_1, window_bounds = array<i64: 8, 512>}, {transform_indices = @transform_2, window_bounds = array<i64: 32, 512>}]} {
    %c0 = arith.constant 0 : index
    %c0_0 = arith.constant 0 : index
    %0 = vector.load %arg1[%c0, %c0_0] : memref<32x512xbf16, #tpu.memory_space<vmem>>, vector<32x512xbf16>
    %1 = arith.extf %0 : vector<32x512xbf16> to vector<32x512xf32>
    %c0_1 = arith.constant 0 : index
    %c0_2 = arith.constant 0 : index
    %2 = vector.load %arg2[%c0_1, %c0_2] : memref<8x512xf32, #tpu.memory_space<vmem>>, vector<1x512xf32>
    %c1 = arith.constant 1 : index
    %c0_3 = arith.constant 0 : index
    %3 = vector.load %arg2[%c1, %c0_3] : memref<8x512xf32, #tpu.memory_space<vmem>>, vector<1x512xf32>
    %4 = vector.broadcast %2 : vector<1x512xf32> to vector<32x512xf32>
    %5 = arith.mulf %1, %4 : vector<32x512xf32>
    %6 = vector.broadcast %3 : vector<1x512xf32> to vector<32x512xf32>
    %7 = arith.addf %5, %6 : vector<32x512xf32>
    %cst = arith.constant 0.000000e+00 : f32
    %8 = vector.broadcast %cst : f32 to vector<32x512xf32>
    %9 = arith.maximumf %7, %8 : vector<32x512xf32>
    %10 = arith.truncf %9 : vector<32x512xf32> to vector<32x512xbf16>
    %c0_4 = arith.constant 0 : index
    %c0_5 = arith.constant 0 : index
    %11 = vector.load %arg3[%c0_4, %c0_5] : memref<32x512xbf16, #tpu.memory_space<vmem>>, vector<32x512xbf16>
    tpu.vector_store %arg3[%c0_4, %c0_5], %10 {strides = array<i32>} : memref<32x512xbf16, #tpu.memory_space<vmem>>, vector<32x512xbf16>,
    return
  }
  func.func @transform_0(%arg0: i32) -> (i32, i32) {
    %c0_i32 = arith.constant 0 : i32
    %c0_i32_0 = arith.constant 0 : i32
    return %arg0, %c0_i32 : i32, i32
  }
  func.func @transform_1(%arg0: i32) -> (i32, i32) {
    %c0_i32 = arith.constant 0 : i32
    %c0_i32_0 = arith.constant 0 : i32
    %c0_i32_1 = arith.constant 0 : i32
    return %c0_i32, %c0_i32_0 : i32, i32
  }
  func.func @transform_2(%arg0: i32) -> (i32, i32) {
    %c0_i32 = arith.constant 0 : i32
    %c0_i32_0 = arith.constant 0 : i32
    return %arg0, %c0_i32 : i32, i32
  }
}

module attributes {stable_mosaic.version = 11 : i64} {
  func.func @_gemm_stats_kernel(%arg0: i32, %arg1: memref<32x1152xbf16, #tpu.memory_space<vmem>>, %arg2: memref<1152x512xbf16, #tpu.memory_space<vmem>>, %arg3: memref<32x512xbf16, #tpu.memory_space<vmem>>, %arg4: memref<8x512xf32, #tpu.memory_space<vmem>>) attributes {dimension_semantics = [#tpu.dimension_semantics<parallel>], iteration_bounds = array<i64: 1>, scalar_prefetch = 0 : i64, scratch_operands = 0 : i64, tpu.core_type = #tpu.core_type<tc>, window_params = [{transform_indices = @transform_0, window_bounds = array<i64: 32, 1152>}, {pipeline_mode = #tpu.pipeline_mode<synchronous>, transform_indices = @transform_1, window_bounds = array<i64: 1152, 512>}, {transform_indices = @transform_2, window_bounds = array<i64: 32, 512>}, {transform_indices = @transform_3, window_bounds = array<i64: 8, 512>}]} {
    %c0 = arith.constant 0 : index
    %c0_0 = arith.constant 0 : index
    %0 = vector.load %arg1[%c0, %c0_0] : memref<32x1152xbf16, #tpu.memory_space<vmem>>, vector<32x1152xbf16>
    %c0_1 = arith.constant 0 : index
    %c0_2 = arith.constant 0 : index
    %1 = vector.load %arg2[%c0_1, %c0_2] : memref<1152x512xbf16, #tpu.memory_space<vmem>>, vector<1152x512xbf16>
    %cst = arith.constant dense<0.000000e+00> : vector<32x512xf32>
    %2 = tpu.matmul %0, %1, %cst {dimension_numbers = #tpu.dot_dimension_numbers<[1], [0], [0], [1], [0, 0, 1, 1], [], []>} : vector<32x1152xbf16>, vector<1152x512xbf16>, vector<32x512xf32> -> vector<32x512xf32>
    %3 = arith.truncf %2 : vector<32x512xf32> to vector<32x512xbf16>
    %c0_3 = arith.constant 0 : index
    %c0_4 = arith.constant 0 : index
    %4 = vector.load %arg3[%c0_3, %c0_4] : memref<32x512xbf16, #tpu.memory_space<vmem>>, vector<32x512xbf16>
    tpu.vector_store %arg3[%c0_3, %c0_4], %3 {strides = array<i32>} : memref<32x512xbf16, #tpu.memory_space<vmem>>, vector<32x512xbf16>,
    %cst_5 = arith.constant 0.000000e+00 : f32
    %5 = vector.broadcast %cst_5 : f32 to vector<8x512xf32>
    %c0_6 = arith.constant 0 : index
    %c0_7 = arith.constant 0 : index
    %6 = vector.load %arg4[%c0_6, %c0_7] : memref<8x512xf32, #tpu.memory_space<vmem>>, vector<8x512xf32>
    tpu.vector_store %arg4[%c0_6, %c0_7], %5 {strides = array<i32>} : memref<8x512xf32, #tpu.memory_space<vmem>>, vector<8x512xf32>,
    %cst_8 = arith.constant dense<0.000000e+00> : vector<512xf32>
    %7 = vector.multi_reduction <add>, %2, %cst_8 [0] : vector<32x512xf32> to vector<512xf32>
    %8 = vector.shape_cast %7 : vector<512xf32> to vector<1x512xf32>
    %c0_9 = arith.constant 0 : index
    %c0_10 = arith.constant 0 : index
    %9 = vector.load %arg4[%c0_9, %c0_10] : memref<8x512xf32, #tpu.memory_space<vmem>>, vector<1x512xf32>
    tpu.vector_store %arg4[%c0_9, %c0_10], %8 {strides = array<i32>} : memref<8x512xf32, #tpu.memory_space<vmem>>, vector<1x512xf32>,
    %10 = arith.mulf %2, %2 : vector<32x512xf32>
    %cst_11 = arith.constant dense<0.000000e+00> : vector<512xf32>
    %11 = vector.multi_reduction <add>, %10, %cst_11 [0] : vector<32x512xf32> to vector<512xf32>
    %12 = vector.shape_cast %11 : vector<512xf32> to vector<1x512xf32>
    %c1 = arith.constant 1 : index
    %c0_12 = arith.constant 0 : index
    %13 = vector.load %arg4[%c1, %c0_12] : memref<8x512xf32, #tpu.memory_space<vmem>>, vector<1x512xf32>
    tpu.vector_store %arg4[%c1, %c0_12], %12 {strides = array<i32>} : memref<8x512xf32, #tpu.memory_space<vmem>>, vector<1x512xf32>,
    return
  }
  func.func @transform_0(%arg0: i32) -> (i32, i32) {
    %c0_i32 = arith.constant 0 : i32
    %c0_i32_0 = arith.constant 0 : i32
    return %arg0, %c0_i32 : i32, i32
  }
  func.func @transform_1(%arg0: i32) -> (i32, i32) {
    %c0_i32 = arith.constant 0 : i32
    %c0_i32_0 = arith.constant 0 : i32
    %c0_i32_1 = arith.constant 0 : i32
    return %c0_i32, %c0_i32_0 : i32, i32
  }
  func.func @transform_2(%arg0: i32) -> (i32, i32) {
    %c0_i32 = arith.constant 0 : i32
    %c0_i32_0 = arith.constant 0 : i32
    return %arg0, %c0_i32 : i32, i32
  }
  func.func @transform_3(%arg0: i32) -> (i32, i32) {
    %c0_i32 = arith.constant 0 : i32
    %c0_i32_0 = arith.constant 0 : i32
    return %arg0, %c0_i32 : i32, i32
  }
}

module attributes {stable_mosaic.version = 11 : i64} {
  func.func @_gemm_stats_kernel(%arg0: i32, %arg1: memref<128x640xbf16, #tpu.memory_space<vmem>>, %arg2: memref<640x512xbf16, #tpu.memory_space<vmem>>, %arg3: memref<128x512xbf16, #tpu.memory_space<vmem>>, %arg4: memref<8x512xf32, #tpu.memory_space<vmem>>) attributes {dimension_semantics = [#tpu.dimension_semantics<parallel>], iteration_bounds = array<i64: 1>, scalar_prefetch = 0 : i64, scratch_operands = 0 : i64, tpu.core_type = #tpu.core_type<tc>, window_params = [{transform_indices = @transform_0, window_bounds = array<i64: 128, 640>}, {pipeline_mode = #tpu.pipeline_mode<synchronous>, transform_indices = @transform_1, window_bounds = array<i64: 640, 512>}, {transform_indices = @transform_2, window_bounds = array<i64: 128, 512>}, {transform_indices = @transform_3, window_bounds = array<i64: 8, 512>}]} {
    %c0 = arith.constant 0 : index
    %c0_0 = arith.constant 0 : index
    %0 = vector.load %arg1[%c0, %c0_0] : memref<128x640xbf16, #tpu.memory_space<vmem>>, vector<128x640xbf16>
    %c0_1 = arith.constant 0 : index
    %c0_2 = arith.constant 0 : index
    %1 = vector.load %arg2[%c0_1, %c0_2] : memref<640x512xbf16, #tpu.memory_space<vmem>>, vector<640x512xbf16>
    %cst = arith.constant dense<0.000000e+00> : vector<128x512xf32>
    %2 = tpu.matmul %0, %1, %cst {dimension_numbers = #tpu.dot_dimension_numbers<[1], [0], [0], [1], [0, 0, 1, 1], [], []>} : vector<128x640xbf16>, vector<640x512xbf16>, vector<128x512xf32> -> vector<128x512xf32>
    %3 = arith.truncf %2 : vector<128x512xf32> to vector<128x512xbf16>
    %c0_3 = arith.constant 0 : index
    %c0_4 = arith.constant 0 : index
    %4 = vector.load %arg3[%c0_3, %c0_4] : memref<128x512xbf16, #tpu.memory_space<vmem>>, vector<128x512xbf16>
    tpu.vector_store %arg3[%c0_3, %c0_4], %3 {strides = array<i32>} : memref<128x512xbf16, #tpu.memory_space<vmem>>, vector<128x512xbf16>,
    %cst_5 = arith.constant 0.000000e+00 : f32
    %5 = vector.broadcast %cst_5 : f32 to vector<8x512xf32>
    %c0_6 = arith.constant 0 : index
    %c0_7 = arith.constant 0 : index
    %6 = vector.load %arg4[%c0_6, %c0_7] : memref<8x512xf32, #tpu.memory_space<vmem>>, vector<8x512xf32>
    tpu.vector_store %arg4[%c0_6, %c0_7], %5 {strides = array<i32>} : memref<8x512xf32, #tpu.memory_space<vmem>>, vector<8x512xf32>,
    %cst_8 = arith.constant dense<0.000000e+00> : vector<512xf32>
    %7 = vector.multi_reduction <add>, %2, %cst_8 [0] : vector<128x512xf32> to vector<512xf32>
    %8 = vector.shape_cast %7 : vector<512xf32> to vector<1x512xf32>
    %c0_9 = arith.constant 0 : index
    %c0_10 = arith.constant 0 : index
    %9 = vector.load %arg4[%c0_9, %c0_10] : memref<8x512xf32, #tpu.memory_space<vmem>>, vector<1x512xf32>
    tpu.vector_store %arg4[%c0_9, %c0_10], %8 {strides = array<i32>} : memref<8x512xf32, #tpu.memory_space<vmem>>, vector<1x512xf32>,
    %10 = arith.mulf %2, %2 : vector<128x512xf32>
    %cst_11 = arith.constant dense<0.000000e+00> : vector<512xf32>
    %11 = vector.multi_reduction <add>, %10, %cst_11 [0] : vector<128x512xf32> to vector<512xf32>
    %12 = vector.shape_cast %11 : vector<512xf32> to vector<1x512xf32>
    %c1 = arith.constant 1 : index
    %c0_12 = arith.constant 0 : index
    %13 = vector.load %arg4[%c1, %c0_12] : memref<8x512xf32, #tpu.memory_space<vmem>>, vector<1x512xf32>
    tpu.vector_store %arg4[%c1, %c0_12], %12 {strides = array<i32>} : memref<8x512xf32, #tpu.memory_space<vmem>>, vector<1x512xf32>,
    return
  }
  func.func @transform_0(%arg0: i32) -> (i32, i32) {
    %c0_i32 = arith.constant 0 : i32
    %c0_i32_0 = arith.constant 0 : i32
    return %arg0, %c0_i32 : i32, i32
  }
  func.func @transform_1(%arg0: i32) -> (i32, i32) {
    %c0_i32 = arith.constant 0 : i32
    %c0_i32_0 = arith.constant 0 : i32
    %c0_i32_1 = arith.constant 0 : i32
    return %c0_i32, %c0_i32_0 : i32, i32
  }
  func.func @transform_2(%arg0: i32) -> (i32, i32) {
    %c0_i32 = arith.constant 0 : i32
    %c0_i32_0 = arith.constant 0 : i32
    return %arg0, %c0_i32 : i32, i32
  }
  func.func @transform_3(%arg0: i32) -> (i32, i32) {
    %c0_i32 = arith.constant 0 : i32
    %c0_i32_0 = arith.constant 0 : i32
    return %arg0, %c0_i32 : i32, i32
  }
}

module attributes {stable_mosaic.version = 11 : i64} {
  func.func @_bn_apply_relu_kernel(%arg0: i32, %arg1: memref<128x512xbf16, #tpu.memory_space<vmem>>, %arg2: memref<8x512xf32, #tpu.memory_space<vmem>>, %arg3: memref<128x512xbf16, #tpu.memory_space<vmem>>) attributes {dimension_semantics = [#tpu.dimension_semantics<parallel>], iteration_bounds = array<i64: 1>, scalar_prefetch = 0 : i64, scratch_operands = 0 : i64, tpu.core_type = #tpu.core_type<tc>, window_params = [{transform_indices = @transform_0, window_bounds = array<i64: 128, 512>}, {pipeline_mode = #tpu.pipeline_mode<synchronous>, transform_indices = @transform_1, window_bounds = array<i64: 8, 512>}, {transform_indices = @transform_2, window_bounds = array<i64: 128, 512>}]} {
    %c0 = arith.constant 0 : index
    %c0_0 = arith.constant 0 : index
    %0 = vector.load %arg1[%c0, %c0_0] : memref<128x512xbf16, #tpu.memory_space<vmem>>, vector<128x512xbf16>
    %1 = arith.extf %0 : vector<128x512xbf16> to vector<128x512xf32>
    %c0_1 = arith.constant 0 : index
    %c0_2 = arith.constant 0 : index
    %2 = vector.load %arg2[%c0_1, %c0_2] : memref<8x512xf32, #tpu.memory_space<vmem>>, vector<1x512xf32>
    %c1 = arith.constant 1 : index
    %c0_3 = arith.constant 0 : index
    %3 = vector.load %arg2[%c1, %c0_3] : memref<8x512xf32, #tpu.memory_space<vmem>>, vector<1x512xf32>
    %4 = vector.broadcast %2 : vector<1x512xf32> to vector<128x512xf32>
    %5 = arith.mulf %1, %4 : vector<128x512xf32>
    %6 = vector.broadcast %3 : vector<1x512xf32> to vector<128x512xf32>
    %7 = arith.addf %5, %6 : vector<128x512xf32>
    %cst = arith.constant 0.000000e+00 : f32
    %8 = vector.broadcast %cst : f32 to vector<128x512xf32>
    %9 = arith.maximumf %7, %8 : vector<128x512xf32>
    %10 = arith.truncf %9 : vector<128x512xf32> to vector<128x512xbf16>
    %c0_4 = arith.constant 0 : index
    %c0_5 = arith.constant 0 : index
    %11 = vector.load %arg3[%c0_4, %c0_5] : memref<128x512xbf16, #tpu.memory_space<vmem>>, vector<128x512xbf16>
    tpu.vector_store %arg3[%c0_4, %c0_5], %10 {strides = array<i32>} : memref<128x512xbf16, #tpu.memory_space<vmem>>, vector<128x512xbf16>,
    return
  }
  func.func @transform_0(%arg0: i32) -> (i32, i32) {
    %c0_i32 = arith.constant 0 : i32
    %c0_i32_0 = arith.constant 0 : i32
    return %arg0, %c0_i32 : i32, i32
  }
  func.func @transform_1(%arg0: i32) -> (i32, i32) {
    %c0_i32 = arith.constant 0 : i32
    %c0_i32_0 = arith.constant 0 : i32
    %c0_i32_1 = arith.constant 0 : i32
    return %c0_i32, %c0_i32_0 : i32, i32
  }
  func.func @transform_2(%arg0: i32) -> (i32, i32) {
    %c0_i32 = arith.constant 0 : i32
    %c0_i32_0 = arith.constant 0 : i32
    return %arg0, %c0_i32 : i32, i32
  }
}

module attributes {stable_mosaic.version = 11 : i64} {
  func.func @_gemm_bias_tanh_kernel(%arg0: i32, %arg1: memref<512x384xbf16, #tpu.memory_space<vmem>>, %arg2: memref<384x128xbf16, #tpu.memory_space<vmem>>, %arg3: memref<1x128xf32, #tpu.memory_space<vmem>>, %arg4: memref<512x128xf32, #tpu.memory_space<vmem>>) attributes {dimension_semantics = [#tpu.dimension_semantics<parallel>], iteration_bounds = array<i64: 1>, scalar_prefetch = 0 : i64, scratch_operands = 0 : i64, tpu.core_type = #tpu.core_type<tc>, window_params = [{transform_indices = @transform_0, window_bounds = array<i64: 512, 384>}, {pipeline_mode = #tpu.pipeline_mode<synchronous>, transform_indices = @transform_1, window_bounds = array<i64: 384, 128>}, {pipeline_mode = #tpu.pipeline_mode<synchronous>, transform_indices = @transform_2, window_bounds = array<i64: 1, 128>}, {transform_indices = @transform_3, window_bounds = array<i64: 512, 128>}]} {
    %c0 = arith.constant 0 : index
    %c0_0 = arith.constant 0 : index
    %0 = vector.load %arg1[%c0, %c0_0] : memref<512x384xbf16, #tpu.memory_space<vmem>>, vector<512x384xbf16>
    %c0_1 = arith.constant 0 : index
    %c0_2 = arith.constant 0 : index
    %1 = vector.load %arg2[%c0_1, %c0_2] : memref<384x128xbf16, #tpu.memory_space<vmem>>, vector<384x128xbf16>
    %cst = arith.constant dense<0.000000e+00> : vector<512x128xf32>
    %2 = tpu.matmul %0, %1, %cst {dimension_numbers = #tpu.dot_dimension_numbers<[1], [0], [0], [1], [0, 0, 1, 1], [], []>} : vector<512x384xbf16>, vector<384x128xbf16>, vector<512x128xf32> -> vector<512x128xf32>
    %c0_3 = arith.constant 0 : index
    %c0_4 = arith.constant 0 : index
    %3 = vector.load %arg3[%c0_3, %c0_4] : memref<1x128xf32, #tpu.memory_space<vmem>>, vector<1x128xf32>
    %4 = vector.broadcast %3 : vector<1x128xf32> to vector<512x128xf32>
    %5 = arith.addf %2, %4 : vector<512x128xf32>
    %6 = math.tanh %5 : vector<512x128xf32>
    %c0_5 = arith.constant 0 : index
    %c0_6 = arith.constant 0 : index
    %7 = vector.load %arg4[%c0_5, %c0_6] : memref<512x128xf32, #tpu.memory_space<vmem>>, vector<512x128xf32>
    tpu.vector_store %arg4[%c0_5, %c0_6], %6 {strides = array<i32>} : memref<512x128xf32, #tpu.memory_space<vmem>>, vector<512x128xf32>,
    return
  }
  func.func @transform_0(%arg0: i32) -> (i32, i32) {
    %c0_i32 = arith.constant 0 : i32
    %c0_i32_0 = arith.constant 0 : i32
    return %arg0, %c0_i32 : i32, i32
  }
  func.func @transform_1(%arg0: i32) -> (i32, i32) {
    %c0_i32 = arith.constant 0 : i32
    %c0_i32_0 = arith.constant 0 : i32
    %c0_i32_1 = arith.constant 0 : i32
    return %c0_i32, %c0_i32_0 : i32, i32
  }
  func.func @transform_2(%arg0: i32) -> (i32, i32) {
    %c0_i32 = arith.constant 0 : i32
    %c0_i32_0 = arith.constant 0 : i32
    %c0_i32_1 = arith.constant 0 : i32
    return %c0_i32, %c0_i32_0 : i32, i32
  }
  func.func @transform_3(%arg0: i32) -> (i32, i32) {
    %c0_i32 = arith.constant 0 : i32
    %c0_i32_0 = arith.constant 0 : i32
    return %arg0, %c0_i32 : i32, i32
  }
}

</mosaic_0001>

<llo_original>
// kernel: generator_forward.7
$region0: #{generator_forward.7}
  #allocation0 [shape = 'u32[]', space=smem, size = 0x4, offset = 0x4, fixed_abs, tag = 'smem constant byte address 0x4 - core index']
  #allocation1 [shape = 'u32[72,128]{1,0:T(1,128)}', space=vmem, size = 0x9000, scoped, tag = 'internal scratch']
  %s0 = inlined_call_operand.vmem [shape: bf16[8,128], index: 0, kind: input, shape index: {}]
  %s1 = inlined_call_operand.vmem [shape: bf16[128,4096], index: 1, kind: input, shape index: {}]
  %s2 = inlined_call_operand.vmem [shape: bf16[8,4096], index: 2, kind: output, shape index: {0}]
  %s3 = inlined_call_operand.vmem [shape: f32[8,4096], index: 3, kind: output, shape index: {1}]
  %4 = xla_tuple %s2, %s3
  %s5 = sld [smem:[#allocation0]]
  $region26: #{generator_forward.7} parent=0
    _
  %s7 = ssub.s32 1, %s5
  %s8 = scalar_select 0, %s7, %s5
  // Predicated region
  $region2: #{generator_forward.7} parent=0 // pred_check
    _
  $region3: #{generator_forward.7} parent=0 // pred_check_branch
    %10 = sbr.rel (0) target = $region5
  $region4: #{generator_forward.7} parent=0 // pred_region
    _
  $region5: #{generator_forward.7} parent=0 // pred_fallthru
    _
  // Predicated region
  $region6: #{generator_forward.7} parent=0 // pred_check
    _
  $region7: #{generator_forward.7} parent=0 // pred_check_branch
    %12 = sbr.rel (0) target = $region9
  $region8: #{generator_forward.7} parent=0 // pred_region
    _
  $region9: #{generator_forward.7} parent=0 // pred_fallthru
    _
  %v13 = vld [vmem:[%s0] sm:$0xf]
  %v14 = vld [vmem:[%s1] sm:$0xff]
  %v15 = vld [vmem:[%s1 + $0x8] sm:$0xff]
  %v16 = vld [vmem:[%s1 + $0x10] sm:$0xff]
  %v17 = vld [vmem:[%s1 + $0x18] sm:$0xff]
  %v18 = vld [vmem:[%s1 + $0x20] sm:$0xff]
  %v19 = vld [vmem:[%s1 + $0x28] sm:$0xff]
  %v20 = vld [vmem:[%s1 + $0x30] sm:$0xff]
  %v21 = vld [vmem:[%s1 + $0x38] sm:$0xff]
  %v22 = vld [vmem:[%s1 + $0x40] sm:$0xff]
  %v23 = vld [vmem:[%s1 + $0x48] sm:$0xff]
  %v24 = vld [vmem:[%s1 + $0x50] sm:$0xff]
  %v25 = vld [vmem:[%s1 + $0x58] sm:$0xff]
  %v26 = vld [vmem:[%s1 + $0x60] sm:$0xff]
  %v27 = vld [vmem:[%s1 + $0x68] sm:$0xff]
  %v28 = vld [vmem:[%s1 + $0x70] sm:$0xff]
  %v29 = vld [vmem:[%s1 + $0x78] sm:$0xff]
  %v30 = vld [vmem:[%s1 + $0x80] sm:$0xff]
  %v31 = vld [vmem:[%s1 + $0x88] sm:$0xff]
  %v32 = vld [vmem:[%s1 + $0x90] sm:$0xff]
  %v33 = vld [vmem:[%s1 + $0x98] sm:$0xff]
  %v34 = vld [vmem:[%s1 + $0xa0] sm:$0xff]
  %v35 = vld [vmem:[%s1 + $0xa8] sm:$0xff]
  %v36 = vld [vmem:[%s1 + $0xb0] sm:$0xff]
  %v37 = vld [vmem:[%s1 + $0xb8] sm:$0xff]
  %v38 = vld [vmem:[%s1 + $0xc0] sm:$0xff]
  %v39 = vld [vmem:[%s1 + $0xc8] sm:$0xff]
  %v40 = vld [vmem:[%s1 + $0xd0] sm:$0xff]
  %v41 = vld [vmem:[%s1 + $0xd8] sm:$0xff]
  %v42 = vld [vmem:[%s1 + $0xe0] sm:$0xff]
  %v43 = vld [vmem:[%s1 + $0xe8] sm:$0xff]
  %v44 = vld [vmem:[%s1 + $0xf0] sm:$0xff]
  %v45 = vld [vmem:[%s1 + $0xf8] sm:$0xff]
  %v46 = vld [vmem:[%s1 + $0x100] sm:$0xff]
  %v47 = vld [vmem:[%s1 + $0x108] sm:$0xff]
  %v48 = vld [vmem:[%s1 + $0x110] sm:$0xff]
  %v49 = vld [vmem:[%s1 + $0x118] sm:$0xff]
  %v50 = vld [vmem:[%s1 + $0x120] sm:$0xff]
  %v51 = vld [vmem:[%s1 + $0x128] sm:$0xff]
  %v52 = vld [vmem:[%s1 + $0x130] sm:$0xff]
  %v53 = vld [vmem:[%s1 + $0x138] sm:$0xff]
  %v54 = vld [vmem:[%s1 + $0x140] sm:$0xff]
  %v55 = vld [vmem:[%s1 + $0x148] sm:$0xff]
  %v56 = vld [vmem:[%s1 + $0x150] sm:$0xff]
  %v57 = vld [vmem:[%s1 + $0x158] sm:$0xff]
  %v58 = vld [vmem:[%s1 + $0x160] sm:$0xff]
  %v59 = vld [vmem:[%s1 + $0x168] sm:$0xff]
  %v60 = vld [vmem:[%s1 + $0x170] sm:$0xff]
  %v61 = vld [vmem:[%s1 + $0x178] sm:$0xff]
  %v62 = vld [vmem:[%s1 + $0x180] sm:$0xff]
  %v63 = vld [vmem:[%s1 + $0x188] sm:$0xff]
  %v64 = vld [vmem:[%s1 + $0x190] sm:$0xff]
  %v65 = vld [vmem:[%s1 + $0x198] sm:$0xff]
  %v66 = vld [vmem:[%s1 + $0x1a0] sm:$0xff]
  %v67 = vld [vmem:[%s1 + $0x1a8] sm:$0xff]
  %v68 = vld [vmem:[%s1 + $0x1b0] sm:$0xff]
  %v69 = vld [vmem:[%s1 + $0x1b8] sm:$0xff]
  %v70 = vld [vmem:[%s1 + $0x1c0] sm:$0xff]
  %v71 = vld [vmem:[%s1 + $0x1c8] sm:$0xff]
  %v72 = vld [vmem:[%s1 + $0x1d0] sm:$0xff]
  %v73 = vld [vmem:[%s1 + $0x1d8] sm:$0xff]
  %v74 = vld [vmem:[%s1 + $0x1e0] sm:$0xff]
  %v75 = vld [vmem:[%s1 + $0x1e8] sm:$0xff]
  %v76 = vld [vmem:[%s1 + $0x1f0] sm:$0xff]
  %v77 = vld [vmem:[%s1 + $0x1f8] sm:$0xff]
  %v78 = vld [vmem:[%s1 + $0x200] sm:$0xff]
  %v79 = vld [vmem:[%s1 + $0x208] sm:$0xff]
  %v80 = vld [vmem:[%s1 + $0x210] sm:$0xff]
  %v81 = vld [vmem:[%s1 + $0x218] sm:$0xff]
  %v82 = vld [vmem:[%s1 + $0x220] sm:$0xff]
  %v83 = vld [vmem:[%s1 + $0x228] sm:$0xff]
  %v84 = vld [vmem:[%s1 + $0x230] sm:$0xff]
  %v85 = vld [vmem:[%s1 + $0x238] sm:$0xff]
  %v86 = vld [vmem:[%s1 + $0x240] sm:$0xff]
  %v87 = vld [vmem:[%s1 + $0x248] sm:$0xff]
  %v88 = vld [vmem:[%s1 + $0x250] sm:$0xff]
  %v89 = vld [vmem:[%s1 + $0x258] sm:$0xff]
  %v90 = vld [vmem:[%s1 + $0x260] sm:$0xff]
  %v91 = vld [vmem:[%s1 + $0x268] sm:$0xff]
  %v92 = vld [vmem:[%s1 + $0x270] sm:$0xff]
  %v93 = vld [vmem:[%s1 + $0x278] sm:$0xff]
  %v94 = vld [vmem:[%s1 + $0x280] sm:$0xff]
  %v95 = vld [vmem:[%s1 + $0x288] sm:$0xff]
  %v96 = vld [vmem:[%s1 + $0x290] sm:$0xff]
  %v97 = vld [vmem:[%s1 + $0x298] sm:$0xff]
  %v98 = vld [vmem:[%s1 + $0x2a0] sm:$0xff]
  %v99 = vld [vmem:[%s1 + $0x2a8] sm:$0xff]
  %v100 = vld [vmem:[%s1 + $0x2b0] sm:$0xff]
  %v101 = vld [vmem:[%s1 + $0x2b8] sm:$0xff]
  %v102 = vld [vmem:[%s1 + $0x2c0] sm:$0xff]
  %v103 = vld [vmem:[%s1 + $0x2c8] sm:$0xff]
  %v104 = vld [vmem:[%s1 + $0x2d0] sm:$0xff]
  %v105 = vld [vmem:[%s1 + $0x2d8] sm:$0xff]
  %v106 = vld [vmem:[%s1 + $0x2e0] sm:$0xff]
  %v107 = vld [vmem:[%s1 + $0x2e8] sm:$0xff]
  %v108 = vld [vmem:[%s1 + $0x2f0] sm:$0xff]
  %v109 = vld [vmem:[%s1 + $0x2f8] sm:$0xff]
  %v110 = vld [vmem:[%s1 + $0x300] sm:$0xff]
  %v111 = vld [vmem:[%s1 + $0x308] sm:$0xff]
  %v112 = vld [vmem:[%s1 + $0x310] sm:$0xff]
  %v113 = vld [vmem:[%s1 + $0x318] sm:$0xff]
  %v114 = vld [vmem:[%s1 + $0x320] sm:$0xff]
  %v115 = vld [vmem:[%s1 + $0x328] sm:$0xff]
  %v116 = vld [vmem:[%s1 + $0x330] sm:$0xff]
  %v117 = vld [vmem:[%s1 + $0x338] sm:$0xff]
  %v118 = vld [vmem:[%s1 + $0x340] sm:$0xff]
  %v119 = vld [vmem:[%s1 + $0x348] sm:$0xff]
  %v120 = vld [vmem:[%s1 + $0x350] sm:$0xff]
  %v121 = vld [vmem:[%s1 + $0x358] sm:$0xff]
  %v122 = vld [vmem:[%s1 + $0x360] sm:$0xff]
  %v123 = vld [vmem:[%s1 + $0x368] sm:$0xff]
  %v124 = vld [vmem:[%s1 + $0x370] sm:$0xff]
  %v125 = vld [vmem:[%s1 + $0x378] sm:$0xff]
  %v126 = vld [vmem:[%s1 + $0x380] sm:$0xff]
  %v127 = vld [vmem:[%s1 + $0x388] sm:$0xff]
  %v128 = vld [vmem:[%s1 + $0x390] sm:$0xff]
  %v129 = vld [vmem:[%s1 + $0x398] sm:$0xff]
  %v130 = vld [vmem:[%s1 + $0x3a0] sm:$0xff]
  %v131 = vld [vmem:[%s1 + $0x3a8] sm:$0xff]
  %v132 = vld [vmem:[%s1 + $0x3b0] sm:$0xff]
  %v133 = vld [vmem:[%s1 + $0x3b8] sm:$0xff]
  %v134 = vld [vmem:[%s1 + $0x3c0] sm:$0xff]
  %v135 = vld [vmem:[%s1 + $0x3c8] sm:$0xff]
  %v136 = vld [vmem:[%s1 + $0x3d0] sm:$0xff]
  %v137 = vld [vmem:[%s1 + $0x3d8] sm:$0xff]
  %v138 = vld [vmem:[%s1 + $0x3e0] sm:$0xff]
  %v139 = vld [vmem:[%s1 + $0x3e8] sm:$0xff]
  %v140 = vld [vmem:[%s1 + $0x3f0] sm:$0xff]
  %v141 = vld [vmem:[%s1 + $0x3f8] sm:$0xff]
  %v142 = vld [vmem:[%s1 + $0x400] sm:$0xff]
  %v143 = vld [vmem:[%s1 + $0x408] sm:$0xff]
  %v144 = vld [vmem:[%s1 + $0x410] sm:$0xff]
  %v145 = vld [vmem:[%s1 + $0x418] sm:$0xff]
  %v146 = vld [vmem:[%s1 + $0x420] sm:$0xff]
  %v147 = vld [vmem:[%s1 + $0x428] sm:$0xff]
  %v148 = vld [vmem:[%s1 + $0x430] sm:$0xff]
  %v149 = vld [vmem:[%s1 + $0x438] sm:$0xff]
  %v150 = vld [vmem:[%s1 + $0x440] sm:$0xff]
  %v151 = vld [vmem:[%s1 + $0x448] sm:$0xff]
  %v152 = vld [vmem:[%s1 + $0x450] sm:$0xff]
  %v153 = vld [vmem:[%s1 + $0x458] sm:$0xff]
  %v154 = vld [vmem:[%s1 + $0x460] sm:$0xff]
  %v155 = vld [vmem:[%s1 + $0x468] sm:$0xff]
  %v156 = vld [vmem:[%s1 + $0x470] sm:$0xff]
  %v157 = vld [vmem:[%s1 + $0x478] sm:$0xff]
  %v158 = vld [vmem:[%s1 + $0x480] sm:$0xff]
  %v159 = vld [vmem:[%s1 + $0x488] sm:$0xff]
  %v160 = vld [vmem:[%s1 + $0x490] sm:$0xff]
  %v161 = vld [vmem:[%s1 + $0x498] sm:$0xff]
  %v162 = vld [vmem:[%s1 + $0x4a0] sm:$0xff]
  %v163 = vld [vmem:[%s1 + $0x4a8] sm:$0xff]
  %v164 = vld [vmem:[%s1 + $0x4b0] sm:$0xff]
  %v165 = vld [vmem:[%s1 + $0x4b8] sm:$0xff]
  %v166 = vld [vmem:[%s1 + $0x4c0] sm:$0xff]
  %v167 = vld [vmem:[%s1 + $0x4c8] sm:$0xff]
  %v168 = vld [vmem:[%s1 + $0x4d0] sm:$0xff]
  %v169 = vld [vmem:[%s1 + $0x4d8] sm:$0xff]
  %v170 = vld [vmem:[%s1 + $0x4e0] sm:$0xff]
  %v171 = vld [vmem:[%s1 + $0x4e8] sm:$0xff]
  %v172 = vld [vmem:[%s1 + $0x4f0] sm:$0xff]
  %v173 = vld [vmem:[%s1 + $0x4f8] sm:$0xff]
  %v174 = vld [vmem:[%s1 + $0x500] sm:$0xff]
  %v175 = vld [vmem:[%s1 + $0x508] sm:$0xff]
  %v176 = vld [vmem:[%s1 + $0x510] sm:$0xff]
  %v177 = vld [vmem:[%s1 + $0x518] sm:$0xff]
  %v178 = vld [vmem:[%s1 + $0x520] sm:$0xff]
  %v179 = vld [vmem:[%s1 + $0x528] sm:$0xff]
  %v180 = vld [vmem:[%s1 + $0x530] sm:$0xff]
  %v181 = vld [vmem:[%s1 + $0x538] sm:$0xff]
  %v182 = vld [vmem:[%s1 + $0x540] sm:$0xff]
  %v183 = vld [vmem:[%s1 + $0x548] sm:$0xff]
  %v184 = vld [vmem:[%s1 + $0x550] sm:$0xff]
  %v185 = vld [vmem:[%s1 + $0x558] sm:$0xff]
  %v186 = vld [vmem:[%s1 + $0x560] sm:$0xff]
  %v187 = vld [vmem:[%s1 + $0x568] sm:$0xff]
  %v188 = vld [vmem:[%s1 + $0x570] sm:$0xff]
  %v189 = vld [vmem:[%s1 + $0x578] sm:$0xff]
  %v190 = vld [vmem:[%s1 + $0x580] sm:$0xff]
  %v191 = vld [vmem:[%s1 + $0x588] sm:$0xff]
  %v192 = vld [vmem:[%s1 + $0x590] sm:$0xff]
  %v193 = vld [vmem:[%s1 + $0x598] sm:$0xff]
  %v194 = vld [vmem:[%s1 + $0x5a0] sm:$0xff]
  %v195 = vld [vmem:[%s1 + $0x5a8] sm:$0xff]
  %v196 = vld [vmem:[%s1 + $0x5b0] sm:$0xff]
  %v197 = vld [vmem:[%s1 + $0x5b8] sm:$0xff]
  %v198 = vld [vmem:[%s1 + $0x5c0] sm:$0xff]
  %v199 = vld [vmem:[%s1 + $0x5c8] sm:$0xff]
  %v200 = vld [vmem:[%s1 + $0x5d0] sm:$0xff]
  %v201 = vld [vmem:[%s1 + $0x5d8] sm:$0xff]
  %v202 = vld [vmem:[%s1 + $0x5e0] sm:$0xff]
  %v203 = vld [vmem:[%s1 + $0x5e8] sm:$0xff]
  %v204 = vld [vmem:[%s1 + $0x5f0] sm:$0xff]
  %v205 = vld [vmem:[%s1 + $0x5f8] sm:$0xff]
  %v206 = vld [vmem:[%s1 + $0x600] sm:$0xff]
  %v207 = vld [vmem:[%s1 + $0x608] sm:$0xff]
  %v208 = vld [vmem:[%s1 + $0x610] sm:$0xff]
  %v209 = vld [vmem:[%s1 + $0x618] sm:$0xff]
  %v210 = vld [vmem:[%s1 + $0x620] sm:$0xff]
  %v211 = vld [vmem:[%s1 + $0x628] sm:$0xff]
  %v212 = vld [vmem:[%s1 + $0x630] sm:$0xff]
  %v213 = vld [vmem:[%s1 + $0x638] sm:$0xff]
  %v214 = vld [vmem:[%s1 + $0x640] sm:$0xff]
  %v215 = vld [vmem:[%s1 + $0x648] sm:$0xff]
  %v216 = vld [vmem:[%s1 + $0x650] sm:$0xff]
  %v217 = vld [vmem:[%s1 + $0x658] sm:$0xff]
  %v218 = vld [vmem:[%s1 + $0x660] sm:$0xff]
  %v219 = vld [vmem:[%s1 + $0x668] sm:$0xff]
  %v220 = vld [vmem:[%s1 + $0x670] sm:$0xff]
  %v221 = vld [vmem:[%s1 + $0x678] sm:$0xff]
  %v222 = vld [vmem:[%s1 + $0x680] sm:$0xff]
  %v223 = vld [vmem:[%s1 + $0x688] sm:$0xff]
  %v224 = vld [vmem:[%s1 + $0x690] sm:$0xff]
  %v225 = vld [vmem:[%s1 + $0x698] sm:$0xff]
  %v226 = vld [vmem:[%s1 + $0x6a0] sm:$0xff]
  %v227 = vld [vmem:[%s1 + $0x6a8] sm:$0xff]
  %v228 = vld [vmem:[%s1 + $0x6b0] sm:$0xff]
  %v229 = vld [vmem:[%s1 + $0x6b8] sm:$0xff]
  %v230 = vld [vmem:[%s1 + $0x6c0] sm:$0xff]
  %v231 = vld [vmem:[%s1 + $0x6c8] sm:$0xff]
  %v232 = vld [vmem:[%s1 + $0x6d0] sm:$0xff]
  %v233 = vld [vmem:[%s1 + $0x6d8] sm:$0xff]
  %v234 = vld [vmem:[%s1 + $0x6e0] sm:$0xff]
  %v235 = vld [vmem:[%s1 + $0x6e8] sm:$0xff]
  %v236 = vld [vmem:[%s1 + $0x6f0] sm:$0xff]
  %v237 = vld [vmem:[%s1 + $0x6f8] sm:$0xff]
  %v238 = vld [vmem:[%s1 + $0x700] sm:$0xff]
  %v239 = vld [vmem:[%s1 + $0x708] sm:$0xff]
  %v240 = vld [vmem:[%s1 + $0x710] sm:$0xff]
  %v241 = vld [vmem:[%s1 + $0x718] sm:$0xff]
  %v242 = vld [vmem:[%s1 + $0x720] sm:$0xff]
  %v243 = vld [vmem:[%s1 + $0x728] sm:$0xff]
  %v244 = vld [vmem:[%s1 + $0x730] sm:$0xff]
  %v245 = vld [vmem:[%s1 + $0x738] sm:$0xff]
  %v246 = vld [vmem:[%s1 + $0x740] sm:$0xff]
  %v247 = vld [vmem:[%s1 + $0x748] sm:$0xff]
  %v248 = vld [vmem:[%s1 + $0x750] sm:$0xff]
  %v249 = vld [vmem:[%s1 + $0x758] sm:$0xff]
  %v250 = vld [vmem:[%s1 + $0x760] sm:$0xff]
  %v251 = vld [vmem:[%s1 + $0x768] sm:$0xff]
  %v252 = vld [vmem:[%s1 + $0x770] sm:$0xff]
  %v253 = vld [vmem:[%s1 + $0x778] sm:$0xff]
  %v254 = vld [vmem:[%s1 + $0x780] sm:$0xff]
  %v255 = vld [vmem:[%s1 + $0x788] sm:$0xff]
  %v256 = vld [vmem:[%s1 + $0x790] sm:$0xff]
  %v257 = vld [vmem:[%s1 + $0x798] sm:$0xff]
  %v258 = vld [vmem:[%s1 + $0x7a0] sm:$0xff]
  %v259 = vld [vmem:[%s1 + $0x7a8] sm:$0xff]
  %v260 = vld [vmem:[%s1 + $0x7b0] sm:$0xff]
  %v261 = vld [vmem:[%s1 + $0x7b8] sm:$0xff]
  %v262 = vld [vmem:[%s1 + $0x7c0] sm:$0xff]
  %v263 = vld [vmem:[%s1 + $0x7c8] sm:$0xff]
  %v264 = vld [vmem:[%s1 + $0x7d0] sm:$0xff]
  %v265 = vld [vmem:[%s1 + $0x7d8] sm:$0xff]
  %v266 = vld [vmem:[%s1 + $0x7e0] sm:$0xff]
  %v267 = vld [vmem:[%s1 + $0x7e8] sm:$0xff]
  %v268 = vld [vmem:[%s1 + $0x7f0] sm:$0xff]
  %v269 = vld [vmem:[%s1 + $0x7f8] sm:$0xff]
  %v526 = vunpack.c.l.b16 %v14
  %v527 = vunpack.c.h.b16 %v14
  %v528 = vunpack.c.l.b16 %v15
  %v529 = vunpack.c.h.b16 %v15
  %v530 = vunpack.c.l.b16 %v16
  %v531 = vunpack.c.h.b16 %v16
  %v532 = vunpack.c.l.b16 %v17
  %v533 = vunpack.c.h.b16 %v17
  %v534 = vunpack.c.l.b16 %v18
  %v535 = vunpack.c.h.b16 %v18
  %v536 = vunpack.c.l.b16 %v19
  %v537 = vunpack.c.h.b16 %v19
  %v538 = vunpack.c.l.b16 %v20
  %v539 = vunpack.c.h.b16 %v20
  %v540 = vunpack.c.l.b16 %v21
  %v541 = vunpack.c.h.b16 %v21
  %v542 = vunpack.c.l.b16 %v22
  %v543 = vunpack.c.h.b16 %v22
  %v544 = vunpack.c.l.b16 %v23
  %v545 = vunpack.c.h.b16 %v23
  %v546 = vunpack.c.l.b16 %v24
  %v547 = vunpack.c.h.b16 %v24
  %v548 = vunpack.c.l.b16 %v25
  %v549 = vunpack.c.h.b16 %v25
  %v550 = vunpack.c.l.b16 %v26
  %v551 = vunpack.c.h.b16 %v26
  %v552 = vunpack.c.l.b16 %v27
  %v553 = vunpack.c.h.b16 %v27
  %v554 = vunpack.c.l.b16 %v28
  %v555 = vunpack.c.h.b16 %v28
  %v556 = vunpack.c.l.b16 %v29
  %v557 = vunpack.c.h.b16 %v29
  %v558 = vunpack.c.l.b16 %v30
  %v559 = vunpack.c.h.b16 %v30
  %v560 = vunpack.c.l.b16 %v31
  %v561 = vunpack.c.h.b16 %v31
  %v562 = vunpack.c.l.b16 %v32
  %v563 = vunpack.c.h.b16 %v32
  %v564 = vunpack.c.l.b16 %v33
  %v565 = vunpack.c.h.b16 %v33
  %v566 = vunpack.c.l.b16 %v34
  %v567 = vunpack.c.h.b16 %v34
  %v568 = vunpack.c.l.b16 %v35
  %v569 = vunpack.c.h.b16 %v35
  %v570 = vunpack.c.l.b16 %v36
  %v571 = vunpack.c.h.b16 %v36
  %v572 = vunpack.c.l.b16 %v37
  %v573 = vunpack.c.h.b16 %v37
  %v574 = vunpack.c.l.b16 %v38
  %v575 = vunpack.c.h.b16 %v38
  %v576 = vunpack.c.l.b16 %v39
  %v577 = vunpack.c.h.b16 %v39
  %v578 = vunpack.c.l.b16 %v40
  %v579 = vunpack.c.h.b16 %v40
  %v580 = vunpack.c.l.b16 %v41
  %v581 = vunpack.c.h.b16 %v41
  %v582 = vunpack.c.l.b16 %v42
  %v583 = vunpack.c.h.b16 %v42
  %v584 = vunpack.c.l.b16 %v43
  %v585 = vunpack.c.h.b16 %v43
  %v586 = vunpack.c.l.b16 %v44
  %v587 = vunpack.c.h.b16 %v44
  %v588 = vunpack.c.l.b16 %v45
  %v589 = vunpack.c.h.b16 %v45
  %v590 = vunpack.c.l.b16 %v46
  %v591 = vunpack.c.h.b16 %v46
  %v592 = vunpack.c.l.b16 %v47
  %v593 = vunpack.c.h.b16 %v47
  %v594 = vunpack.c.l.b16 %v48
  %v595 = vunpack.c.h.b16 %v48
  %v596 = vunpack.c.l.b16 %v49
  %v597 = vunpack.c.h.b16 %v49
  %v598 = vunpack.c.l.b16 %v50
  %v599 = vunpack.c.h.b16 %v50
  %v600 = vunpack.c.l.b16 %v51
  %v601 = vunpack.c.h.b16 %v51
  %v602 = vunpack.c.l.b16 %v52
  %v603 = vunpack.c.h.b16 %v52
  %v604 = vunpack.c.l.b16 %v53
  %v605 = vunpack.c.h.b16 %v53
  %v606 = vunpack.c.l.b16 %v54
  %v607 = vunpack.c.h.b16 %v54
  %v608 = vunpack.c.l.b16 %v55
  %v609 = vunpack.c.h.b16 %v55
  %v610 = vunpack.c.l.b16 %v56
  %v611 = vunpack.c.h.b16 %v56
  %v612 = vunpack.c.l.b16 %v57
  %v613 = vunpack.c.h.b16 %v57
  %v614 = vunpack.c.l.b16 %v58
  %v615 = vunpack.c.h.b16 %v58
  %v616 = vunpack.c.l.b16 %v59
  %v617 = vunpack.c.h.b16 %v59
  %v618 = vunpack.c.l.b16 %v60
  %v619 = vunpack.c.h.b16 %v60
  %v620 = vunpack.c.l.b16 %v61
  %v621 = vunpack.c.h.b16 %v61
  %v622 = vunpack.c.l.b16 %v62
  %v623 = vunpack.c.h.b16 %v62
  %v624 = vunpack.c.l.b16 %v63
  %v625 = vunpack.c.h.b16 %v63
  %v626 = vunpack.c.l.b16 %v64
  %v627 = vunpack.c.h.b16 %v64
  %v628 = vunpack.c.l.b16 %v65
  %v629 = vunpack.c.h.b16 %v65
  %v630 = vunpack.c.l.b16 %v66
  %v631 = vunpack.c.h.b16 %v66
  %v632 = vunpack.c.l.b16 %v67
  %v633 = vunpack.c.h.b16 %v67
  %v634 = vunpack.c.l.b16 %v68
  %v635 = vunpack.c.h.b16 %v68
  %v636 = vunpack.c.l.b16 %v69
  %v637 = vunpack.c.h.b16 %v69
  %v638 = vunpack.c.l.b16 %v70
  %v639 = vunpack.c.h.b16 %v70
  %v640 = vunpack.c.l.b16 %v71
  %v641 = vunpack.c.h.b16 %v71
  %v642 = vunpack.c.l.b16 %v72
  %v643 = vunpack.c.h.b16 %v72
  %v644 = vunpack.c.l.b16 %v73
  %v645 = vunpack.c.h.b16 %v73
  %v646 = vunpack.c.l.b16 %v74
  %v647 = vunpack.c.h.b16 %v74
  %v648 = vunpack.c.l.b16 %v75
  %v649 = vunpack.c.h.b16 %v75
  %v650 = vunpack.c.l.b16 %v76
  %v651 = vunpack.c.h.b16 %v76
  %v652 = vunpack.c.l.b16 %v77
  %v653 = vunpack.c.h.b16 %v77
  %v654 = vunpack.c.l.b16 %v78
  %v655 = vunpack.c.h.b16 %v78
  %v656 = vunpack.c.l.b16 %v79
  %v657 = vunpack.c.h.b16 %v79
  %v658 = vunpack.c.l.b16 %v80
  %v659 = vunpack.c.h.b16 %v80
  %v660 = vunpack.c.l.b16 %v81
  %v661 = vunpack.c.h.b16 %v81
  %v662 = vunpack.c.l.b16 %v82
  %v663 = vunpack.c.h.b16 %v82
  %v664 = vunpack.c.l.b16 %v83
  %v665 = vunpack.c.h.b16 %v83
  %v666 = vunpack.c.l.b16 %v84
  %v667 = vunpack.c.h.b16 %v84
  %v668 = vunpack.c.l.b16 %v85
  %v669 = vunpack.c.h.b16 %v85
  %v670 = vunpack.c.l.b16 %v86
  %v671 = vunpack.c.h.b16 %v86
  %v672 = vunpack.c.l.b16 %v87
  %v673 = vunpack.c.h.b16 %v87
  %v674 = vunpack.c.l.b16 %v88
  %v675 = vunpack.c.h.b16 %v88
  %v676 = vunpack.c.l.b16 %v89
  %v677 = vunpack.c.h.b16 %v89
  %v678 = vunpack.c.l.b16 %v90
  %v679 = vunpack.c.h.b16 %v90
  %v680 = vunpack.c.l.b16 %v91
  %v681 = vunpack.c.h.b16 %v91
  %v682 = vunpack.c.l.b16 %v92
  %v683 = vunpack.c.h.b16 %v92
  %v684 = vunpack.c.l.b16 %v93
  %v685 = vunpack.c.h.b16 %v93
  %v686 = vunpack.c.l.b16 %v94
  %v687 = vunpack.c.h.b16 %v94
  %v688 = vunpack.c.l.b16 %v95
  %v689 = vunpack.c.h.b16 %v95
  %v690 = vunpack.c.l.b16 %v96
  %v691 = vunpack.c.h.b16 %v96
  %v692 = vunpack.c.l.b16 %v97
  %v693 = vunpack.c.h.b16 %v97
  %v694 = vunpack.c.l.b16 %v98
  %v695 = vunpack.c.h.b16 %v98
  %v696 = vunpack.c.l.b16 %v99
  %v697 = vunpack.c.h.b16 %v99
  %v698 = vunpack.c.l.b16 %v100
  %v699 = vunpack.c.h.b16 %v100
  %v700 = vunpack.c.l.b16 %v101
  %v701 = vunpack.c.h.b16 %v101
  %v702 = vunpack.c.l.b16 %v102
  %v703 = vunpack.c.h.b16 %v102
  %v704 = vunpack.c.l.b16 %v103
  %v705 = vunpack.c.h.b16 %v103
  %v706 = vunpack.c.l.b16 %v104
  %v707 = vunpack.c.h.b16 %v104
  %v708 = vunpack.c.l.b16 %v105
  %v709 = vunpack.c.h.b16 %v105
  %v710 = vunpack.c.l.b16 %v106
  %v711 = vunpack.c.h.b16 %v106
  %v712 = vunpack.c.l.b16 %v107
  %v713 = vunpack.c.h.b16 %v107
  %v714 = vunpack.c.l.b16 %v108
  %v715 = vunpack.c.h.b16 %v108
  %v716 = vunpack.c.l.b16 %v109
  %v717 = vunpack.c.h.b16 %v109
  %v718 = vunpack.c.l.b16 %v110
  %v719 = vunpack.c.h.b16 %v110
  %v720 = vunpack.c.l.b16 %v111
  %v721 = vunpack.c.h.b16 %v111
  %v722 = vunpack.c.l.b16 %v112
  %v723 = vunpack.c.h.b16 %v112
  %v724 = vunpack.c.l.b16 %v113
  %v725 = vunpack.c.h.b16 %v113
  %v726 = vunpack.c.l.b16 %v114
  %v727 = vunpack.c.h.b16 %v114
  %v728 = vunpack.c.l.b16 %v115
  %v729 = vunpack.c.h.b16 %v115
  %v730 = vunpack.c.l.b16 %v116
  %v731 = vunpack.c.h.b16 %v116
  %v732 = vunpack.c.l.b16 %v117
  %v733 = vunpack.c.h.b16 %v117
  %v734 = vunpack.c.l.b16 %v118
  %v735 = vunpack.c.h.b16 %v118
  %v736 = vunpack.c.l.b16 %v119
  %v737 = vunpack.c.h.b16 %v119
  %v738 = vunpack.c.l.b16 %v120
  %v739 = vunpack.c.h.b16 %v120
  %v740 = vunpack.c.l.b16 %v121
  %v741 = vunpack.c.h.b16 %v121
  %v742 = vunpack.c.l.b16 %v122
  %v743 = vunpack.c.h.b16 %v122
  %v744 = vunpack.c.l.b16 %v123
  %v745 = vunpack.c.h.b16 %v123
  %v746 = vunpack.c.l.b16 %v124
  %v747 = vunpack.c.h.b16 %v124
  %v748 = vunpack.c.l.b16 %v125
  %v749 = vunpack.c.h.b16 %v125
  %v750 = vunpack.c.l.b16 %v126
  %v751 = vunpack.c.h.b16 %v126
  %v752 = vunpack.c.l.b16 %v127
  %v753 = vunpack.c.h.b16 %v127
  %v754 = vunpack.c.l.b16 %v128
  %v755 = vunpack.c.h.b16 %v128
  %v756 = vunpack.c.l.b16 %v129
  %v757 = vunpack.c.h.b16 %v129
  %v758 = vunpack.c.l.b16 %v130
  %v759 = vunpack.c.h.b16 %v130
  %v760 = vunpack.c.l.b16 %v131
  %v761 = vunpack.c.h.b16 %v131
  %v762 = vunpack.c.l.b16 %v132
  %v763 = vunpack.c.h.b16 %v132
  %v764 = vunpack.c.l.b16 %v133
  %v765 = vunpack.c.h.b16 %v133
  %v766 = vunpack.c.l.b16 %v134
  %v767 = vunpack.c.h.b16 %v134
  %v768 = vunpack.c.l.b16 %v135
  %v769 = vunpack.c.h.b16 %v135
  %v770 = vunpack.c.l.b16 %v136
  %v771 = vunpack.c.h.b16 %v136
  %v772 = vunpack.c.l.b16 %v137
  %v773 = vunpack.c.h.b16 %v137
  %v774 = vunpack.c.l.b16 %v138
  %v775 = vunpack.c.h.b16 %v138
  %v776 = vunpack.c.l.b16 %v139
  %v777 = vunpack.c.h.b16 %v139
  %v778 = vunpack.c.l.b16 %v140
  %v779 = vunpack.c.h.b16 %v140
  %v780 = vunpack.c.l.b16 %v141
  %v781 = vunpack.c.h.b16 %v141
  %v782 = vunpack.c.l.b16 %v142
  %v783 = vunpack.c.h.b16 %v142
  %v784 = vunpack.c.l.b16 %v143
  %v785 = vunpack.c.h.b16 %v143
  %v786 = vunpack.c.l.b16 %v144
  %v787 = vunpack.c.h.b16 %v144
  %v788 = vunpack.c.l.b16 %v145
  %v789 = vunpack.c.h.b16 %v145
  %v790 = vunpack.c.l.b16 %v146
  %v791 = vunpack.c.h.b16 %v146
  %v792 = vunpack.c.l.b16 %v147
  %v793 = vunpack.c.h.b16 %v147
  %v794 = vunpack.c.l.b16 %v148
  %v795 = vunpack.c.h.b16 %v148
  %v796 = vunpack.c.l.b16 %v149
  %v797 = vunpack.c.h.b16 %v149
  %v798 = vunpack.c.l.b16 %v150
  %v799 = vunpack.c.h.b16 %v150
  %v800 = vunpack.c.l.b16 %v151
  %v801 = vunpack.c.h.b16 %v151
  %v802 = vunpack.c.l.b16 %v152
  %v803 = vunpack.c.h.b16 %v152
  %v804 = vunpack.c.l.b16 %v153
  %v805 = vunpack.c.h.b16 %v153
  %v806 = vunpack.c.l.b16 %v154
  %v807 = vunpack.c.h.b16 %v154
  %v808 = vunpack.c.l.b16 %v155
  %v809 = vunpack.c.h.b16 %v155
  %v810 = vunpack.c.l.b16 %v156
  %v811 = vunpack.c.h.b16 %v156
  %v812 = vunpack.c.l.b16 %v157
  %v813 = vunpack.c.h.b16 %v157
  %v814 = vunpack.c.l.b16 %v158
  %v815 = vunpack.c.h.b16 %v158
  %v816 = vunpack.c.l.b16 %v159
  %v817 = vunpack.c.h.b16 %v159
  %v818 = vunpack.c.l.b16 %v160
  %v819 = vunpack.c.h.b16 %v160
  %v820 = vunpack.c.l.b16 %v161
  %v821 = vunpack.c.h.b16 %v161
  %v822 = vunpack.c.l.b16 %v162
  %v823 = vunpack.c.h.b16 %v162
  %v824 = vunpack.c.l.b16 %v163
  %v825 = vunpack.c.h.b16 %v163
  %v826 = vunpack.c.l.b16 %v164
  %v827 = vunpack.c.h.b16 %v164
  %v828 = vunpack.c.l.b16 %v165
  %v829 = vunpack.c.h.b16 %v165
  %v830 = vunpack.c.l.b16 %v166
  %v831 = vunpack.c.h.b16 %v166
  %v832 = vunpack.c.l.b16 %v167
  %v833 = vunpack.c.h.b16 %v167
  %v834 = vunpack.c.l.b16 %v168
  %v835 = vunpack.c.h.b16 %v168
  %v836 = vunpack.c.l.b16 %v169
  %v837 = vunpack.c.h.b16 %v169
  %v838 = vunpack.c.l.b16 %v170
  %v839 = vunpack.c.h.b16 %v170
  %v840 = vunpack.c.l.b16 %v171
  %v841 = vunpack.c.h.b16 %v171
  %v842 = vunpack.c.l.b16 %v172
  %v843 = vunpack.c.h.b16 %v172
  %v844 = vunpack.c.l.b16 %v173
  %v845 = vunpack.c.h.b16 %v173
  %v846 = vunpack.c.l.b16 %v174
  %v847 = vunpack.c.h.b16 %v174
  %v848 = vunpack.c.l.b16 %v175
  %v849 = vunpack.c.h.b16 %v175
  %v850 = vunpack.c.l.b16 %v176
  %v851 = vunpack.c.h.b16 %v176
  %v852 = vunpack.c.l.b16 %v177
  %v853 = vunpack.c.h.b16 %v177
  %v854 = vunpack.c.l.b16 %v178
  %v855 = vunpack.c.h.b16 %v178
  %v856 = vunpack.c.l.b16 %v179
  %v857 = vunpack.c.h.b16 %v179
  %v858 = vunpack.c.l.b16 %v180
  %v859 = vunpack.c.h.b16 %v180
  %v860 = vunpack.c.l.b16 %v181
  %v861 = vunpack.c.h.b16 %v181
  %v862 = vunpack.c.l.b16 %v182
  %v863 = vunpack.c.h.b16 %v182
  %v864 = vunpack.c.l.b16 %v183
  %v865 = vunpack.c.h.b16 %v183
  %v866 = vunpack.c.l.b16 %v184
  %v867 = vunpack.c.h.b16 %v184
  %v868 = vunpack.c.l.b16 %v185
  %v869 = vunpack.c.h.b16 %v185
  %v870 = vunpack.c.l.b16 %v186
  %v871 = vunpack.c.h.b16 %v186
  %v872 = vunpack.c.l.b16 %v187
  %v873 = vunpack.c.h.b16 %v187
  %v874 = vunpack.c.l.b16 %v188
  %v875 = vunpack.c.h.b16 %v188
  %v876 = vunpack.c.l.b16 %v189
  %v877 = vunpack.c.h.b16 %v189
  %v878 = vunpack.c.l.b16 %v190
  %v879 = vunpack.c.h.b16 %v190
  %v880 = vunpack.c.l.b16 %v191
  %v881 = vunpack.c.h.b16 %v191
  %v882 = vunpack.c.l.b16 %v192
  %v883 = vunpack.c.h.b16 %v192
  %v884 = vunpack.c.l.b16 %v193
  %v885 = vunpack.c.h.b16 %v193
  %v886 = vunpack.c.l.b16 %v194
  %v887 = vunpack.c.h.b16 %v194
  %v888 = vunpack.c.l.b16 %v195
  %v889 = vunpack.c.h.b16 %v195
  %v890 = vunpack.c.l.b16 %v196
  %v891 = vunpack.c.h.b16 %v196
  %v892 = vunpack.c.l.b16 %v197
  %v893 = vunpack.c.h.b16 %v197
  %v894 = vunpack.c.l.b16 %v198
  %v895 = vunpack.c.h.b16 %v198
  %v896 = vunpack.c.l.b16 %v199
  %v897 = vunpack.c.h.b16 %v199
  %v898 = vunpack.c.l.b16 %v200
  %v899 = vunpack.c.h.b16 %v200
  %v900 = vunpack.c.l.b16 %v201
  %v901 = vunpack.c.h.b16 %v201
  %v902 = vunpack.c.l.b16 %v202
  %v903 = vunpack.c.h.b16 %v202
  %v904 = vunpack.c.l.b16 %v203
  %v905 = vunpack.c.h.b16 %v203
  %v906 = vunpack.c.l.b16 %v204
  %v907 = vunpack.c.h.b16 %v204
  %v908 = vunpack.c.l.b16 %v205
  %v909 = vunpack.c.h.b16 %v205
  %v910 = vunpack.c.l.b16 %v206
  %v911 = vunpack.c.h.b16 %v206
  %v912 = vunpack.c.l.b16 %v207
  %v913 = vunpack.c.h.b16 %v207
  %v914 = vunpack.c.l.b16 %v208
  %v915 = vunpack.c.h.b16 %v208
  %v916 = vunpack.c.l.b16 %v209
  %v917 = vunpack.c.h.b16 %v209
  %v918 = vunpack.c.l.b16 %v210
  %v919 = vunpack.c.h.b16 %v210
  %v920 = vunpack.c.l.b16 %v211
  %v921 = vunpack.c.h.b16 %v211
  %v922 = vunpack.c.l.b16 %v212
  %v923 = vunpack.c.h.b16 %v212
  %v924 = vunpack.c.l.b16 %v213
  %v925 = vunpack.c.h.b16 %v213
  %v926 = vunpack.c.l.b16 %v214
  %v927 = vunpack.c.h.b16 %v214
  %v928 = vunpack.c.l.b16 %v215
  %v929 = vunpack.c.h.b16 %v215
  %v930 = vunpack.c.l.b16 %v216
  %v931 = vunpack.c.h.b16 %v216
  %v932 = vunpack.c.l.b16 %v217
  %v933 = vunpack.c.h.b16 %v217
  %v934 = vunpack.c.l.b16 %v218
  %v935 = vunpack.c.h.b16 %v218
  %v936 = vunpack.c.l.b16 %v219
  %v937 = vunpack.c.h.b16 %v219
  %v938 = vunpack.c.l.b16 %v220
  %v939 = vunpack.c.h.b16 %v220
  %v940 = vunpack.c.l.b16 %v221
  %v941 = vunpack.c.h.b16 %v221
  %v942 = vunpack.c.l.b16 %v222
  %v943 = vunpack.c.h.b16 %v222
  %v944 = vunpack.c.l.b16 %v223
  %v945 = vunpack.c.h.b16 %v223
  %v946 = vunpack.c.l.b16 %v224
  %v947 = vunpack.c.h.b16 %v224
  %v948 = vunpack.c.l.b16 %v225
  %v949 = vunpack.c.h.b16 %v225
  %v950 = vunpack.c.l.b16 %v226
  %v951 = vunpack.c.h.b16 %v226
  %v952 = vunpack.c.l.b16 %v227
  %v953 = vunpack.c.h.b16 %v227
  %v954 = vunpack.c.l.b16 %v228
  %v955 = vunpack.c.h.b16 %v228
  %v956 = vunpack.c.l.b16 %v229
  %v957 = vunpack.c.h.b16 %v229
  %v958 = vunpack.c.l.b16 %v230
  %v959 = vunpack.c.h.b16 %v230
  %v960 = vunpack.c.l.b16 %v231
  %v961 = vunpack.c.h.b16 %v231
  %v962 = vunpack.c.l.b16 %v232
  %v963 = vunpack.c.h.b16 %v232
  %v964 = vunpack.c.l.b16 %v233
  %v965 = vunpack.c.h.b16 %v233
  %v966 = vunpack.c.l.b16 %v234
  %v967 = vunpack.c.h.b16 %v234
  %v968 = vunpack.c.l.b16 %v235
  %v969 = vunpack.c.h.b16 %v235
  %v970 = vunpack.c.l.b16 %v236
  %v971 = vunpack.c.h.b16 %v236
  %v972 = vunpack.c.l.b16 %v237
  %v973 = vunpack.c.h.b16 %v237
  %v974 = vunpack.c.l.b16 %v238
  %v975 = vunpack.c.h.b16 %v238
  %v976 = vunpack.c.l.b16 %v239
  %v977 = vunpack.c.h.b16 %v239
  %v978 = vunpack.c.l.b16 %v240
  %v979 = vunpack.c.h.b16 %v240
  %v980 = vunpack.c.l.b16 %v241
  %v981 = vunpack.c.h.b16 %v241
  %v982 = vunpack.c.l.b16 %v242
  %v983 = vunpack.c.h.b16 %v242
  %v984 = vunpack.c.l.b16 %v243
  %v985 = vunpack.c.h.b16 %v243
  %v986 = vunpack.c.l.b16 %v244
  %v987 = vunpack.c.h.b16 %v244
  %v988 = vunpack.c.l.b16 %v245
  %v989 = vunpack.c.h.b16 %v245
  %v990 = vunpack.c.l.b16 %v246
  %v991 = vunpack.c.h.b16 %v246
  %v992 = vunpack.c.l.b16 %v247
  %v993 = vunpack.c.h.b16 %v247
  %v994 = vunpack.c.l.b16 %v248
  %v995 = vunpack.c.h.b16 %v248
  %v996 = vunpack.c.l.b16 %v249
  %v997 = vunpack.c.h.b16 %v249
  %v998 = vunpack.c.l.b16 %v250
  %v999 = vunpack.c.h.b16 %v250
  %v1000 = vunpack.c.l.b16 %v251
  %v1001 = vunpack.c.h.b16 %v251
  %v1002 = vunpack.c.l.b16 %v252
  %v1003 = vunpack.c.h.b16 %v252
  %v1004 = vunpack.c.l.b16 %v253
  %v1005 = vunpack.c.h.b16 %v253
  %v1006 = vunpack.c.l.b16 %v254
  %v1007 = vunpack.c.h.b16 %v254
  %v1008 = vunpack.c.l.b16 %v255
  %v1009 = vunpack.c.h.b16 %v255
  %v1010 = vunpack.c.l.b16 %v256
  %v1011 = vunpack.c.h.b16 %v256
  %v1012 = vunpack.c.l.b16 %v257
  %v1013 = vunpack.c.h.b16 %v257
  %v1014 = vunpack.c.l.b16 %v258
  %v1015 = vunpack.c.h.b16 %v258
  %v1016 = vunpack.c.l.b16 %v259
  %v1017 = vunpack.c.h.b16 %v259
  %v1018 = vunpack.c.l.b16 %v260
  %v1019 = vunpack.c.h.b16 %v260
  %v1020 = vunpack.c.l.b16 %v261
  %v1021 = vunpack.c.h.b16 %v261
  %v1022 = vunpack.c.l.b16 %v262
  %v1023 = vunpack.c.h.b16 %v262
  %v1024 = vunpack.c.l.b16 %v263
  %v1025 = vunpack.c.h.b16 %v263
  %v1026 = vunpack.c.l.b16 %v264
  %v1027 = vunpack.c.h.b16 %v264
  %v1028 = vunpack.c.l.b16 %v265
  %v1029 = vunpack.c.h.b16 %v265
  %v1030 = vunpack.c.l.b16 %v266
  %v1031 = vunpack.c.h.b16 %v266
  %v1032 = vunpack.c.l.b16 %v267
  %v1033 = vunpack.c.h.b16 %v267
  %v1034 = vunpack.c.l.b16 %v268
  %v1035 = vunpack.c.h.b16 %v268
  %v1036 = vunpack.c.l.b16 %v269
  %v1037 = vunpack.c.h.b16 %v269
  %v1038 = vpack.c.b16 %v558, %v526
  %v1039 = vpack.c.b16 %v559, %v527
  %v1040 = vpack.c.b16 %v560, %v528
  %v1041 = vpack.c.b16 %v561, %v529
  %v1042 = vpack.c.b16 %v562, %v530
  %v1043 = vpack.c.b16 %v563, %v531
  %v1044 = vpack.c.b16 %v564, %v532
  %v1045 = vpack.c.b16 %v565, %v533
  %v1046 = vpack.c.b16 %v566, %v534
  %v1047 = vpack.c.b16 %v567, %v535
  %v1048 = vpack.c.b16 %v568, %v536
  %v1049 = vpack.c.b16 %v569, %v537
  %v1050 = vpack.c.b16 %v570, %v538
  %v1051 = vpack.c.b16 %v571, %v539
  %v1052 = vpack.c.b16 %v572, %v540
  %v1053 = vpack.c.b16 %v573, %v541
  %v1054 = vpack.c.b16 %v574, %v542
  %v1055 = vpack.c.b16 %v575, %v543
  %v1056 = vpack.c.b16 %v576, %v544
  %v1057 = vpack.c.b16 %v577, %v545
  %v1058 = vpack.c.b16 %v578, %v546
  %v1059 = vpack.c.b16 %v579, %v547
  %v1060 = vpack.c.b16 %v580, %v548
  %v1061 = vpack.c.b16 %v581, %v549
  %v1062 = vpack.c.b16 %v582, %v550
  %v1063 = vpack.c.b16 %v583, %v551
  %v1064 = vpack.c.b16 %v584, %v552
  %v1065 = vpack.c.b16 %v585, %v553
  %v1066 = vpack.c.b16 %v586, %v554
  %v1067 = vpack.c.b16 %v587, %v555
  %v1068 = vpack.c.b16 %v588, %v556
  %v1069 = vpack.c.b16 %v589, %v557
  %v1070 = vpack.c.b16 %v622, %v590
  %v1071 = vpack.c.b16 %v623, %v591
  %v1072 = vpack.c.b16 %v624, %v592
  %v1073 = vpack.c.b16 %v625, %v593
  %v1074 = vpack.c.b16 %v626, %v594
  %v1075 = vpack.c.b16 %v627, %v595
  %v1076 = vpack.c.b16 %v628, %v596
  %v1077 = vpack.c.b16 %v629, %v597
  %v1078 = vpack.c.b16 %v630, %v598
  %v1079 = vpack.c.b16 %v631, %v599
  %v1080 = vpack.c.b16 %v632, %v600
  %v1081 = vpack.c.b16 %v633, %v601
  %v1082 = vpack.c.b16 %v634, %v602
  %v1083 = vpack.c.b16 %v635, %v603
  %v1084 = vpack.c.b16 %v636, %v604
  %v1085 = vpack.c.b16 %v637, %v605
  %v1086 = vpack.c.b16 %v638, %v606
  %v1087 = vpack.c.b16 %v639, %v607
  %v1088 = vpack.c.b16 %v640, %v608
  %v1089 = vpack.c.b16 %v641, %v609
  %v1090 = vpack.c.b16 %v642, %v610
  %v1091 = vpack.c.b16 %v643, %v611
  %v1092 = vpack.c.b16 %v644, %v612
  %v1093 = vpack.c.b16 %v645, %v613
  %v1094 = vpack.c.b16 %v646, %v614
  %v1095 = vpack.c.b16 %v647, %v615
  %v1096 = vpack.c.b16 %v648, %v616
  %v1097 = vpack.c.b16 %v649, %v617
  %v1098 = vpack.c.b16 %v650, %v618
  %v1099 = vpack.c.b16 %v651, %v619
  %v1100 = vpack.c.b16 %v652, %v620
  %v1101 = vpack.c.b16 %v653, %v621
  %v1102 = vpack.c.b16 %v686, %v654
  %v1103 = vpack.c.b16 %v687, %v655
  %v1104 = vpack.c.b16 %v688, %v656
  %v1105 = vpack.c.b16 %v689, %v657
  %v1106 = vpack.c.b16 %v690, %v658
  %v1107 = vpack.c.b16 %v691, %v659
  %v1108 = vpack.c.b16 %v692, %v660
  %v1109 = vpack.c.b16 %v693, %v661
  %v1110 = vpack.c.b16 %v694, %v662
  %v1111 = vpack.c.b16 %v695, %v663
  %v1112 = vpack.c.b16 %v696, %v664
  %v1113 = vpack.c.b16 %v697, %v665
  %v1114 = vpack.c.b16 %v698, %v666
  %v1115 = vpack.c.b16 %v699, %v667
  %v1116 = vpack.c.b16 %v700, %v668
  %v1117 = vpack.c.b16 %v701, %v669
  %v1118 = vpack.c.b16 %v702, %v670
  %v1119 = vpack.c.b16 %v703, %v671
  %v1120 = vpack.c.b16 %v704, %v672
  %v1121 = vpack.c.b16 %v705, %v673
  %v1122 = vpack.c.b16 %v706, %v674
  %v1123 = vpack.c.b16 %v707, %v675
  %v1124 = vpack.c.b16 %v708, %v676
  %v1125 = vpack.c.b16 %v709, %v677
  %v1126 = vpack.c.b16 %v710, %v678
  %v1127 = vpack.c.b16 %v711, %v679
  %v1128 = vpack.c.b16 %v712, %v680
  %v1129 = vpack.c.b16 %v713, %v681
  %v1130 = vpack.c.b16 %v714, %v682
  %v1131 = vpack.c.b16 %v715, %v683
  %v1132 = vpack.c.b16 %v716, %v684
  %v1133 = vpack.c.b16 %v717, %v685
  %v1134 = vpack.c.b16 %v750, %v718
  %v1135 = vpack.c.b16 %v751, %v719
  %v1136 = vpack.c.b16 %v752, %v720
  %v1137 = vpack.c.b16 %v753, %v721
  %v1138 = vpack.c.b16 %v754, %v722
  %v1139 = vpack.c.b16 %v755, %v723
  %v1140 = vpack.c.b16 %v756, %v724
  %v1141 = vpack.c.b16 %v757, %v725
  %v1142 = vpack.c.b16 %v758, %v726
  %v1143 = vpack.c.b16 %v759, %v727
  %v1144 = vpack.c.b16 %v760, %v728
  %v1145 = vpack.c.b16 %v761, %v729
  %v1146 = vpack.c.b16 %v762, %v730
  %v1147 = vpack.c.b16 %v763, %v731
  %v1148 = vpack.c.b16 %v764, %v732
  %v1149 = vpack.c.b16 %v765, %v733
  %v1150 = vpack.c.b16 %v766, %v734
  %v1151 = vpack.c.b16 %v767, %v735
  %v1152 = vpack.c.b16 %v768, %v736
  %v1153 = vpack.c.b16 %v769, %v737
  %v1154 = vpack.c.b16 %v770, %v738
  %v1155 = vpack.c.b16 %v771, %v739
  %v1156 = vpack.c.b16 %v772, %v740
  %v1157 = vpack.c.b16 %v773, %v741
  %v1158 = vpack.c.b16 %v774, %v742
  %v1159 = vpack.c.b16 %v775, %v743
  %v1160 = vpack.c.b16 %v776, %v744
  %v1161 = vpack.c.b16 %v777, %v745
  %v1162 = vpack.c.b16 %v778, %v746
  %v1163 = vpack.c.b16 %v779, %v747
  %v1164 = vpack.c.b16 %v780, %v748
  %v1165 = vpack.c.b16 %v781, %v749
  %v1166 = vpack.c.b16 %v814, %v782
  %v1167 = vpack.c.b16 %v815, %v783
  %v1168 = vpack.c.b16 %v816, %v784
  %v1169 = vpack.c.b16 %v817, %v785
  %v1170 = vpack.c.b16 %v818, %v786
  %v1171 = vpack.c.b16 %v819, %v787
  %v1172 = vpack.c.b16 %v820, %v788
  %v1173 = vpack.c.b16 %v821, %v789
  %v1174 = vpack.c.b16 %v822, %v790
  %v1175 = vpack.c.b16 %v823, %v791
  %v1176 = vpack.c.b16 %v824, %v792
  %v1177 = vpack.c.b16 %v825, %v793
  %v1178 = vpack.c.b16 %v826, %v794
  %v1179 = vpack.c.b16 %v827, %v795
  %v1180 = vpack.c.b16 %v828, %v796
  %v1181 = vpack.c.b16 %v829, %v797
  %v1182 = vpack.c.b16 %v830, %v798
  %v1183 = vpack.c.b16 %v831, %v799
  %v1184 = vpack.c.b16 %v832, %v800
  %v1185 = vpack.c.b16 %v833, %v801
  %v1186 = vpack.c.b16 %v834, %v802
  %v1187 = vpack.c.b16 %v835, %v803
  %v1188 = vpack.c.b16 %v836, %v804
  %v1189 = vpack.c.b16 %v837, %v805
  %v1190 = vpack.c.b16 %v838, %v806
  %v1191 = vpack.c.b16 %v839, %v807
  %v1192 = vpack.c.b16 %v840, %v808
  %v1193 = vpack.c.b16 %v841, %v809
  %v1194 = vpack.c.b16 %v842, %v810
  %v1195 = vpack.c.b16 %v843, %v811
  %v1196 = vpack.c.b16 %v844, %v812
  %v1197 = vpack.c.b16 %v845, %v813
  %v1198 = vpack.c.b16 %v878, %v846
  %v1199 = vpack.c.b16 %v879, %v847
  %v1200 = vpack.c.b16 %v880, %v848
  %v1201 = vpack.c.b16 %v881, %v849
  %v1202 = vpack.c.b16 %v882, %v850
  %v1203 = vpack.c.b16 %v883, %v851
  %v1204 = vpack.c.b16 %v884, %v852
  %v1205 = vpack.c.b16 %v885, %v853
  %v1206 = vpack.c.b16 %v886, %v854
  %v1207 = vpack.c.b16 %v887, %v855
  %v1208 = vpack.c.b16 %v888, %v856
  %v1209 = vpack.c.b16 %v889, %v857
  %v1210 = vpack.c.b16 %v890, %v858
  %v1211 = vpack.c.b16 %v891, %v859
  %v1212 = vpack.c.b16 %v892, %v860
  %v1213 = vpack.c.b16 %v893, %v861
  %v1214 = vpack.c.b16 %v894, %v862
  %v1215 = vpack.c.b16 %v895, %v863
  %v1216 = vpack.c.b16 %v896, %v864
  %v1217 = vpack.c.b16 %v897, %v865
  %v1218 = vpack.c.b16 %v898, %v866
  %v1219 = vpack.c.b16 %v899, %v867
  %v1220 = vpack.c.b16 %v900, %v868
  %v1221 = vpack.c.b16 %v901, %v869
  %v1222 = vpack.c.b16 %v902, %v870
  %v1223 = vpack.c.b16 %v903, %v871
  %v1224 = vpack.c.b16 %v904, %v872
  %v1225 = vpack.c.b16 %v905, %v873
  %v1226 = vpack.c.b16 %v906, %v874
  %v1227 = vpack.c.b16 %v907, %v875
  %v1228 = vpack.c.b16 %v908, %v876
  %v1229 = vpack.c.b16 %v909, %v877
  %v1230 = vpack.c.b16 %v942, %v910
  %v1231 = vpack.c.b16 %v943, %v911
  %v1232 = vpack.c.b16 %v944, %v912
  %v1233 = vpack.c.b16 %v945, %v913
  %v1234 = vpack.c.b16 %v946, %v914
  %v1235 = vpack.c.b16 %v947, %v915
  %v1236 = vpack.c.b16 %v948, %v916
  %v1237 = vpack.c.b16 %v949, %v917
  %v1238 = vpack.c.b16 %v950, %v918
  %v1239 = vpack.c.b16 %v951, %v919
  %v1240 = vpack.c.b16 %v952, %v920
  %v1241 = vpack.c.b16 %v953, %v921
  %v1242 = vpack.c.b16 %v954, %v922
  %v1243 = vpack.c.b16 %v955, %v923
  %v1244 = vpack.c.b16 %v956, %v924
  %v1245 = vpack.c.b16 %v957, %v925
  %v1246 = vpack.c.b16 %v958, %v926
  %v1247 = vpack.c.b16 %v959, %v927
  %v1248 = vpack.c.b16 %v960, %v928
  %v1249 = vpack.c.b16 %v961, %v929
  %v1250 = vpack.c.b16 %v962, %v930
  %v1251 = vpack.c.b16 %v963, %v931
  %v1252 = vpack.c.b16 %v964, %v932
  %v1253 = vpack.c.b16 %v965, %v933
  %v1254 = vpack.c.b16 %v966, %v934
  %v1255 = vpack.c.b16 %v967, %v935
  %v1256 = vpack.c.b16 %v968, %v936
  %v1257 = vpack.c.b16 %v969, %v937
  %v1258 = vpack.c.b16 %v970, %v938
  %v1259 = vpack.c.b16 %v971, %v939
  %v1260 = vpack.c.b16 %v972, %v940
  %v1261 = vpack.c.b16 %v973, %v941
  %v1262 = vpack.c.b16 %v1006, %v974
  %v1263 = vpack.c.b16 %v1007, %v975
  %v1264 = vpack.c.b16 %v1008, %v976
  %v1265 = vpack.c.b16 %v1009, %v977
  %v1266 = vpack.c.b16 %v1010, %v978
  %v1267 = vpack.c.b16 %v1011, %v979
  %v1268 = vpack.c.b16 %v1012, %v980
  %v1269 = vpack.c.b16 %v1013, %v981
  %v1270 = vpack.c.b16 %v1014, %v982
  %v1271 = vpack.c.b16 %v1015, %v983
  %v1272 = vpack.c.b16 %v1016, %v984
  %v1273 = vpack.c.b16 %v1017, %v985
  %v1274 = vpack.c.b16 %v1018, %v986
  %v1275 = vpack.c.b16 %v1019, %v987
  %v1276 = vpack.c.b16 %v1020, %v988
  %v1277 = vpack.c.b16 %v1021, %v989
  %v1278 = vpack.c.b16 %v1022, %v990
  %v1279 = vpack.c.b16 %v1023, %v991
  %v1280 = vpack.c.b16 %v1024, %v992
  %v1281 = vpack.c.b16 %v1025, %v993
  %v1282 = vpack.c.b16 %v1026, %v994
  %v1283 = vpack.c.b16 %v1027, %v995
  %v1284 = vpack.c.b16 %v1028, %v996
  %v1285 = vpack.c.b16 %v1029, %v997
  %v1286 = vpack.c.b16 %v1030, %v998
  %v1287 = vpack.c.b16 %v1031, %v999
  %v1288 = vpack.c.b16 %v1032, %v1000
  %v1289 = vpack.c.b16 %v1033, %v1001
  %v1290 = vpack.c.b16 %v1034, %v1002
  %v1291 = vpack.c.b16 %v1035, %v1003
  %v1292 = vpack.c.b16 %v1036, %v1004
  %v1293 = vpack.c.b16 %v1037, %v1005
  %1550 = vmatpush.bf16.msra.mxu0 %v1262
  %1551 = vmatpush.bf16.msra.mxu0 %v1230
  %1552 = vmatpush.bf16.msra.mxu0 %v1198
  %1553 = vmatpush.bf16.msra.mxu0 %v1166
  %1554 = vmatpush.bf16.msra.mxu0 %v1134
  %1555 = vmatpush.bf16.msra.mxu0 %v1102
  %1556 = vmatpush.bf16.msra.mxu0 %v1070
  %1557 = vmatpush.bf16.msra.mxu0 %v1038
  %1558 = vmatmul.bf16.gmra.mxu0 %v13
  %v1559 = vpop.f32.mrf.mxu0
  %v1560 = vadd.f32 0.0, %v1559
  %v1561 = vpop.f32.mrf.mxu0
  %1562 = vdwg.mxu0
  %1563 = vmatpush.bf16.msra.mxu0 %v1263
  %1564 = vmatpush.bf16.msra.mxu0 %v1231
  %1565 = vmatpush.bf16.msra.mxu0 %v1199
  %1566 = vmatpush.bf16.msra.mxu0 %v1167
  %1567 = vmatpush.bf16.msra.mxu0 %v1135
  %1568 = vmatpush.bf16.msra.mxu0 %v1103
  %1569 = vmatpush.bf16.msra.mxu0 %v1071
  %1570 = vmatpush.bf16.msra.mxu0 %v1039
  %1571 = vmatmul.bf16.gmra.mxu0 %v13
  %v1572 = vpop.f32.mrf.mxu0
  %v1573 = vadd.f32 0.0, %v1572
  %v1574 = vpop.f32.mrf.mxu0
  %1575 = vdwg.mxu0
  %1576 = vmatpush.bf16.msra.mxu0 %v1264
  %1577 = vmatpush.bf16.msra.mxu0 %v1232
  %1578 = vmatpush.bf16.msra.mxu0 %v1200
  %1579 = vmatpush.bf16.msra.mxu0 %v1168
  %1580 = vmatpush.bf16.msra.mxu0 %v1136
  %1581 = vmatpush.bf16.msra.mxu0 %v1104
  %1582 = vmatpush.bf16.msra.mxu0 %v1072
  %1583 = vmatpush.bf16.msra.mxu0 %v1040
  %1584 = vmatmul.bf16.gmra.mxu0 %v13
  %v1585 = vpop.f32.mrf.mxu0
  %v1586 = vadd.f32 0.0, %v1585
  %v1587 = vpop.f32.mrf.mxu0
  %1588 = vdwg.mxu0
  %1589 = vmatpush.bf16.msra.mxu0 %v1265
  %1590 = vmatpush.bf16.msra.mxu0 %v1233
  %1591 = vmatpush.bf16.msra.mxu0 %v1201
  %1592 = vmatpush.bf16.msra.mxu0 %v1169
  %1593 = vmatpush.bf16.msra.mxu0 %v1137
  %1594 = vmatpush.bf16.msra.mxu0 %v1105
  %1595 = vmatpush.bf16.msra.mxu0 %v1073
  %1596 = vmatpush.bf16.msra.mxu0 %v1041
  %1597 = vmatmul.bf16.gmra.mxu0 %v13
  %v1598 = vpop.f32.mrf.mxu0
  %v1599 = vadd.f32 0.0, %v1598
  %v1600 = vpop.f32.mrf.mxu0
  %1601 = vdwg.mxu0
  %1602 = vmatpush.bf16.msra.mxu0 %v1266
  %1603 = vmatpush.bf16.msra.mxu0 %v1234
  %1604 = vmatpush.bf16.msra.mxu0 %v1202
  %1605 = vmatpush.bf16.msra.mxu0 %v1170
  %1606 = vmatpush.bf16.msra.mxu0 %v1138
  %1607 = vmatpush.bf16.msra.mxu0 %v1106
  %1608 = vmatpush.bf16.msra.mxu0 %v1074
  %1609 = vmatpush.bf16.msra.mxu0 %v1042
  %1610 = vmatmul.bf16.gmra.mxu0 %v13
  %v1611 = vpop.f32.mrf.mxu0
  %v1612 = vadd.f32 0.0, %v1611
  %v1613 = vpop.f32.mrf.mxu0
  %1614 = vdwg.mxu0
  %1615 = vmatpush.bf16.msra.mxu0 %v1267
  %1616 = vmatpush.bf16.msra.mxu0 %v1235
  %1617 = vmatpush.bf16.msra.mxu0 %v1203
  %1618 = vmatpush.bf16.msra.mxu0 %v1171
  %1619 = vmatpush.bf16.msra.mxu0 %v1139
  %1620 = vmatpush.bf16.msra.mxu0 %v1107
  %1621 = vmatpush.bf16.msra.mxu0 %v1075
  %1622 = vmatpush.bf16.msra.mxu0 %v1043
  %1623 = vmatmul.bf16.gmra.mxu0 %v13
  %v1624 = vpop.f32.mrf.mxu0
  %v1625 = vadd.f32 0.0, %v1624
  %v1626 = vpop.f32.mrf.mxu0
  %1627 = vdwg.mxu0
  %1628 = vmatpush.bf16.msra.mxu0 %v1268
  %1629 = vmatpush.bf16.msra.mxu0 %v1236
  %1630 = vmatpush.bf16.msra.mxu0 %v1204
  %1631 = vmatpush.bf16.msra.mxu0 %v1172
  %1632 = vmatpush.bf16.msra.mxu0 %v1140
  %1633 = vmatpush.bf16.msra.mxu0 %v1108
  %1634 = vmatpush.bf16.msra.mxu0 %v1076
  %1635 = vmatpush.bf16.msra.mxu0 %v1044
  %1636 = vmatmul.bf16.gmra.mxu0 %v13
  %v1637 = vpop.f32.mrf.mxu0
  %v1638 = vadd.f32 0.0, %v1637
  %v1639 = vpop.f32.mrf.mxu0
  %1640 = vdwg.mxu0
  %1641 = vmatpush.bf16.msra.mxu0 %v1269
  %1642 = vmatpush.bf16.msra.mxu0 %v1237
  %1643 = vmatpush.bf16.msra.mxu0 %v1205
  %1644 = vmatpush.bf16.msra.mxu0 %v1173
  %1645 = vmatpush.bf16.msra.mxu0 %v1141
  %1646 = vmatpush.bf16.msra.mxu0 %v1109
  %1647 = vmatpush.bf16.msra.mxu0 %v1077
  %1648 = vmatpush.bf16.msra.mxu0 %v1045
  %1649 = vmatmul.bf16.gmra.mxu0 %v13
  %v1650 = vpop.f32.mrf.mxu0
  %v1651 = vadd.f32 0.0, %v1650
  %v1652 = vpop.f32.mrf.mxu0
  %1653 = vdwg.mxu0
  %1654 = vmatpush.bf16.msra.mxu0 %v1270
  %1655 = vmatpush.bf16.msra.mxu0 %v1238
  %1656 = vmatpush.bf16.msra.mxu0 %v1206
  %1657 = vmatpush.bf16.msra.mxu0 %v1174
  %1658 = vmatpush.bf16.msra.mxu0 %v1142
  %1659 = vmatpush.bf16.msra.mxu0 %v1110
  %1660 = vmatpush.bf16.msra.mxu0 %v1078
  %1661 = vmatpush.bf16.msra.mxu0 %v1046
  %1662 = vmatmul.bf16.gmra.mxu0 %v13
  %v1663 = vpop.f32.mrf.mxu0
  %v1664 = vadd.f32 0.0, %v1663
  %v1665 = vpop.f32.mrf.mxu0
  %1666 = vdwg.mxu0
  %1667 = vmatpush.bf16.msra.mxu0 %v1271
  %1668 = vmatpush.bf16.msra.mxu0 %v1239
  %1669 = vmatpush.bf16.msra.mxu0 %v1207
  %1670 = vmatpush.bf16.msra.mxu0 %v1175
  %1671 = vmatpush.bf16.msra.mxu0 %v1143
  %1672 = vmatpush.bf16.msra.mxu0 %v1111
  %1673 = vmatpush.bf16.msra.mxu0 %v1079
  %1674 = vmatpush.bf16.msra.mxu0 %v1047
  %1675 = vmatmul.bf16.gmra.mxu0 %v13
  %v1676 = vpop.f32.mrf.mxu0
  %v1677 = vadd.f32 0.0, %v1676
  %v1678 = vpop.f32.mrf.mxu0
  %1679 = vdwg.mxu0
  %1680 = vmatpush.bf16.msra.mxu0 %v1272
  %1681 = vmatpush.bf16.msra.mxu0 %v1240
  %1682 = vmatpush.bf16.msra.mxu0 %v1208
  %1683 = vmatpush.bf16.msra.mxu0 %v1176
  %1684 = vmatpush.bf16.msra.mxu0 %v1144
  %1685 = vmatpush.bf16.msra.mxu0 %v1112
  %1686 = vmatpush.bf16.msra.mxu0 %v1080
  %1687 = vmatpush.bf16.msra.mxu0 %v1048
  %1688 = vmatmul.bf16.gmra.mxu0 %v13
  %v1689 = vpop.f32.mrf.mxu0
  %v1690 = vadd.f32 0.0, %v1689
  %v1691 = vpop.f32.mrf.mxu0
  %1692 = vdwg.mxu0
  %1693 = vmatpush.bf16.msra.mxu0 %v1273
  %1694 = vmatpush.bf16.msra.mxu0 %v1241
  %1695 = vmatpush.bf16.msra.mxu0 %v1209
  %1696 = vmatpush.bf16.msra.mxu0 %v1177
  %1697 = vmatpush.bf16.msra.mxu0 %v1145
  %1698 = vmatpush.bf16.msra.mxu0 %v1113
  %1699 = vmatpush.bf16.msra.mxu0 %v1081
  %1700 = vmatpush.bf16.msra.mxu0 %v1049
  %1701 = vmatmul.bf16.gmra.mxu0 %v13
  %v1702 = vpop.f32.mrf.mxu0
  %v1703 = vadd.f32 0.0, %v1702
  %v1704 = vpop.f32.mrf.mxu0
  %1705 = vdwg.mxu0
  %1706 = vmatpush.bf16.msra.mxu0 %v1274
  %1707 = vmatpush.bf16.msra.mxu0 %v1242
  %1708 = vmatpush.bf16.msra.mxu0 %v1210
  %1709 = vmatpush.bf16.msra.mxu0 %v1178
  %1710 = vmatpush.bf16.msra.mxu0 %v1146
  %1711 = vmatpush.bf16.msra.mxu0 %v1114
  %1712 = vmatpush.bf16.msra.mxu0 %v1082
  %1713 = vmatpush.bf16.msra.mxu0 %v1050
  %1714 = vmatmul.bf16.gmra.mxu0 %v13
  %v1715 = vpop.f32.mrf.mxu0
  %v1716 = vadd.f32 0.0, %v1715
  %v1717 = vpop.f32.mrf.mxu0
  %1718 = vdwg.mxu0
  %1719 = vmatpush.bf16.msra.mxu0 %v1275
  %1720 = vmatpush.bf16.msra.mxu0 %v1243
  %1721 = vmatpush.bf16.msra.mxu0 %v1211
  %1722 = vmatpush.bf16.msra.mxu0 %v1179
  %1723 = vmatpush.bf16.msra.mxu0 %v1147
  %1724 = vmatpush.bf16.msra.mxu0 %v1115
  %1725 = vmatpush.bf16.msra.mxu0 %v1083
  %1726 = vmatpush.bf16.msra.mxu0 %v1051
  %1727 = vmatmul.bf16.gmra.mxu0 %v13
  %v1728 = vpop.f32.mrf.mxu0
  %v1729 = vadd.f32 0.0, %v1728
  %v1730 = vpop.f32.mrf.mxu0
  %1731 = vdwg.mxu0
  %1732 = vmatpush.bf16.msra.mxu0 %v1276
  %1733 = vmatpush.bf16.msra.mxu0 %v1244
  %1734 = vmatpush.bf16.msra.mxu0 %v1212
  %1735 = vmatpush.bf16.msra.mxu0 %v1180
  %1736 = vmatpush.bf16.msra.mxu0 %v1148
  %1737 = vmatpush.bf16.msra.mxu0 %v1116
  %1738 = vmatpush.bf16.msra.mxu0 %v1084
  %1739 = vmatpush.bf16.msra.mxu0 %v1052
  %1740 = vmatmul.bf16.gmra.mxu0 %v13
  %v1741 = vpop.f32.mrf.mxu0
  %v1742 = vadd.f32 0.0, %v1741
  %v1743 = vpop.f32.mrf.mxu0
  %1744 = vdwg.mxu0
  %1745 = vmatpush.bf16.msra.mxu0 %v1277
  %1746 = vmatpush.bf16.msra.mxu0 %v1245
  %1747 = vmatpush.bf16.msra.mxu0 %v1213
  %1748 = vmatpush.bf16.msra.mxu0 %v1181
  %1749 = vmatpush.bf16.msra.mxu0 %v1149
  %1750 = vmatpush.bf16.msra.mxu0 %v1117
  %1751 = vmatpush.bf16.msra.mxu0 %v1085
  %1752 = vmatpush.bf16.msra.mxu0 %v1053
  %1753 = vmatmul.bf16.gmra.mxu0 %v13
  %v1754 = vpop.f32.mrf.mxu0
  %v1755 = vadd.f32 0.0, %v1754
  %v1756 = vpop.f32.mrf.mxu0
  %1757 = vdwg.mxu0
  %1758 = vmatpush.bf16.msra.mxu0 %v1278
  %1759 = vmatpush.bf16.msra.mxu0 %v1246
  %1760 = vmatpush.bf16.msra.mxu0 %v1214
  %1761 = vmatpush.bf16.msra.mxu0 %v1182
  %1762 = vmatpush.bf16.msra.mxu0 %v1150
  %1763 = vmatpush.bf16.msra.mxu0 %v1118
  %1764 = vmatpush.bf16.msra.mxu0 %v1086
  %1765 = vmatpush.bf16.msra.mxu0 %v1054
  %1766 = vmatmul.bf16.gmra.mxu0 %v13
  %v1767 = vpop.f32.mrf.mxu0
  %v1768 = vadd.f32 0.0, %v1767
  %v1769 = vpop.f32.mrf.mxu0
  %1770 = vdwg.mxu0
  %1771 = vmatpush.bf16.msra.mxu0 %v1279
  %1772 = vmatpush.bf16.msra.mxu0 %v1247
  %1773 = vmatpush.bf16.msra.mxu0 %v1215
  %1774 = vmatpush.bf16.msra.mxu0 %v1183
  %1775 = vmatpush.bf16.msra.mxu0 %v1151
  %1776 = vmatpush.bf16.msra.mxu0 %v1119
  %1777 = vmatpush.bf16.msra.mxu0 %v1087
  %1778 = vmatpush.bf16.msra.mxu0 %v1055
  %1779 = vmatmul.bf16.gmra.mxu0 %v13
  %v1780 = vpop.f32.mrf.mxu0
  %v1781 = vadd.f32 0.0, %v1780
  %v1782 = vpop.f32.mrf.mxu0
  %1783 = vdwg.mxu0
  %1784 = vmatpush.bf16.msra.mxu0 %v1280
  %1785 = vmatpush.bf16.msra.mxu0 %v1248
  %1786 = vmatpush.bf16.msra.mxu0 %v1216
  %1787 = vmatpush.bf16.msra.mxu0 %v1184
  %1788 = vmatpush.bf16.msra.mxu0 %v1152
  %1789 = vmatpush.bf16.msra.mxu0 %v1120
  %1790 = vmatpush.bf16.msra.mxu0 %v1088
  %1791 = vmatpush.bf16.msra.mxu0 %v1056
  %1792 = vmatmul.bf16.gmra.mxu0 %v13
  %v1793 = vpop.f32.mrf.mxu0
  %v1794 = vadd.f32 0.0, %v1793
  %v1795 = vpop.f32.mrf.mxu0
  %1796 = vdwg.mxu0
  %1797 = vmatpush.bf16.msra.mxu0 %v1281
  %1798 = vmatpush.bf16.msra.mxu0 %v1249
  %1799 = vmatpush.bf16.msra.mxu0 %v1217
  %1800 = vmatpush.bf16.msra.mxu0 %v1185
  %1801 = vmatpush.bf16.msra.mxu0 %v1153
  %1802 = vmatpush.bf16.msra.mxu0 %v1121
  %1803 = vmatpush.bf16.msra.mxu0 %v1089
  %1804 = vmatpush.bf16.msra.mxu0 %v1057
  %1805 = vmatmul.bf16.gmra.mxu0 %v13
  %v1806 = vpop.f32.mrf.mxu0
  %v1807 = vadd.f32 0.0, %v1806
  %v1808 = vpop.f32.mrf.mxu0
  %1809 = vdwg.mxu0
  %1810 = vmatpush.bf16.msra.mxu0 %v1282
  %1811 = vmatpush.bf16.msra.mxu0 %v1250
  %1812 = vmatpush.bf16.msra.mxu0 %v1218
  %1813 = vmatpush.bf16.msra.mxu0 %v1186
  %1814 = vmatpush.bf16.msra.mxu0 %v1154
  %1815 = vmatpush.bf16.msra.mxu0 %v1122
  %1816 = vmatpush.bf16.msra.mxu0 %v1090
  %1817 = vmatpush.bf16.msra.mxu0 %v1058
  %1818 = vmatmul.bf16.gmra.mxu0 %v13
  %v1819 = vpop.f32.mrf.mxu0
  %v1820 = vadd.f32 0.0, %v1819
  %v1821 = vpop.f32.mrf.mxu0
  %1822 = vdwg.mxu0
  %1823 = vmatpush.bf16.msra.mxu0 %v1283
  %1824 = vmatpush.bf16.msra.mxu0 %v1251
  %1825 = vmatpush.bf16.msra.mxu0 %v1219
  %1826 = vmatpush.bf16.msra.mxu0 %v1187
  %1827 = vmatpush.bf16.msra.mxu0 %v1155
  %1828 = vmatpush.bf16.msra.mxu0 %v1123
  %1829 = vmatpush.bf16.msra.mxu0 %v1091
  %1830 = vmatpush.bf16.msra.mxu0 %v1059
  %1831 = vmatmul.bf16.gmra.mxu0 %v13
  %v1832 = vpop.f32.mrf.mxu0
  %v1833 = vadd.f32 0.0, %v1832
  %v1834 = vpop.f32.mrf.mxu0
  %1835 = vdwg.mxu0
  %1836 = vmatpush.bf16.msra.mxu0 %v1284
  %1837 = vmatpush.bf16.msra.mxu0 %v1252
  %1838 = vmatpush.bf16.msra.mxu0 %v1220
  %1839 = vmatpush.bf16.msra.mxu0 %v1188
  %1840 = vmatpush.bf16.msra.mxu0 %v1156
  %1841 = vmatpush.bf16.msra.mxu0 %v1124
  %1842 = vmatpush.bf16.msra.mxu0 %v1092
  %1843 = vmatpush.bf16.msra.mxu0 %v1060
  %1844 = vmatmul.bf16.gmra.mxu0 %v13
  %v1845 = vpop.f32.mrf.mxu0
  %v1846 = vadd.f32 0.0, %v1845
  %v1847 = vpop.f32.mrf.mxu0
  %1848 = vdwg.mxu0
  %1849 = vmatpush.bf16.msra.mxu0 %v1285
  %1850 = vmatpush.bf16.msra.mxu0 %v1253
  %1851 = vmatpush.bf16.msra.mxu0 %v1221
  %1852 = vmatpush.bf16.msra.mxu0 %v1189
  %1853 = vmatpush.bf16.msra.mxu0 %v1157
  %1854 = vmatpush.bf16.msra.mxu0 %v1125
  %1855 = vmatpush.bf16.msra.mxu0 %v1093
  %1856 = vmatpush.bf16.msra.mxu0 %v1061
  %1857 = vmatmul.bf16.gmra.mxu0 %v13
  %v1858 = vpop.f32.mrf.mxu0
  %v1859 = vadd.f32 0.0, %v1858
  %v1860 = vpop.f32.mrf.mxu0
  %1861 = vdwg.mxu0
  %1862 = vmatpush.bf16.msra.mxu0 %v1286
  %1863 = vmatpush.bf16.msra.mxu0 %v1254
  %1864 = vmatpush.bf16.msra.mxu0 %v1222
  %1865 = vmatpush.bf16.msra.mxu0 %v1190
  %1866 = vmatpush.bf16.msra.mxu0 %v1158
  %1867 = vmatpush.bf16.msra.mxu0 %v1126
  %1868 = vmatpush.bf16.msra.mxu0 %v1094
  %1869 = vmatpush.bf16.msra.mxu0 %v1062
  %1870 = vmatmul.bf16.gmra.mxu0 %v13
  %v1871 = vpop.f32.mrf.mxu0
  %v1872 = vadd.f32 0.0, %v1871
  %v1873 = vpop.f32.mrf.mxu0
  %1874 = vdwg.mxu0
  %1875 = vmatpush.bf16.msra.mxu0 %v1287
  %1876 = vmatpush.bf16.msra.mxu0 %v1255
  %1877 = vmatpush.bf16.msra.mxu0 %v1223
  %1878 = vmatpush.bf16.msra.mxu0 %v1191
  %1879 = vmatpush.bf16.msra.mxu0 %v1159
  %1880 = vmatpush.bf16.msra.mxu0 %v1127
  %1881 = vmatpush.bf16.msra.mxu0 %v1095
  %1882 = vmatpush.bf16.msra.mxu0 %v1063
  %1883 = vmatmul.bf16.gmra.mxu0 %v13
  %v1884 = vpop.f32.mrf.mxu0
  %v1885 = vadd.f32 0.0, %v1884
  %v1886 = vpop.f32.mrf.mxu0
  %1887 = vdwg.mxu0
  %1888 = vmatpush.bf16.msra.mxu0 %v1288
  %1889 = vmatpush.bf16.msra.mxu0 %v1256
  %1890 = vmatpush.bf16.msra.mxu0 %v1224
  %1891 = vmatpush.bf16.msra.mxu0 %v1192
  %1892 = vmatpush.bf16.msra.mxu0 %v1160
  %1893 = vmatpush.bf16.msra.mxu0 %v1128
  %1894 = vmatpush.bf16.msra.mxu0 %v1096
  %1895 = vmatpush.bf16.msra.mxu0 %v1064
  %1896 = vmatmul.bf16.gmra.mxu0 %v13
  %v1897 = vpop.f32.mrf.mxu0
  %v1898 = vadd.f32 0.0, %v1897
  %v1899 = vpop.f32.mrf.mxu0
  %1900 = vdwg.mxu0
  %1901 = vmatpush.bf16.msra.mxu0 %v1289
  %1902 = vmatpush.bf16.msra.mxu0 %v1257
  %1903 = vmatpush.bf16.msra.mxu0 %v1225
  %1904 = vmatpush.bf16.msra.mxu0 %v1193
  %1905 = vmatpush.bf16.msra.mxu0 %v1161
  %1906 = vmatpush.bf16.msra.mxu0 %v1129
  %1907 = vmatpush.bf16.msra.mxu0 %v1097
  %1908 = vmatpush.bf16.msra.mxu0 %v1065
  %1909 = vmatmul.bf16.gmra.mxu0 %v13
  %v1910 = vpop.f32.mrf.mxu0
  %v1911 = vadd.f32 0.0, %v1910
  %v1912 = vpop.f32.mrf.mxu0
  %1913 = vdwg.mxu0
  %1914 = vmatpush.bf16.msra.mxu0 %v1290
  %1915 = vmatpush.bf16.msra.mxu0 %v1258
  %1916 = vmatpush.bf16.msra.mxu0 %v1226
  %1917 = vmatpush.bf16.msra.mxu0 %v1194
  %1918 = vmatpush.bf16.msra.mxu0 %v1162
  %1919 = vmatpush.bf16.msra.mxu0 %v1130
  %1920 = vmatpush.bf16.msra.mxu0 %v1098
  %1921 = vmatpush.bf16.msra.mxu0 %v1066
  %1922 = vmatmul.bf16.gmra.mxu0 %v13
  %v1923 = vpop.f32.mrf.mxu0
  %v1924 = vadd.f32 0.0, %v1923
  %v1925 = vpop.f32.mrf.mxu0
  %1926 = vdwg.mxu0
  %1927 = vmatpush.bf16.msra.mxu0 %v1291
  %1928 = vmatpush.bf16.msra.mxu0 %v1259
  %1929 = vmatpush.bf16.msra.mxu0 %v1227
  %1930 = vmatpush.bf16.msra.mxu0 %v1195
  %1931 = vmatpush.bf16.msra.mxu0 %v1163
  %1932 = vmatpush.bf16.msra.mxu0 %v1131
  %1933 = vmatpush.bf16.msra.mxu0 %v1099
  %1934 = vmatpush.bf16.msra.mxu0 %v1067
  %1935 = vmatmul.bf16.gmra.mxu0 %v13
  %v1936 = vpop.f32.mrf.mxu0
  %v1937 = vadd.f32 0.0, %v1936
  %v1938 = vpop.f32.mrf.mxu0
  %1939 = vdwg.mxu0
  %1940 = vmatpush.bf16.msra.mxu0 %v1292
  %1941 = vmatpush.bf16.msra.mxu0 %v1260
  %1942 = vmatpush.bf16.msra.mxu0 %v1228
  %1943 = vmatpush.bf16.msra.mxu0 %v1196
  %1944 = vmatpush.bf16.msra.mxu0 %v1164
  %1945 = vmatpush.bf16.msra.mxu0 %v1132
  %1946 = vmatpush.bf16.msra.mxu0 %v1100
  %1947 = vmatpush.bf16.msra.mxu0 %v1068
  %1948 = vmatmul.bf16.gmra.mxu0 %v13
  %v1949 = vpop.f32.mrf.mxu0
  %v1950 = vadd.f32 0.0, %v1949
  %v1951 = vpop.f32.mrf.mxu0
  %1952 = vdwg.mxu0
  %1953 = vmatpush.bf16.msra.mxu0 %v1293
  %1954 = vmatpush.bf16.msra.mxu0 %v1261
  %1955 = vmatpush.bf16.msra.mxu0 %v1229
  %1956 = vmatpush.bf16.msra.mxu0 %v1197
  %1957 = vmatpush.bf16.msra.mxu0 %v1165
  %1958 = vmatpush.bf16.msra.mxu0 %v1133
  %1959 = vmatpush.bf16.msra.mxu0 %v1101
  %1960 = vmatpush.bf16.msra.mxu0 %v1069
  %1961 = vmatmul.bf16.gmra.mxu0 %v13
  %v1962 = vpop.f32.mrf.mxu0
  %v1963 = vadd.f32 0.0, %v1962
  %v1964 = vpop.f32.mrf.mxu0
  %1965 = vdwg.mxu0
  %v1966 = vpack.c.bf16 %v1573, %v1560
  %v1967 = vpack.c.bf16 %v1599, %v1586
  %v1968 = vpack.c.bf16 %v1625, %v1612
  %v1969 = vpack.c.bf16 %v1651, %v1638
  %v1970 = vpack.c.bf16 %v1677, %v1664
  %v1971 = vpack.c.bf16 %v1703, %v1690
  %v1972 = vpack.c.bf16 %v1729, %v1716
  %v1973 = vpack.c.bf16 %v1755, %v1742
  %v1974 = vpack.c.bf16 %v1781, %v1768
  %v1975 = vpack.c.bf16 %v1807, %v1794
  %v1976 = vpack.c.bf16 %v1833, %v1820
  %v1977 = vpack.c.bf16 %v1859, %v1846
  %v1978 = vpack.c.bf16 %v1885, %v1872
  %v1979 = vpack.c.bf16 %v1911, %v1898
  %v1980 = vpack.c.bf16 %v1937, %v1924
  %v1981 = vpack.c.bf16 %v1963, %v1950
  %1982 = vst [vmem:[%s2] sm:$0xff] %v1966
  %1983 = vst [vmem:[%s2 + $0x8] sm:$0xff] %v1967
  %1984 = vst [vmem:[%s2 + $0x10] sm:$0xff] %v1968
  %1985 = vst [vmem:[%s2 + $0x18] sm:$0xff] %v1969
  %1986 = vst [vmem:[%s2 + $0x20] sm:$0xff] %v1970
  %1987 = vst [vmem:[%s2 + $0x28] sm:$0xff] %v1971
  %1988 = vst [vmem:[%s2 + $0x30] sm:$0xff] %v1972
  %1989 = vst [vmem:[%s2 + $0x38] sm:$0xff] %v1973
  %1990 = vst [vmem:[%s2 + $0x40] sm:$0xff] %v1974
  %1991 = vst [vmem:[%s2 + $0x48] sm:$0xff] %v1975
  %1992 = vst [vmem:[%s2 + $0x50] sm:$0xff] %v1976
  %1993 = vst [vmem:[%s2 + $0x58] sm:$0xff] %v1977
  %1994 = vst [vmem:[%s2 + $0x60] sm:$0xff] %v1978
  %1995 = vst [vmem:[%s2 + $0x68] sm:$0xff] %v1979
  %1996 = vst [vmem:[%s2 + $0x70] sm:$0xff] %v1980
  %1997 = vst [vmem:[%s2 + $0x78] sm:$0xff] %v1981
  %1998 = vst [vmem:[%s3] sm:$0xff] 0.0
  %1999 = vst [vmem:[%s3 + $0x8] sm:$0xff] 0.0
  %2000 = vst [vmem:[%s3 + $0x10] sm:$0xff] 0.0
  %2001 = vst [vmem:[%s3 + $0x18] sm:$0xff] 0.0
  %2002 = vst [vmem:[%s3 + $0x20] sm:$0xff] 0.0
  %2003 = vst [vmem:[%s3 + $0x28] sm:$0xff] 0.0
  %2004 = vst [vmem:[%s3 + $0x30] sm:$0xff] 0.0
  %2005 = vst [vmem:[%s3 + $0x38] sm:$0xff] 0.0
  %2006 = vst [vmem:[%s3 + $0x40] sm:$0xff] 0.0
  %2007 = vst [vmem:[%s3 + $0x48] sm:$0xff] 0.0
  %2008 = vst [vmem:[%s3 + $0x50] sm:$0xff] 0.0
  %2009 = vst [vmem:[%s3 + $0x58] sm:$0xff] 0.0
  %2010 = vst [vmem:[%s3 + $0x60] sm:$0xff] 0.0
  %2011 = vst [vmem:[%s3 + $0x68] sm:$0xff] 0.0
  %2012 = vst [vmem:[%s3 + $0x70] sm:$0xff] 0.0
  %2013 = vst [vmem:[%s3 + $0x78] sm:$0xff] 0.0
  %2014 = vst [vmem:[%s3 + $0x80] sm:$0xff] 0.0
  %2015 = vst [vmem:[%s3 + $0x88] sm:$0xff] 0.0
  %2016 = vst [vmem:[%s3 + $0x90] sm:$0xff] 0.0
  %2017 = vst [vmem:[%s3 + $0x98] sm:$0xff] 0.0
  %2018 = vst [vmem:[%s3 + $0xa0] sm:$0xff] 0.0
  %2019 = vst [vmem:[%s3 + $0xa8] sm:$0xff] 0.0
  %2020 = vst [vmem:[%s3 + $0xb0] sm:$0xff] 0.0
  %2021 = vst [vmem:[%s3 + $0xb8] sm:$0xff] 0.0
  %2022 = vst [vmem:[%s3 + $0xc0] sm:$0xff] 0.0
  %2023 = vst [vmem:[%s3 + $0xc8] sm:$0xff] 0.0
  %2024 = vst [vmem:[%s3 + $0xd0] sm:$0xff] 0.0
  %2025 = vst [vmem:[%s3 + $0xd8] sm:$0xff] 0.0
  %2026 = vst [vmem:[%s3 + $0xe0] sm:$0xff] 0.0
  %2027 = vst [vmem:[%s3 + $0xe8] sm:$0xff] 0.0
  %2028 = vst [vmem:[%s3 + $0xf0] sm:$0xff] 0.0
  %2029 = vst [vmem:[%s3 + $0xf8] sm:$0xff] 0.0
  %v2030 = vrot.slane %v1560, 4
  %v2031 = vadd.f32 %v1560, %v2030
  %v2032 = vrot.slane %v2031, 2
  %v2033 = vadd.f32 %v2031, %v2032
  %v2034 = vrot.slane %v2033, 1
  %v2035 = vadd.f32 %v2033, %v2034
  %v2036 = vrot.slane %v1573, 4
  %v2037 = vadd.f32 %v1573, %v2036
  %v2038 = vrot.slane %v2037, 2
  %v2039 = vadd.f32 %v2037, %v2038
  %v2040 = vrot.slane %v2039, 1
  %v2041 = vadd.f32 %v2039, %v2040
  %v2042 = vrot.slane %v1586, 4
  %v2043 = vadd.f32 %v1586, %v2042
  %v2044 = vrot.slane %v2043, 2
  %v2045 = vadd.f32 %v2043, %v2044
  %v2046 = vrot.slane %v2045, 1
  %v2047 = vadd.f32 %v2045, %v2046
  %v2048 = vrot.slane %v1599, 4
  %v2049 = vadd.f32 %v1599, %v2048
  %v2050 = vrot.slane %v2049, 2
  %v2051 = vadd.f32 %v2049, %v2050
  %v2052 = vrot.slane %v2051, 1
  %v2053 = vadd.f32 %v2051, %v2052
  %v2054 = vrot.slane %v1612, 4
  %v2055 = vadd.f32 %v1612, %v2054
  %v2056 = vrot.slane %v2055, 2
  %v2057 = vadd.f32 %v2055, %v2056
  %v2058 = vrot.slane %v2057, 1
  %v2059 = vadd.f32 %v2057, %v2058
  %v2060 = vrot.slane %v1625, 4
  %v2061 = vadd.f32 %v1625, %v2060
  %v2062 = vrot.slane %v2061, 2
  %v2063 = vadd.f32 %v2061, %v2062
  %v2064 = vrot.slane %v2063, 1
  %v2065 = vadd.f32 %v2063, %v2064
  %v2066 = vrot.slane %v1638, 4
  %v2067 = vadd.f32 %v1638, %v2066
  %v2068 = vrot.slane %v2067, 2
  %v2069 = vadd.f32 %v2067, %v2068
  %v2070 = vrot.slane %v2069, 1
  %v2071 = vadd.f32 %v2069, %v2070
  %v2072 = vrot.slane %v1651, 4
  %v2073 = vadd.f32 %v1651, %v2072
  %v2074 = vrot.slane %v2073, 2
  %v2075 = vadd.f32 %v2073, %v2074
  %v2076 = vrot.slane %v2075, 1
  %v2077 = vadd.f32 %v2075, %v2076
  %v2078 = vrot.slane %v1664, 4
  %v2079 = vadd.f32 %v1664, %v2078
  %v2080 = vrot.slane %v2079, 2
  %v2081 = vadd.f32 %v2079, %v2080
  %v2082 = vrot.slane %v2081, 1
  %v2083 = vadd.f32 %v2081, %v2082
  %v2084 = vrot.slane %v1677, 4
  %v2085 = vadd.f32 %v1677, %v2084
  %v2086 = vrot.slane %v2085, 2
  %v2087 = vadd.f32 %v2085, %v2086
  %v2088 = vrot.slane %v2087, 1
  %v2089 = vadd.f32 %v2087, %v2088
  %v2090 = vrot.slane %v1690, 4
  %v2091 = vadd.f32 %v1690, %v2090
  %v2092 = vrot.slane %v2091, 2
  %v2093 = vadd.f32 %v2091, %v2092
  %v2094 = vrot.slane %v2093, 1
  %v2095 = vadd.f32 %v2093, %v2094
  %v2096 = vrot.slane %v1703, 4
  %v2097 = vadd.f32 %v1703, %v2096
  %v2098 = vrot.slane %v2097, 2
  %v2099 = vadd.f32 %v2097, %v2098
  %v2100 = vrot.slane %v2099, 1
  %v2101 = vadd.f32 %v2099, %v2100
  %v2102 = vrot.slane %v1716, 4
  %v2103 = vadd.f32 %v1716, %v2102
  %v2104 = vrot.slane %v2103, 2
  %v2105 = vadd.f32 %v2103, %v2104
  %v2106 = vrot.slane %v2105, 1
  %v2107 = vadd.f32 %v2105, %v2106
  %v2108 = vrot.slane %v1729, 4
  %v2109 = vadd.f32 %v1729, %v2108
  %v2110 = vrot.slane %v2109, 2
  %v2111 = vadd.f32 %v2109, %v2110
  %v2112 = vrot.slane %v2111, 1
  %v2113 = vadd.f32 %v2111, %v2112
  %v2114 = vrot.slane %v1742, 4
  %v2115 = vadd.f32 %v1742, %v2114
  %v2116 = vrot.slane %v2115, 2
  %v2117 = vadd.f32 %v2115, %v2116
  %v2118 = vrot.slane %v2117, 1
  %v2119 = vadd.f32 %v2117, %v2118
  %v2120 = vrot.slane %v1755, 4
  %v2121 = vadd.f32 %v1755, %v2120
  %v2122 = vrot.slane %v2121, 2
  %v2123 = vadd.f32 %v2121, %v2122
  %v2124 = vrot.slane %v2123, 1
  %v2125 = vadd.f32 %v2123, %v2124
  %v2126 = vrot.slane %v1768, 4
  %v2127 = vadd.f32 %v1768, %v2126
  %v2128 = vrot.slane %v2127, 2
  %v2129 = vadd.f32 %v2127, %v2128
  %v2130 = vrot.slane %v2129, 1
  %v2131 = vadd.f32 %v2129, %v2130
  %v2132 = vrot.slane %v1781, 4
  %v2133 = vadd.f32 %v1781, %v2132
  %v2134 = vrot.slane %v2133, 2
  %v2135 = vadd.f32 %v2133, %v2134
  %v2136 = vrot.slane %v2135, 1
  %v2137 = vadd.f32 %v2135, %v2136
  %v2138 = vrot.slane %v1794, 4
  %v2139 = vadd.f32 %v1794, %v2138
  %v2140 = vrot.slane %v2139, 2
  %v2141 = vadd.f32 %v2139, %v2140
  %v2142 = vrot.slane %v2141, 1
  %v2143 = vadd.f32 %v2141, %v2142
  %v2144 = vrot.slane %v1807, 4
  %v2145 = vadd.f32 %v1807, %v2144
  %v2146 = vrot.slane %v2145, 2
  %v2147 = vadd.f32 %v2145, %v2146
  %v2148 = vrot.slane %v2147, 1
  %v2149 = vadd.f32 %v2147, %v2148
  %v2150 = vrot.slane %v1820, 4
  %v2151 = vadd.f32 %v1820, %v2150
  %v2152 = vrot.slane %v2151, 2
  %v2153 = vadd.f32 %v2151, %v2152
  %v2154 = vrot.slane %v2153, 1
  %v2155 = vadd.f32 %v2153, %v2154
  %v2156 = vrot.slane %v1833, 4
  %v2157 = vadd.f32 %v1833, %v2156
  %v2158 = vrot.slane %v2157, 2
  %v2159 = vadd.f32 %v2157, %v2158
  %v2160 = vrot.slane %v2159, 1
  %v2161 = vadd.f32 %v2159, %v2160
  %v2162 = vrot.slane %v1846, 4
  %v2163 = vadd.f32 %v1846, %v2162
  %v2164 = vrot.slane %v2163, 2
  %v2165 = vadd.f32 %v2163, %v2164
  %v2166 = vrot.slane %v2165, 1
  %v2167 = vadd.f32 %v2165, %v2166
  %v2168 = vrot.slane %v1859, 4
  %v2169 = vadd.f32 %v1859, %v2168
  %v2170 = vrot.slane %v2169, 2
  %v2171 = vadd.f32 %v2169, %v2170
  %v2172 = vrot.slane %v2171, 1
  %v2173 = vadd.f32 %v2171, %v2172
  %v2174 = vrot.slane %v1872, 4
  %v2175 = vadd.f32 %v1872, %v2174
  %v2176 = vrot.slane %v2175, 2
  %v2177 = vadd.f32 %v2175, %v2176
  %v2178 = vrot.slane %v2177, 1
  %v2179 = vadd.f32 %v2177, %v2178
  %v2180 = vrot.slane %v1885, 4
  %v2181 = vadd.f32 %v1885, %v2180
  %v2182 = vrot.slane %v2181, 2
  %v2183 = vadd.f32 %v2181, %v2182
  %v2184 = vrot.slane %v2183, 1
  %v2185 = vadd.f32 %v2183, %v2184
  %v2186 = vrot.slane %v1898, 4
  %v2187 = vadd.f32 %v1898, %v2186
  %v2188 = vrot.slane %v2187, 2
  %v2189 = vadd.f32 %v2187, %v2188
  %v2190 = vrot.slane %v2189, 1
  %v2191 = vadd.f32 %v2189, %v2190
  %v2192 = vrot.slane %v1911, 4
  %v2193 = vadd.f32 %v1911, %v2192
  %v2194 = vrot.slane %v2193, 2
  %v2195 = vadd.f32 %v2193, %v2194
  %v2196 = vrot.slane %v2195, 1
  %v2197 = vadd.f32 %v2195, %v2196
  %v2198 = vrot.slane %v1924, 4
  %v2199 = vadd.f32 %v1924, %v2198
  %v2200 = vrot.slane %v2199, 2
  %v2201 = vadd.f32 %v2199, %v2200
  %v2202 = vrot.slane %v2201, 1
  %v2203 = vadd.f32 %v2201, %v2202
  %v2204 = vrot.slane %v1937, 4
  %v2205 = vadd.f32 %v1937, %v2204
  %v2206 = vrot.slane %v2205, 2
  %v2207 = vadd.f32 %v2205, %v2206
  %v2208 = vrot.slane %v2207, 1
  %v2209 = vadd.f32 %v2207, %v2208
  %v2210 = vrot.slane %v1950, 4
  %v2211 = vadd.f32 %v1950, %v2210
  %v2212 = vrot.slane %v2211, 2
  %v2213 = vadd.f32 %v2211, %v2212
  %v2214 = vrot.slane %v2213, 1
  %v2215 = vadd.f32 %v2213, %v2214
  %v2216 = vrot.slane %v1963, 4
  %v2217 = vadd.f32 %v1963, %v2216
  %v2218 = vrot.slane %v2217, 2
  %v2219 = vadd.f32 %v2217, %v2218
  %v2220 = vrot.slane %v2219, 1
  %v2221 = vadd.f32 %v2219, %v2220
  %v2254 = vrot.slane %v2041, 7
  %v2255 = vrot.slane %v2047, 6
  %v2256 = vrot.slane %v2053, 5
  %v2257 = vrot.slane %v2059, 4
  %v2258 = vrot.slane %v2065, 3
  %v2259 = vrot.slane %v2071, 2
  %v2260 = vrot.slane %v2077, 1
  %v2261 = vrot.slane %v2089, 7
  %v2262 = vrot.slane %v2095, 6
  %v2263 = vrot.slane %v2101, 5
  %v2264 = vrot.slane %v2107, 4
  %v2265 = vrot.slane %v2113, 3
  %v2266 = vrot.slane %v2119, 2
  %v2267 = vrot.slane %v2125, 1
  %v2268 = vrot.slane %v2137, 7
  %v2269 = vrot.slane %v2143, 6
  %v2270 = vrot.slane %v2149, 5
  %v2271 = vrot.slane %v2155, 4
  %v2272 = vrot.slane %v2161, 3
  %v2273 = vrot.slane %v2167, 2
  %v2274 = vrot.slane %v2173, 1
  %v2275 = vrot.slane %v2185, 7
  %v2276 = vrot.slane %v2191, 6
  %v2277 = vrot.slane %v2197, 5
  %v2278 = vrot.slane %v2203, 4
  %v2279 = vrot.slane %v2209, 3
  %v2280 = vrot.slane %v2215, 2
  %v2281 = vrot.slane %v2221, 1
  %vm2282 = vcmask 1040384
  %v2283 = vsel %vm2282, %v2035, %v2254
  %vm2284 = vcmask 1042434
  %v2285 = vsel %vm2284, %v2255, %v2256
  %vm2286 = vcmask 1041408
  %v2287 = vsel %vm2286, %v2283, %v2285
  %vm2288 = vcmask 1044484
  %v2289 = vsel %vm2288, %v2257, %v2258
  %vm2290 = vcmask 1046534
  %v2291 = vsel %vm2290, %v2259, %v2260
  %vm2292 = vcmask 1045508
  %v2293 = vsel %vm2292, %v2289, %v2291
  %vm2294 = vcmask 1043456
  %v2295 = vsel %vm2294, %v2287, %v2293
  %v2296 = vsel %vm2282, %v2083, %v2261
  %v2297 = vsel %vm2284, %v2262, %v2263
  %v2298 = vsel %vm2286, %v2296, %v2297
  %v2299 = vsel %vm2288, %v2264, %v2265
  %v2300 = vsel %vm2290, %v2266, %v2267
  %v2301 = vsel %vm2292, %v2299, %v2300
  %v2302 = vsel %vm2294, %v2298, %v2301
  %v2303 = vsel %vm2282, %v2131, %v2268
  %v2304 = vsel %vm2284, %v2269, %v2270
  %v2305 = vsel %vm2286, %v2303, %v2304
  %v2306 = vsel %vm2288, %v2271, %v2272
  %v2307 = vsel %vm2290, %v2273, %v2274
  %v2308 = vsel %vm2292, %v2306, %v2307
  %v2309 = vsel %vm2294, %v2305, %v2308
  %v2310 = vsel %vm2282, %v2179, %v2275
  %v2311 = vsel %vm2284, %v2276, %v2277
  %v2312 = vsel %vm2286, %v2310, %v2311
  %v2313 = vsel %vm2288, %v2278, %v2279
  %v2314 = vsel %vm2290, %v2280, %v2281
  %v2315 = vsel %vm2292, %v2313, %v2314
  %v2316 = vsel %vm2294, %v2312, %v2315
  %2321 = vst [vmem:[%s3] ss:$8 sm:$0xf] %v2295
  %2322 = vst [vmem:[%s3] ss:$8 sm:$0xf0] %v2295
  %s2323 = scalar_lea.vmem %s3, 64
  %2324 = vst [vmem:[%s2323] ss:$8 sm:$0xf] %v2302
  %2325 = vst [vmem:[%s2323] ss:$8 sm:$0xf0] %v2302
  %s2326 = scalar_lea.vmem %s3, 128
  %2327 = vst [vmem:[%s2326] ss:$8 sm:$0xf] %v2309
  %2328 = vst [vmem:[%s2326] ss:$8 sm:$0xf0] %v2309
  %s2329 = scalar_lea.vmem %s3, 192
  %2330 = vst [vmem:[%s2329] ss:$8 sm:$0xf] %v2316
  %2331 = vst [vmem:[%s2329] ss:$8 sm:$0xf0] %v2316
  %v2332 = vmul.f32 %v1560, %v1560
  %v2333 = vmul.f32 %v1573, %v1573
  %v2334 = vmul.f32 %v1586, %v1586
  %v2335 = vmul.f32 %v1599, %v1599
  %v2336 = vmul.f32 %v1612, %v1612
  %v2337 = vmul.f32 %v1625, %v1625
  %v2338 = vmul.f32 %v1638, %v1638
  %v2339 = vmul.f32 %v1651, %v1651
  %v2340 = vmul.f32 %v1664, %v1664
  %v2341 = vmul.f32 %v1677, %v1677
  %v2342 = vmul.f32 %v1690, %v1690
  %v2343 = vmul.f32 %v1703, %v1703
  %v2344 = vmul.f32 %v1716, %v1716
  %v2345 = vmul.f32 %v1729, %v1729
  %v2346 = vmul.f32 %v1742, %v1742
  %v2347 = vmul.f32 %v1755, %v1755
  %v2348 = vmul.f32 %v1768, %v1768
  %v2349 = vmul.f32 %v1781, %v1781
  %v2350 = vmul.f32 %v1794, %v1794
  %v2351 = vmul.f32 %v1807, %v1807
  %v2352 = vmul.f32 %v1820, %v1820
  %v2353 = vmul.f32 %v1833, %v1833
  %v2354 = vmul.f32 %v1846, %v1846
  %v2355 = vmul.f32 %v1859, %v1859
  %v2356 = vmul.f32 %v1872, %v1872
  %v2357 = vmul.f32 %v1885, %v1885
  %v2358 = vmul.f32 %v1898, %v1898
  %v2359 = vmul.f32 %v1911, %v1911
  %v2360 = vmul.f32 %v1924, %v1924
  %v2361 = vmul.f32 %v1937, %v1937
  %v2362 = vmul.f32 %v1950, %v1950
  %v2363 = vmul.f32 %v1963, %v1963
  %v2364 = vrot.slane %v2332, 4
  %v2365 = vadd.f32 %v2332, %v2364
  %v2366 = vrot.slane %v2365, 2
  %v2367 = vadd.f32 %v2365, %v2366
  %v2368 = vrot.slane %v2367, 1
  %v2369 = vadd.f32 %v2367, %v2368
  %v2370 = vrot.slane %v2333, 4
  %v2371 = vadd.f32 %v2333, %v2370
  %v2372 = vrot.slane %v2371, 2
  %v2373 = vadd.f32 %v2371, %v2372
  %v2374 = vrot.slane %v2373, 1
  %v2375 = vadd.f32 %v2373, %v2374
  %v2376 = vrot.slane %v2334, 4
  %v2377 = vadd.f32 %v2334, %v2376
  %v2378 = vrot.slane %v2377, 2
  %v2379 = vadd.f32 %v2377, %v2378
  %v2380 = vrot.slane %v2379, 1
  %v2381 = vadd.f32 %v2379, %v2380
  %v2382 = vrot.slane %v2335, 4
  %v2383 = vadd.f32 %v2335, %v2382
  %v2384 = vrot.slane %v2383, 2
  %v2385 = vadd.f32 %v2383, %v2384
  %v2386 = vrot.slane %v2385, 1
  %v2387 = vadd.f32 %v2385, %v2386
  %v2388 = vrot.slane %v2336, 4
  %v2389 = vadd.f32 %v2336, %v2388
  %v2390 = vrot.slane %v2389, 2
  %v2391 = vadd.f32 %v2389, %v2390
  %v2392 = vrot.slane %v2391, 1
  %v2393 = vadd.f32 %v2391, %v2392
  %v2394 = vrot.slane %v2337, 4
  %v2395 = vadd.f32 %v2337, %v2394
  %v2396 = vrot.slane %v2395, 2
  %v2397 = vadd.f32 %v2395, %v2396
  %v2398 = vrot.slane %v2397, 1
  %v2399 = vadd.f32 %v2397, %v2398
  %v2400 = vrot.slane %v2338, 4
  %v2401 = vadd.f32 %v2338, %v2400
  %v2402 = vrot.slane %v2401, 2
  %v2403 = vadd.f32 %v2401, %v2402
  %v2404 = vrot.slane %v2403, 1
  %v2405 = vadd.f32 %v2403, %v2404
  %v2406 = vrot.slane %v2339, 4
  %v2407 = vadd.f32 %v2339, %v2406
  %v2408 = vrot.slane %v2407, 2
  %v2409 = vadd.f32 %v2407, %v2408
  %v2410 = vrot.slane %v2409, 1
  %v2411 = vadd.f32 %v2409, %v2410
  %v2412 = vrot.slane %v2340, 4
  %v2413 = vadd.f32 %v2340, %v2412
  %v2414 = vrot.slane %v2413, 2
  %v2415 = vadd.f32 %v2413, %v2414
  %v2416 = vrot.slane %v2415, 1
  %v2417 = vadd.f32 %v2415, %v2416
  %v2418 = vrot.slane %v2341, 4
  %v2419 = vadd.f32 %v2341, %v2418
  %v2420 = vrot.slane %v2419, 2
  %v2421 = vadd.f32 %v2419, %v2420
  %v2422 = vrot.slane %v2421, 1
  %v2423 = vadd.f32 %v2421, %v2422
  %v2424 = vrot.slane %v2342, 4
  %v2425 = vadd.f32 %v2342, %v2424
  %v2426 = vrot.slane %v2425, 2
  %v2427 = vadd.f32 %v2425, %v2426
  %v2428 = vrot.slane %v2427, 1
  %v2429 = vadd.f32 %v2427, %v2428
  %v2430 = vrot.slane %v2343, 4
  %v2431 = vadd.f32 %v2343, %v2430
  %v2432 = vrot.slane %v2431, 2
  %v2433 = vadd.f32 %v2431, %v2432
  %v2434 = vrot.slane %v2433, 1
  %v2435 = vadd.f32 %v2433, %v2434
  %v2436 = vrot.slane %v2344, 4
  %v2437 = vadd.f32 %v2344, %v2436
  %v2438 = vrot.slane %v2437, 2
  %v2439 = vadd.f32 %v2437, %v2438
  %v2440 = vrot.slane %v2439, 1
  %v2441 = vadd.f32 %v2439, %v2440
  %v2442 = vrot.slane %v2345, 4
  %v2443 = vadd.f32 %v2345, %v2442
  %v2444 = vrot.slane %v2443, 2
  %v2445 = vadd.f32 %v2443, %v2444
  %v2446 = vrot.slane %v2445, 1
  %v2447 = vadd.f32 %v2445, %v2446
  %v2448 = vrot.slane %v2346, 4
  %v2449 = vadd.f32 %v2346, %v2448
  %v2450 = vrot.slane %v2449, 2
  %v2451 = vadd.f32 %v2449, %v2450
  %v2452 = vrot.slane %v2451, 1
  %v2453 = vadd.f32 %v2451, %v2452
  %v2454 = vrot.slane %v2347, 4
  %v2455 = vadd.f32 %v2347, %v2454
  %v2456 = vrot.slane %v2455, 2
  %v2457 = vadd.f32 %v2455, %v2456
  %v2458 = vrot.slane %v2457, 1
  %v2459 = vadd.f32 %v2457, %v2458
  %v2460 = vrot.slane %v2348, 4
  %v2461 = vadd.f32 %v2348, %v2460
  %v2462 = vrot.slane %v2461, 2
  %v2463 = vadd.f32 %v2461, %v2462
  %v2464 = vrot.slane %v2463, 1
  %v2465 = vadd.f32 %v2463, %v2464
  %v2466 = vrot.slane %v2349, 4
  %v2467 = vadd.f32 %v2349, %v2466
  %v2468 = vrot.slane %v2467, 2
  %v2469 = vadd.f32 %v2467, %v2468
  %v2470 = vrot.slane %v2469, 1
  %v2471 = vadd.f32 %v2469, %v2470
  %v2472 = vrot.slane %v2350, 4
  %v2473 = vadd.f32 %v2350, %v2472
  %v2474 = vrot.slane %v2473, 2
  %v2475 = vadd.f32 %v2473, %v2474
  %v2476 = vrot.slane %v2475, 1
  %v2477 = vadd.f32 %v2475, %v2476
  %v2478 = vrot.slane %v2351, 4
  %v2479 = vadd.f32 %v2351, %v2478
  %v2480 = vrot.slane %v2479, 2
  %v2481 = vadd.f32 %v2479, %v2480
  %v2482 = vrot.slane %v2481, 1
  %v2483 = vadd.f32 %v2481, %v2482
  %v2484 = vrot.slane %v2352, 4
  %v2485 = vadd.f32 %v2352, %v2484
  %v2486 = vrot.slane %v2485, 2
  %v2487 = vadd.f32 %v2485, %v2486
  %v2488 = vrot.slane %v2487, 1
  %v2489 = vadd.f32 %v2487, %v2488
  %v2490 = vrot.slane %v2353, 4
  %v2491 = vadd.f32 %v2353, %v2490
  %v2492 = vrot.slane %v2491, 2
  %v2493 = vadd.f32 %v2491, %v2492
  %v2494 = vrot.slane %v2493, 1
  %v2495 = vadd.f32 %v2493, %v2494
  %v2496 = vrot.slane %v2354, 4
  %v2497 = vadd.f32 %v2354, %v2496
  %v2498 = vrot.slane %v2497, 2
  %v2499 = vadd.f32 %v2497, %v2498
  %v2500 = vrot.slane %v2499, 1
  %v2501 = vadd.f32 %v2499, %v2500
  %v2502 = vrot.slane %v2355, 4
  %v2503 = vadd.f32 %v2355, %v2502
  %v2504 = vrot.slane %v2503, 2
  %v2505 = vadd.f32 %v2503, %v2504
  %v2506 = vrot.slane %v2505, 1
  %v2507 = vadd.f32 %v2505, %v2506
  %v2508 = vrot.slane %v2356, 4
  %v2509 = vadd.f32 %v2356, %v2508
  %v2510 = vrot.slane %v2509, 2
  %v2511 = vadd.f32 %v2509, %v2510
  %v2512 = vrot.slane %v2511, 1
  %v2513 = vadd.f32 %v2511, %v2512
  %v2514 = vrot.slane %v2357, 4
  %v2515 = vadd.f32 %v2357, %v2514
  %v2516 = vrot.slane %v2515, 2
  %v2517 = vadd.f32 %v2515, %v2516
  %v2518 = vrot.slane %v2517, 1
  %v2519 = vadd.f32 %v2517, %v2518
  %v2520 = vrot.slane %v2358, 4
  %v2521 = vadd.f32 %v2358, %v2520
  %v2522 = vrot.slane %v2521, 2
  %v2523 = vadd.f32 %v2521, %v2522
  %v2524 = vrot.slane %v2523, 1
  %v2525 = vadd.f32 %v2523, %v2524
  %v2526 = vrot.slane %v2359, 4
  %v2527 = vadd.f32 %v2359, %v2526
  %v2528 = vrot.slane %v2527, 2
  %v2529 = vadd.f32 %v2527, %v2528
  %v2530 = vrot.slane %v2529, 1
  %v2531 = vadd.f32 %v2529, %v2530
  %v2532 = vrot.slane %v2360, 4
  %v2533 = vadd.f32 %v2360, %v2532
  %v2534 = vrot.slane %v2533, 2
  %v2535 = vadd.f32 %v2533, %v2534
  %v2536 = vrot.slane %v2535, 1
  %v2537 = vadd.f32 %v2535, %v2536
  %v2538 = vrot.slane %v2361, 4
  %v2539 = vadd.f32 %v2361, %v2538
  %v2540 = vrot.slane %v2539, 2
  %v2541 = vadd.f32 %v2539, %v2540
  %v2542 = vrot.slane %v2541, 1
  %v2543 = vadd.f32 %v2541, %v2542
  %v2544 = vrot.slane %v2362, 4
  %v2545 = vadd.f32 %v2362, %v2544
  %v2546 = vrot.slane %v2545, 2
  %v2547 = vadd.f32 %v2545, %v2546
  %v2548 = vrot.slane %v2547, 1
  %v2549 = vadd.f32 %v2547, %v2548
  %v2550 = vrot.slane %v2363, 4
  %v2551 = vadd.f32 %v2363, %v2550
  %v2552 = vrot.slane %v2551, 2
  %v2553 = vadd.f32 %v2551, %v2552
  %v2554 = vrot.slane %v2553, 1
  %v2555 = vadd.f32 %v2553, %v2554
  %v2588 = vrot.slane %v2375, 7
  %v2589 = vrot.slane %v2381, 6
  %v2590 = vrot.slane %v2387, 5
  %v2591 = vrot.slane %v2393, 4
  %v2592 = vrot.slane %v2399, 3
  %v2593 = vrot.slane %v2405, 2
  %v2594 = vrot.slane %v2411, 1
  %v2595 = vrot.slane %v2423, 7
  %v2596 = vrot.slane %v2429, 6
  %v2597 = vrot.slane %v2435, 5
  %v2598 = vrot.slane %v2441, 4
  %v2599 = vrot.slane %v2447, 3
  %v2600 = vrot.slane %v2453, 2
  %v2601 = vrot.slane %v2459, 1
  %v2602 = vrot.slane %v2471, 7
  %v2603 = vrot.slane %v2477, 6
  %v2604 = vrot.slane %v2483, 5
  %v2605 = vrot.slane %v2489, 4
  %v2606 = vrot.slane %v2495, 3
  %v2607 = vrot.slane %v2501, 2
  %v2608 = vrot.slane %v2507, 1
  %v2609 = vrot.slane %v2519, 7
  %v2610 = vrot.slane %v2525, 6
  %v2611 = vrot.slane %v2531, 5
  %v2612 = vrot.slane %v2537, 4
  %v2613 = vrot.slane %v2543, 3
  %v2614 = vrot.slane %v2549, 2
  %v2615 = vrot.slane %v2555, 1
  %v2616 = vsel %vm2282, %v2369, %v2588
  %v2617 = vsel %vm2284, %v2589, %v2590
  %v2618 = vsel %vm2286, %v2616, %v2617
  %v2619 = vsel %vm2288, %v2591, %v2592
  %v2620 = vsel %vm2290, %v2593, %v2594
  %v2621 = vsel %vm2292, %v2619, %v2620
  %v2622 = vsel %vm2294, %v2618, %v2621
  %v2623 = vsel %vm2282, %v2417, %v2595
  %v2624 = vsel %vm2284, %v2596, %v2597
  %v2625 = vsel %vm2286, %v2623, %v2624
  %v2626 = vsel %vm2288, %v2598, %v2599
  %v2627 = vsel %vm2290, %v2600, %v2601
  %v2628 = vsel %vm2292, %v2626, %v2627
  %v2629 = vsel %vm2294, %v2625, %v2628
  %v2630 = vsel %vm2282, %v2465, %v2602
  %v2631 = vsel %vm2284, %v2603, %v2604
  %v2632 = vsel %vm2286, %v2630, %v2631
  %v2633 = vsel %vm2288, %v2605, %v2606
  %v2634 = vsel %vm2290, %v2607, %v2608
  %v2635 = vsel %vm2292, %v2633, %v2634
  %v2636 = vsel %vm2294, %v2632, %v2635
  %v2637 = vsel %vm2282, %v2513, %v2609
  %v2638 = vsel %vm2284, %v2610, %v2611
  %v2639 = vsel %vm2286, %v2637, %v2638
  %v2640 = vsel %vm2288, %v2612, %v2613
  %v2641 = vsel %vm2290, %v2614, %v2615
  %v2642 = vsel %vm2292, %v2640, %v2641
  %v2643 = vsel %vm2294, %v2639, %v2642
  %s2648 = scalar_lea.vmem %s3, 1
  %2649 = vst [vmem:[%s2648] ss:$8 sm:$0xf] %v2622
  %2650 = vst [vmem:[%s2648] ss:$8 sm:$0xf0] %v2622
  %s2651 = scalar_lea.vmem %s3, 65
  %2652 = vst [vmem:[%s2651] ss:$8 sm:$0xf] %v2629
  %2653 = vst [vmem:[%s2651] ss:$8 sm:$0xf0] %v2629
  %s2654 = scalar_lea.vmem %s3, 129
  %2655 = vst [vmem:[%s2654] ss:$8 sm:$0xf] %v2636
  %2656 = vst [vmem:[%s2654] ss:$8 sm:$0xf0] %v2636
  %s2657 = scalar_lea.vmem %s3, 193
  %2658 = vst [vmem:[%s2657] ss:$8 sm:$0xf] %v2643
  %2659 = vst [vmem:[%s2657] ss:$8 sm:$0xf0] %v2643
  // Predicated region
  $region10: #{generator_forward.7} parent=0 // pred_check
    _
  $region11: #{generator_forward.7} parent=0 // pred_check_branch
    %2661 = sbr.rel (0) target = $region13
  $region12: #{generator_forward.7} parent=0 // pred_region
    _
  $region13: #{generator_forward.7} parent=0 // pred_fallthru
    _
  // Predicated region
  $region14: #{generator_forward.7} parent=0 // pred_check
    _
  $region15: #{generator_forward.7} parent=0 // pred_check_branch
    %2663 = sbr.rel (0) target = $region17
  $region16: #{generator_forward.7} parent=0 // pred_region
    _
  $region17: #{generator_forward.7} parent=0 // pred_fallthru
    _
  // Predicated region
  $region18: #{generator_forward.7} parent=0 // pred_check
    _
  $region19: #{generator_forward.7} parent=0 // pred_check_branch
    %2665 = sbr.rel (0) target = $region21
  $region20: #{generator_forward.7} parent=0 // pred_region
    _
  $region21: #{generator_forward.7} parent=0 // pred_fallthru
    _
  // Predicated region
  $region22: #{generator_forward.7} parent=0 // pred_check
    _
  $region23: #{generator_forward.7} parent=0 // pred_check_branch
    %2667 = sbr.rel (0) target = $region25
  $region24: #{generator_forward.7} parent=0 // pred_region
    _
  $region25: #{generator_forward.7} parent=0 // pred_fallthru
    _

// kernel: generator_forward.8
$region0: #{generator_forward.8}
  #allocation0 [shape = 'u32[]', space=smem, size = 0x4, offset = 0x4, fixed_abs, tag = 'smem constant byte address 0x4 - core index']
  #allocation1 [shape = 'u32[72,128]{1,0:T(1,128)}', space=vmem, size = 0x9000, scoped, tag = 'internal scratch']
  %s0 = inlined_call_operand.vmem [shape: bf16[8,4096], index: 0, kind: input, shape index: {}]
  %s1 = inlined_call_operand.vmem [shape: f32[8,4096], index: 1, kind: input, shape index: {}]
  %s2 = inlined_call_operand.vmem [shape: bf16[8,4096], index: 2, kind: output, shape index: {}]
  %s3 = sld [smem:[#allocation0]]
  $region18: #{generator_forward.8} parent=0
    _
  %s5 = ssub.s32 1, %s3
  %s6 = scalar_select 0, %s5, %s3
  // Predicated region
  $region2: #{generator_forward.8} parent=0 // pred_check
    _
  $region3: #{generator_forward.8} parent=0 // pred_check_branch
    %8 = sbr.rel (0) target = $region5
  $region4: #{generator_forward.8} parent=0 // pred_region
    _
  $region5: #{generator_forward.8} parent=0 // pred_fallthru
    _
  // Predicated region
  $region6: #{generator_forward.8} parent=0 // pred_check
    _
  $region7: #{generator_forward.8} parent=0 // pred_check_branch
    %10 = sbr.rel (0) target = $region9
  $region8: #{generator_forward.8} parent=0 // pred_region
    _
  $region9: #{generator_forward.8} parent=0 // pred_fallthru
    _
  %v11 = vld [vmem:[%s0] sm:$0xff]
  %v12 = vld [vmem:[%s0 + $0x8] sm:$0xff]
  %v13 = vld [vmem:[%s0 + $0x10] sm:$0xff]
  %v14 = vld [vmem:[%s0 + $0x18] sm:$0xff]
  %v15 = vld [vmem:[%s0 + $0x20] sm:$0xff]
  %v16 = vld [vmem:[%s0 + $0x28] sm:$0xff]
  %v17 = vld [vmem:[%s0 + $0x30] sm:$0xff]
  %v18 = vld [vmem:[%s0 + $0x38] sm:$0xff]
  %v19 = vld [vmem:[%s0 + $0x40] sm:$0xff]
  %v20 = vld [vmem:[%s0 + $0x48] sm:$0xff]
  %v21 = vld [vmem:[%s0 + $0x50] sm:$0xff]
  %v22 = vld [vmem:[%s0 + $0x58] sm:$0xff]
  %v23 = vld [vmem:[%s0 + $0x60] sm:$0xff]
  %v24 = vld [vmem:[%s0 + $0x68] sm:$0xff]
  %v25 = vld [vmem:[%s0 + $0x70] sm:$0xff]
  %v26 = vld [vmem:[%s0 + $0x78] sm:$0xff]
  %v27 = vunpack.c.l.bf16 %v11
  %v28 = vunpack.c.h.bf16 %v11
  %v29 = vunpack.c.l.bf16 %v12
  %v30 = vunpack.c.h.bf16 %v12
  %v31 = vunpack.c.l.bf16 %v13
  %v32 = vunpack.c.h.bf16 %v13
  %v33 = vunpack.c.l.bf16 %v14
  %v34 = vunpack.c.h.bf16 %v14
  %v35 = vunpack.c.l.bf16 %v15
  %v36 = vunpack.c.h.bf16 %v15
  %v37 = vunpack.c.l.bf16 %v16
  %v38 = vunpack.c.h.bf16 %v16
  %v39 = vunpack.c.l.bf16 %v17
  %v40 = vunpack.c.h.bf16 %v17
  %v41 = vunpack.c.l.bf16 %v18
  %v42 = vunpack.c.h.bf16 %v18
  %v43 = vunpack.c.l.bf16 %v19
  %v44 = vunpack.c.h.bf16 %v19
  %v45 = vunpack.c.l.bf16 %v20
  %v46 = vunpack.c.h.bf16 %v20
  %v47 = vunpack.c.l.bf16 %v21
  %v48 = vunpack.c.h.bf16 %v21
  %v49 = vunpack.c.l.bf16 %v22
  %v50 = vunpack.c.h.bf16 %v22
  %v51 = vunpack.c.l.bf16 %v23
  %v52 = vunpack.c.h.bf16 %v23
  %v53 = vunpack.c.l.bf16 %v24
  %v54 = vunpack.c.h.bf16 %v24
  %v55 = vunpack.c.l.bf16 %v25
  %v56 = vunpack.c.h.bf16 %v25
  %v57 = vunpack.c.l.bf16 %v26
  %v58 = vunpack.c.h.bf16 %v26
  %v59 = vld [vmem:[%s1] ss:$8 sm:$0xf]
  %v60 = vld [vmem:[%s1] ss:$8 sm:$0xf0]
  %v61 = vor.u32 %v59, %v60
  %s62 = scalar_lea.vmem %s1, 64
  %v63 = vld [vmem:[%s62] ss:$8 sm:$0xf]
  %v64 = vld [vmem:[%s62] ss:$8 sm:$0xf0]
  %v65 = vor.u32 %v63, %v64
  %s66 = scalar_lea.vmem %s1, 128
  %v67 = vld [vmem:[%s66] ss:$8 sm:$0xf]
  %v68 = vld [vmem:[%s66] ss:$8 sm:$0xf0]
  %v69 = vor.u32 %v67, %v68
  %s70 = scalar_lea.vmem %s1, 192
  %v71 = vld [vmem:[%s70] ss:$8 sm:$0xf]
  %v72 = vld [vmem:[%s70] ss:$8 sm:$0xf0]
  %v73 = vor.u32 %v71, %v72
  %s74 = scalar_lea.vmem %s1, 1
  %v75 = vld [vmem:[%s74] ss:$8 sm:$0xf]
  %v76 = vld [vmem:[%s74] ss:$8 sm:$0xf0]
  %v77 = vor.u32 %v75, %v76
  %s78 = scalar_lea.vmem %s1, 65
  %v79 = vld [vmem:[%s78] ss:$8 sm:$0xf]
  %v80 = vld [vmem:[%s78] ss:$8 sm:$0xf0]
  %v81 = vor.u32 %v79, %v80
  %s82 = scalar_lea.vmem %s1, 129
  %v83 = vld [vmem:[%s82] ss:$8 sm:$0xf]
  %v84 = vld [vmem:[%s82] ss:$8 sm:$0xf0]
  %v85 = vor.u32 %v83, %v84
  %s86 = scalar_lea.vmem %s1, 193
  %v87 = vld [vmem:[%s86] ss:$8 sm:$0xf]
  %v88 = vld [vmem:[%s86] ss:$8 sm:$0xf0]
  %v89 = vor.u32 %v87, %v88
  %v94 = vperm.slane %v61, 0
  %v95 = vperm.slane %v61, 1
  %v96 = vperm.slane %v61, 2
  %v97 = vperm.slane %v61, 3
  %v98 = vperm.slane %v61, 4
  %v99 = vperm.slane %v61, 5
  %v100 = vperm.slane %v61, 6
  %v101 = vperm.slane %v61, 7
  %v102 = vperm.slane %v65, 0
  %v103 = vperm.slane %v65, 1
  %v104 = vperm.slane %v65, 2
  %v105 = vperm.slane %v65, 3
  %v106 = vperm.slane %v65, 4
  %v107 = vperm.slane %v65, 5
  %v108 = vperm.slane %v65, 6
  %v109 = vperm.slane %v65, 7
  %v110 = vperm.slane %v69, 0
  %v111 = vperm.slane %v69, 1
  %v112 = vperm.slane %v69, 2
  %v113 = vperm.slane %v69, 3
  %v114 = vperm.slane %v69, 4
  %v115 = vperm.slane %v69, 5
  %v116 = vperm.slane %v69, 6
  %v117 = vperm.slane %v69, 7
  %v118 = vperm.slane %v73, 0
  %v119 = vperm.slane %v73, 1
  %v120 = vperm.slane %v73, 2
  %v121 = vperm.slane %v73, 3
  %v122 = vperm.slane %v73, 4
  %v123 = vperm.slane %v73, 5
  %v124 = vperm.slane %v73, 6
  %v125 = vperm.slane %v73, 7
  %v158 = vmul.f32 %v27, %v94
  %v159 = vmul.f32 %v28, %v95
  %v160 = vmul.f32 %v29, %v96
  %v161 = vmul.f32 %v30, %v97
  %v162 = vmul.f32 %v31, %v98
  %v163 = vmul.f32 %v32, %v99
  %v164 = vmul.f32 %v33, %v100
  %v165 = vmul.f32 %v34, %v101
  %v166 = vmul.f32 %v35, %v102
  %v167 = vmul.f32 %v36, %v103
  %v168 = vmul.f32 %v37, %v104
  %v169 = vmul.f32 %v38, %v105
  %v170 = vmul.f32 %v39, %v106
  %v171 = vmul.f32 %v40, %v107
  %v172 = vmul.f32 %v41, %v108
  %v173 = vmul.f32 %v42, %v109
  %v174 = vmul.f32 %v43, %v110
  %v175 = vmul.f32 %v44, %v111
  %v176 = vmul.f32 %v45, %v112
  %v177 = vmul.f32 %v46, %v113
  %v178 = vmul.f32 %v47, %v114
  %v179 = vmul.f32 %v48, %v115
  %v180 = vmul.f32 %v49, %v116
  %v181 = vmul.f32 %v50, %v117
  %v182 = vmul.f32 %v51, %v118
  %v183 = vmul.f32 %v52, %v119
  %v184 = vmul.f32 %v53, %v120
  %v185 = vmul.f32 %v54, %v121
  %v186 = vmul.f32 %v55, %v122
  %v187 = vmul.f32 %v56, %v123
  %v188 = vmul.f32 %v57, %v124
  %v189 = vmul.f32 %v58, %v125
  %v194 = vperm.slane %v77, 0
  %v195 = vperm.slane %v77, 1
  %v196 = vperm.slane %v77, 2
  %v197 = vperm.slane %v77, 3
  %v198 = vperm.slane %v77, 4
  %v199 = vperm.slane %v77, 5
  %v200 = vperm.slane %v77, 6
  %v201 = vperm.slane %v77, 7
  %v202 = vperm.slane %v81, 0
  %v203 = vperm.slane %v81, 1
  %v204 = vperm.slane %v81, 2
  %v205 = vperm.slane %v81, 3
  %v206 = vperm.slane %v81, 4
  %v207 = vperm.slane %v81, 5
  %v208 = vperm.slane %v81, 6
  %v209 = vperm.slane %v81, 7
  %v210 = vperm.slane %v85, 0
  %v211 = vperm.slane %v85, 1
  %v212 = vperm.slane %v85, 2
  %v213 = vperm.slane %v85, 3
  %v214 = vperm.slane %v85, 4
  %v215 = vperm.slane %v85, 5
  %v216 = vperm.slane %v85, 6
  %v217 = vperm.slane %v85, 7
  %v218 = vperm.slane %v89, 0
  %v219 = vperm.slane %v89, 1
  %v220 = vperm.slane %v89, 2
  %v221 = vperm.slane %v89, 3
  %v222 = vperm.slane %v89, 4
  %v223 = vperm.slane %v89, 5
  %v224 = vperm.slane %v89, 6
  %v225 = vperm.slane %v89, 7
  %v258 = vadd.f32 %v158, %v194
  %v259 = vadd.f32 %v159, %v195
  %v260 = vadd.f32 %v160, %v196
  %v261 = vadd.f32 %v161, %v197
  %v262 = vadd.f32 %v162, %v198
  %v263 = vadd.f32 %v163, %v199
  %v264 = vadd.f32 %v164, %v200
  %v265 = vadd.f32 %v165, %v201
  %v266 = vadd.f32 %v166, %v202
  %v267 = vadd.f32 %v167, %v203
  %v268 = vadd.f32 %v168, %v204
  %v269 = vadd.f32 %v169, %v205
  %v270 = vadd.f32 %v170, %v206
  %v271 = vadd.f32 %v171, %v207
  %v272 = vadd.f32 %v172, %v208
  %v273 = vadd.f32 %v173, %v209
  %v274 = vadd.f32 %v174, %v210
  %v275 = vadd.f32 %v175, %v211
  %v276 = vadd.f32 %v176, %v212
  %v277 = vadd.f32 %v177, %v213
  %v278 = vadd.f32 %v178, %v214
  %v279 = vadd.f32 %v179, %v215
  %v280 = vadd.f32 %v180, %v216
  %v281 = vadd.f32 %v181, %v217
  %v282 = vadd.f32 %v182, %v218
  %v283 = vadd.f32 %v183, %v219
  %v284 = vadd.f32 %v184, %v220
  %v285 = vadd.f32 %v185, %v221
  %v286 = vadd.f32 %v186, %v222
  %v287 = vadd.f32 %v187, %v223
  %v288 = vadd.f32 %v188, %v224
  %v289 = vadd.f32 %v189, %v225
  %v290 = vmax.f32 %v258, 0.0
  %v291 = vmax.f32 %v259, 0.0
  %v292 = vmax.f32 %v260, 0.0
  %v293 = vmax.f32 %v261, 0.0
  %v294 = vmax.f32 %v262, 0.0
  %v295 = vmax.f32 %v263, 0.0
  %v296 = vmax.f32 %v264, 0.0
  %v297 = vmax.f32 %v265, 0.0
  %v298 = vmax.f32 %v266, 0.0
  %v299 = vmax.f32 %v267, 0.0
  %v300 = vmax.f32 %v268, 0.0
  %v301 = vmax.f32 %v269, 0.0
  %v302 = vmax.f32 %v270, 0.0
  %v303 = vmax.f32 %v271, 0.0
  %v304 = vmax.f32 %v272, 0.0
  %v305 = vmax.f32 %v273, 0.0
  %v306 = vmax.f32 %v274, 0.0
  %v307 = vmax.f32 %v275, 0.0
  %v308 = vmax.f32 %v276, 0.0
  %v309 = vmax.f32 %v277, 0.0
  %v310 = vmax.f32 %v278, 0.0
  %v311 = vmax.f32 %v279, 0.0
  %v312 = vmax.f32 %v280, 0.0
  %v313 = vmax.f32 %v281, 0.0
  %v314 = vmax.f32 %v282, 0.0
  %v315 = vmax.f32 %v283, 0.0
  %v316 = vmax.f32 %v284, 0.0
  %v317 = vmax.f32 %v285, 0.0
  %v318 = vmax.f32 %v286, 0.0
  %v319 = vmax.f32 %v287, 0.0
  %v320 = vmax.f32 %v288, 0.0
  %v321 = vmax.f32 %v289, 0.0
  %v322 = vpack.c.bf16 %v291, %v290
  %v323 = vpack.c.bf16 %v293, %v292
  %v324 = vpack.c.bf16 %v295, %v294
  %v325 = vpack.c.bf16 %v297, %v296
  %v326 = vpack.c.bf16 %v299, %v298
  %v327 = vpack.c.bf16 %v301, %v300
  %v328 = vpack.c.bf16 %v303, %v302
  %v329 = vpack.c.bf16 %v305, %v304
  %v330 = vpack.c.bf16 %v307, %v306
  %v331 = vpack.c.bf16 %v309, %v308
  %v332 = vpack.c.bf16 %v311, %v310
  %v333 = vpack.c.bf16 %v313, %v312
  %v334 = vpack.c.bf16 %v315, %v314
  %v335 = vpack.c.bf16 %v317, %v316
  %v336 = vpack.c.bf16 %v319, %v318
  %v337 = vpack.c.bf16 %v321, %v320
  %338 = vst [vmem:[%s2] sm:$0xff] %v322
  %339 = vst [vmem:[%s2 + $0x8] sm:$0xff] %v323
  %340 = vst [vmem:[%s2 + $0x10] sm:$0xff] %v324
  %341 = vst [vmem:[%s2 + $0x18] sm:$0xff] %v325
  %342 = vst [vmem:[%s2 + $0x20] sm:$0xff] %v326
  %343 = vst [vmem:[%s2 + $0x28] sm:$0xff] %v327
  %344 = vst [vmem:[%s2 + $0x30] sm:$0xff] %v328
  %345 = vst [vmem:[%s2 + $0x38] sm:$0xff] %v329
  %346 = vst [vmem:[%s2 + $0x40] sm:$0xff] %v330
  %347 = vst [vmem:[%s2 + $0x48] sm:$0xff] %v331
  %348 = vst [vmem:[%s2 + $0x50] sm:$0xff] %v332
  %349 = vst [vmem:[%s2 + $0x58] sm:$0xff] %v333
  %350 = vst [vmem:[%s2 + $0x60] sm:$0xff] %v334
  %351 = vst [vmem:[%s2 + $0x68] sm:$0xff] %v335
  %352 = vst [vmem:[%s2 + $0x70] sm:$0xff] %v336
  %353 = vst [vmem:[%s2 + $0x78] sm:$0xff] %v337
  // Predicated region
  $region10: #{generator_forward.8} parent=0 // pred_check
    _
  $region11: #{generator_forward.8} parent=0 // pred_check_branch
    %355 = sbr.rel (0) target = $region13
  $region12: #{generator_forward.8} parent=0 // pred_region
    _
  $region13: #{generator_forward.8} parent=0 // pred_fallthru
    _
  // Predicated region
  $region14: #{generator_forward.8} parent=0 // pred_check
    _
  $region15: #{generator_forward.8} parent=0 // pred_check_branch
    %357 = sbr.rel (0) target = $region17
  $region16: #{generator_forward.8} parent=0 // pred_region
    _
  $region17: #{generator_forward.8} parent=0 // pred_fallthru
    _

// kernel: tile.48
$region0: #{tile.48}
  #allocation0 [shape = 's32[1]{0}', space=sflag, size = 0x4, scoped, tag = 'scoped memory for tile.48']
  %s0 = inlined_call_operand.vmem [shape: f32[128], index: 0, kind: input, shape index: {}]
  %s1 = inlined_call_operand.vmem [shape: f32[4,128], index: 1, kind: output, shape index: {}]
  // Predicated region
  $region2: #{tile.48} parent=0 // pred_check
    _
  $region3: #{tile.48} parent=0 // pred_check_branch
    %3 = sbr.rel (0) target = $region5
  $region4: #{tile.48} parent=0 // pred_region
    _
  $region5: #{tile.48} parent=0 // pred_fallthru
    _
  %v4 = vld [vmem:[%s0] ss:$0 sm:$0xff]
  %5 = vst [vmem:[%s1] sm:$0xf] %v4

// kernel: generator_forward.10
$region0: #{generator_forward.10}
  #allocation0 [shape = 'u32[]', space=smem, size = 0x4, offset = 0x4, fixed_abs, tag = 'smem constant byte address 0x4 - core index']
  #allocation1 [shape = 'u32[72,128]{1,0:T(1,128)}', space=vmem, size = 0x9000, scoped, tag = 'internal scratch']
  %s0 = inlined_call_operand.vmem [shape: bf16[32,512], index: 0, kind: input, shape index: {}]
  %s1 = inlined_call_operand.vmem [shape: f32[8,512], index: 1, kind: input, shape index: {}]
  %s2 = inlined_call_operand.vmem [shape: bf16[32,512], index: 2, kind: output, shape index: {}]
  %s3 = sld [smem:[#allocation0]]
  $region18: #{generator_forward.10} parent=0
    _
  %s5 = ssub.s32 1, %s3
  %s6 = scalar_select 0, %s5, %s3
  // Predicated region
  $region2: #{generator_forward.10} parent=0 // pred_check
    _
  $region3: #{generator_forward.10} parent=0 // pred_check_branch
    %8 = sbr.rel (0) target = $region5
  $region4: #{generator_forward.10} parent=0 // pred_region
    _
  $region5: #{generator_forward.10} parent=0 // pred_fallthru
    _
  // Predicated region
  $region6: #{generator_forward.10} parent=0 // pred_check
    _
  $region7: #{generator_forward.10} parent=0 // pred_check_branch
    %10 = sbr.rel (0) target = $region9
  $region8: #{generator_forward.10} parent=0 // pred_region
    _
  $region9: #{generator_forward.10} parent=0 // pred_fallthru
    _
  %v11 = vld [vmem:[%s0] sm:$0xff]
  %v12 = vld [vmem:[%s0 + $0x8] sm:$0xff]
  %v13 = vld [vmem:[%s0 + $0x10] sm:$0xff]
  %v14 = vld [vmem:[%s0 + $0x18] sm:$0xff]
  %v15 = vld [vmem:[%s0 + $0x20] sm:$0xff]
  %v16 = vld [vmem:[%s0 + $0x28] sm:$0xff]
  %v17 = vld [vmem:[%s0 + $0x30] sm:$0xff]
  %v18 = vld [vmem:[%s0 + $0x38] sm:$0xff]
  %v19 = vunpack.c.l.bf16 %v11
  %v20 = vunpack.c.h.bf16 %v11
  %v21 = vunpack.c.l.bf16 %v12
  %v22 = vunpack.c.h.bf16 %v12
  %v23 = vunpack.c.l.bf16 %v13
  %v24 = vunpack.c.h.bf16 %v13
  %v25 = vunpack.c.l.bf16 %v14
  %v26 = vunpack.c.h.bf16 %v14
  %v27 = vunpack.c.l.bf16 %v15
  %v28 = vunpack.c.h.bf16 %v15
  %v29 = vunpack.c.l.bf16 %v16
  %v30 = vunpack.c.h.bf16 %v16
  %v31 = vunpack.c.l.bf16 %v17
  %v32 = vunpack.c.h.bf16 %v17
  %v33 = vunpack.c.l.bf16 %v18
  %v34 = vunpack.c.h.bf16 %v18
  %v35 = vld [vmem:[%s1] ss:$8 sm:$0xf]
  %s36 = scalar_lea.vmem %s1, 1
  %v37 = vld [vmem:[%s36] ss:$8 sm:$0xf]
  %v39 = vperm.slane %v35, 0
  %v40 = vperm.slane %v35, 1
  %v41 = vperm.slane %v35, 2
  %v42 = vperm.slane %v35, 3
  %v47 = vmul.f32 %v19, %v39
  %v48 = vmul.f32 %v20, %v40
  %v49 = vmul.f32 %v21, %v41
  %v50 = vmul.f32 %v22, %v42
  %v51 = vmul.f32 %v23, %v39
  %v52 = vmul.f32 %v24, %v40
  %v53 = vmul.f32 %v25, %v41
  %v54 = vmul.f32 %v26, %v42
  %v55 = vmul.f32 %v27, %v39
  %v56 = vmul.f32 %v28, %v40
  %v57 = vmul.f32 %v29, %v41
  %v58 = vmul.f32 %v30, %v42
  %v59 = vmul.f32 %v31, %v39
  %v60 = vmul.f32 %v32, %v40
  %v61 = vmul.f32 %v33, %v41
  %v62 = vmul.f32 %v34, %v42
  %v64 = vperm.slane %v37, 0
  %v65 = vperm.slane %v37, 1
  %v66 = vperm.slane %v37, 2
  %v67 = vperm.slane %v37, 3
  %v72 = vadd.f32 %v47, %v64
  %v73 = vadd.f32 %v48, %v65
  %v74 = vadd.f32 %v49, %v66
  %v75 = vadd.f32 %v50, %v67
  %v76 = vadd.f32 %v51, %v64
  %v77 = vadd.f32 %v52, %v65
  %v78 = vadd.f32 %v53, %v66
  %v79 = vadd.f32 %v54, %v67
  %v80 = vadd.f32 %v55, %v64
  %v81 = vadd.f32 %v56, %v65
  %v82 = vadd.f32 %v57, %v66
  %v83 = vadd.f32 %v58, %v67
  %v84 = vadd.f32 %v59, %v64
  %v85 = vadd.f32 %v60, %v65
  %v86 = vadd.f32 %v61, %v66
  %v87 = vadd.f32 %v62, %v67
  %v88 = vmax.f32 %v72, 0.0
  %v89 = vmax.f32 %v73, 0.0
  %v90 = vmax.f32 %v74, 0.0
  %v91 = vmax.f32 %v75, 0.0
  %v92 = vmax.f32 %v76, 0.0
  %v93 = vmax.f32 %v77, 0.0
  %v94 = vmax.f32 %v78, 0.0
  %v95 = vmax.f32 %v79, 0.0
  %v96 = vmax.f32 %v80, 0.0
  %v97 = vmax.f32 %v81, 0.0
  %v98 = vmax.f32 %v82, 0.0
  %v99 = vmax.f32 %v83, 0.0
  %v100 = vmax.f32 %v84, 0.0
  %v101 = vmax.f32 %v85, 0.0
  %v102 = vmax.f32 %v86, 0.0
  %v103 = vmax.f32 %v87, 0.0
  %v104 = vpack.c.bf16 %v89, %v88
  %v105 = vpack.c.bf16 %v91, %v90
  %v106 = vpack.c.bf16 %v93, %v92
  %v107 = vpack.c.bf16 %v95, %v94
  %v108 = vpack.c.bf16 %v97, %v96
  %v109 = vpack.c.bf16 %v99, %v98
  %v110 = vpack.c.bf16 %v101, %v100
  %v111 = vpack.c.bf16 %v103, %v102
  %112 = vst [vmem:[%s2] sm:$0xff] %v104
  %113 = vst [vmem:[%s2 + $0x8] sm:$0xff] %v105
  %114 = vst [vmem:[%s2 + $0x10] sm:$0xff] %v106
  %115 = vst [vmem:[%s2 + $0x18] sm:$0xff] %v107
  %116 = vst [vmem:[%s2 + $0x20] sm:$0xff] %v108
  %117 = vst [vmem:[%s2 + $0x28] sm:$0xff] %v109
  %118 = vst [vmem:[%s2 + $0x30] sm:$0xff] %v110
  %119 = vst [vmem:[%s2 + $0x38] sm:$0xff] %v111
  // Predicated region
  $region10: #{generator_forward.10} parent=0 // pred_check
    _
  $region11: #{generator_forward.10} parent=0 // pred_check_branch
    %121 = sbr.rel (0) target = $region13
  $region12: #{generator_forward.10} parent=0 // pred_region
    _
  $region13: #{generator_forward.10} parent=0 // pred_fallthru
    _
  // Predicated region
  $region14: #{generator_forward.10} parent=0 // pred_check
    _
  $region15: #{generator_forward.10} parent=0 // pred_check_branch
    %123 = sbr.rel (0) target = $region17
  $region16: #{generator_forward.10} parent=0 // pred_region
    _
  $region17: #{generator_forward.10} parent=0 // pred_fallthru
    _

// kernel: generator_forward.9
$region0: #{generator_forward.9}
  #allocation0 [shape = 'u32[]', space=smem, size = 0x4, offset = 0x4, fixed_abs, tag = 'smem constant byte address 0x4 - core index']
  #allocation1 [shape = 'u32[72,128]{1,0:T(1,128)}', space=vmem, size = 0x9000, scoped, tag = 'internal scratch']
  %s0 = inlined_call_operand.vmem [shape: bf16[32,1152], index: 0, kind: input, shape index: {}]
  %s1 = inlined_call_operand.vmem [shape: bf16[1152,512], index: 1, kind: input, shape index: {}]
  %s2 = inlined_call_operand.vmem [shape: bf16[32,512], index: 2, kind: output, shape index: {0}]
  %s3 = inlined_call_operand.vmem [shape: f32[8,512], index: 3, kind: output, shape index: {1}]
  %4 = xla_tuple %s2, %s3
  %s5 = sld [smem:[#allocation0]]
  $region26: #{generator_forward.9} parent=0
    _
  %s7 = ssub.s32 1, %s5
  %s8 = scalar_select 0, %s7, %s5
  // Predicated region
  $region2: #{generator_forward.9} parent=0 // pred_check
    _
  $region3: #{generator_forward.9} parent=0 // pred_check_branch
    %10 = sbr.rel (0) target = $region5
  $region4: #{generator_forward.9} parent=0 // pred_region
    _
  $region5: #{generator_forward.9} parent=0 // pred_fallthru
    _
  // Predicated region
  $region6: #{generator_forward.9} parent=0 // pred_check
    _
  $region7: #{generator_forward.9} parent=0 // pred_check_branch
    %12 = sbr.rel (0) target = $region9
  $region8: #{generator_forward.9} parent=0 // pred_region
    _
  $region9: #{generator_forward.9} parent=0 // pred_fallthru
    _
  %v13 = vld [vmem:[%s0] sm:$0xff]
  %v14 = vld [vmem:[%s0 + $0x8] sm:$0xff]
  %v15 = vld [vmem:[%s0 + $0x10] sm:$0xff]
  %v16 = vld [vmem:[%s0 + $0x18] sm:$0xff]
  %v17 = vld [vmem:[%s0 + $0x20] sm:$0xf]
  %v18 = vld [vmem:[%s0 + $0x24] sm:$0xff]
  %v19 = vld [vmem:[%s0 + $0x2c] sm:$0xff]
  %v20 = vld [vmem:[%s0 + $0x34] sm:$0xff]
  %v21 = vld [vmem:[%s0 + $0x3c] sm:$0xff]
  %v22 = vld [vmem:[%s0 + $0x44] sm:$0xf]
  %v23 = vld [vmem:[%s0 + $0x48] sm:$0xff]
  %v24 = vld [vmem:[%s0 + $0x50] sm:$0xff]
  %v25 = vld [vmem:[%s0 + $0x58] sm:$0xff]
  %v26 = vld [vmem:[%s0 + $0x60] sm:$0xff]
  %v27 = vld [vmem:[%s0 + $0x68] sm:$0xf]
  %v28 = vld [vmem:[%s0 + $0x6c] sm:$0xff]
  %v29 = vld [vmem:[%s0 + $0x74] sm:$0xff]
  %v30 = vld [vmem:[%s0 + $0x7c] sm:$0xff]
  %v31 = vld [vmem:[%s0 + $0x84] sm:$0xff]
  %v32 = vld [vmem:[%s0 + $0x8c] sm:$0xf]
  %v33 = vld [vmem:[%s1] sm:$0xff]
  %v34 = vld [vmem:[%s1 + $0x8] sm:$0xff]
  %v35 = vld [vmem:[%s1 + $0x10] sm:$0xff]
  %v36 = vld [vmem:[%s1 + $0x18] sm:$0xff]
  %v37 = vld [vmem:[%s1 + $0x20] sm:$0xff]
  %v38 = vld [vmem:[%s1 + $0x28] sm:$0xff]
  %v39 = vld [vmem:[%s1 + $0x30] sm:$0xff]
  %v40 = vld [vmem:[%s1 + $0x38] sm:$0xff]
  %v41 = vld [vmem:[%s1 + $0x40] sm:$0xff]
  %v42 = vld [vmem:[%s1 + $0x48] sm:$0xff]
  %v43 = vld [vmem:[%s1 + $0x50] sm:$0xff]
  %v44 = vld [vmem:[%s1 + $0x58] sm:$0xff]
  %v45 = vld [vmem:[%s1 + $0x60] sm:$0xff]
  %v46 = vld [vmem:[%s1 + $0x68] sm:$0xff]
  %v47 = vld [vmem:[%s1 + $0x70] sm:$0xff]
  %v48 = vld [vmem:[%s1 + $0x78] sm:$0xff]
  %v49 = vld [vmem:[%s1 + $0x80] sm:$0xff]
  %v50 = vld [vmem:[%s1 + $0x88] sm:$0xff]
  %v51 = vld [vmem:[%s1 + $0x90] sm:$0xff]
  %v52 = vld [vmem:[%s1 + $0x98] sm:$0xff]
  %v53 = vld [vmem:[%s1 + $0xa0] sm:$0xff]
  %v54 = vld [vmem:[%s1 + $0xa8] sm:$0xff]
  %v55 = vld [vmem:[%s1 + $0xb0] sm:$0xff]
  %v56 = vld [vmem:[%s1 + $0xb8] sm:$0xff]
  %v57 = vld [vmem:[%s1 + $0xc0] sm:$0xff]
  %v58 = vld [vmem:[%s1 + $0xc8] sm:$0xff]
  %v59 = vld [vmem:[%s1 + $0xd0] sm:$0xff]
  %v60 = vld [vmem:[%s1 + $0xd8] sm:$0xff]
  %v61 = vld [vmem:[%s1 + $0xe0] sm:$0xff]
  %v62 = vld [vmem:[%s1 + $0xe8] sm:$0xff]
  %v63 = vld [vmem:[%s1 + $0xf0] sm:$0xff]
  %v64 = vld [vmem:[%s1 + $0xf8] sm:$0xff]
  %v65 = vld [vmem:[%s1 + $0x100] sm:$0xff]
  %v66 = vld [vmem:[%s1 + $0x108] sm:$0xff]
  %v67 = vld [vmem:[%s1 + $0x110] sm:$0xff]
  %v68 = vld [vmem:[%s1 + $0x118] sm:$0xff]
  %v69 = vld [vmem:[%s1 + $0x120] sm:$0xff]
  %v70 = vld [vmem:[%s1 + $0x128] sm:$0xff]
  %v71 = vld [vmem:[%s1 + $0x130] sm:$0xff]
  %v72 = vld [vmem:[%s1 + $0x138] sm:$0xff]
  %v73 = vld [vmem:[%s1 + $0x140] sm:$0xff]
  %v74 = vld [vmem:[%s1 + $0x148] sm:$0xff]
  %v75 = vld [vmem:[%s1 + $0x150] sm:$0xff]
  %v76 = vld [vmem:[%s1 + $0x158] sm:$0xff]
  %v77 = vld [vmem:[%s1 + $0x160] sm:$0xff]
  %v78 = vld [vmem:[%s1 + $0x168] sm:$0xff]
  %v79 = vld [vmem:[%s1 + $0x170] sm:$0xff]
  %v80 = vld [vmem:[%s1 + $0x178] sm:$0xff]
  %v81 = vld [vmem:[%s1 + $0x180] sm:$0xff]
  %v82 = vld [vmem:[%s1 + $0x188] sm:$0xff]
  %v83 = vld [vmem:[%s1 + $0x190] sm:$0xff]
  %v84 = vld [vmem:[%s1 + $0x198] sm:$0xff]
  %v85 = vld [vmem:[%s1 + $0x1a0] sm:$0xff]
  %v86 = vld [vmem:[%s1 + $0x1a8] sm:$0xff]
  %v87 = vld [vmem:[%s1 + $0x1b0] sm:$0xff]
  %v88 = vld [vmem:[%s1 + $0x1b8] sm:$0xff]
  %v89 = vld [vmem:[%s1 + $0x1c0] sm:$0xff]
  %v90 = vld [vmem:[%s1 + $0x1c8] sm:$0xff]
  %v91 = vld [vmem:[%s1 + $0x1d0] sm:$0xff]
  %v92 = vld [vmem:[%s1 + $0x1d8] sm:$0xff]
  %v93 = vld [vmem:[%s1 + $0x1e0] sm:$0xff]
  %v94 = vld [vmem:[%s1 + $0x1e8] sm:$0xff]
  %v95 = vld [vmem:[%s1 + $0x1f0] sm:$0xff]
  %v96 = vld [vmem:[%s1 + $0x1f8] sm:$0xff]
  %v97 = vld [vmem:[%s1 + $0x200] sm:$0xff]
  %v98 = vld [vmem:[%s1 + $0x208] sm:$0xff]
  %v99 = vld [vmem:[%s1 + $0x210] sm:$0xff]
  %v100 = vld [vmem:[%s1 + $0x218] sm:$0xff]
  %v101 = vld [vmem:[%s1 + $0x220] sm:$0xff]
  %v102 = vld [vmem:[%s1 + $0x228] sm:$0xff]
  %v103 = vld [vmem:[%s1 + $0x230] sm:$0xff]
  %v104 = vld [vmem:[%s1 + $0x238] sm:$0xff]
  %v105 = vld [vmem:[%s1 + $0x240] sm:$0xff]
  %v106 = vld [vmem:[%s1 + $0x248] sm:$0xff]
  %v107 = vld [vmem:[%s1 + $0x250] sm:$0xff]
  %v108 = vld [vmem:[%s1 + $0x258] sm:$0xff]
  %v109 = vld [vmem:[%s1 + $0x260] sm:$0xff]
  %v110 = vld [vmem:[%s1 + $0x268] sm:$0xff]
  %v111 = vld [vmem:[%s1 + $0x270] sm:$0xff]
  %v112 = vld [vmem:[%s1 + $0x278] sm:$0xff]
  %v113 = vld [vmem:[%s1 + $0x280] sm:$0xff]
  %v114 = vld [vmem:[%s1 + $0x288] sm:$0xff]
  %v115 = vld [vmem:[%s1 + $0x290] sm:$0xff]
  %v116 = vld [vmem:[%s1 + $0x298] sm:$0xff]
  %v117 = vld [vmem:[%s1 + $0x2a0] sm:$0xff]
  %v118 = vld [vmem:[%s1 + $0x2a8] sm:$0xff]
  %v119 = vld [vmem:[%s1 + $0x2b0] sm:$0xff]
  %v120 = vld [vmem:[%s1 + $0x2b8] sm:$0xff]
  %v121 = vld [vmem:[%s1 + $0x2c0] sm:$0xff]
  %v122 = vld [vmem:[%s1 + $0x2c8] sm:$0xff]
  %v123 = vld [vmem:[%s1 + $0x2d0] sm:$0xff]
  %v124 = vld [vmem:[%s1 + $0x2d8] sm:$0xff]
  %v125 = vld [vmem:[%s1 + $0x2e0] sm:$0xff]
  %v126 = vld [vmem:[%s1 + $0x2e8] sm:$0xff]
  %v127 = vld [vmem:[%s1 + $0x2f0] sm:$0xff]
  %v128 = vld [vmem:[%s1 + $0x2f8] sm:$0xff]
  %v129 = vld [vmem:[%s1 + $0x300] sm:$0xff]
  %v130 = vld [vmem:[%s1 + $0x308] sm:$0xff]
  %v131 = vld [vmem:[%s1 + $0x310] sm:$0xff]
  %v132 = vld [vmem:[%s1 + $0x318] sm:$0xff]
  %v133 = vld [vmem:[%s1 + $0x320] sm:$0xff]
  %v134 = vld [vmem:[%s1 + $0x328] sm:$0xff]
  %v135 = vld [vmem:[%s1 + $0x330] sm:$0xff]
  %v136 = vld [vmem:[%s1 + $0x338] sm:$0xff]
  %v137 = vld [vmem:[%s1 + $0x340] sm:$0xff]
  %v138 = vld [vmem:[%s1 + $0x348] sm:$0xff]
  %v139 = vld [vmem:[%s1 + $0x350] sm:$0xff]
  %v140 = vld [vmem:[%s1 + $0x358] sm:$0xff]
  %v141 = vld [vmem:[%s1 + $0x360] sm:$0xff]
  %v142 = vld [vmem:[%s1 + $0x368] sm:$0xff]
  %v143 = vld [vmem:[%s1 + $0x370] sm:$0xff]
  %v144 = vld [vmem:[%s1 + $0x378] sm:$0xff]
  %v145 = vld [vmem:[%s1 + $0x380] sm:$0xff]
  %v146 = vld [vmem:[%s1 + $0x388] sm:$0xff]
  %v147 = vld [vmem:[%s1 + $0x390] sm:$0xff]
  %v148 = vld [vmem:[%s1 + $0x398] sm:$0xff]
  %v149 = vld [vmem:[%s1 + $0x3a0] sm:$0xff]
  %v150 = vld [vmem:[%s1 + $0x3a8] sm:$0xff]
  %v151 = vld [vmem:[%s1 + $0x3b0] sm:$0xff]
  %v152 = vld [vmem:[%s1 + $0x3b8] sm:$0xff]
  %v153 = vld [vmem:[%s1 + $0x3c0] sm:$0xff]
  %v154 = vld [vmem:[%s1 + $0x3c8] sm:$0xff]
  %v155 = vld [vmem:[%s1 + $0x3d0] sm:$0xff]
  %v156 = vld [vmem:[%s1 + $0x3d8] sm:$0xff]
  %v157 = vld [vmem:[%s1 + $0x3e0] sm:$0xff]
  %v158 = vld [vmem:[%s1 + $0x3e8] sm:$0xff]
  %v159 = vld [vmem:[%s1 + $0x3f0] sm:$0xff]
  %v160 = vld [vmem:[%s1 + $0x3f8] sm:$0xff]
  %v161 = vld [vmem:[%s1 + $0x400] sm:$0xff]
  %v162 = vld [vmem:[%s1 + $0x408] sm:$0xff]
  %v163 = vld [vmem:[%s1 + $0x410] sm:$0xff]
  %v164 = vld [vmem:[%s1 + $0x418] sm:$0xff]
  %v165 = vld [vmem:[%s1 + $0x420] sm:$0xff]
  %v166 = vld [vmem:[%s1 + $0x428] sm:$0xff]
  %v167 = vld [vmem:[%s1 + $0x430] sm:$0xff]
  %v168 = vld [vmem:[%s1 + $0x438] sm:$0xff]
  %v169 = vld [vmem:[%s1 + $0x440] sm:$0xff]
  %v170 = vld [vmem:[%s1 + $0x448] sm:$0xff]
  %v171 = vld [vmem:[%s1 + $0x450] sm:$0xff]
  %v172 = vld [vmem:[%s1 + $0x458] sm:$0xff]
  %v173 = vld [vmem:[%s1 + $0x460] sm:$0xff]
  %v174 = vld [vmem:[%s1 + $0x468] sm:$0xff]
  %v175 = vld [vmem:[%s1 + $0x470] sm:$0xff]
  %v176 = vld [vmem:[%s1 + $0x478] sm:$0xff]
  %v177 = vld [vmem:[%s1 + $0x480] sm:$0xff]
  %v178 = vld [vmem:[%s1 + $0x488] sm:$0xff]
  %v179 = vld [vmem:[%s1 + $0x490] sm:$0xff]
  %v180 = vld [vmem:[%s1 + $0x498] sm:$0xff]
  %v181 = vld [vmem:[%s1 + $0x4a0] sm:$0xff]
  %v182 = vld [vmem:[%s1 + $0x4a8] sm:$0xff]
  %v183 = vld [vmem:[%s1 + $0x4b0] sm:$0xff]
  %v184 = vld [vmem:[%s1 + $0x4b8] sm:$0xff]
  %v185 = vld [vmem:[%s1 + $0x4c0] sm:$0xff]
  %v186 = vld [vmem:[%s1 + $0x4c8] sm:$0xff]
  %v187 = vld [vmem:[%s1 + $0x4d0] sm:$0xff]
  %v188 = vld [vmem:[%s1 + $0x4d8] sm:$0xff]
  %v189 = vld [vmem:[%s1 + $0x4e0] sm:$0xff]
  %v190 = vld [vmem:[%s1 + $0x4e8] sm:$0xff]
  %v191 = vld [vmem:[%s1 + $0x4f0] sm:$0xff]
  %v192 = vld [vmem:[%s1 + $0x4f8] sm:$0xff]
  %v193 = vld [vmem:[%s1 + $0x500] sm:$0xff]
  %v194 = vld [vmem:[%s1 + $0x508] sm:$0xff]
  %v195 = vld [vmem:[%s1 + $0x510] sm:$0xff]
  %v196 = vld [vmem:[%s1 + $0x518] sm:$0xff]
  %v197 = vld [vmem:[%s1 + $0x520] sm:$0xff]
  %v198 = vld [vmem:[%s1 + $0x528] sm:$0xff]
  %v199 = vld [vmem:[%s1 + $0x530] sm:$0xff]
  %v200 = vld [vmem:[%s1 + $0x538] sm:$0xff]
  %v201 = vld [vmem:[%s1 + $0x540] sm:$0xff]
  %v202 = vld [vmem:[%s1 + $0x548] sm:$0xff]
  %v203 = vld [vmem:[%s1 + $0x550] sm:$0xff]
  %v204 = vld [vmem:[%s1 + $0x558] sm:$0xff]
  %v205 = vld [vmem:[%s1 + $0x560] sm:$0xff]
  %v206 = vld [vmem:[%s1 + $0x568] sm:$0xff]
  %v207 = vld [vmem:[%s1 + $0x570] sm:$0xff]
  %v208 = vld [vmem:[%s1 + $0x578] sm:$0xff]
  %v209 = vld [vmem:[%s1 + $0x580] sm:$0xff]
  %v210 = vld [vmem:[%s1 + $0x588] sm:$0xff]
  %v211 = vld [vmem:[%s1 + $0x590] sm:$0xff]
  %v212 = vld [vmem:[%s1 + $0x598] sm:$0xff]
  %v213 = vld [vmem:[%s1 + $0x5a0] sm:$0xff]
  %v214 = vld [vmem:[%s1 + $0x5a8] sm:$0xff]
  %v215 = vld [vmem:[%s1 + $0x5b0] sm:$0xff]
  %v216 = vld [vmem:[%s1 + $0x5b8] sm:$0xff]
  %v217 = vld [vmem:[%s1 + $0x5c0] sm:$0xff]
  %v218 = vld [vmem:[%s1 + $0x5c8] sm:$0xff]
  %v219 = vld [vmem:[%s1 + $0x5d0] sm:$0xff]
  %v220 = vld [vmem:[%s1 + $0x5d8] sm:$0xff]
  %v221 = vld [vmem:[%s1 + $0x5e0] sm:$0xff]
  %v222 = vld [vmem:[%s1 + $0x5e8] sm:$0xff]
  %v223 = vld [vmem:[%s1 + $0x5f0] sm:$0xff]
  %v224 = vld [vmem:[%s1 + $0x5f8] sm:$0xff]
  %v225 = vld [vmem:[%s1 + $0x600] sm:$0xff]
  %v226 = vld [vmem:[%s1 + $0x608] sm:$0xff]
  %v227 = vld [vmem:[%s1 + $0x610] sm:$0xff]
  %v228 = vld [vmem:[%s1 + $0x618] sm:$0xff]
  %v229 = vld [vmem:[%s1 + $0x620] sm:$0xff]
  %v230 = vld [vmem:[%s1 + $0x628] sm:$0xff]
  %v231 = vld [vmem:[%s1 + $0x630] sm:$0xff]
  %v232 = vld [vmem:[%s1 + $0x638] sm:$0xff]
  %v233 = vld [vmem:[%s1 + $0x640] sm:$0xff]
  %v234 = vld [vmem:[%s1 + $0x648] sm:$0xff]
  %v235 = vld [vmem:[%s1 + $0x650] sm:$0xff]
  %v236 = vld [vmem:[%s1 + $0x658] sm:$0xff]
  %v237 = vld [vmem:[%s1 + $0x660] sm:$0xff]
  %v238 = vld [vmem:[%s1 + $0x668] sm:$0xff]
  %v239 = vld [vmem:[%s1 + $0x670] sm:$0xff]
  %v240 = vld [vmem:[%s1 + $0x678] sm:$0xff]
  %v241 = vld [vmem:[%s1 + $0x680] sm:$0xff]
  %v242 = vld [vmem:[%s1 + $0x688] sm:$0xff]
  %v243 = vld [vmem:[%s1 + $0x690] sm:$0xff]
  %v244 = vld [vmem:[%s1 + $0x698] sm:$0xff]
  %v245 = vld [vmem:[%s1 + $0x6a0] sm:$0xff]
  %v246 = vld [vmem:[%s1 + $0x6a8] sm:$0xff]
  %v247 = vld [vmem:[%s1 + $0x6b0] sm:$0xff]
  %v248 = vld [vmem:[%s1 + $0x6b8] sm:$0xff]
  %v249 = vld [vmem:[%s1 + $0x6c0] sm:$0xff]
  %v250 = vld [vmem:[%s1 + $0x6c8] sm:$0xff]
  %v251 = vld [vmem:[%s1 + $0x6d0] sm:$0xff]
  %v252 = vld [vmem:[%s1 + $0x6d8] sm:$0xff]
  %v253 = vld [vmem:[%s1 + $0x6e0] sm:$0xff]
  %v254 = vld [vmem:[%s1 + $0x6e8] sm:$0xff]
  %v255 = vld [vmem:[%s1 + $0x6f0] sm:$0xff]
  %v256 = vld [vmem:[%s1 + $0x6f8] sm:$0xff]
  %v257 = vld [vmem:[%s1 + $0x700] sm:$0xff]
  %v258 = vld [vmem:[%s1 + $0x708] sm:$0xff]
  %v259 = vld [vmem:[%s1 + $0x710] sm:$0xff]
  %v260 = vld [vmem:[%s1 + $0x718] sm:$0xff]
  %v261 = vld [vmem:[%s1 + $0x720] sm:$0xff]
  %v262 = vld [vmem:[%s1 + $0x728] sm:$0xff]
  %v263 = vld [vmem:[%s1 + $0x730] sm:$0xff]
  %v264 = vld [vmem:[%s1 + $0x738] sm:$0xff]
  %v265 = vld [vmem:[%s1 + $0x740] sm:$0xff]
  %v266 = vld [vmem:[%s1 + $0x748] sm:$0xff]
  %v267 = vld [vmem:[%s1 + $0x750] sm:$0xff]
  %v268 = vld [vmem:[%s1 + $0x758] sm:$0xff]
  %v269 = vld [vmem:[%s1 + $0x760] sm:$0xff]
  %v270 = vld [vmem:[%s1 + $0x768] sm:$0xff]
  %v271 = vld [vmem:[%s1 + $0x770] sm:$0xff]
  %v272 = vld [vmem:[%s1 + $0x778] sm:$0xff]
  %v273 = vld [vmem:[%s1 + $0x780] sm:$0xff]
  %v274 = vld [vmem:[%s1 + $0x788] sm:$0xff]
  %v275 = vld [vmem:[%s1 + $0x790] sm:$0xff]
  %v276 = vld [vmem:[%s1 + $0x798] sm:$0xff]
  %v277 = vld [vmem:[%s1 + $0x7a0] sm:$0xff]
  %v278 = vld [vmem:[%s1 + $0x7a8] sm:$0xff]
  %v279 = vld [vmem:[%s1 + $0x7b0] sm:$0xff]
  %v280 = vld [vmem:[%s1 + $0x7b8] sm:$0xff]
  %v281 = vld [vmem:[%s1 + $0x7c0] sm:$0xff]
  %v282 = vld [vmem:[%s1 + $0x7c8] sm:$0xff]
  %v283 = vld [vmem:[%s1 + $0x7d0] sm:$0xff]
  %v284 = vld [vmem:[%s1 + $0x7d8] sm:$0xff]
  %v285 = vld [vmem:[%s1 + $0x7e0] sm:$0xff]
  %v286 = vld [vmem:[%s1 + $0x7e8] sm:$0xff]
  %v287 = vld [vmem:[%s1 + $0x7f0] sm:$0xff]
  %v288 = vld [vmem:[%s1 + $0x7f8] sm:$0xff]
  %v289 = vld [vmem:[%s1 + $0x800] sm:$0xff]
  %v290 = vld [vmem:[%s1 + $0x808] sm:$0xff]
  %v291 = vld [vmem:[%s1 + $0x810] sm:$0xff]
  %v292 = vld [vmem:[%s1 + $0x818] sm:$0xff]
  %v293 = vld [vmem:[%s1 + $0x820] sm:$0xff]
  %v294 = vld [vmem:[%s1 + $0x828] sm:$0xff]
  %v295 = vld [vmem:[%s1 + $0x830] sm:$0xff]
  %v296 = vld [vmem:[%s1 + $0x838] sm:$0xff]
  %v297 = vld [vmem:[%s1 + $0x840] sm:$0xff]
  %v298 = vld [vmem:[%s1 + $0x848] sm:$0xff]
  %v299 = vld [vmem:[%s1 + $0x850] sm:$0xff]
  %v300 = vld [vmem:[%s1 + $0x858] sm:$0xff]
  %v301 = vld [vmem:[%s1 + $0x860] sm:$0xff]
  %v302 = vld [vmem:[%s1 + $0x868] sm:$0xff]
  %v303 = vld [vmem:[%s1 + $0x870] sm:$0xff]
  %v304 = vld [vmem:[%s1 + $0x878] sm:$0xff]
  %v305 = vld [vmem:[%s1 + $0x880] sm:$0xff]
  %v306 = vld [vmem:[%s1 + $0x888] sm:$0xff]
  %v307 = vld [vmem:[%s1 + $0x890] sm:$0xff]
  %v308 = vld [vmem:[%s1 + $0x898] sm:$0xff]
  %v309 = vld [vmem:[%s1 + $0x8a0] sm:$0xff]
  %v310 = vld [vmem:[%s1 + $0x8a8] sm:$0xff]
  %v311 = vld [vmem:[%s1 + $0x8b0] sm:$0xff]
  %v312 = vld [vmem:[%s1 + $0x8b8] sm:$0xff]
  %v313 = vld [vmem:[%s1 + $0x8c0] sm:$0xff]
  %v314 = vld [vmem:[%s1 + $0x8c8] sm:$0xff]
  %v315 = vld [vmem:[%s1 + $0x8d0] sm:$0xff]
  %v316 = vld [vmem:[%s1 + $0x8d8] sm:$0xff]
  %v317 = vld [vmem:[%s1 + $0x8e0] sm:$0xff]
  %v318 = vld [vmem:[%s1 + $0x8e8] sm:$0xff]
  %v319 = vld [vmem:[%s1 + $0x8f0] sm:$0xff]
  %v320 = vld [vmem:[%s1 + $0x8f8] sm:$0xff]
  %v341 = vunpack.c.l.b16 %v13
  %v342 = vunpack.c.h.b16 %v13
  %v343 = vunpack.c.l.b16 %v14
  %v344 = vunpack.c.h.b16 %v14
  %v345 = vunpack.c.l.b16 %v15
  %v346 = vunpack.c.h.b16 %v15
  %v347 = vunpack.c.l.b16 %v16
  %v348 = vunpack.c.h.b16 %v16
  %v349 = vunpack.c.l.b16 %v17
  %v350 = vunpack.c.l.b16 %v18
  %v351 = vunpack.c.h.b16 %v18
  %v352 = vunpack.c.l.b16 %v19
  %v353 = vunpack.c.h.b16 %v19
  %v354 = vunpack.c.l.b16 %v20
  %v355 = vunpack.c.h.b16 %v20
  %v356 = vunpack.c.l.b16 %v21
  %v357 = vunpack.c.h.b16 %v21
  %v358 = vunpack.c.l.b16 %v22
  %v359 = vunpack.c.l.b16 %v23
  %v360 = vunpack.c.h.b16 %v23
  %v361 = vunpack.c.l.b16 %v24
  %v362 = vunpack.c.h.b16 %v24
  %v363 = vunpack.c.l.b16 %v25
  %v364 = vunpack.c.h.b16 %v25
  %v365 = vunpack.c.l.b16 %v26
  %v366 = vunpack.c.h.b16 %v26
  %v367 = vunpack.c.l.b16 %v27
  %v368 = vunpack.c.l.b16 %v28
  %v369 = vunpack.c.h.b16 %v28
  %v370 = vunpack.c.l.b16 %v29
  %v371 = vunpack.c.h.b16 %v29
  %v372 = vunpack.c.l.b16 %v30
  %v373 = vunpack.c.h.b16 %v30
  %v374 = vunpack.c.l.b16 %v31
  %v375 = vunpack.c.h.b16 %v31
  %v376 = vunpack.c.l.b16 %v32
  %v377 = vpack.c.b16 %v350, %v341
  %v378 = vpack.c.b16 %v351, %v342
  %v379 = vpack.c.b16 %v352, %v343
  %v380 = vpack.c.b16 %v353, %v344
  %v381 = vpack.c.b16 %v354, %v345
  %v382 = vpack.c.b16 %v355, %v346
  %v383 = vpack.c.b16 %v356, %v347
  %v384 = vpack.c.b16 %v357, %v348
  %v385 = vpack.c.b16 %v358, %v349
  %v386 = vpack.c.b16 %v368, %v359
  %v387 = vpack.c.b16 %v369, %v360
  %v388 = vpack.c.b16 %v370, %v361
  %v389 = vpack.c.b16 %v371, %v362
  %v390 = vpack.c.b16 %v372, %v363
  %v391 = vpack.c.b16 %v373, %v364
  %v392 = vpack.c.b16 %v374, %v365
  %v393 = vpack.c.b16 %v375, %v366
  %v394 = vpack.c.b16 %v376, %v367
  %v701 = vunpack.c.l.b16 %v33
  %v702 = vunpack.c.h.b16 %v33
  %v703 = vunpack.c.l.b16 %v34
  %v704 = vunpack.c.h.b16 %v34
  %v705 = vunpack.c.l.b16 %v35
  %v706 = vunpack.c.h.b16 %v35
  %v707 = vunpack.c.l.b16 %v36
  %v708 = vunpack.c.h.b16 %v36
  %v709 = vunpack.c.l.b16 %v37
  %v710 = vunpack.c.h.b16 %v37
  %v711 = vunpack.c.l.b16 %v38
  %v712 = vunpack.c.h.b16 %v38
  %v713 = vunpack.c.l.b16 %v39
  %v714 = vunpack.c.h.b16 %v39
  %v715 = vunpack.c.l.b16 %v40
  %v716 = vunpack.c.h.b16 %v40
  %v717 = vunpack.c.l.b16 %v41
  %v718 = vunpack.c.h.b16 %v41
  %v719 = vunpack.c.l.b16 %v42
  %v720 = vunpack.c.h.b16 %v42
  %v721 = vunpack.c.l.b16 %v43
  %v722 = vunpack.c.h.b16 %v43
  %v723 = vunpack.c.l.b16 %v44
  %v724 = vunpack.c.h.b16 %v44
  %v725 = vunpack.c.l.b16 %v45
  %v726 = vunpack.c.h.b16 %v45
  %v727 = vunpack.c.l.b16 %v46
  %v728 = vunpack.c.h.b16 %v46
  %v729 = vunpack.c.l.b16 %v47
  %v730 = vunpack.c.h.b16 %v47
  %v731 = vunpack.c.l.b16 %v48
  %v732 = vunpack.c.h.b16 %v48
  %v733 = vunpack.c.l.b16 %v49
  %v734 = vunpack.c.h.b16 %v49
  %v735 = vunpack.c.l.b16 %v50
  %v736 = vunpack.c.h.b16 %v50
  %v737 = vunpack.c.l.b16 %v51
  %v738 = vunpack.c.h.b16 %v51
  %v739 = vunpack.c.l.b16 %v52
  %v740 = vunpack.c.h.b16 %v52
  %v741 = vunpack.c.l.b16 %v53
  %v742 = vunpack.c.h.b16 %v53
  %v743 = vunpack.c.l.b16 %v54
  %v744 = vunpack.c.h.b16 %v54
  %v745 = vunpack.c.l.b16 %v55
  %v746 = vunpack.c.h.b16 %v55
  %v747 = vunpack.c.l.b16 %v56
  %v748 = vunpack.c.h.b16 %v56
  %v749 = vunpack.c.l.b16 %v57
  %v750 = vunpack.c.h.b16 %v57
  %v751 = vunpack.c.l.b16 %v58
  %v752 = vunpack.c.h.b16 %v58
  %v753 = vunpack.c.l.b16 %v59
  %v754 = vunpack.c.h.b16 %v59
  %v755 = vunpack.c.l.b16 %v60
  %v756 = vunpack.c.h.b16 %v60
  %v757 = vunpack.c.l.b16 %v61
  %v758 = vunpack.c.h.b16 %v61
  %v759 = vunpack.c.l.b16 %v62
  %v760 = vunpack.c.h.b16 %v62
  %v761 = vunpack.c.l.b16 %v63
  %v762 = vunpack.c.h.b16 %v63
  %v763 = vunpack.c.l.b16 %v64
  %v764 = vunpack.c.h.b16 %v64
  %v765 = vunpack.c.l.b16 %v65
  %v766 = vunpack.c.h.b16 %v65
  %v767 = vunpack.c.l.b16 %v66
  %v768 = vunpack.c.h.b16 %v66
  %v769 = vunpack.c.l.b16 %v67
  %v770 = vunpack.c.h.b16 %v67
  %v771 = vunpack.c.l.b16 %v68
  %v772 = vunpack.c.h.b16 %v68
  %v773 = vunpack.c.l.b16 %v69
  %v774 = vunpack.c.h.b16 %v69
  %v775 = vunpack.c.l.b16 %v70
  %v776 = vunpack.c.h.b16 %v70
  %v777 = vunpack.c.l.b16 %v71
  %v778 = vunpack.c.h.b16 %v71
  %v779 = vunpack.c.l.b16 %v72
  %v780 = vunpack.c.h.b16 %v72
  %v781 = vunpack.c.l.b16 %v73
  %v782 = vunpack.c.h.b16 %v73
  %v783 = vunpack.c.l.b16 %v74
  %v784 = vunpack.c.h.b16 %v74
  %v785 = vunpack.c.l.b16 %v75
  %v786 = vunpack.c.h.b16 %v75
  %v787 = vunpack.c.l.b16 %v76
  %v788 = vunpack.c.h.b16 %v76
  %v789 = vunpack.c.l.b16 %v77
  %v790 = vunpack.c.h.b16 %v77
  %v791 = vunpack.c.l.b16 %v78
  %v792 = vunpack.c.h.b16 %v78
  %v793 = vunpack.c.l.b16 %v79
  %v794 = vunpack.c.h.b16 %v79
  %v795 = vunpack.c.l.b16 %v80
  %v796 = vunpack.c.h.b16 %v80
  %v797 = vunpack.c.l.b16 %v81
  %v798 = vunpack.c.h.b16 %v81
  %v799 = vunpack.c.l.b16 %v82
  %v800 = vunpack.c.h.b16 %v82
  %v801 = vunpack.c.l.b16 %v83
  %v802 = vunpack.c.h.b16 %v83
  %v803 = vunpack.c.l.b16 %v84
  %v804 = vunpack.c.h.b16 %v84
  %v805 = vunpack.c.l.b16 %v85
  %v806 = vunpack.c.h.b16 %v85
  %v807 = vunpack.c.l.b16 %v86
  %v808 = vunpack.c.h.b16 %v86
  %v809 = vunpack.c.l.b16 %v87
  %v810 = vunpack.c.h.b16 %v87
  %v811 = vunpack.c.l.b16 %v88
  %v812 = vunpack.c.h.b16 %v88
  %v813 = vunpack.c.l.b16 %v89
  %v814 = vunpack.c.h.b16 %v89
  %v815 = vunpack.c.l.b16 %v90
  %v816 = vunpack.c.h.b16 %v90
  %v817 = vunpack.c.l.b16 %v91
  %v818 = vunpack.c.h.b16 %v91
  %v819 = vunpack.c.l.b16 %v92
  %v820 = vunpack.c.h.b16 %v92
  %v821 = vunpack.c.l.b16 %v93
  %v822 = vunpack.c.h.b16 %v93
  %v823 = vunpack.c.l.b16 %v94
  %v824 = vunpack.c.h.b16 %v94
  %v825 = vunpack.c.l.b16 %v95
  %v826 = vunpack.c.h.b16 %v95
  %v827 = vunpack.c.l.b16 %v96
  %v828 = vunpack.c.h.b16 %v96
  %v829 = vunpack.c.l.b16 %v97
  %v830 = vunpack.c.h.b16 %v97
  %v831 = vunpack.c.l.b16 %v98
  %v832 = vunpack.c.h.b16 %v98
  %v833 = vunpack.c.l.b16 %v99
  %v834 = vunpack.c.h.b16 %v99
  %v835 = vunpack.c.l.b16 %v100
  %v836 = vunpack.c.h.b16 %v100
  %v837 = vunpack.c.l.b16 %v101
  %v838 = vunpack.c.h.b16 %v101
  %v839 = vunpack.c.l.b16 %v102
  %v840 = vunpack.c.h.b16 %v102
  %v841 = vunpack.c.l.b16 %v103
  %v842 = vunpack.c.h.b16 %v103
  %v843 = vunpack.c.l.b16 %v104
  %v844 = vunpack.c.h.b16 %v104
  %v845 = vunpack.c.l.b16 %v105
  %v846 = vunpack.c.h.b16 %v105
  %v847 = vunpack.c.l.b16 %v106
  %v848 = vunpack.c.h.b16 %v106
  %v849 = vunpack.c.l.b16 %v107
  %v850 = vunpack.c.h.b16 %v107
  %v851 = vunpack.c.l.b16 %v108
  %v852 = vunpack.c.h.b16 %v108
  %v853 = vunpack.c.l.b16 %v109
  %v854 = vunpack.c.h.b16 %v109
  %v855 = vunpack.c.l.b16 %v110
  %v856 = vunpack.c.h.b16 %v110
  %v857 = vunpack.c.l.b16 %v111
  %v858 = vunpack.c.h.b16 %v111
  %v859 = vunpack.c.l.b16 %v112
  %v860 = vunpack.c.h.b16 %v112
  %v861 = vunpack.c.l.b16 %v113
  %v862 = vunpack.c.h.b16 %v113
  %v863 = vunpack.c.l.b16 %v114
  %v864 = vunpack.c.h.b16 %v114
  %v865 = vunpack.c.l.b16 %v115
  %v866 = vunpack.c.h.b16 %v115
  %v867 = vunpack.c.l.b16 %v116
  %v868 = vunpack.c.h.b16 %v116
  %v869 = vunpack.c.l.b16 %v117
  %v870 = vunpack.c.h.b16 %v117
  %v871 = vunpack.c.l.b16 %v118
  %v872 = vunpack.c.h.b16 %v118
  %v873 = vunpack.c.l.b16 %v119
  %v874 = vunpack.c.h.b16 %v119
  %v875 = vunpack.c.l.b16 %v120
  %v876 = vunpack.c.h.b16 %v120
  %v877 = vunpack.c.l.b16 %v121
  %v878 = vunpack.c.h.b16 %v121
  %v879 = vunpack.c.l.b16 %v122
  %v880 = vunpack.c.h.b16 %v122
  %v881 = vunpack.c.l.b16 %v123
  %v882 = vunpack.c.h.b16 %v123
  %v883 = vunpack.c.l.b16 %v124
  %v884 = vunpack.c.h.b16 %v124
  %v885 = vunpack.c.l.b16 %v125
  %v886 = vunpack.c.h.b16 %v125
  %v887 = vunpack.c.l.b16 %v126
  %v888 = vunpack.c.h.b16 %v126
  %v889 = vunpack.c.l.b16 %v127
  %v890 = vunpack.c.h.b16 %v127
  %v891 = vunpack.c.l.b16 %v128
  %v892 = vunpack.c.h.b16 %v128
  %v893 = vunpack.c.l.b16 %v129
  %v894 = vunpack.c.h.b16 %v129
  %v895 = vunpack.c.l.b16 %v130
  %v896 = vunpack.c.h.b16 %v130
  %v897 = vunpack.c.l.b16 %v131
  %v898 = vunpack.c.h.b16 %v131
  %v899 = vunpack.c.l.b16 %v132
  %v900 = vunpack.c.h.b16 %v132
  %v901 = vunpack.c.l.b16 %v133
  %v902 = vunpack.c.h.b16 %v133
  %v903 = vunpack.c.l.b16 %v134
  %v904 = vunpack.c.h.b16 %v134
  %v905 = vunpack.c.l.b16 %v135
  %v906 = vunpack.c.h.b16 %v135
  %v907 = vunpack.c.l.b16 %v136
  %v908 = vunpack.c.h.b16 %v136
  %v909 = vunpack.c.l.b16 %v137
  %v910 = vunpack.c.h.b16 %v137
  %v911 = vunpack.c.l.b16 %v138
  %v912 = vunpack.c.h.b16 %v138
  %v913 = vunpack.c.l.b16 %v139
  %v914 = vunpack.c.h.b16 %v139
  %v915 = vunpack.c.l.b16 %v140
  %v916 = vunpack.c.h.b16 %v140
  %v917 = vunpack.c.l.b16 %v141
  %v918 = vunpack.c.h.b16 %v141
  %v919 = vunpack.c.l.b16 %v142
  %v920 = vunpack.c.h.b16 %v142
  %v921 = vunpack.c.l.b16 %v143
  %v922 = vunpack.c.h.b16 %v143
  %v923 = vunpack.c.l.b16 %v144
  %v924 = vunpack.c.h.b16 %v144
  %v925 = vunpack.c.l.b16 %v145
  %v926 = vunpack.c.h.b16 %v145
  %v927 = vunpack.c.l.b16 %v146
  %v928 = vunpack.c.h.b16 %v146
  %v929 = vunpack.c.l.b16 %v147
  %v930 = vunpack.c.h.b16 %v147
  %v931 = vunpack.c.l.b16 %v148
  %v932 = vunpack.c.h.b16 %v148
  %v933 = vunpack.c.l.b16 %v149
  %v934 = vunpack.c.h.b16 %v149
  %v935 = vunpack.c.l.b16 %v150
  %v936 = vunpack.c.h.b16 %v150
  %v937 = vunpack.c.l.b16 %v151
  %v938 = vunpack.c.h.b16 %v151
  %v939 = vunpack.c.l.b16 %v152
  %v940 = vunpack.c.h.b16 %v152
  %v941 = vunpack.c.l.b16 %v153
  %v942 = vunpack.c.h.b16 %v153
  %v943 = vunpack.c.l.b16 %v154
  %v944 = vunpack.c.h.b16 %v154
  %v945 = vunpack.c.l.b16 %v155
  %v946 = vunpack.c.h.b16 %v155
  %v947 = vunpack.c.l.b16 %v156
  %v948 = vunpack.c.h.b16 %v156
  %v949 = vunpack.c.l.b16 %v157
  %v950 = vunpack.c.h.b16 %v157
  %v951 = vunpack.c.l.b16 %v158
  %v952 = vunpack.c.h.b16 %v158
  %v953 = vunpack.c.l.b16 %v159
  %v954 = vunpack.c.h.b16 %v159
  %v955 = vunpack.c.l.b16 %v160
  %v956 = vunpack.c.h.b16 %v160
  %v957 = vunpack.c.l.b16 %v161
  %v958 = vunpack.c.h.b16 %v161
  %v959 = vunpack.c.l.b16 %v162
  %v960 = vunpack.c.h.b16 %v162
  %v961 = vunpack.c.l.b16 %v163
  %v962 = vunpack.c.h.b16 %v163
  %v963 = vunpack.c.l.b16 %v164
  %v964 = vunpack.c.h.b16 %v164
  %v965 = vunpack.c.l.b16 %v165
  %v966 = vunpack.c.h.b16 %v165
  %v967 = vunpack.c.l.b16 %v166
  %v968 = vunpack.c.h.b16 %v166
  %v969 = vunpack.c.l.b16 %v167
  %v970 = vunpack.c.h.b16 %v167
  %v971 = vunpack.c.l.b16 %v168
  %v972 = vunpack.c.h.b16 %v168
  %v973 = vunpack.c.l.b16 %v169
  %v974 = vunpack.c.h.b16 %v169
  %v975 = vunpack.c.l.b16 %v170
  %v976 = vunpack.c.h.b16 %v170
  %v977 = vunpack.c.l.b16 %v171
  %v978 = vunpack.c.h.b16 %v171
  %v979 = vunpack.c.l.b16 %v172
  %v980 = vunpack.c.h.b16 %v172
  %v981 = vunpack.c.l.b16 %v173
  %v982 = vunpack.c.h.b16 %v173
  %v983 = vunpack.c.l.b16 %v174
  %v984 = vunpack.c.h.b16 %v174
  %v985 = vunpack.c.l.b16 %v175
  %v986 = vunpack.c.h.b16 %v175
  %v987 = vunpack.c.l.b16 %v176
  %v988 = vunpack.c.h.b16 %v176
  %v989 = vunpack.c.l.b16 %v177
  %v990 = vunpack.c.h.b16 %v177
  %v991 = vunpack.c.l.b16 %v178
  %v992 = vunpack.c.h.b16 %v178
  %v993 = vunpack.c.l.b16 %v179
  %v994 = vunpack.c.h.b16 %v179
  %v995 = vunpack.c.l.b16 %v180
  %v996 = vunpack.c.h.b16 %v180
  %v997 = vunpack.c.l.b16 %v181
  %v998 = vunpack.c.h.b16 %v181
  %v999 = vunpack.c.l.b16 %v182
  %v1000 = vunpack.c.h.b16 %v182
  %v1001 = vunpack.c.l.b16 %v183
  %v1002 = vunpack.c.h.b16 %v183
  %v1003 = vunpack.c.l.b16 %v184
  %v1004 = vunpack.c.h.b16 %v184
  %v1005 = vunpack.c.l.b16 %v185
  %v1006 = vunpack.c.h.b16 %v185
  %v1007 = vunpack.c.l.b16 %v186
  %v1008 = vunpack.c.h.b16 %v186
  %v1009 = vunpack.c.l.b16 %v187
  %v1010 = vunpack.c.h.b16 %v187
  %v1011 = vunpack.c.l.b16 %v188
  %v1012 = vunpack.c.h.b16 %v188
  %v1013 = vunpack.c.l.b16 %v189
  %v1014 = vunpack.c.h.b16 %v189
  %v1015 = vunpack.c.l.b16 %v190
  %v1016 = vunpack.c.h.b16 %v190
  %v1017 = vunpack.c.l.b16 %v191
  %v1018 = vunpack.c.h.b16 %v191
  %v1019 = vunpack.c.l.b16 %v192
  %v1020 = vunpack.c.h.b16 %v192
  %v1021 = vunpack.c.l.b16 %v193
  %v1022 = vunpack.c.h.b16 %v193
  %v1023 = vunpack.c.l.b16 %v194
  %v1024 = vunpack.c.h.b16 %v194
  %v1025 = vunpack.c.l.b16 %v195
  %v1026 = vunpack.c.h.b16 %v195
  %v1027 = vunpack.c.l.b16 %v196
  %v1028 = vunpack.c.h.b16 %v196
  %v1029 = vunpack.c.l.b16 %v197
  %v1030 = vunpack.c.h.b16 %v197
  %v1031 = vunpack.c.l.b16 %v198
  %v1032 = vunpack.c.h.b16 %v198
  %v1033 = vunpack.c.l.b16 %v199
  %v1034 = vunpack.c.h.b16 %v199
  %v1035 = vunpack.c.l.b16 %v200
  %v1036 = vunpack.c.h.b16 %v200
  %v1037 = vunpack.c.l.b16 %v201
  %v1038 = vunpack.c.h.b16 %v201
  %v1039 = vunpack.c.l.b16 %v202
  %v1040 = vunpack.c.h.b16 %v202
  %v1041 = vunpack.c.l.b16 %v203
  %v1042 = vunpack.c.h.b16 %v203
  %v1043 = vunpack.c.l.b16 %v204
  %v1044 = vunpack.c.h.b16 %v204
  %v1045 = vunpack.c.l.b16 %v205
  %v1046 = vunpack.c.h.b16 %v205
  %v1047 = vunpack.c.l.b16 %v206
  %v1048 = vunpack.c.h.b16 %v206
  %v1049 = vunpack.c.l.b16 %v207
  %v1050 = vunpack.c.h.b16 %v207
  %v1051 = vunpack.c.l.b16 %v208
  %v1052 = vunpack.c.h.b16 %v208
  %v1053 = vunpack.c.l.b16 %v209
  %v1054 = vunpack.c.h.b16 %v209
  %v1055 = vunpack.c.l.b16 %v210
  %v1056 = vunpack.c.h.b16 %v210
  %v1057 = vunpack.c.l.b16 %v211
  %v1058 = vunpack.c.h.b16 %v211
  %v1059 = vunpack.c.l.b16 %v212
  %v1060 = vunpack.c.h.b16 %v212
  %v1061 = vunpack.c.l.b16 %v213
  %v1062 = vunpack.c.h.b16 %v213
  %v1063 = vunpack.c.l.b16 %v214
  %v1064 = vunpack.c.h.b16 %v214
  %v1065 = vunpack.c.l.b16 %v215
  %v1066 = vunpack.c.h.b16 %v215
  %v1067 = vunpack.c.l.b16 %v216
  %v1068 = vunpack.c.h.b16 %v216
  %v1069 = vunpack.c.l.b16 %v217
  %v1070 = vunpack.c.h.b16 %v217
  %v1071 = vunpack.c.l.b16 %v218
  %v1072 = vunpack.c.h.b16 %v218
  %v1073 = vunpack.c.l.b16 %v219
  %v1074 = vunpack.c.h.b16 %v219
  %v1075 = vunpack.c.l.b16 %v220
  %v1076 = vunpack.c.h.b16 %v220
  %v1077 = vunpack.c.l.b16 %v221
  %v1078 = vunpack.c.h.b16 %v221
  %v1079 = vunpack.c.l.b16 %v222
  %v1080 = vunpack.c.h.b16 %v222
  %v1081 = vunpack.c.l.b16 %v223
  %v1082 = vunpack.c.h.b16 %v223
  %v1083 = vunpack.c.l.b16 %v224
  %v1084 = vunpack.c.h.b16 %v224
  %v1085 = vunpack.c.l.b16 %v225
  %v1086 = vunpack.c.h.b16 %v225
  %v1087 = vunpack.c.l.b16 %v226
  %v1088 = vunpack.c.h.b16 %v226
  %v1089 = vunpack.c.l.b16 %v227
  %v1090 = vunpack.c.h.b16 %v227
  %v1091 = vunpack.c.l.b16 %v228
  %v1092 = vunpack.c.h.b16 %v228
  %v1093 = vunpack.c.l.b16 %v229
  %v1094 = vunpack.c.h.b16 %v229
  %v1095 = vunpack.c.l.b16 %v230
  %v1096 = vunpack.c.h.b16 %v230
  %v1097 = vunpack.c.l.b16 %v231
  %v1098 = vunpack.c.h.b16 %v231
  %v1099 = vunpack.c.l.b16 %v232
  %v1100 = vunpack.c.h.b16 %v232
  %v1101 = vunpack.c.l.b16 %v233
  %v1102 = vunpack.c.h.b16 %v233
  %v1103 = vunpack.c.l.b16 %v234
  %v1104 = vunpack.c.h.b16 %v234
  %v1105 = vunpack.c.l.b16 %v235
  %v1106 = vunpack.c.h.b16 %v235
  %v1107 = vunpack.c.l.b16 %v236
  %v1108 = vunpack.c.h.b16 %v236
  %v1109 = vunpack.c.l.b16 %v237
  %v1110 = vunpack.c.h.b16 %v237
  %v1111 = vunpack.c.l.b16 %v238
  %v1112 = vunpack.c.h.b16 %v238
  %v1113 = vunpack.c.l.b16 %v239
  %v1114 = vunpack.c.h.b16 %v239
  %v1115 = vunpack.c.l.b16 %v240
  %v1116 = vunpack.c.h.b16 %v240
  %v1117 = vunpack.c.l.b16 %v241
  %v1118 = vunpack.c.h.b16 %v241
  %v1119 = vunpack.c.l.b16 %v242
  %v1120 = vunpack.c.h.b16 %v242
  %v1121 = vunpack.c.l.b16 %v243
  %v1122 = vunpack.c.h.b16 %v243
  %v1123 = vunpack.c.l.b16 %v244
  %v1124 = vunpack.c.h.b16 %v244
  %v1125 = vunpack.c.l.b16 %v245
  %v1126 = vunpack.c.h.b16 %v245
  %v1127 = vunpack.c.l.b16 %v246
  %v1128 = vunpack.c.h.b16 %v246
  %v1129 = vunpack.c.l.b16 %v247
  %v1130 = vunpack.c.h.b16 %v247
  %v1131 = vunpack.c.l.b16 %v248
  %v1132 = vunpack.c.h.b16 %v248
  %v1133 = vunpack.c.l.b16 %v249
  %v1134 = vunpack.c.h.b16 %v249
  %v1135 = vunpack.c.l.b16 %v250
  %v1136 = vunpack.c.h.b16 %v250
  %v1137 = vunpack.c.l.b16 %v251
  %v1138 = vunpack.c.h.b16 %v251
  %v1139 = vunpack.c.l.b16 %v252
  %v1140 = vunpack.c.h.b16 %v252
  %v1141 = vunpack.c.l.b16 %v253
  %v1142 = vunpack.c.h.b16 %v253
  %v1143 = vunpack.c.l.b16 %v254
  %v1144 = vunpack.c.h.b16 %v254
  %v1145 = vunpack.c.l.b16 %v255
  %v1146 = vunpack.c.h.b16 %v255
  %v1147 = vunpack.c.l.b16 %v256
  %v1148 = vunpack.c.h.b16 %v256
  %v1149 = vunpack.c.l.b16 %v257
  %v1150 = vunpack.c.h.b16 %v257
  %v1151 = vunpack.c.l.b16 %v258
  %v1152 = vunpack.c.h.b16 %v258
  %v1153 = vunpack.c.l.b16 %v259
  %v1154 = vunpack.c.h.b16 %v259
  %v1155 = vunpack.c.l.b16 %v260
  %v1156 = vunpack.c.h.b16 %v260
  %v1157 = vunpack.c.l.b16 %v261
  %v1158 = vunpack.c.h.b16 %v261
  %v1159 = vunpack.c.l.b16 %v262
  %v1160 = vunpack.c.h.b16 %v262
  %v1161 = vunpack.c.l.b16 %v263
  %v1162 = vunpack.c.h.b16 %v263
  %v1163 = vunpack.c.l.b16 %v264
  %v1164 = vunpack.c.h.b16 %v264
  %v1165 = vunpack.c.l.b16 %v265
  %v1166 = vunpack.c.h.b16 %v265
  %v1167 = vunpack.c.l.b16 %v266
  %v1168 = vunpack.c.h.b16 %v266
  %v1169 = vunpack.c.l.b16 %v267
  %v1170 = vunpack.c.h.b16 %v267
  %v1171 = vunpack.c.l.b16 %v268
  %v1172 = vunpack.c.h.b16 %v268
  %v1173 = vunpack.c.l.b16 %v269
  %v1174 = vunpack.c.h.b16 %v269
  %v1175 = vunpack.c.l.b16 %v270
  %v1176 = vunpack.c.h.b16 %v270
  %v1177 = vunpack.c.l.b16 %v271
  %v1178 = vunpack.c.h.b16 %v271
  %v1179 = vunpack.c.l.b16 %v272
  %v1180 = vunpack.c.h.b16 %v272
  %v1181 = vunpack.c.l.b16 %v273
  %v1182 = vunpack.c.h.b16 %v273
  %v1183 = vunpack.c.l.b16 %v274
  %v1184 = vunpack.c.h.b16 %v274
  %v1185 = vunpack.c.l.b16 %v275
  %v1186 = vunpack.c.h.b16 %v275
  %v1187 = vunpack.c.l.b16 %v276
  %v1188 = vunpack.c.h.b16 %v276
  %v1189 = vunpack.c.l.b16 %v277
  %v1190 = vunpack.c.h.b16 %v277
  %v1191 = vunpack.c.l.b16 %v278
  %v1192 = vunpack.c.h.b16 %v278
  %v1193 = vunpack.c.l.b16 %v279
  %v1194 = vunpack.c.h.b16 %v279
  %v1195 = vunpack.c.l.b16 %v280
  %v1196 = vunpack.c.h.b16 %v280
  %v1197 = vunpack.c.l.b16 %v281
  %v1198 = vunpack.c.h.b16 %v281
  %v1199 = vunpack.c.l.b16 %v282
  %v1200 = vunpack.c.h.b16 %v282
  %v1201 = vunpack.c.l.b16 %v283
  %v1202 = vunpack.c.h.b16 %v283
  %v1203 = vunpack.c.l.b16 %v284
  %v1204 = vunpack.c.h.b16 %v284
  %v1205 = vunpack.c.l.b16 %v285
  %v1206 = vunpack.c.h.b16 %v285
  %v1207 = vunpack.c.l.b16 %v286
  %v1208 = vunpack.c.h.b16 %v286
  %v1209 = vunpack.c.l.b16 %v287
  %v1210 = vunpack.c.h.b16 %v287
  %v1211 = vunpack.c.l.b16 %v288
  %v1212 = vunpack.c.h.b16 %v288
  %v1213 = vunpack.c.l.b16 %v289
  %v1214 = vunpack.c.h.b16 %v289
  %v1215 = vunpack.c.l.b16 %v290
  %v1216 = vunpack.c.h.b16 %v290
  %v1217 = vunpack.c.l.b16 %v291
  %v1218 = vunpack.c.h.b16 %v291
  %v1219 = vunpack.c.l.b16 %v292
  %v1220 = vunpack.c.h.b16 %v292
  %v1221 = vunpack.c.l.b16 %v293
  %v1222 = vunpack.c.h.b16 %v293
  %v1223 = vunpack.c.l.b16 %v294
  %v1224 = vunpack.c.h.b16 %v294
  %v1225 = vunpack.c.l.b16 %v295
  %v1226 = vunpack.c.h.b16 %v295
  %v1227 = vunpack.c.l.b16 %v296
  %v1228 = vunpack.c.h.b16 %v296
  %v1229 = vunpack.c.l.b16 %v297
  %v1230 = vunpack.c.h.b16 %v297
  %v1231 = vunpack.c.l.b16 %v298
  %v1232 = vunpack.c.h.b16 %v298
  %v1233 = vunpack.c.l.b16 %v299
  %v1234 = vunpack.c.h.b16 %v299
  %v1235 = vunpack.c.l.b16 %v300
  %v1236 = vunpack.c.h.b16 %v300
  %v1237 = vunpack.c.l.b16 %v301
  %v1238 = vunpack.c.h.b16 %v301
  %v1239 = vunpack.c.l.b16 %v302
  %v1240 = vunpack.c.h.b16 %v302
  %v1241 = vunpack.c.l.b16 %v303
  %v1242 = vunpack.c.h.b16 %v303
  %v1243 = vunpack.c.l.b16 %v304
  %v1244 = vunpack.c.h.b16 %v304
  %v1245 = vunpack.c.l.b16 %v305
  %v1246 = vunpack.c.h.b16 %v305
  %v1247 = vunpack.c.l.b16 %v306
  %v1248 = vunpack.c.h.b16 %v306
  %v1249 = vunpack.c.l.b16 %v307
  %v1250 = vunpack.c.h.b16 %v307
  %v1251 = vunpack.c.l.b16 %v308
  %v1252 = vunpack.c.h.b16 %v308
  %v1253 = vunpack.c.l.b16 %v309
  %v1254 = vunpack.c.h.b16 %v309
  %v1255 = vunpack.c.l.b16 %v310
  %v1256 = vunpack.c.h.b16 %v310
  %v1257 = vunpack.c.l.b16 %v311
  %v1258 = vunpack.c.h.b16 %v311
  %v1259 = vunpack.c.l.b16 %v312
  %v1260 = vunpack.c.h.b16 %v312
  %v1261 = vunpack.c.l.b16 %v313
  %v1262 = vunpack.c.h.b16 %v313
  %v1263 = vunpack.c.l.b16 %v314
  %v1264 = vunpack.c.h.b16 %v314
  %v1265 = vunpack.c.l.b16 %v315
  %v1266 = vunpack.c.h.b16 %v315
  %v1267 = vunpack.c.l.b16 %v316
  %v1268 = vunpack.c.h.b16 %v316
  %v1269 = vunpack.c.l.b16 %v317
  %v1270 = vunpack.c.h.b16 %v317
  %v1271 = vunpack.c.l.b16 %v318
  %v1272 = vunpack.c.h.b16 %v318
  %v1273 = vunpack.c.l.b16 %v319
  %v1274 = vunpack.c.h.b16 %v319
  %v1275 = vunpack.c.l.b16 %v320
  %v1276 = vunpack.c.h.b16 %v320
  %v1277 = vpack.c.b16 %v705, %v701
  %v1278 = vpack.c.b16 %v706, %v702
  %v1279 = vpack.c.b16 %v707, %v703
  %v1280 = vpack.c.b16 %v708, %v704
  %v1281 = vpack.c.b16 %v713, %v709
  %v1282 = vpack.c.b16 %v714, %v710
  %v1283 = vpack.c.b16 %v715, %v711
  %v1284 = vpack.c.b16 %v716, %v712
  %v1285 = vpack.c.b16 %v721, %v717
  %v1286 = vpack.c.b16 %v722, %v718
  %v1287 = vpack.c.b16 %v723, %v719
  %v1288 = vpack.c.b16 %v724, %v720
  %v1289 = vpack.c.b16 %v729, %v725
  %v1290 = vpack.c.b16 %v730, %v726
  %v1291 = vpack.c.b16 %v731, %v727
  %v1292 = vpack.c.b16 %v732, %v728
  %v1293 = vpack.c.b16 %v737, %v733
  %v1294 = vpack.c.b16 %v738, %v734
  %v1295 = vpack.c.b16 %v739, %v735
  %v1296 = vpack.c.b16 %v740, %v736
  %v1297 = vpack.c.b16 %v745, %v741
  %v1298 = vpack.c.b16 %v746, %v742
  %v1299 = vpack.c.b16 %v747, %v743
  %v1300 = vpack.c.b16 %v748, %v744
  %v1301 = vpack.c.b16 %v753, %v749
  %v1302 = vpack.c.b16 %v754, %v750
  %v1303 = vpack.c.b16 %v755, %v751
  %v1304 = vpack.c.b16 %v756, %v752
  %v1305 = vpack.c.b16 %v761, %v757
  %v1306 = vpack.c.b16 %v762, %v758
  %v1307 = vpack.c.b16 %v763, %v759
  %v1308 = vpack.c.b16 %v764, %v760
  %v1309 = vpack.c.b16 %v769, %v765
  %v1310 = vpack.c.b16 %v770, %v766
  %v1311 = vpack.c.b16 %v771, %v767
  %v1312 = vpack.c.b16 %v772, %v768
  %v1313 = vpack.c.b16 %v777, %v773
  %v1314 = vpack.c.b16 %v778, %v774
  %v1315 = vpack.c.b16 %v779, %v775
  %v1316 = vpack.c.b16 %v780, %v776
  %v1317 = vpack.c.b16 %v785, %v781
  %v1318 = vpack.c.b16 %v786, %v782
  %v1319 = vpack.c.b16 %v787, %v783
  %v1320 = vpack.c.b16 %v788, %v784
  %v1321 = vpack.c.b16 %v793, %v789
  %v1322 = vpack.c.b16 %v794, %v790
  %v1323 = vpack.c.b16 %v795, %v791
  %v1324 = vpack.c.b16 %v796, %v792
  %v1325 = vpack.c.b16 %v801, %v797
  %v1326 = vpack.c.b16 %v802, %v798
  %v1327 = vpack.c.b16 %v803, %v799
  %v1328 = vpack.c.b16 %v804, %v800
  %v1329 = vpack.c.b16 %v809, %v805
  %v1330 = vpack.c.b16 %v810, %v806
  %v1331 = vpack.c.b16 %v811, %v807
  %v1332 = vpack.c.b16 %v812, %v808
  %v1333 = vpack.c.b16 %v817, %v813
  %v1334 = vpack.c.b16 %v818, %v814
  %v1335 = vpack.c.b16 %v819, %v815
  %v1336 = vpack.c.b16 %v820, %v816
  %v1337 = vpack.c.b16 %v825, %v821
  %v1338 = vpack.c.b16 %v826, %v822
  %v1339 = vpack.c.b16 %v827, %v823
  %v1340 = vpack.c.b16 %v828, %v824
  %v1341 = vpack.c.b16 %v833, %v829
  %v1342 = vpack.c.b16 %v834, %v830
  %v1343 = vpack.c.b16 %v835, %v831
  %v1344 = vpack.c.b16 %v836, %v832
  %v1345 = vpack.c.b16 %v841, %v837
  %v1346 = vpack.c.b16 %v842, %v838
  %v1347 = vpack.c.b16 %v843, %v839
  %v1348 = vpack.c.b16 %v844, %v840
  %v1349 = vpack.c.b16 %v849, %v845
  %v1350 = vpack.c.b16 %v850, %v846
  %v1351 = vpack.c.b16 %v851, %v847
  %v1352 = vpack.c.b16 %v852, %v848
  %v1353 = vpack.c.b16 %v857, %v853
  %v1354 = vpack.c.b16 %v858, %v854
  %v1355 = vpack.c.b16 %v859, %v855
  %v1356 = vpack.c.b16 %v860, %v856
  %v1357 = vpack.c.b16 %v865, %v861
  %v1358 = vpack.c.b16 %v866, %v862
  %v1359 = vpack.c.b16 %v867, %v863
  %v1360 = vpack.c.b16 %v868, %v864
  %v1361 = vpack.c.b16 %v873, %v869
  %v1362 = vpack.c.b16 %v874, %v870
  %v1363 = vpack.c.b16 %v875, %v871
  %v1364 = vpack.c.b16 %v876, %v872
  %v1365 = vpack.c.b16 %v881, %v877
  %v1366 = vpack.c.b16 %v882, %v878
  %v1367 = vpack.c.b16 %v883, %v879
  %v1368 = vpack.c.b16 %v884, %v880
  %v1369 = vpack.c.b16 %v889, %v885
  %v1370 = vpack.c.b16 %v890, %v886
  %v1371 = vpack.c.b16 %v891, %v887
  %v1372 = vpack.c.b16 %v892, %v888
  %v1373 = vpack.c.b16 %v897, %v893
  %v1374 = vpack.c.b16 %v898, %v894
  %v1375 = vpack.c.b16 %v899, %v895
  %v1376 = vpack.c.b16 %v900, %v896
  %v1377 = vpack.c.b16 %v905, %v901
  %v1378 = vpack.c.b16 %v906, %v902
  %v1379 = vpack.c.b16 %v907, %v903
  %v1380 = vpack.c.b16 %v908, %v904
  %v1381 = vpack.c.b16 %v913, %v909
  %v1382 = vpack.c.b16 %v914, %v910
  %v1383 = vpack.c.b16 %v915, %v911
  %v1384 = vpack.c.b16 %v916, %v912
  %v1385 = vpack.c.b16 %v921, %v917
  %v1386 = vpack.c.b16 %v922, %v918
  %v1387 = vpack.c.b16 %v923, %v919
  %v1388 = vpack.c.b16 %v924, %v920
  %v1389 = vpack.c.b16 %v929, %v925
  %v1390 = vpack.c.b16 %v930, %v926
  %v1391 = vpack.c.b16 %v931, %v927
  %v1392 = vpack.c.b16 %v932, %v928
  %v1393 = vpack.c.b16 %v937, %v933
  %v1394 = vpack.c.b16 %v938, %v934
  %v1395 = vpack.c.b16 %v939, %v935
  %v1396 = vpack.c.b16 %v940, %v936
  %v1397 = vpack.c.b16 %v945, %v941
  %v1398 = vpack.c.b16 %v946, %v942
  %v1399 = vpack.c.b16 %v947, %v943
  %v1400 = vpack.c.b16 %v948, %v944
  %v1401 = vpack.c.b16 %v953, %v949
  %v1402 = vpack.c.b16 %v954, %v950
  %v1403 = vpack.c.b16 %v955, %v951
  %v1404 = vpack.c.b16 %v956, %v952
  %v1405 = vpack.c.b16 %v961, %v957
  %v1406 = vpack.c.b16 %v962, %v958
  %v1407 = vpack.c.b16 %v963, %v959
  %v1408 = vpack.c.b16 %v964, %v960
  %v1409 = vpack.c.b16 %v969, %v965
  %v1410 = vpack.c.b16 %v970, %v966
  %v1411 = vpack.c.b16 %v971, %v967
  %v1412 = vpack.c.b16 %v972, %v968
  %v1413 = vpack.c.b16 %v977, %v973
  %v1414 = vpack.c.b16 %v978, %v974
  %v1415 = vpack.c.b16 %v979, %v975
  %v1416 = vpack.c.b16 %v980, %v976
  %v1417 = vpack.c.b16 %v985, %v981
  %v1418 = vpack.c.b16 %v986, %v982
  %v1419 = vpack.c.b16 %v987, %v983
  %v1420 = vpack.c.b16 %v988, %v984
  %v1421 = vpack.c.b16 %v993, %v989
  %v1422 = vpack.c.b16 %v994, %v990
  %v1423 = vpack.c.b16 %v995, %v991
  %v1424 = vpack.c.b16 %v996, %v992
  %v1425 = vpack.c.b16 %v1001, %v997
  %v1426 = vpack.c.b16 %v1002, %v998
  %v1427 = vpack.c.b16 %v1003, %v999
  %v1428 = vpack.c.b16 %v1004, %v1000
  %v1429 = vpack.c.b16 %v1009, %v1005
  %v1430 = vpack.c.b16 %v1010, %v1006
  %v1431 = vpack.c.b16 %v1011, %v1007
  %v1432 = vpack.c.b16 %v1012, %v1008
  %v1433 = vpack.c.b16 %v1017, %v1013
  %v1434 = vpack.c.b16 %v1018, %v1014
  %v1435 = vpack.c.b16 %v1019, %v1015
  %v1436 = vpack.c.b16 %v1020, %v1016
  %v1437 = vpack.c.b16 %v1025, %v1021
  %v1438 = vpack.c.b16 %v1026, %v1022
  %v1439 = vpack.c.b16 %v1027, %v1023
  %v1440 = vpack.c.b16 %v1028, %v1024
  %v1441 = vpack.c.b16 %v1033, %v1029
  %v1442 = vpack.c.b16 %v1034, %v1030
  %v1443 = vpack.c.b16 %v1035, %v1031
  %v1444 = vpack.c.b16 %v1036, %v1032
  %v1445 = vpack.c.b16 %v1041, %v1037
  %v1446 = vpack.c.b16 %v1042, %v1038
  %v1447 = vpack.c.b16 %v1043, %v1039
  %v1448 = vpack.c.b16 %v1044, %v1040
  %v1449 = vpack.c.b16 %v1049, %v1045
  %v1450 = vpack.c.b16 %v1050, %v1046
  %v1451 = vpack.c.b16 %v1051, %v1047
  %v1452 = vpack.c.b16 %v1052, %v1048
  %v1453 = vpack.c.b16 %v1057, %v1053
  %v1454 = vpack.c.b16 %v1058, %v1054
  %v1455 = vpack.c.b16 %v1059, %v1055
  %v1456 = vpack.c.b16 %v1060, %v1056
  %v1457 = vpack.c.b16 %v1065, %v1061
  %v1458 = vpack.c.b16 %v1066, %v1062
  %v1459 = vpack.c.b16 %v1067, %v1063
  %v1460 = vpack.c.b16 %v1068, %v1064
  %v1461 = vpack.c.b16 %v1073, %v1069
  %v1462 = vpack.c.b16 %v1074, %v1070
  %v1463 = vpack.c.b16 %v1075, %v1071
  %v1464 = vpack.c.b16 %v1076, %v1072
  %v1465 = vpack.c.b16 %v1081, %v1077
  %v1466 = vpack.c.b16 %v1082, %v1078
  %v1467 = vpack.c.b16 %v1083, %v1079
  %v1468 = vpack.c.b16 %v1084, %v1080
  %v1469 = vpack.c.b16 %v1089, %v1085
  %v1470 = vpack.c.b16 %v1090, %v1086
  %v1471 = vpack.c.b16 %v1091, %v1087
  %v1472 = vpack.c.b16 %v1092, %v1088
  %v1473 = vpack.c.b16 %v1097, %v1093
  %v1474 = vpack.c.b16 %v1098, %v1094
  %v1475 = vpack.c.b16 %v1099, %v1095
  %v1476 = vpack.c.b16 %v1100, %v1096
  %v1477 = vpack.c.b16 %v1105, %v1101
  %v1478 = vpack.c.b16 %v1106, %v1102
  %v1479 = vpack.c.b16 %v1107, %v1103
  %v1480 = vpack.c.b16 %v1108, %v1104
  %v1481 = vpack.c.b16 %v1113, %v1109
  %v1482 = vpack.c.b16 %v1114, %v1110
  %v1483 = vpack.c.b16 %v1115, %v1111
  %v1484 = vpack.c.b16 %v1116, %v1112
  %v1485 = vpack.c.b16 %v1121, %v1117
  %v1486 = vpack.c.b16 %v1122, %v1118
  %v1487 = vpack.c.b16 %v1123, %v1119
  %v1488 = vpack.c.b16 %v1124, %v1120
  %v1489 = vpack.c.b16 %v1129, %v1125
  %v1490 = vpack.c.b16 %v1130, %v1126
  %v1491 = vpack.c.b16 %v1131, %v1127
  %v1492 = vpack.c.b16 %v1132, %v1128
  %v1493 = vpack.c.b16 %v1137, %v1133
  %v1494 = vpack.c.b16 %v1138, %v1134
  %v1495 = vpack.c.b16 %v1139, %v1135
  %v1496 = vpack.c.b16 %v1140, %v1136
  %v1497 = vpack.c.b16 %v1145, %v1141
  %v1498 = vpack.c.b16 %v1146, %v1142
  %v1499 = vpack.c.b16 %v1147, %v1143
  %v1500 = vpack.c.b16 %v1148, %v1144
  %v1501 = vpack.c.b16 %v1153, %v1149
  %v1502 = vpack.c.b16 %v1154, %v1150
  %v1503 = vpack.c.b16 %v1155, %v1151
  %v1504 = vpack.c.b16 %v1156, %v1152
  %v1505 = vpack.c.b16 %v1161, %v1157
  %v1506 = vpack.c.b16 %v1162, %v1158
  %v1507 = vpack.c.b16 %v1163, %v1159
  %v1508 = vpack.c.b16 %v1164, %v1160
  %v1509 = vpack.c.b16 %v1169, %v1165
  %v1510 = vpack.c.b16 %v1170, %v1166
  %v1511 = vpack.c.b16 %v1171, %v1167
  %v1512 = vpack.c.b16 %v1172, %v1168
  %v1513 = vpack.c.b16 %v1177, %v1173
  %v1514 = vpack.c.b16 %v1178, %v1174
  %v1515 = vpack.c.b16 %v1179, %v1175
  %v1516 = vpack.c.b16 %v1180, %v1176
  %v1517 = vpack.c.b16 %v1185, %v1181
  %v1518 = vpack.c.b16 %v1186, %v1182
  %v1519 = vpack.c.b16 %v1187, %v1183
  %v1520 = vpack.c.b16 %v1188, %v1184
  %v1521 = vpack.c.b16 %v1193, %v1189
  %v1522 = vpack.c.b16 %v1194, %v1190
  %v1523 = vpack.c.b16 %v1195, %v1191
  %v1524 = vpack.c.b16 %v1196, %v1192
  %v1525 = vpack.c.b16 %v1201, %v1197
  %v1526 = vpack.c.b16 %v1202, %v1198
  %v1527 = vpack.c.b16 %v1203, %v1199
  %v1528 = vpack.c.b16 %v1204, %v1200
  %v1529 = vpack.c.b16 %v1209, %v1205
  %v1530 = vpack.c.b16 %v1210, %v1206
  %v1531 = vpack.c.b16 %v1211, %v1207
  %v1532 = vpack.c.b16 %v1212, %v1208
  %v1533 = vpack.c.b16 %v1217, %v1213
  %v1534 = vpack.c.b16 %v1218, %v1214
  %v1535 = vpack.c.b16 %v1219, %v1215
  %v1536 = vpack.c.b16 %v1220, %v1216
  %v1537 = vpack.c.b16 %v1225, %v1221
  %v1538 = vpack.c.b16 %v1226, %v1222
  %v1539 = vpack.c.b16 %v1227, %v1223
  %v1540 = vpack.c.b16 %v1228, %v1224
  %v1541 = vpack.c.b16 %v1233, %v1229
  %v1542 = vpack.c.b16 %v1234, %v1230
  %v1543 = vpack.c.b16 %v1235, %v1231
  %v1544 = vpack.c.b16 %v1236, %v1232
  %v1545 = vpack.c.b16 %v1241, %v1237
  %v1546 = vpack.c.b16 %v1242, %v1238
  %v1547 = vpack.c.b16 %v1243, %v1239
  %v1548 = vpack.c.b16 %v1244, %v1240
  %v1549 = vpack.c.b16 %v1249, %v1245
  %v1550 = vpack.c.b16 %v1250, %v1246
  %v1551 = vpack.c.b16 %v1251, %v1247
  %v1552 = vpack.c.b16 %v1252, %v1248
  %v1553 = vpack.c.b16 %v1257, %v1253
  %v1554 = vpack.c.b16 %v1258, %v1254
  %v1555 = vpack.c.b16 %v1259, %v1255
  %v1556 = vpack.c.b16 %v1260, %v1256
  %v1557 = vpack.c.b16 %v1265, %v1261
  %v1558 = vpack.c.b16 %v1266, %v1262
  %v1559 = vpack.c.b16 %v1267, %v1263
  %v1560 = vpack.c.b16 %v1268, %v1264
  %v1561 = vpack.c.b16 %v1273, %v1269
  %v1562 = vpack.c.b16 %v1274, %v1270
  %v1563 = vpack.c.b16 %v1275, %v1271
  %v1564 = vpack.c.b16 %v1276, %v1272
  %1853 = vmatpush.bf16.msra.mxu0 %v1305
  %1854 = vmatpush.bf16.msra.mxu0 %v1301
  %1855 = vmatpush.bf16.msra.mxu0 %v1297
  %1856 = vmatpush.bf16.msra.mxu0 %v1293
  %1857 = vmatpush.bf16.msra.mxu0 %v1289
  %1858 = vmatpush.bf16.msra.mxu0 %v1285
  %1859 = vmatpush.bf16.msra.mxu0 %v1281
  %1860 = vmatpush.bf16.msra.mxu0 %v1277
  %1861 = vmatmul.bf16.gmra.mxu0 %v377
  %v1862 = vpop.f32.mrf.mxu0
  %v1863 = vadd.f32 0.0, %v1862
  %v1864 = vpop.f32.mrf.mxu0
  %v1865 = vadd.f32 0.0, %v1864
  %1866 = vmatmul.bf16.gmra.mxu0 %v386
  %v1867 = vpop.f32.mrf.mxu0
  %v1868 = vadd.f32 0.0, %v1867
  %v1869 = vpop.f32.mrf.mxu0
  %v1870 = vadd.f32 0.0, %v1869
  %1871 = vdwg.mxu0
  %1872 = vmatpush.bf16.msra.mxu0 %v1337
  %1873 = vmatpush.bf16.msra.mxu0 %v1333
  %1874 = vmatpush.bf16.msra.mxu0 %v1329
  %1875 = vmatpush.bf16.msra.mxu0 %v1325
  %1876 = vmatpush.bf16.msra.mxu0 %v1321
  %1877 = vmatpush.bf16.msra.mxu0 %v1317
  %1878 = vmatpush.bf16.msra.mxu0 %v1313
  %1879 = vmatpush.bf16.msra.mxu0 %v1309
  %1880 = vmatmul.bf16.gmra.mxu0 %v378
  %v1881 = vpop.f32.mrf.mxu0
  %v1882 = vadd.f32 %v1863, %v1881
  %v1883 = vpop.f32.mrf.mxu0
  %v1884 = vadd.f32 %v1865, %v1883
  %1885 = vmatmul.bf16.gmra.mxu0 %v387
  %v1886 = vpop.f32.mrf.mxu0
  %v1887 = vadd.f32 %v1868, %v1886
  %v1888 = vpop.f32.mrf.mxu0
  %v1889 = vadd.f32 %v1870, %v1888
  %1890 = vdwg.mxu0
  %1891 = vmatpush.bf16.msra.mxu0 %v1369
  %1892 = vmatpush.bf16.msra.mxu0 %v1365
  %1893 = vmatpush.bf16.msra.mxu0 %v1361
  %1894 = vmatpush.bf16.msra.mxu0 %v1357
  %1895 = vmatpush.bf16.msra.mxu0 %v1353
  %1896 = vmatpush.bf16.msra.mxu0 %v1349
  %1897 = vmatpush.bf16.msra.mxu0 %v1345
  %1898 = vmatpush.bf16.msra.mxu0 %v1341
  %1899 = vmatmul.bf16.gmra.mxu0 %v379
  %v1900 = vpop.f32.mrf.mxu0
  %v1901 = vadd.f32 %v1882, %v1900
  %v1902 = vpop.f32.mrf.mxu0
  %v1903 = vadd.f32 %v1884, %v1902
  %1904 = vmatmul.bf16.gmra.mxu0 %v388
  %v1905 = vpop.f32.mrf.mxu0
  %v1906 = vadd.f32 %v1887, %v1905
  %v1907 = vpop.f32.mrf.mxu0
  %v1908 = vadd.f32 %v1889, %v1907
  %1909 = vdwg.mxu0
  %1910 = vmatpush.bf16.msra.mxu0 %v1401
  %1911 = vmatpush.bf16.msra.mxu0 %v1397
  %1912 = vmatpush.bf16.msra.mxu0 %v1393
  %1913 = vmatpush.bf16.msra.mxu0 %v1389
  %1914 = vmatpush.bf16.msra.mxu0 %v1385
  %1915 = vmatpush.bf16.msra.mxu0 %v1381
  %1916 = vmatpush.bf16.msra.mxu0 %v1377
  %1917 = vmatpush.bf16.msra.mxu0 %v1373
  %1918 = vmatmul.bf16.gmra.mxu0 %v380
  %v1919 = vpop.f32.mrf.mxu0
  %v1920 = vadd.f32 %v1901, %v1919
  %v1921 = vpop.f32.mrf.mxu0
  %v1922 = vadd.f32 %v1903, %v1921
  %1923 = vmatmul.bf16.gmra.mxu0 %v389
  %v1924 = vpop.f32.mrf.mxu0
  %v1925 = vadd.f32 %v1906, %v1924
  %v1926 = vpop.f32.mrf.mxu0
  %v1927 = vadd.f32 %v1908, %v1926
  %1928 = vdwg.mxu0
  %1929 = vmatpush.bf16.msra.mxu0 %v1433
  %1930 = vmatpush.bf16.msra.mxu0 %v1429
  %1931 = vmatpush.bf16.msra.mxu0 %v1425
  %1932 = vmatpush.bf16.msra.mxu0 %v1421
  %1933 = vmatpush.bf16.msra.mxu0 %v1417
  %1934 = vmatpush.bf16.msra.mxu0 %v1413
  %1935 = vmatpush.bf16.msra.mxu0 %v1409
  %1936 = vmatpush.bf16.msra.mxu0 %v1405
  %1937 = vmatmul.bf16.gmra.mxu0 %v381
  %v1938 = vpop.f32.mrf.mxu0
  %v1939 = vadd.f32 %v1920, %v1938
  %v1940 = vpop.f32.mrf.mxu0
  %v1941 = vadd.f32 %v1922, %v1940
  %1942 = vmatmul.bf16.gmra.mxu0 %v390
  %v1943 = vpop.f32.mrf.mxu0
  %v1944 = vadd.f32 %v1925, %v1943
  %v1945 = vpop.f32.mrf.mxu0
  %v1946 = vadd.f32 %v1927, %v1945
  %1947 = vdwg.mxu0
  %1948 = vmatpush.bf16.msra.mxu0 %v1465
  %1949 = vmatpush.bf16.msra.mxu0 %v1461
  %1950 = vmatpush.bf16.msra.mxu0 %v1457
  %1951 = vmatpush.bf16.msra.mxu0 %v1453
  %1952 = vmatpush.bf16.msra.mxu0 %v1449
  %1953 = vmatpush.bf16.msra.mxu0 %v1445
  %1954 = vmatpush.bf16.msra.mxu0 %v1441
  %1955 = vmatpush.bf16.msra.mxu0 %v1437
  %1956 = vmatmul.bf16.gmra.mxu0 %v382
  %v1957 = vpop.f32.mrf.mxu0
  %v1958 = vadd.f32 %v1939, %v1957
  %v1959 = vpop.f32.mrf.mxu0
  %v1960 = vadd.f32 %v1941, %v1959
  %1961 = vmatmul.bf16.gmra.mxu0 %v391
  %v1962 = vpop.f32.mrf.mxu0
  %v1963 = vadd.f32 %v1944, %v1962
  %v1964 = vpop.f32.mrf.mxu0
  %v1965 = vadd.f32 %v1946, %v1964
  %1966 = vdwg.mxu0
  %1967 = vmatpush.bf16.msra.mxu0 %v1497
  %1968 = vmatpush.bf16.msra.mxu0 %v1493
  %1969 = vmatpush.bf16.msra.mxu0 %v1489
  %1970 = vmatpush.bf16.msra.mxu0 %v1485
  %1971 = vmatpush.bf16.msra.mxu0 %v1481
  %1972 = vmatpush.bf16.msra.mxu0 %v1477
  %1973 = vmatpush.bf16.msra.mxu0 %v1473
  %1974 = vmatpush.bf16.msra.mxu0 %v1469
  %1975 = vmatmul.bf16.gmra.mxu0 %v383
  %v1976 = vpop.f32.mrf.mxu0
  %v1977 = vadd.f32 %v1958, %v1976
  %v1978 = vpop.f32.mrf.mxu0
  %v1979 = vadd.f32 %v1960, %v1978
  %1980 = vmatmul.bf16.gmra.mxu0 %v392
  %v1981 = vpop.f32.mrf.mxu0
  %v1982 = vadd.f32 %v1963, %v1981
  %v1983 = vpop.f32.mrf.mxu0
  %v1984 = vadd.f32 %v1965, %v1983
  %1985 = vdwg.mxu0
  %1986 = vmatpush.bf16.msra.mxu0 %v1529
  %1987 = vmatpush.bf16.msra.mxu0 %v1525
  %1988 = vmatpush.bf16.msra.mxu0 %v1521
  %1989 = vmatpush.bf16.msra.mxu0 %v1517
  %1990 = vmatpush.bf16.msra.mxu0 %v1513
  %1991 = vmatpush.bf16.msra.mxu0 %v1509
  %1992 = vmatpush.bf16.msra.mxu0 %v1505
  %1993 = vmatpush.bf16.msra.mxu0 %v1501
  %1994 = vmatmul.bf16.gmra.mxu0 %v384
  %v1995 = vpop.f32.mrf.mxu0
  %v1996 = vadd.f32 %v1977, %v1995
  %v1997 = vpop.f32.mrf.mxu0
  %v1998 = vadd.f32 %v1979, %v1997
  %1999 = vmatmul.bf16.gmra.mxu0 %v393
  %v2000 = vpop.f32.mrf.mxu0
  %v2001 = vadd.f32 %v1982, %v2000
  %v2002 = vpop.f32.mrf.mxu0
  %v2003 = vadd.f32 %v1984, %v2002
  %2004 = vdwg.mxu0
  %2005 = vmatpush.bf16.msra.mxu0 %v1561
  %2006 = vmatpush.bf16.msra.mxu0 %v1557
  %2007 = vmatpush.bf16.msra.mxu0 %v1553
  %2008 = vmatpush.bf16.msra.mxu0 %v1549
  %2009 = vmatpush.bf16.msra.mxu0 %v1545
  %2010 = vmatpush.bf16.msra.mxu0 %v1541
  %2011 = vmatpush.bf16.msra.mxu0 %v1537
  %2012 = vmatpush.bf16.msra.mxu0 %v1533
  %2013 = vmatmul.bf16.gmra.mxu0 %v385
  %v2014 = vpop.f32.mrf.mxu0
  %v2015 = vadd.f32 %v1996, %v2014
  %v2016 = vpop.f32.mrf.mxu0
  %v2017 = vadd.f32 %v1998, %v2016
  %2018 = vmatmul.bf16.gmra.mxu0 %v394
  %v2019 = vpop.f32.mrf.mxu0
  %v2020 = vadd.f32 %v2001, %v2019
  %v2021 = vpop.f32.mrf.mxu0
  %v2022 = vadd.f32 %v2003, %v2021
  %2023 = vdwg.mxu0
  %2024 = vmatpush.bf16.msra.mxu0 %v1306
  %2025 = vmatpush.bf16.msra.mxu0 %v1302
  %2026 = vmatpush.bf16.msra.mxu0 %v1298
  %2027 = vmatpush.bf16.msra.mxu0 %v1294
  %2028 = vmatpush.bf16.msra.mxu0 %v1290
  %2029 = vmatpush.bf16.msra.mxu0 %v1286
  %2030 = vmatpush.bf16.msra.mxu0 %v1282
  %2031 = vmatpush.bf16.msra.mxu0 %v1278
  %2032 = vmatmul.bf16.gmra.mxu0 %v377
  %v2033 = vpop.f32.mrf.mxu0
  %v2034 = vadd.f32 0.0, %v2033
  %v2035 = vpop.f32.mrf.mxu0
  %v2036 = vadd.f32 0.0, %v2035
  %2037 = vmatmul.bf16.gmra.mxu0 %v386
  %v2038 = vpop.f32.mrf.mxu0
  %v2039 = vadd.f32 0.0, %v2038
  %v2040 = vpop.f32.mrf.mxu0
  %v2041 = vadd.f32 0.0, %v2040
  %2042 = vdwg.mxu0
  %2043 = vmatpush.bf16.msra.mxu0 %v1338
  %2044 = vmatpush.bf16.msra.mxu0 %v1334
  %2045 = vmatpush.bf16.msra.mxu0 %v1330
  %2046 = vmatpush.bf16.msra.mxu0 %v1326
  %2047 = vmatpush.bf16.msra.mxu0 %v1322
  %2048 = vmatpush.bf16.msra.mxu0 %v1318
  %2049 = vmatpush.bf16.msra.mxu0 %v1314
  %2050 = vmatpush.bf16.msra.mxu0 %v1310
  %2051 = vmatmul.bf16.gmra.mxu0 %v378
  %v2052 = vpop.f32.mrf.mxu0
  %v2053 = vadd.f32 %v2034, %v2052
  %v2054 = vpop.f32.mrf.mxu0
  %v2055 = vadd.f32 %v2036, %v2054
  %2056 = vmatmul.bf16.gmra.mxu0 %v387
  %v2057 = vpop.f32.mrf.mxu0
  %v2058 = vadd.f32 %v2039, %v2057
  %v2059 = vpop.f32.mrf.mxu0
  %v2060 = vadd.f32 %v2041, %v2059
  %2061 = vdwg.mxu0
  %2062 = vmatpush.bf16.msra.mxu0 %v1370
  %2063 = vmatpush.bf16.msra.mxu0 %v1366
  %2064 = vmatpush.bf16.msra.mxu0 %v1362
  %2065 = vmatpush.bf16.msra.mxu0 %v1358
  %2066 = vmatpush.bf16.msra.mxu0 %v1354
  %2067 = vmatpush.bf16.msra.mxu0 %v1350
  %2068 = vmatpush.bf16.msra.mxu0 %v1346
  %2069 = vmatpush.bf16.msra.mxu0 %v1342
  %2070 = vmatmul.bf16.gmra.mxu0 %v379
  %v2071 = vpop.f32.mrf.mxu0
  %v2072 = vadd.f32 %v2053, %v2071
  %v2073 = vpop.f32.mrf.mxu0
  %v2074 = vadd.f32 %v2055, %v2073
  %2075 = vmatmul.bf16.gmra.mxu0 %v388
  %v2076 = vpop.f32.mrf.mxu0
  %v2077 = vadd.f32 %v2058, %v2076
  %v2078 = vpop.f32.mrf.mxu0
  %v2079 = vadd.f32 %v2060, %v2078
  %2080 = vdwg.mxu0
  %2081 = vmatpush.bf16.msra.mxu0 %v1402
  %2082 = vmatpush.bf16.msra.mxu0 %v1398
  %2083 = vmatpush.bf16.msra.mxu0 %v1394
  %2084 = vmatpush.bf16.msra.mxu0 %v1390
  %2085 = vmatpush.bf16.msra.mxu0 %v1386
  %2086 = vmatpush.bf16.msra.mxu0 %v1382
  %2087 = vmatpush.bf16.msra.mxu0 %v1378
  %2088 = vmatpush.bf16.msra.mxu0 %v1374
  %2089 = vmatmul.bf16.gmra.mxu0 %v380
  %v2090 = vpop.f32.mrf.mxu0
  %v2091 = vadd.f32 %v2072, %v2090
  %v2092 = vpop.f32.mrf.mxu0
  %v2093 = vadd.f32 %v2074, %v2092
  %2094 = vmatmul.bf16.gmra.mxu0 %v389
  %v2095 = vpop.f32.mrf.mxu0
  %v2096 = vadd.f32 %v2077, %v2095
  %v2097 = vpop.f32.mrf.mxu0
  %v2098 = vadd.f32 %v2079, %v2097
  %2099 = vdwg.mxu0
  %2100 = vmatpush.bf16.msra.mxu0 %v1434
  %2101 = vmatpush.bf16.msra.mxu0 %v1430
  %2102 = vmatpush.bf16.msra.mxu0 %v1426
  %2103 = vmatpush.bf16.msra.mxu0 %v1422
  %2104 = vmatpush.bf16.msra.mxu0 %v1418
  %2105 = vmatpush.bf16.msra.mxu0 %v1414
  %2106 = vmatpush.bf16.msra.mxu0 %v1410
  %2107 = vmatpush.bf16.msra.mxu0 %v1406
  %2108 = vmatmul.bf16.gmra.mxu0 %v381
  %v2109 = vpop.f32.mrf.mxu0
  %v2110 = vadd.f32 %v2091, %v2109
  %v2111 = vpop.f32.mrf.mxu0
  %v2112 = vadd.f32 %v2093, %v2111
  %2113 = vmatmul.bf16.gmra.mxu0 %v390
  %v2114 = vpop.f32.mrf.mxu0
  %v2115 = vadd.f32 %v2096, %v2114
  %v2116 = vpop.f32.mrf.mxu0
  %v2117 = vadd.f32 %v2098, %v2116
  %2118 = vdwg.mxu0
  %2119 = vmatpush.bf16.msra.mxu0 %v1466
  %2120 = vmatpush.bf16.msra.mxu0 %v1462
  %2121 = vmatpush.bf16.msra.mxu0 %v1458
  %2122 = vmatpush.bf16.msra.mxu0 %v1454
  %2123 = vmatpush.bf16.msra.mxu0 %v1450
  %2124 = vmatpush.bf16.msra.mxu0 %v1446
  %2125 = vmatpush.bf16.msra.mxu0 %v1442
  %2126 = vmatpush.bf16.msra.mxu0 %v1438
  %2127 = vmatmul.bf16.gmra.mxu0 %v382
  %v2128 = vpop.f32.mrf.mxu0
  %v2129 = vadd.f32 %v2110, %v2128
  %v2130 = vpop.f32.mrf.mxu0
  %v2131 = vadd.f32 %v2112, %v2130
  %2132 = vmatmul.bf16.gmra.mxu0 %v391
  %v2133 = vpop.f32.mrf.mxu0
  %v2134 = vadd.f32 %v2115, %v2133
  %v2135 = vpop.f32.mrf.mxu0
  %v2136 = vadd.f32 %v2117, %v2135
  %2137 = vdwg.mxu0
  %2138 = vmatpush.bf16.msra.mxu0 %v1498
  %2139 = vmatpush.bf16.msra.mxu0 %v1494
  %2140 = vmatpush.bf16.msra.mxu0 %v1490
  %2141 = vmatpush.bf16.msra.mxu0 %v1486
  %2142 = vmatpush.bf16.msra.mxu0 %v1482
  %2143 = vmatpush.bf16.msra.mxu0 %v1478
  %2144 = vmatpush.bf16.msra.mxu0 %v1474
  %2145 = vmatpush.bf16.msra.mxu0 %v1470
  %2146 = vmatmul.bf16.gmra.mxu0 %v383
  %v2147 = vpop.f32.mrf.mxu0
  %v2148 = vadd.f32 %v2129, %v2147
  %v2149 = vpop.f32.mrf.mxu0
  %v2150 = vadd.f32 %v2131, %v2149
  %2151 = vmatmul.bf16.gmra.mxu0 %v392
  %v2152 = vpop.f32.mrf.mxu0
  %v2153 = vadd.f32 %v2134, %v2152
  %v2154 = vpop.f32.mrf.mxu0
  %v2155 = vadd.f32 %v2136, %v2154
  %2156 = vdwg.mxu0
  %2157 = vmatpush.bf16.msra.mxu0 %v1530
  %2158 = vmatpush.bf16.msra.mxu0 %v1526
  %2159 = vmatpush.bf16.msra.mxu0 %v1522
  %2160 = vmatpush.bf16.msra.mxu0 %v1518
  %2161 = vmatpush.bf16.msra.mxu0 %v1514
  %2162 = vmatpush.bf16.msra.mxu0 %v1510
  %2163 = vmatpush.bf16.msra.mxu0 %v1506
  %2164 = vmatpush.bf16.msra.mxu0 %v1502
  %2165 = vmatmul.bf16.gmra.mxu0 %v384
  %v2166 = vpop.f32.mrf.mxu0
  %v2167 = vadd.f32 %v2148, %v2166
  %v2168 = vpop.f32.mrf.mxu0
  %v2169 = vadd.f32 %v2150, %v2168
  %2170 = vmatmul.bf16.gmra.mxu0 %v393
  %v2171 = vpop.f32.mrf.mxu0
  %v2172 = vadd.f32 %v2153, %v2171
  %v2173 = vpop.f32.mrf.mxu0
  %v2174 = vadd.f32 %v2155, %v2173
  %2175 = vdwg.mxu0
  %2176 = vmatpush.bf16.msra.mxu0 %v1562
  %2177 = vmatpush.bf16.msra.mxu0 %v1558
  %2178 = vmatpush.bf16.msra.mxu0 %v1554
  %2179 = vmatpush.bf16.msra.mxu0 %v1550
  %2180 = vmatpush.bf16.msra.mxu0 %v1546
  %2181 = vmatpush.bf16.msra.mxu0 %v1542
  %2182 = vmatpush.bf16.msra.mxu0 %v1538
  %2183 = vmatpush.bf16.msra.mxu0 %v1534
  %2184 = vmatmul.bf16.gmra.mxu0 %v385
  %v2185 = vpop.f32.mrf.mxu0
  %v2186 = vadd.f32 %v2167, %v2185
  %v2187 = vpop.f32.mrf.mxu0
  %v2188 = vadd.f32 %v2169, %v2187
  %2189 = vmatmul.bf16.gmra.mxu0 %v394
  %v2190 = vpop.f32.mrf.mxu0
  %v2191 = vadd.f32 %v2172, %v2190
  %v2192 = vpop.f32.mrf.mxu0
  %v2193 = vadd.f32 %v2174, %v2192
  %2194 = vdwg.mxu0
  %2195 = vmatpush.bf16.msra.mxu0 %v1307
  %2196 = vmatpush.bf16.msra.mxu0 %v1303
  %2197 = vmatpush.bf16.msra.mxu0 %v1299
  %2198 = vmatpush.bf16.msra.mxu0 %v1295
  %2199 = vmatpush.bf16.msra.mxu0 %v1291
  %2200 = vmatpush.bf16.msra.mxu0 %v1287
  %2201 = vmatpush.bf16.msra.mxu0 %v1283
  %2202 = vmatpush.bf16.msra.mxu0 %v1279
  %2203 = vmatmul.bf16.gmra.mxu0 %v377
  %v2204 = vpop.f32.mrf.mxu0
  %v2205 = vadd.f32 0.0, %v2204
  %v2206 = vpop.f32.mrf.mxu0
  %v2207 = vadd.f32 0.0, %v2206
  %2208 = vmatmul.bf16.gmra.mxu0 %v386
  %v2209 = vpop.f32.mrf.mxu0
  %v2210 = vadd.f32 0.0, %v2209
  %v2211 = vpop.f32.mrf.mxu0
  %v2212 = vadd.f32 0.0, %v2211
  %2213 = vdwg.mxu0
  %2214 = vmatpush.bf16.msra.mxu0 %v1339
  %2215 = vmatpush.bf16.msra.mxu0 %v1335
  %2216 = vmatpush.bf16.msra.mxu0 %v1331
  %2217 = vmatpush.bf16.msra.mxu0 %v1327
  %2218 = vmatpush.bf16.msra.mxu0 %v1323
  %2219 = vmatpush.bf16.msra.mxu0 %v1319
  %2220 = vmatpush.bf16.msra.mxu0 %v1315
  %2221 = vmatpush.bf16.msra.mxu0 %v1311
  %2222 = vmatmul.bf16.gmra.mxu0 %v378
  %v2223 = vpop.f32.mrf.mxu0
  %v2224 = vadd.f32 %v2205, %v2223
  %v2225 = vpop.f32.mrf.mxu0
  %v2226 = vadd.f32 %v2207, %v2225
  %2227 = vmatmul.bf16.gmra.mxu0 %v387
  %v2228 = vpop.f32.mrf.mxu0
  %v2229 = vadd.f32 %v2210, %v2228
  %v2230 = vpop.f32.mrf.mxu0
  %v2231 = vadd.f32 %v2212, %v2230
  %2232 = vdwg.mxu0
  %2233 = vmatpush.bf16.msra.mxu0 %v1371
  %2234 = vmatpush.bf16.msra.mxu0 %v1367
  %2235 = vmatpush.bf16.msra.mxu0 %v1363
  %2236 = vmatpush.bf16.msra.mxu0 %v1359
  %2237 = vmatpush.bf16.msra.mxu0 %v1355
  %2238 = vmatpush.bf16.msra.mxu0 %v1351
  %2239 = vmatpush.bf16.msra.mxu0 %v1347
  %2240 = vmatpush.bf16.msra.mxu0 %v1343
  %2241 = vmatmul.bf16.gmra.mxu0 %v379
  %v2242 = vpop.f32.mrf.mxu0
  %v2243 = vadd.f32 %v2224, %v2242
  %v2244 = vpop.f32.mrf.mxu0
  %v2245 = vadd.f32 %v2226, %v2244
  %2246 = vmatmul.bf16.gmra.mxu0 %v388
  %v2247 = vpop.f32.mrf.mxu0
  %v2248 = vadd.f32 %v2229, %v2247
  %v2249 = vpop.f32.mrf.mxu0
  %v2250 = vadd.f32 %v2231, %v2249
  %2251 = vdwg.mxu0
  %2252 = vmatpush.bf16.msra.mxu0 %v1403
  %2253 = vmatpush.bf16.msra.mxu0 %v1399
  %2254 = vmatpush.bf16.msra.mxu0 %v1395
  %2255 = vmatpush.bf16.msra.mxu0 %v1391
  %2256 = vmatpush.bf16.msra.mxu0 %v1387
  %2257 = vmatpush.bf16.msra.mxu0 %v1383
  %2258 = vmatpush.bf16.msra.mxu0 %v1379
  %2259 = vmatpush.bf16.msra.mxu0 %v1375
  %2260 = vmatmul.bf16.gmra.mxu0 %v380
  %v2261 = vpop.f32.mrf.mxu0
  %v2262 = vadd.f32 %v2243, %v2261
  %v2263 = vpop.f32.mrf.mxu0
  %v2264 = vadd.f32 %v2245, %v2263
  %2265 = vmatmul.bf16.gmra.mxu0 %v389
  %v2266 = vpop.f32.mrf.mxu0
  %v2267 = vadd.f32 %v2248, %v2266
  %v2268 = vpop.f32.mrf.mxu0
  %v2269 = vadd.f32 %v2250, %v2268
  %2270 = vdwg.mxu0
  %2271 = vmatpush.bf16.msra.mxu0 %v1435
  %2272 = vmatpush.bf16.msra.mxu0 %v1431
  %2273 = vmatpush.bf16.msra.mxu0 %v1427
  %2274 = vmatpush.bf16.msra.mxu0 %v1423
  %2275 = vmatpush.bf16.msra.mxu0 %v1419
  %2276 = vmatpush.bf16.msra.mxu0 %v1415
  %2277 = vmatpush.bf16.msra.mxu0 %v1411
  %2278 = vmatpush.bf16.msra.mxu0 %v1407
  %2279 = vmatmul.bf16.gmra.mxu0 %v381
  %v2280 = vpop.f32.mrf.mxu0
  %v2281 = vadd.f32 %v2262, %v2280
  %v2282 = vpop.f32.mrf.mxu0
  %v2283 = vadd.f32 %v2264, %v2282
  %2284 = vmatmul.bf16.gmra.mxu0 %v390
  %v2285 = vpop.f32.mrf.mxu0
  %v2286 = vadd.f32 %v2267, %v2285
  %v2287 = vpop.f32.mrf.mxu0
  %v2288 = vadd.f32 %v2269, %v2287
  %2289 = vdwg.mxu0
  %2290 = vmatpush.bf16.msra.mxu0 %v1467
  %2291 = vmatpush.bf16.msra.mxu0 %v1463
  %2292 = vmatpush.bf16.msra.mxu0 %v1459
  %2293 = vmatpush.bf16.msra.mxu0 %v1455
  %2294 = vmatpush.bf16.msra.mxu0 %v1451
  %2295 = vmatpush.bf16.msra.mxu0 %v1447
  %2296 = vmatpush.bf16.msra.mxu0 %v1443
  %2297 = vmatpush.bf16.msra.mxu0 %v1439
  %2298 = vmatmul.bf16.gmra.mxu0 %v382
  %v2299 = vpop.f32.mrf.mxu0
  %v2300 = vadd.f32 %v2281, %v2299
  %v2301 = vpop.f32.mrf.mxu0
  %v2302 = vadd.f32 %v2283, %v2301
  %2303 = vmatmul.bf16.gmra.mxu0 %v391
  %v2304 = vpop.f32.mrf.mxu0
  %v2305 = vadd.f32 %v2286, %v2304
  %v2306 = vpop.f32.mrf.mxu0
  %v2307 = vadd.f32 %v2288, %v2306
  %2308 = vdwg.mxu0
  %2309 = vmatpush.bf16.msra.mxu0 %v1499
  %2310 = vmatpush.bf16.msra.mxu0 %v1495
  %2311 = vmatpush.bf16.msra.mxu0 %v1491
  %2312 = vmatpush.bf16.msra.mxu0 %v1487
  %2313 = vmatpush.bf16.msra.mxu0 %v1483
  %2314 = vmatpush.bf16.msra.mxu0 %v1479
  %2315 = vmatpush.bf16.msra.mxu0 %v1475
  %2316 = vmatpush.bf16.msra.mxu0 %v1471
  %2317 = vmatmul.bf16.gmra.mxu0 %v383
  %v2318 = vpop.f32.mrf.mxu0
  %v2319 = vadd.f32 %v2300, %v2318
  %v2320 = vpop.f32.mrf.mxu0
  %v2321 = vadd.f32 %v2302, %v2320
  %2322 = vmatmul.bf16.gmra.mxu0 %v392
  %v2323 = vpop.f32.mrf.mxu0
  %v2324 = vadd.f32 %v2305, %v2323
  %v2325 = vpop.f32.mrf.mxu0
  %v2326 = vadd.f32 %v2307, %v2325
  %2327 = vdwg.mxu0
  %2328 = vmatpush.bf16.msra.mxu0 %v1531
  %2329 = vmatpush.bf16.msra.mxu0 %v1527
  %2330 = vmatpush.bf16.msra.mxu0 %v1523
  %2331 = vmatpush.bf16.msra.mxu0 %v1519
  %2332 = vmatpush.bf16.msra.mxu0 %v1515
  %2333 = vmatpush.bf16.msra.mxu0 %v1511
  %2334 = vmatpush.bf16.msra.mxu0 %v1507
  %2335 = vmatpush.bf16.msra.mxu0 %v1503
  %2336 = vmatmul.bf16.gmra.mxu0 %v384
  %v2337 = vpop.f32.mrf.mxu0
  %v2338 = vadd.f32 %v2319, %v2337
  %v2339 = vpop.f32.mrf.mxu0
  %v2340 = vadd.f32 %v2321, %v2339
  %2341 = vmatmul.bf16.gmra.mxu0 %v393
  %v2342 = vpop.f32.mrf.mxu0
  %v2343 = vadd.f32 %v2324, %v2342
  %v2344 = vpop.f32.mrf.mxu0
  %v2345 = vadd.f32 %v2326, %v2344
  %2346 = vdwg.mxu0
  %2347 = vmatpush.bf16.msra.mxu0 %v1563
  %2348 = vmatpush.bf16.msra.mxu0 %v1559
  %2349 = vmatpush.bf16.msra.mxu0 %v1555
  %2350 = vmatpush.bf16.msra.mxu0 %v1551
  %2351 = vmatpush.bf16.msra.mxu0 %v1547
  %2352 = vmatpush.bf16.msra.mxu0 %v1543
  %2353 = vmatpush.bf16.msra.mxu0 %v1539
  %2354 = vmatpush.bf16.msra.mxu0 %v1535
  %2355 = vmatmul.bf16.gmra.mxu0 %v385
  %v2356 = vpop.f32.mrf.mxu0
  %v2357 = vadd.f32 %v2338, %v2356
  %v2358 = vpop.f32.mrf.mxu0
  %v2359 = vadd.f32 %v2340, %v2358
  %2360 = vmatmul.bf16.gmra.mxu0 %v394
  %v2361 = vpop.f32.mrf.mxu0
  %v2362 = vadd.f32 %v2343, %v2361
  %v2363 = vpop.f32.mrf.mxu0
  %v2364 = vadd.f32 %v2345, %v2363
  %2365 = vdwg.mxu0
  %2366 = vmatpush.bf16.msra.mxu0 %v1308
  %2367 = vmatpush.bf16.msra.mxu0 %v1304
  %2368 = vmatpush.bf16.msra.mxu0 %v1300
  %2369 = vmatpush.bf16.msra.mxu0 %v1296
  %2370 = vmatpush.bf16.msra.mxu0 %v1292
  %2371 = vmatpush.bf16.msra.mxu0 %v1288
  %2372 = vmatpush.bf16.msra.mxu0 %v1284
  %2373 = vmatpush.bf16.msra.mxu0 %v1280
  %2374 = vmatmul.bf16.gmra.mxu0 %v377
  %v2375 = vpop.f32.mrf.mxu0
  %v2376 = vadd.f32 0.0, %v2375
  %v2377 = vpop.f32.mrf.mxu0
  %v2378 = vadd.f32 0.0, %v2377
  %2379 = vmatmul.bf16.gmra.mxu0 %v386
  %v2380 = vpop.f32.mrf.mxu0
  %v2381 = vadd.f32 0.0, %v2380
  %v2382 = vpop.f32.mrf.mxu0
  %v2383 = vadd.f32 0.0, %v2382
  %2384 = vdwg.mxu0
  %2385 = vmatpush.bf16.msra.mxu0 %v1340
  %2386 = vmatpush.bf16.msra.mxu0 %v1336
  %2387 = vmatpush.bf16.msra.mxu0 %v1332
  %2388 = vmatpush.bf16.msra.mxu0 %v1328
  %2389 = vmatpush.bf16.msra.mxu0 %v1324
  %2390 = vmatpush.bf16.msra.mxu0 %v1320
  %2391 = vmatpush.bf16.msra.mxu0 %v1316
  %2392 = vmatpush.bf16.msra.mxu0 %v1312
  %2393 = vmatmul.bf16.gmra.mxu0 %v378
  %v2394 = vpop.f32.mrf.mxu0
  %v2395 = vadd.f32 %v2376, %v2394
  %v2396 = vpop.f32.mrf.mxu0
  %v2397 = vadd.f32 %v2378, %v2396
  %2398 = vmatmul.bf16.gmra.mxu0 %v387
  %v2399 = vpop.f32.mrf.mxu0
  %v2400 = vadd.f32 %v2381, %v2399
  %v2401 = vpop.f32.mrf.mxu0
  %v2402 = vadd.f32 %v2383, %v2401
  %2403 = vdwg.mxu0
  %2404 = vmatpush.bf16.msra.mxu0 %v1372
  %2405 = vmatpush.bf16.msra.mxu0 %v1368
  %2406 = vmatpush.bf16.msra.mxu0 %v1364
  %2407 = vmatpush.bf16.msra.mxu0 %v1360
  %2408 = vmatpush.bf16.msra.mxu0 %v1356
  %2409 = vmatpush.bf16.msra.mxu0 %v1352
  %2410 = vmatpush.bf16.msra.mxu0 %v1348
  %2411 = vmatpush.bf16.msra.mxu0 %v1344
  %2412 = vmatmul.bf16.gmra.mxu0 %v379
  %v2413 = vpop.f32.mrf.mxu0
  %v2414 = vadd.f32 %v2395, %v2413
  %v2415 = vpop.f32.mrf.mxu0
  %v2416 = vadd.f32 %v2397, %v2415
  %2417 = vmatmul.bf16.gmra.mxu0 %v388
  %v2418 = vpop.f32.mrf.mxu0
  %v2419 = vadd.f32 %v2400, %v2418
  %v2420 = vpop.f32.mrf.mxu0
  %v2421 = vadd.f32 %v2402, %v2420
  %2422 = vdwg.mxu0
  %2423 = vmatpush.bf16.msra.mxu0 %v1404
  %2424 = vmatpush.bf16.msra.mxu0 %v1400
  %2425 = vmatpush.bf16.msra.mxu0 %v1396
  %2426 = vmatpush.bf16.msra.mxu0 %v1392
  %2427 = vmatpush.bf16.msra.mxu0 %v1388
  %2428 = vmatpush.bf16.msra.mxu0 %v1384
  %2429 = vmatpush.bf16.msra.mxu0 %v1380
  %2430 = vmatpush.bf16.msra.mxu0 %v1376
  %2431 = vmatmul.bf16.gmra.mxu0 %v380
  %v2432 = vpop.f32.mrf.mxu0
  %v2433 = vadd.f32 %v2414, %v2432
  %v2434 = vpop.f32.mrf.mxu0
  %v2435 = vadd.f32 %v2416, %v2434
  %2436 = vmatmul.bf16.gmra.mxu0 %v389
  %v2437 = vpop.f32.mrf.mxu0
  %v2438 = vadd.f32 %v2419, %v2437
  %v2439 = vpop.f32.mrf.mxu0
  %v2440 = vadd.f32 %v2421, %v2439
  %2441 = vdwg.mxu0
  %2442 = vmatpush.bf16.msra.mxu0 %v1436
  %2443 = vmatpush.bf16.msra.mxu0 %v1432
  %2444 = vmatpush.bf16.msra.mxu0 %v1428
  %2445 = vmatpush.bf16.msra.mxu0 %v1424
  %2446 = vmatpush.bf16.msra.mxu0 %v1420
  %2447 = vmatpush.bf16.msra.mxu0 %v1416
  %2448 = vmatpush.bf16.msra.mxu0 %v1412
  %2449 = vmatpush.bf16.msra.mxu0 %v1408
  %2450 = vmatmul.bf16.gmra.mxu0 %v381
  %v2451 = vpop.f32.mrf.mxu0
  %v2452 = vadd.f32 %v2433, %v2451
  %v2453 = vpop.f32.mrf.mxu0
  %v2454 = vadd.f32 %v2435, %v2453
  %2455 = vmatmul.bf16.gmra.mxu0 %v390
  %v2456 = vpop.f32.mrf.mxu0
  %v2457 = vadd.f32 %v2438, %v2456
  %v2458 = vpop.f32.mrf.mxu0
  %v2459 = vadd.f32 %v2440, %v2458
  %2460 = vdwg.mxu0
  %2461 = vmatpush.bf16.msra.mxu0 %v1468
  %2462 = vmatpush.bf16.msra.mxu0 %v1464
  %2463 = vmatpush.bf16.msra.mxu0 %v1460
  %2464 = vmatpush.bf16.msra.mxu0 %v1456
  %2465 = vmatpush.bf16.msra.mxu0 %v1452
  %2466 = vmatpush.bf16.msra.mxu0 %v1448
  %2467 = vmatpush.bf16.msra.mxu0 %v1444
  %2468 = vmatpush.bf16.msra.mxu0 %v1440
  %2469 = vmatmul.bf16.gmra.mxu0 %v382
  %v2470 = vpop.f32.mrf.mxu0
  %v2471 = vadd.f32 %v2452, %v2470
  %v2472 = vpop.f32.mrf.mxu0
  %v2473 = vadd.f32 %v2454, %v2472
  %2474 = vmatmul.bf16.gmra.mxu0 %v391
  %v2475 = vpop.f32.mrf.mxu0
  %v2476 = vadd.f32 %v2457, %v2475
  %v2477 = vpop.f32.mrf.mxu0
  %v2478 = vadd.f32 %v2459, %v2477
  %2479 = vdwg.mxu0
  %2480 = vmatpush.bf16.msra.mxu0 %v1500
  %2481 = vmatpush.bf16.msra.mxu0 %v1496
  %2482 = vmatpush.bf16.msra.mxu0 %v1492
  %2483 = vmatpush.bf16.msra.mxu0 %v1488
  %2484 = vmatpush.bf16.msra.mxu0 %v1484
  %2485 = vmatpush.bf16.msra.mxu0 %v1480
  %2486 = vmatpush.bf16.msra.mxu0 %v1476
  %2487 = vmatpush.bf16.msra.mxu0 %v1472
  %2488 = vmatmul.bf16.gmra.mxu0 %v383
  %v2489 = vpop.f32.mrf.mxu0
  %v2490 = vadd.f32 %v2471, %v2489
  %v2491 = vpop.f32.mrf.mxu0
  %v2492 = vadd.f32 %v2473, %v2491
  %2493 = vmatmul.bf16.gmra.mxu0 %v392
  %v2494 = vpop.f32.mrf.mxu0
  %v2495 = vadd.f32 %v2476, %v2494
  %v2496 = vpop.f32.mrf.mxu0
  %v2497 = vadd.f32 %v2478, %v2496
  %2498 = vdwg.mxu0
  %2499 = vmatpush.bf16.msra.mxu0 %v1532
  %2500 = vmatpush.bf16.msra.mxu0 %v1528
  %2501 = vmatpush.bf16.msra.mxu0 %v1524
  %2502 = vmatpush.bf16.msra.mxu0 %v1520
  %2503 = vmatpush.bf16.msra.mxu0 %v1516
  %2504 = vmatpush.bf16.msra.mxu0 %v1512
  %2505 = vmatpush.bf16.msra.mxu0 %v1508
  %2506 = vmatpush.bf16.msra.mxu0 %v1504
  %2507 = vmatmul.bf16.gmra.mxu0 %v384
  %v2508 = vpop.f32.mrf.mxu0
  %v2509 = vadd.f32 %v2490, %v2508
  %v2510 = vpop.f32.mrf.mxu0
  %v2511 = vadd.f32 %v2492, %v2510
  %2512 = vmatmul.bf16.gmra.mxu0 %v393
  %v2513 = vpop.f32.mrf.mxu0
  %v2514 = vadd.f32 %v2495, %v2513
  %v2515 = vpop.f32.mrf.mxu0
  %v2516 = vadd.f32 %v2497, %v2515
  %2517 = vdwg.mxu0
  %2518 = vmatpush.bf16.msra.mxu0 %v1564
  %2519 = vmatpush.bf16.msra.mxu0 %v1560
  %2520 = vmatpush.bf16.msra.mxu0 %v1556
  %2521 = vmatpush.bf16.msra.mxu0 %v1552
  %2522 = vmatpush.bf16.msra.mxu0 %v1548
  %2523 = vmatpush.bf16.msra.mxu0 %v1544
  %2524 = vmatpush.bf16.msra.mxu0 %v1540
  %2525 = vmatpush.bf16.msra.mxu0 %v1536
  %2526 = vmatmul.bf16.gmra.mxu0 %v385
  %v2527 = vpop.f32.mrf.mxu0
  %v2528 = vadd.f32 %v2509, %v2527
  %v2529 = vpop.f32.mrf.mxu0
  %v2530 = vadd.f32 %v2511, %v2529
  %2531 = vmatmul.bf16.gmra.mxu0 %v394
  %v2532 = vpop.f32.mrf.mxu0
  %v2533 = vadd.f32 %v2514, %v2532
  %v2534 = vpop.f32.mrf.mxu0
  %v2535 = vadd.f32 %v2516, %v2534
  %2536 = vdwg.mxu0
  %v2537 = vpack.c.bf16 %v2186, %v2015
  %v2538 = vpack.c.bf16 %v2528, %v2357
  %v2539 = vpack.c.bf16 %v2188, %v2017
  %v2540 = vpack.c.bf16 %v2530, %v2359
  %v2541 = vpack.c.bf16 %v2191, %v2020
  %v2542 = vpack.c.bf16 %v2533, %v2362
  %v2543 = vpack.c.bf16 %v2193, %v2022
  %v2544 = vpack.c.bf16 %v2535, %v2364
  %2545 = vst [vmem:[%s2] sm:$0xff] %v2537
  %2546 = vst [vmem:[%s2 + $0x8] sm:$0xff] %v2538
  %2547 = vst [vmem:[%s2 + $0x10] sm:$0xff] %v2539
  %2548 = vst [vmem:[%s2 + $0x18] sm:$0xff] %v2540
  %2549 = vst [vmem:[%s2 + $0x20] sm:$0xff] %v2541
  %2550 = vst [vmem:[%s2 + $0x28] sm:$0xff] %v2542
  %2551 = vst [vmem:[%s2 + $0x30] sm:$0xff] %v2543
  %2552 = vst [vmem:[%s2 + $0x38] sm:$0xff] %v2544
  %2553 = vst [vmem:[%s3] sm:$0xff] 0.0
  %2554 = vst [vmem:[%s3 + $0x8] sm:$0xff] 0.0
  %2555 = vst [vmem:[%s3 + $0x10] sm:$0xff] 0.0
  %2556 = vst [vmem:[%s3 + $0x18] sm:$0xff] 0.0
  %v2557 = vadd.f32 %v2015, %v2017
  %v2558 = vadd.f32 %v2557, %v2020
  %v2559 = vadd.f32 %v2558, %v2022
  %v2560 = vrot.slane %v2559, 4
  %v2561 = vadd.f32 %v2559, %v2560
  %v2562 = vrot.slane %v2561, 2
  %v2563 = vadd.f32 %v2561, %v2562
  %v2564 = vrot.slane %v2563, 1
  %v2565 = vadd.f32 %v2563, %v2564
  %v2566 = vadd.f32 %v2186, %v2188
  %v2567 = vadd.f32 %v2566, %v2191
  %v2568 = vadd.f32 %v2567, %v2193
  %v2569 = vrot.slane %v2568, 4
  %v2570 = vadd.f32 %v2568, %v2569
  %v2571 = vrot.slane %v2570, 2
  %v2572 = vadd.f32 %v2570, %v2571
  %v2573 = vrot.slane %v2572, 1
  %v2574 = vadd.f32 %v2572, %v2573
  %v2575 = vadd.f32 %v2357, %v2359
  %v2576 = vadd.f32 %v2575, %v2362
  %v2577 = vadd.f32 %v2576, %v2364
  %v2578 = vrot.slane %v2577, 4
  %v2579 = vadd.f32 %v2577, %v2578
  %v2580 = vrot.slane %v2579, 2
  %v2581 = vadd.f32 %v2579, %v2580
  %v2582 = vrot.slane %v2581, 1
  %v2583 = vadd.f32 %v2581, %v2582
  %v2584 = vadd.f32 %v2528, %v2530
  %v2585 = vadd.f32 %v2584, %v2533
  %v2586 = vadd.f32 %v2585, %v2535
  %v2587 = vrot.slane %v2586, 4
  %v2588 = vadd.f32 %v2586, %v2587
  %v2589 = vrot.slane %v2588, 2
  %v2590 = vadd.f32 %v2588, %v2589
  %v2591 = vrot.slane %v2590, 1
  %v2592 = vadd.f32 %v2590, %v2591
  %v2597 = vrot.slane %v2574, 7
  %v2598 = vrot.slane %v2583, 6
  %v2599 = vrot.slane %v2592, 5
  %vm2600 = vcmask 1040384
  %v2601 = vsel %vm2600, %v2565, %v2597
  %vm2602 = vcmask 1042434
  %v2603 = vsel %vm2602, %v2598, %v2599
  %vm2604 = vcmask 1041408
  %v2605 = vsel %vm2604, %v2601, %v2603
  %v2607 = vlaneseq
  %vm2608 = vcmp.ge.s32.totalorder %v2607, 0
  %vm2609 = vcmp.lt.s32.totalorder %v2607, 512
  %vm2610 = vmand %vm2608, %vm2609
  %2611 = vst.msk [vmem:[%s3] ss:$8 sm:$0xf] %vm2610, %v2605
  %2612 = vst.msk [vmem:[%s3] ss:$8 sm:$0x0] %vm2610, %v2605
  %v2613 = vmul.f32 %v2015, %v2015
  %v2614 = vmul.f32 %v2186, %v2186
  %v2615 = vmul.f32 %v2357, %v2357
  %v2616 = vmul.f32 %v2528, %v2528
  %v2617 = vmul.f32 %v2017, %v2017
  %v2618 = vmul.f32 %v2188, %v2188
  %v2619 = vmul.f32 %v2359, %v2359
  %v2620 = vmul.f32 %v2530, %v2530
  %v2621 = vmul.f32 %v2020, %v2020
  %v2622 = vmul.f32 %v2191, %v2191
  %v2623 = vmul.f32 %v2362, %v2362
  %v2624 = vmul.f32 %v2533, %v2533
  %v2625 = vmul.f32 %v2022, %v2022
  %v2626 = vmul.f32 %v2193, %v2193
  %v2627 = vmul.f32 %v2364, %v2364
  %v2628 = vmul.f32 %v2535, %v2535
  %v2629 = vadd.f32 %v2613, %v2617
  %v2630 = vadd.f32 %v2629, %v2621
  %v2631 = vadd.f32 %v2630, %v2625
  %v2632 = vrot.slane %v2631, 4
  %v2633 = vadd.f32 %v2631, %v2632
  %v2634 = vrot.slane %v2633, 2
  %v2635 = vadd.f32 %v2633, %v2634
  %v2636 = vrot.slane %v2635, 1
  %v2637 = vadd.f32 %v2635, %v2636
  %v2638 = vadd.f32 %v2614, %v2618
  %v2639 = vadd.f32 %v2638, %v2622
  %v2640 = vadd.f32 %v2639, %v2626
  %v2641 = vrot.slane %v2640, 4
  %v2642 = vadd.f32 %v2640, %v2641
  %v2643 = vrot.slane %v2642, 2
  %v2644 = vadd.f32 %v2642, %v2643
  %v2645 = vrot.slane %v2644, 1
  %v2646 = vadd.f32 %v2644, %v2645
  %v2647 = vadd.f32 %v2615, %v2619
  %v2648 = vadd.f32 %v2647, %v2623
  %v2649 = vadd.f32 %v2648, %v2627
  %v2650 = vrot.slane %v2649, 4
  %v2651 = vadd.f32 %v2649, %v2650
  %v2652 = vrot.slane %v2651, 2
  %v2653 = vadd.f32 %v2651, %v2652
  %v2654 = vrot.slane %v2653, 1
  %v2655 = vadd.f32 %v2653, %v2654
  %v2656 = vadd.f32 %v2616, %v2620
  %v2657 = vadd.f32 %v2656, %v2624
  %v2658 = vadd.f32 %v2657, %v2628
  %v2659 = vrot.slane %v2658, 4
  %v2660 = vadd.f32 %v2658, %v2659
  %v2661 = vrot.slane %v2660, 2
  %v2662 = vadd.f32 %v2660, %v2661
  %v2663 = vrot.slane %v2662, 1
  %v2664 = vadd.f32 %v2662, %v2663
  %v2669 = vrot.slane %v2646, 7
  %v2670 = vrot.slane %v2655, 6
  %v2671 = vrot.slane %v2664, 5
  %v2672 = vsel %vm2600, %v2637, %v2669
  %v2673 = vsel %vm2602, %v2670, %v2671
  %v2674 = vsel %vm2604, %v2672, %v2673
  %s2676 = scalar_lea.vmem %s3, 1
  %2677 = vst.msk [vmem:[%s2676] ss:$8 sm:$0xf] %vm2610, %v2674
  %2678 = vst.msk [vmem:[%s2676] ss:$8 sm:$0x0] %vm2610, %v2674
  // Predicated region
  $region10: #{generator_forward.9} parent=0 // pred_check
    _
  $region11: #{generator_forward.9} parent=0 // pred_check_branch
    %2680 = sbr.rel (0) target = $region13
  $region12: #{generator_forward.9} parent=0 // pred_region
    _
  $region13: #{generator_forward.9} parent=0 // pred_fallthru
    _
  // Predicated region
  $region14: #{generator_forward.9} parent=0 // pred_check
    _
  $region15: #{generator_forward.9} parent=0 // pred_check_branch
    %2682 = sbr.rel (0) target = $region17
  $region16: #{generator_forward.9} parent=0 // pred_region
    _
  $region17: #{generator_forward.9} parent=0 // pred_fallthru
    _
  // Predicated region
  $region18: #{generator_forward.9} parent=0 // pred_check
    _
  $region19: #{generator_forward.9} parent=0 // pred_check_branch
    %2684 = sbr.rel (0) target = $region21
  $region20: #{generator_forward.9} parent=0 // pred_region
    _
  $region21: #{generator_forward.9} parent=0 // pred_fallthru
    _
  // Predicated region
  $region22: #{generator_forward.9} parent=0 // pred_check
    _
  $region23: #{generator_forward.9} parent=0 // pred_check_branch
    %2686 = sbr.rel (0) target = $region25
  $region24: #{generator_forward.9} parent=0 // pred_region
    _
  $region25: #{generator_forward.9} parent=0 // pred_fallthru
    _

// kernel: generator_forward.11
$region0: #{generator_forward.11}
  #allocation0 [shape = 'u32[]', space=smem, size = 0x4, offset = 0x4, fixed_abs, tag = 'smem constant byte address 0x4 - core index']
  #allocation1 [shape = 'u32[72,128]{1,0:T(1,128)}', space=vmem, size = 0x9000, scoped, tag = 'internal scratch']
  %s0 = inlined_call_operand.vmem [shape: bf16[128,640], index: 0, kind: input, shape index: {}]
  %s1 = inlined_call_operand.vmem [shape: bf16[640,512], index: 1, kind: input, shape index: {}]
  %s2 = inlined_call_operand.vmem [shape: bf16[128,512], index: 2, kind: output, shape index: {0}]
  %s3 = inlined_call_operand.vmem [shape: f32[8,512], index: 3, kind: output, shape index: {1}]
  %4 = xla_tuple %s2, %s3
  %s5 = sld [smem:[#allocation0]]
  $region26: #{generator_forward.11} parent=0
    _
  %s7 = ssub.s32 1, %s5
  %s8 = scalar_select 0, %s7, %s5
  // Predicated region
  $region2: #{generator_forward.11} parent=0 // pred_check
    _
  $region3: #{generator_forward.11} parent=0 // pred_check_branch
    %10 = sbr.rel (0) target = $region5
  $region4: #{generator_forward.11} parent=0 // pred_region
    _
  $region5: #{generator_forward.11} parent=0 // pred_fallthru
    _
  // Predicated region
  $region6: #{generator_forward.11} parent=0 // pred_check
    _
  $region7: #{generator_forward.11} parent=0 // pred_check_branch
    %12 = sbr.rel (0) target = $region9
  $region8: #{generator_forward.11} parent=0 // pred_region
    _
  $region9: #{generator_forward.11} parent=0 // pred_fallthru
    _
  %v13 = vld [vmem:[%s0] sm:$0xff]
  %v14 = vld [vmem:[%s0 + $0x8] sm:$0xff]
  %v15 = vld [vmem:[%s0 + $0x10] sm:$0xf]
  %v16 = vld [vmem:[%s0 + $0x14] sm:$0xff]
  %v17 = vld [vmem:[%s0 + $0x1c] sm:$0xff]
  %v18 = vld [vmem:[%s0 + $0x24] sm:$0xf]
  %v19 = vld [vmem:[%s0 + $0x28] sm:$0xff]
  %v20 = vld [vmem:[%s0 + $0x30] sm:$0xff]
  %v21 = vld [vmem:[%s0 + $0x38] sm:$0xf]
  %v22 = vld [vmem:[%s0 + $0x3c] sm:$0xff]
  %v23 = vld [vmem:[%s0 + $0x44] sm:$0xff]
  %v24 = vld [vmem:[%s0 + $0x4c] sm:$0xf]
  %v25 = vld [vmem:[%s0 + $0x50] sm:$0xff]
  %v26 = vld [vmem:[%s0 + $0x58] sm:$0xff]
  %v27 = vld [vmem:[%s0 + $0x60] sm:$0xf]
  %v28 = vld [vmem:[%s0 + $0x64] sm:$0xff]
  %v29 = vld [vmem:[%s0 + $0x6c] sm:$0xff]
  %v30 = vld [vmem:[%s0 + $0x74] sm:$0xf]
  %v31 = vld [vmem:[%s0 + $0x78] sm:$0xff]
  %v32 = vld [vmem:[%s0 + $0x80] sm:$0xff]
  %v33 = vld [vmem:[%s0 + $0x88] sm:$0xf]
  %v34 = vld [vmem:[%s0 + $0x8c] sm:$0xff]
  %v35 = vld [vmem:[%s0 + $0x94] sm:$0xff]
  %v36 = vld [vmem:[%s0 + $0x9c] sm:$0xf]
  %v37 = vld [vmem:[%s0 + $0xa0] sm:$0xff]
  %v38 = vld [vmem:[%s0 + $0xa8] sm:$0xff]
  %v39 = vld [vmem:[%s0 + $0xb0] sm:$0xf]
  %v40 = vld [vmem:[%s0 + $0xb4] sm:$0xff]
  %v41 = vld [vmem:[%s0 + $0xbc] sm:$0xff]
  %v42 = vld [vmem:[%s0 + $0xc4] sm:$0xf]
  %v43 = vld [vmem:[%s0 + $0xc8] sm:$0xff]
  %v44 = vld [vmem:[%s0 + $0xd0] sm:$0xff]
  %v45 = vld [vmem:[%s0 + $0xd8] sm:$0xf]
  %v46 = vld [vmem:[%s0 + $0xdc] sm:$0xff]
  %v47 = vld [vmem:[%s0 + $0xe4] sm:$0xff]
  %v48 = vld [vmem:[%s0 + $0xec] sm:$0xf]
  %v49 = vld [vmem:[%s0 + $0xf0] sm:$0xff]
  %v50 = vld [vmem:[%s0 + $0xf8] sm:$0xff]
  %v51 = vld [vmem:[%s0 + $0x100] sm:$0xf]
  %v52 = vld [vmem:[%s0 + $0x104] sm:$0xff]
  %v53 = vld [vmem:[%s0 + $0x10c] sm:$0xff]
  %v54 = vld [vmem:[%s0 + $0x114] sm:$0xf]
  %v55 = vld [vmem:[%s0 + $0x118] sm:$0xff]
  %v56 = vld [vmem:[%s0 + $0x120] sm:$0xff]
  %v57 = vld [vmem:[%s0 + $0x128] sm:$0xf]
  %v58 = vld [vmem:[%s0 + $0x12c] sm:$0xff]
  %v59 = vld [vmem:[%s0 + $0x134] sm:$0xff]
  %v60 = vld [vmem:[%s0 + $0x13c] sm:$0xf]
  %v61 = vld [vmem:[%s1] sm:$0xff]
  %v62 = vld [vmem:[%s1 + $0x8] sm:$0xff]
  %v63 = vld [vmem:[%s1 + $0x10] sm:$0xff]
  %v64 = vld [vmem:[%s1 + $0x18] sm:$0xff]
  %v65 = vld [vmem:[%s1 + $0x20] sm:$0xff]
  %v66 = vld [vmem:[%s1 + $0x28] sm:$0xff]
  %v67 = vld [vmem:[%s1 + $0x30] sm:$0xff]
  %v68 = vld [vmem:[%s1 + $0x38] sm:$0xff]
  %v69 = vld [vmem:[%s1 + $0x40] sm:$0xff]
  %v70 = vld [vmem:[%s1 + $0x48] sm:$0xff]
  %v71 = vld [vmem:[%s1 + $0x50] sm:$0xff]
  %v72 = vld [vmem:[%s1 + $0x58] sm:$0xff]
  %v73 = vld [vmem:[%s1 + $0x60] sm:$0xff]
  %v74 = vld [vmem:[%s1 + $0x68] sm:$0xff]
  %v75 = vld [vmem:[%s1 + $0x70] sm:$0xff]
  %v76 = vld [vmem:[%s1 + $0x78] sm:$0xff]
  %v77 = vld [vmem:[%s1 + $0x80] sm:$0xff]
  %v78 = vld [vmem:[%s1 + $0x88] sm:$0xff]
  %v79 = vld [vmem:[%s1 + $0x90] sm:$0xff]
  %v80 = vld [vmem:[%s1 + $0x98] sm:$0xff]
  %v81 = vld [vmem:[%s1 + $0xa0] sm:$0xff]
  %v82 = vld [vmem:[%s1 + $0xa8] sm:$0xff]
  %v83 = vld [vmem:[%s1 + $0xb0] sm:$0xff]
  %v84 = vld [vmem:[%s1 + $0xb8] sm:$0xff]
  %v85 = vld [vmem:[%s1 + $0xc0] sm:$0xff]
  %v86 = vld [vmem:[%s1 + $0xc8] sm:$0xff]
  %v87 = vld [vmem:[%s1 + $0xd0] sm:$0xff]
  %v88 = vld [vmem:[%s1 + $0xd8] sm:$0xff]
  %v89 = vld [vmem:[%s1 + $0xe0] sm:$0xff]
  %v90 = vld [vmem:[%s1 + $0xe8] sm:$0xff]
  %v91 = vld [vmem:[%s1 + $0xf0] sm:$0xff]
  %v92 = vld [vmem:[%s1 + $0xf8] sm:$0xff]
  %v93 = vld [vmem:[%s1 + $0x100] sm:$0xff]
  %v94 = vld [vmem:[%s1 + $0x108] sm:$0xff]
  %v95 = vld [vmem:[%s1 + $0x110] sm:$0xff]
  %v96 = vld [vmem:[%s1 + $0x118] sm:$0xff]
  %v97 = vld [vmem:[%s1 + $0x120] sm:$0xff]
  %v98 = vld [vmem:[%s1 + $0x128] sm:$0xff]
  %v99 = vld [vmem:[%s1 + $0x130] sm:$0xff]
  %v100 = vld [vmem:[%s1 + $0x138] sm:$0xff]
  %v101 = vld [vmem:[%s1 + $0x140] sm:$0xff]
  %v102 = vld [vmem:[%s1 + $0x148] sm:$0xff]
  %v103 = vld [vmem:[%s1 + $0x150] sm:$0xff]
  %v104 = vld [vmem:[%s1 + $0x158] sm:$0xff]
  %v105 = vld [vmem:[%s1 + $0x160] sm:$0xff]
  %v106 = vld [vmem:[%s1 + $0x168] sm:$0xff]
  %v107 = vld [vmem:[%s1 + $0x170] sm:$0xff]
  %v108 = vld [vmem:[%s1 + $0x178] sm:$0xff]
  %v109 = vld [vmem:[%s1 + $0x180] sm:$0xff]
  %v110 = vld [vmem:[%s1 + $0x188] sm:$0xff]
  %v111 = vld [vmem:[%s1 + $0x190] sm:$0xff]
  %v112 = vld [vmem:[%s1 + $0x198] sm:$0xff]
  %v113 = vld [vmem:[%s1 + $0x1a0] sm:$0xff]
  %v114 = vld [vmem:[%s1 + $0x1a8] sm:$0xff]
  %v115 = vld [vmem:[%s1 + $0x1b0] sm:$0xff]
  %v116 = vld [vmem:[%s1 + $0x1b8] sm:$0xff]
  %v117 = vld [vmem:[%s1 + $0x1c0] sm:$0xff]
  %v118 = vld [vmem:[%s1 + $0x1c8] sm:$0xff]
  %v119 = vld [vmem:[%s1 + $0x1d0] sm:$0xff]
  %v120 = vld [vmem:[%s1 + $0x1d8] sm:$0xff]
  %v121 = vld [vmem:[%s1 + $0x1e0] sm:$0xff]
  %v122 = vld [vmem:[%s1 + $0x1e8] sm:$0xff]
  %v123 = vld [vmem:[%s1 + $0x1f0] sm:$0xff]
  %v124 = vld [vmem:[%s1 + $0x1f8] sm:$0xff]
  %v125 = vld [vmem:[%s1 + $0x200] sm:$0xff]
  %v126 = vld [vmem:[%s1 + $0x208] sm:$0xff]
  %v127 = vld [vmem:[%s1 + $0x210] sm:$0xff]
  %v128 = vld [vmem:[%s1 + $0x218] sm:$0xff]
  %v129 = vld [vmem:[%s1 + $0x220] sm:$0xff]
  %v130 = vld [vmem:[%s1 + $0x228] sm:$0xff]
  %v131 = vld [vmem:[%s1 + $0x230] sm:$0xff]
  %v132 = vld [vmem:[%s1 + $0x238] sm:$0xff]
  %v133 = vld [vmem:[%s1 + $0x240] sm:$0xff]
  %v134 = vld [vmem:[%s1 + $0x248] sm:$0xff]
  %v135 = vld [vmem:[%s1 + $0x250] sm:$0xff]
  %v136 = vld [vmem:[%s1 + $0x258] sm:$0xff]
  %v137 = vld [vmem:[%s1 + $0x260] sm:$0xff]
  %v138 = vld [vmem:[%s1 + $0x268] sm:$0xff]
  %v139 = vld [vmem:[%s1 + $0x270] sm:$0xff]
  %v140 = vld [vmem:[%s1 + $0x278] sm:$0xff]
  %v141 = vld [vmem:[%s1 + $0x280] sm:$0xff]
  %v142 = vld [vmem:[%s1 + $0x288] sm:$0xff]
  %v143 = vld [vmem:[%s1 + $0x290] sm:$0xff]
  %v144 = vld [vmem:[%s1 + $0x298] sm:$0xff]
  %v145 = vld [vmem:[%s1 + $0x2a0] sm:$0xff]
  %v146 = vld [vmem:[%s1 + $0x2a8] sm:$0xff]
  %v147 = vld [vmem:[%s1 + $0x2b0] sm:$0xff]
  %v148 = vld [vmem:[%s1 + $0x2b8] sm:$0xff]
  %v149 = vld [vmem:[%s1 + $0x2c0] sm:$0xff]
  %v150 = vld [vmem:[%s1 + $0x2c8] sm:$0xff]
  %v151 = vld [vmem:[%s1 + $0x2d0] sm:$0xff]
  %v152 = vld [vmem:[%s1 + $0x2d8] sm:$0xff]
  %v153 = vld [vmem:[%s1 + $0x2e0] sm:$0xff]
  %v154 = vld [vmem:[%s1 + $0x2e8] sm:$0xff]
  %v155 = vld [vmem:[%s1 + $0x2f0] sm:$0xff]
  %v156 = vld [vmem:[%s1 + $0x2f8] sm:$0xff]
  %v157 = vld [vmem:[%s1 + $0x300] sm:$0xff]
  %v158 = vld [vmem:[%s1 + $0x308] sm:$0xff]
  %v159 = vld [vmem:[%s1 + $0x310] sm:$0xff]
  %v160 = vld [vmem:[%s1 + $0x318] sm:$0xff]
  %v161 = vld [vmem:[%s1 + $0x320] sm:$0xff]
  %v162 = vld [vmem:[%s1 + $0x328] sm:$0xff]
  %v163 = vld [vmem:[%s1 + $0x330] sm:$0xff]
  %v164 = vld [vmem:[%s1 + $0x338] sm:$0xff]
  %v165 = vld [vmem:[%s1 + $0x340] sm:$0xff]
  %v166 = vld [vmem:[%s1 + $0x348] sm:$0xff]
  %v167 = vld [vmem:[%s1 + $0x350] sm:$0xff]
  %v168 = vld [vmem:[%s1 + $0x358] sm:$0xff]
  %v169 = vld [vmem:[%s1 + $0x360] sm:$0xff]
  %v170 = vld [vmem:[%s1 + $0x368] sm:$0xff]
  %v171 = vld [vmem:[%s1 + $0x370] sm:$0xff]
  %v172 = vld [vmem:[%s1 + $0x378] sm:$0xff]
  %v173 = vld [vmem:[%s1 + $0x380] sm:$0xff]
  %v174 = vld [vmem:[%s1 + $0x388] sm:$0xff]
  %v175 = vld [vmem:[%s1 + $0x390] sm:$0xff]
  %v176 = vld [vmem:[%s1 + $0x398] sm:$0xff]
  %v177 = vld [vmem:[%s1 + $0x3a0] sm:$0xff]
  %v178 = vld [vmem:[%s1 + $0x3a8] sm:$0xff]
  %v179 = vld [vmem:[%s1 + $0x3b0] sm:$0xff]
  %v180 = vld [vmem:[%s1 + $0x3b8] sm:$0xff]
  %v181 = vld [vmem:[%s1 + $0x3c0] sm:$0xff]
  %v182 = vld [vmem:[%s1 + $0x3c8] sm:$0xff]
  %v183 = vld [vmem:[%s1 + $0x3d0] sm:$0xff]
  %v184 = vld [vmem:[%s1 + $0x3d8] sm:$0xff]
  %v185 = vld [vmem:[%s1 + $0x3e0] sm:$0xff]
  %v186 = vld [vmem:[%s1 + $0x3e8] sm:$0xff]
  %v187 = vld [vmem:[%s1 + $0x3f0] sm:$0xff]
  %v188 = vld [vmem:[%s1 + $0x3f8] sm:$0xff]
  %v189 = vld [vmem:[%s1 + $0x400] sm:$0xff]
  %v190 = vld [vmem:[%s1 + $0x408] sm:$0xff]
  %v191 = vld [vmem:[%s1 + $0x410] sm:$0xff]
  %v192 = vld [vmem:[%s1 + $0x418] sm:$0xff]
  %v193 = vld [vmem:[%s1 + $0x420] sm:$0xff]
  %v194 = vld [vmem:[%s1 + $0x428] sm:$0xff]
  %v195 = vld [vmem:[%s1 + $0x430] sm:$0xff]
  %v196 = vld [vmem:[%s1 + $0x438] sm:$0xff]
  %v197 = vld [vmem:[%s1 + $0x440] sm:$0xff]
  %v198 = vld [vmem:[%s1 + $0x448] sm:$0xff]
  %v199 = vld [vmem:[%s1 + $0x450] sm:$0xff]
  %v200 = vld [vmem:[%s1 + $0x458] sm:$0xff]
  %v201 = vld [vmem:[%s1 + $0x460] sm:$0xff]
  %v202 = vld [vmem:[%s1 + $0x468] sm:$0xff]
  %v203 = vld [vmem:[%s1 + $0x470] sm:$0xff]
  %v204 = vld [vmem:[%s1 + $0x478] sm:$0xff]
  %v205 = vld [vmem:[%s1 + $0x480] sm:$0xff]
  %v206 = vld [vmem:[%s1 + $0x488] sm:$0xff]
  %v207 = vld [vmem:[%s1 + $0x490] sm:$0xff]
  %v208 = vld [vmem:[%s1 + $0x498] sm:$0xff]
  %v209 = vld [vmem:[%s1 + $0x4a0] sm:$0xff]
  %v210 = vld [vmem:[%s1 + $0x4a8] sm:$0xff]
  %v211 = vld [vmem:[%s1 + $0x4b0] sm:$0xff]
  %v212 = vld [vmem:[%s1 + $0x4b8] sm:$0xff]
  %v213 = vld [vmem:[%s1 + $0x4c0] sm:$0xff]
  %v214 = vld [vmem:[%s1 + $0x4c8] sm:$0xff]
  %v215 = vld [vmem:[%s1 + $0x4d0] sm:$0xff]
  %v216 = vld [vmem:[%s1 + $0x4d8] sm:$0xff]
  %v217 = vld [vmem:[%s1 + $0x4e0] sm:$0xff]
  %v218 = vld [vmem:[%s1 + $0x4e8] sm:$0xff]
  %v219 = vld [vmem:[%s1 + $0x4f0] sm:$0xff]
  %v220 = vld [vmem:[%s1 + $0x4f8] sm:$0xff]
  %v269 = vunpack.c.l.b16 %v13
  %v270 = vunpack.c.h.b16 %v13
  %v271 = vunpack.c.l.b16 %v14
  %v272 = vunpack.c.h.b16 %v14
  %v273 = vunpack.c.l.b16 %v15
  %v274 = vunpack.c.l.b16 %v16
  %v275 = vunpack.c.h.b16 %v16
  %v276 = vunpack.c.l.b16 %v17
  %v277 = vunpack.c.h.b16 %v17
  %v278 = vunpack.c.l.b16 %v18
  %v279 = vunpack.c.l.b16 %v19
  %v280 = vunpack.c.h.b16 %v19
  %v281 = vunpack.c.l.b16 %v20
  %v282 = vunpack.c.h.b16 %v20
  %v283 = vunpack.c.l.b16 %v21
  %v284 = vunpack.c.l.b16 %v22
  %v285 = vunpack.c.h.b16 %v22
  %v286 = vunpack.c.l.b16 %v23
  %v287 = vunpack.c.h.b16 %v23
  %v288 = vunpack.c.l.b16 %v24
  %v289 = vunpack.c.l.b16 %v25
  %v290 = vunpack.c.h.b16 %v25
  %v291 = vunpack.c.l.b16 %v26
  %v292 = vunpack.c.h.b16 %v26
  %v293 = vunpack.c.l.b16 %v27
  %v294 = vunpack.c.l.b16 %v28
  %v295 = vunpack.c.h.b16 %v28
  %v296 = vunpack.c.l.b16 %v29
  %v297 = vunpack.c.h.b16 %v29
  %v298 = vunpack.c.l.b16 %v30
  %v299 = vunpack.c.l.b16 %v31
  %v300 = vunpack.c.h.b16 %v31
  %v301 = vunpack.c.l.b16 %v32
  %v302 = vunpack.c.h.b16 %v32
  %v303 = vunpack.c.l.b16 %v33
  %v304 = vunpack.c.l.b16 %v34
  %v305 = vunpack.c.h.b16 %v34
  %v306 = vunpack.c.l.b16 %v35
  %v307 = vunpack.c.h.b16 %v35
  %v308 = vunpack.c.l.b16 %v36
  %v309 = vunpack.c.l.b16 %v37
  %v310 = vunpack.c.h.b16 %v37
  %v311 = vunpack.c.l.b16 %v38
  %v312 = vunpack.c.h.b16 %v38
  %v313 = vunpack.c.l.b16 %v39
  %v314 = vunpack.c.l.b16 %v40
  %v315 = vunpack.c.h.b16 %v40
  %v316 = vunpack.c.l.b16 %v41
  %v317 = vunpack.c.h.b16 %v41
  %v318 = vunpack.c.l.b16 %v42
  %v319 = vunpack.c.l.b16 %v43
  %v320 = vunpack.c.h.b16 %v43
  %v321 = vunpack.c.l.b16 %v44
  %v322 = vunpack.c.h.b16 %v44
  %v323 = vunpack.c.l.b16 %v45
  %v324 = vunpack.c.l.b16 %v46
  %v325 = vunpack.c.h.b16 %v46
  %v326 = vunpack.c.l.b16 %v47
  %v327 = vunpack.c.h.b16 %v47
  %v328 = vunpack.c.l.b16 %v48
  %v329 = vunpack.c.l.b16 %v49
  %v330 = vunpack.c.h.b16 %v49
  %v331 = vunpack.c.l.b16 %v50
  %v332 = vunpack.c.h.b16 %v50
  %v333 = vunpack.c.l.b16 %v51
  %v334 = vunpack.c.l.b16 %v52
  %v335 = vunpack.c.h.b16 %v52
  %v336 = vunpack.c.l.b16 %v53
  %v337 = vunpack.c.h.b16 %v53
  %v338 = vunpack.c.l.b16 %v54
  %v339 = vunpack.c.l.b16 %v55
  %v340 = vunpack.c.h.b16 %v55
  %v341 = vunpack.c.l.b16 %v56
  %v342 = vunpack.c.h.b16 %v56
  %v343 = vunpack.c.l.b16 %v57
  %v344 = vunpack.c.l.b16 %v58
  %v345 = vunpack.c.h.b16 %v58
  %v346 = vunpack.c.l.b16 %v59
  %v347 = vunpack.c.h.b16 %v59
  %v348 = vunpack.c.l.b16 %v60
  %v349 = vpack.c.b16 %v274, %v269
  %v350 = vpack.c.b16 %v275, %v270
  %v351 = vpack.c.b16 %v276, %v271
  %v352 = vpack.c.b16 %v277, %v272
  %v353 = vpack.c.b16 %v278, %v273
  %v354 = vpack.c.b16 %v284, %v279
  %v355 = vpack.c.b16 %v285, %v280
  %v356 = vpack.c.b16 %v286, %v281
  %v357 = vpack.c.b16 %v287, %v282
  %v358 = vpack.c.b16 %v288, %v283
  %v359 = vpack.c.b16 %v294, %v289
  %v360 = vpack.c.b16 %v295, %v290
  %v361 = vpack.c.b16 %v296, %v291
  %v362 = vpack.c.b16 %v297, %v292
  %v363 = vpack.c.b16 %v298, %v293
  %v364 = vpack.c.b16 %v304, %v299
  %v365 = vpack.c.b16 %v305, %v300
  %v366 = vpack.c.b16 %v306, %v301
  %v367 = vpack.c.b16 %v307, %v302
  %v368 = vpack.c.b16 %v308, %v303
  %v369 = vpack.c.b16 %v314, %v309
  %v370 = vpack.c.b16 %v315, %v310
  %v371 = vpack.c.b16 %v316, %v311
  %v372 = vpack.c.b16 %v317, %v312
  %v373 = vpack.c.b16 %v318, %v313
  %v374 = vpack.c.b16 %v324, %v319
  %v375 = vpack.c.b16 %v325, %v320
  %v376 = vpack.c.b16 %v326, %v321
  %v377 = vpack.c.b16 %v327, %v322
  %v378 = vpack.c.b16 %v328, %v323
  %v379 = vpack.c.b16 %v334, %v329
  %v380 = vpack.c.b16 %v335, %v330
  %v381 = vpack.c.b16 %v336, %v331
  %v382 = vpack.c.b16 %v337, %v332
  %v383 = vpack.c.b16 %v338, %v333
  %v384 = vpack.c.b16 %v344, %v339
  %v385 = vpack.c.b16 %v345, %v340
  %v386 = vpack.c.b16 %v346, %v341
  %v387 = vpack.c.b16 %v347, %v342
  %v388 = vpack.c.b16 %v348, %v343
  %v589 = vunpack.c.l.b16 %v61
  %v590 = vunpack.c.h.b16 %v61
  %v591 = vunpack.c.l.b16 %v62
  %v592 = vunpack.c.h.b16 %v62
  %v593 = vunpack.c.l.b16 %v63
  %v594 = vunpack.c.h.b16 %v63
  %v595 = vunpack.c.l.b16 %v64
  %v596 = vunpack.c.h.b16 %v64
  %v597 = vunpack.c.l.b16 %v65
  %v598 = vunpack.c.h.b16 %v65
  %v599 = vunpack.c.l.b16 %v66
  %v600 = vunpack.c.h.b16 %v66
  %v601 = vunpack.c.l.b16 %v67
  %v602 = vunpack.c.h.b16 %v67
  %v603 = vunpack.c.l.b16 %v68
  %v604 = vunpack.c.h.b16 %v68
  %v605 = vunpack.c.l.b16 %v69
  %v606 = vunpack.c.h.b16 %v69
  %v607 = vunpack.c.l.b16 %v70
  %v608 = vunpack.c.h.b16 %v70
  %v609 = vunpack.c.l.b16 %v71
  %v610 = vunpack.c.h.b16 %v71
  %v611 = vunpack.c.l.b16 %v72
  %v612 = vunpack.c.h.b16 %v72
  %v613 = vunpack.c.l.b16 %v73
  %v614 = vunpack.c.h.b16 %v73
  %v615 = vunpack.c.l.b16 %v74
  %v616 = vunpack.c.h.b16 %v74
  %v617 = vunpack.c.l.b16 %v75
  %v618 = vunpack.c.h.b16 %v75
  %v619 = vunpack.c.l.b16 %v76
  %v620 = vunpack.c.h.b16 %v76
  %v621 = vunpack.c.l.b16 %v77
  %v622 = vunpack.c.h.b16 %v77
  %v623 = vunpack.c.l.b16 %v78
  %v624 = vunpack.c.h.b16 %v78
  %v625 = vunpack.c.l.b16 %v79
  %v626 = vunpack.c.h.b16 %v79
  %v627 = vunpack.c.l.b16 %v80
  %v628 = vunpack.c.h.b16 %v80
  %v629 = vunpack.c.l.b16 %v81
  %v630 = vunpack.c.h.b16 %v81
  %v631 = vunpack.c.l.b16 %v82
  %v632 = vunpack.c.h.b16 %v82
  %v633 = vunpack.c.l.b16 %v83
  %v634 = vunpack.c.h.b16 %v83
  %v635 = vunpack.c.l.b16 %v84
  %v636 = vunpack.c.h.b16 %v84
  %v637 = vunpack.c.l.b16 %v85
  %v638 = vunpack.c.h.b16 %v85
  %v639 = vunpack.c.l.b16 %v86
  %v640 = vunpack.c.h.b16 %v86
  %v641 = vunpack.c.l.b16 %v87
  %v642 = vunpack.c.h.b16 %v87
  %v643 = vunpack.c.l.b16 %v88
  %v644 = vunpack.c.h.b16 %v88
  %v645 = vunpack.c.l.b16 %v89
  %v646 = vunpack.c.h.b16 %v89
  %v647 = vunpack.c.l.b16 %v90
  %v648 = vunpack.c.h.b16 %v90
  %v649 = vunpack.c.l.b16 %v91
  %v650 = vunpack.c.h.b16 %v91
  %v651 = vunpack.c.l.b16 %v92
  %v652 = vunpack.c.h.b16 %v92
  %v653 = vunpack.c.l.b16 %v93
  %v654 = vunpack.c.h.b16 %v93
  %v655 = vunpack.c.l.b16 %v94
  %v656 = vunpack.c.h.b16 %v94
  %v657 = vunpack.c.l.b16 %v95
  %v658 = vunpack.c.h.b16 %v95
  %v659 = vunpack.c.l.b16 %v96
  %v660 = vunpack.c.h.b16 %v96
  %v661 = vunpack.c.l.b16 %v97
  %v662 = vunpack.c.h.b16 %v97
  %v663 = vunpack.c.l.b16 %v98
  %v664 = vunpack.c.h.b16 %v98
  %v665 = vunpack.c.l.b16 %v99
  %v666 = vunpack.c.h.b16 %v99
  %v667 = vunpack.c.l.b16 %v100
  %v668 = vunpack.c.h.b16 %v100
  %v669 = vunpack.c.l.b16 %v101
  %v670 = vunpack.c.h.b16 %v101
  %v671 = vunpack.c.l.b16 %v102
  %v672 = vunpack.c.h.b16 %v102
  %v673 = vunpack.c.l.b16 %v103
  %v674 = vunpack.c.h.b16 %v103
  %v675 = vunpack.c.l.b16 %v104
  %v676 = vunpack.c.h.b16 %v104
  %v677 = vunpack.c.l.b16 %v105
  %v678 = vunpack.c.h.b16 %v105
  %v679 = vunpack.c.l.b16 %v106
  %v680 = vunpack.c.h.b16 %v106
  %v681 = vunpack.c.l.b16 %v107
  %v682 = vunpack.c.h.b16 %v107
  %v683 = vunpack.c.l.b16 %v108
  %v684 = vunpack.c.h.b16 %v108
  %v685 = vunpack.c.l.b16 %v109
  %v686 = vunpack.c.h.b16 %v109
  %v687 = vunpack.c.l.b16 %v110
  %v688 = vunpack.c.h.b16 %v110
  %v689 = vunpack.c.l.b16 %v111
  %v690 = vunpack.c.h.b16 %v111
  %v691 = vunpack.c.l.b16 %v112
  %v692 = vunpack.c.h.b16 %v112
  %v693 = vunpack.c.l.b16 %v113
  %v694 = vunpack.c.h.b16 %v113
  %v695 = vunpack.c.l.b16 %v114
  %v696 = vunpack.c.h.b16 %v114
  %v697 = vunpack.c.l.b16 %v115
  %v698 = vunpack.c.h.b16 %v115
  %v699 = vunpack.c.l.b16 %v116
  %v700 = vunpack.c.h.b16 %v116
  %v701 = vunpack.c.l.b16 %v117
  %v702 = vunpack.c.h.b16 %v117
  %v703 = vunpack.c.l.b16 %v118
  %v704 = vunpack.c.h.b16 %v118
  %v705 = vunpack.c.l.b16 %v119
  %v706 = vunpack.c.h.b16 %v119
  %v707 = vunpack.c.l.b16 %v120
  %v708 = vunpack.c.h.b16 %v120
  %v709 = vunpack.c.l.b16 %v121
  %v710 = vunpack.c.h.b16 %v121
  %v711 = vunpack.c.l.b16 %v122
  %v712 = vunpack.c.h.b16 %v122
  %v713 = vunpack.c.l.b16 %v123
  %v714 = vunpack.c.h.b16 %v123
  %v715 = vunpack.c.l.b16 %v124
  %v716 = vunpack.c.h.b16 %v124
  %v717 = vunpack.c.l.b16 %v125
  %v718 = vunpack.c.h.b16 %v125
  %v719 = vunpack.c.l.b16 %v126
  %v720 = vunpack.c.h.b16 %v126
  %v721 = vunpack.c.l.b16 %v127
  %v722 = vunpack.c.h.b16 %v127
  %v723 = vunpack.c.l.b16 %v128
  %v724 = vunpack.c.h.b16 %v128
  %v725 = vunpack.c.l.b16 %v129
  %v726 = vunpack.c.h.b16 %v129
  %v727 = vunpack.c.l.b16 %v130
  %v728 = vunpack.c.h.b16 %v130
  %v729 = vunpack.c.l.b16 %v131
  %v730 = vunpack.c.h.b16 %v131
  %v731 = vunpack.c.l.b16 %v132
  %v732 = vunpack.c.h.b16 %v132
  %v733 = vunpack.c.l.b16 %v133
  %v734 = vunpack.c.h.b16 %v133
  %v735 = vunpack.c.l.b16 %v134
  %v736 = vunpack.c.h.b16 %v134
  %v737 = vunpack.c.l.b16 %v135
  %v738 = vunpack.c.h.b16 %v135
  %v739 = vunpack.c.l.b16 %v136
  %v740 = vunpack.c.h.b16 %v136
  %v741 = vunpack.c.l.b16 %v137
  %v742 = vunpack.c.h.b16 %v137
  %v743 = vunpack.c.l.b16 %v138
  %v744 = vunpack.c.h.b16 %v138
  %v745 = vunpack.c.l.b16 %v139
  %v746 = vunpack.c.h.b16 %v139
  %v747 = vunpack.c.l.b16 %v140
  %v748 = vunpack.c.h.b16 %v140
  %v749 = vunpack.c.l.b16 %v141
  %v750 = vunpack.c.h.b16 %v141
  %v751 = vunpack.c.l.b16 %v142
  %v752 = vunpack.c.h.b16 %v142
  %v753 = vunpack.c.l.b16 %v143
  %v754 = vunpack.c.h.b16 %v143
  %v755 = vunpack.c.l.b16 %v144
  %v756 = vunpack.c.h.b16 %v144
  %v757 = vunpack.c.l.b16 %v145
  %v758 = vunpack.c.h.b16 %v145
  %v759 = vunpack.c.l.b16 %v146
  %v760 = vunpack.c.h.b16 %v146
  %v761 = vunpack.c.l.b16 %v147
  %v762 = vunpack.c.h.b16 %v147
  %v763 = vunpack.c.l.b16 %v148
  %v764 = vunpack.c.h.b16 %v148
  %v765 = vunpack.c.l.b16 %v149
  %v766 = vunpack.c.h.b16 %v149
  %v767 = vunpack.c.l.b16 %v150
  %v768 = vunpack.c.h.b16 %v150
  %v769 = vunpack.c.l.b16 %v151
  %v770 = vunpack.c.h.b16 %v151
  %v771 = vunpack.c.l.b16 %v152
  %v772 = vunpack.c.h.b16 %v152
  %v773 = vunpack.c.l.b16 %v153
  %v774 = vunpack.c.h.b16 %v153
  %v775 = vunpack.c.l.b16 %v154
  %v776 = vunpack.c.h.b16 %v154
  %v777 = vunpack.c.l.b16 %v155
  %v778 = vunpack.c.h.b16 %v155
  %v779 = vunpack.c.l.b16 %v156
  %v780 = vunpack.c.h.b16 %v156
  %v781 = vunpack.c.l.b16 %v157
  %v782 = vunpack.c.h.b16 %v157
  %v783 = vunpack.c.l.b16 %v158
  %v784 = vunpack.c.h.b16 %v158
  %v785 = vunpack.c.l.b16 %v159
  %v786 = vunpack.c.h.b16 %v159
  %v787 = vunpack.c.l.b16 %v160
  %v788 = vunpack.c.h.b16 %v160
  %v789 = vunpack.c.l.b16 %v161
  %v790 = vunpack.c.h.b16 %v161
  %v791 = vunpack.c.l.b16 %v162
  %v792 = vunpack.c.h.b16 %v162
  %v793 = vunpack.c.l.b16 %v163
  %v794 = vunpack.c.h.b16 %v163
  %v795 = vunpack.c.l.b16 %v164
  %v796 = vunpack.c.h.b16 %v164
  %v797 = vunpack.c.l.b16 %v165
  %v798 = vunpack.c.h.b16 %v165
  %v799 = vunpack.c.l.b16 %v166
  %v800 = vunpack.c.h.b16 %v166
  %v801 = vunpack.c.l.b16 %v167
  %v802 = vunpack.c.h.b16 %v167
  %v803 = vunpack.c.l.b16 %v168
  %v804 = vunpack.c.h.b16 %v168
  %v805 = vunpack.c.l.b16 %v169
  %v806 = vunpack.c.h.b16 %v169
  %v807 = vunpack.c.l.b16 %v170
  %v808 = vunpack.c.h.b16 %v170
  %v809 = vunpack.c.l.b16 %v171
  %v810 = vunpack.c.h.b16 %v171
  %v811 = vunpack.c.l.b16 %v172
  %v812 = vunpack.c.h.b16 %v172
  %v813 = vunpack.c.l.b16 %v173
  %v814 = vunpack.c.h.b16 %v173
  %v815 = vunpack.c.l.b16 %v174
  %v816 = vunpack.c.h.b16 %v174
  %v817 = vunpack.c.l.b16 %v175
  %v818 = vunpack.c.h.b16 %v175
  %v819 = vunpack.c.l.b16 %v176
  %v820 = vunpack.c.h.b16 %v176
  %v821 = vunpack.c.l.b16 %v177
  %v822 = vunpack.c.h.b16 %v177
  %v823 = vunpack.c.l.b16 %v178
  %v824 = vunpack.c.h.b16 %v178
  %v825 = vunpack.c.l.b16 %v179
  %v826 = vunpack.c.h.b16 %v179
  %v827 = vunpack.c.l.b16 %v180
  %v828 = vunpack.c.h.b16 %v180
  %v829 = vunpack.c.l.b16 %v181
  %v830 = vunpack.c.h.b16 %v181
  %v831 = vunpack.c.l.b16 %v182
  %v832 = vunpack.c.h.b16 %v182
  %v833 = vunpack.c.l.b16 %v183
  %v834 = vunpack.c.h.b16 %v183
  %v835 = vunpack.c.l.b16 %v184
  %v836 = vunpack.c.h.b16 %v184
  %v837 = vunpack.c.l.b16 %v185
  %v838 = vunpack.c.h.b16 %v185
  %v839 = vunpack.c.l.b16 %v186
  %v840 = vunpack.c.h.b16 %v186
  %v841 = vunpack.c.l.b16 %v187
  %v842 = vunpack.c.h.b16 %v187
  %v843 = vunpack.c.l.b16 %v188
  %v844 = vunpack.c.h.b16 %v188
  %v845 = vunpack.c.l.b16 %v189
  %v846 = vunpack.c.h.b16 %v189
  %v847 = vunpack.c.l.b16 %v190
  %v848 = vunpack.c.h.b16 %v190
  %v849 = vunpack.c.l.b16 %v191
  %v850 = vunpack.c.h.b16 %v191
  %v851 = vunpack.c.l.b16 %v192
  %v852 = vunpack.c.h.b16 %v192
  %v853 = vunpack.c.l.b16 %v193
  %v854 = vunpack.c.h.b16 %v193
  %v855 = vunpack.c.l.b16 %v194
  %v856 = vunpack.c.h.b16 %v194
  %v857 = vunpack.c.l.b16 %v195
  %v858 = vunpack.c.h.b16 %v195
  %v859 = vunpack.c.l.b16 %v196
  %v860 = vunpack.c.h.b16 %v196
  %v861 = vunpack.c.l.b16 %v197
  %v862 = vunpack.c.h.b16 %v197
  %v863 = vunpack.c.l.b16 %v198
  %v864 = vunpack.c.h.b16 %v198
  %v865 = vunpack.c.l.b16 %v199
  %v866 = vunpack.c.h.b16 %v199
  %v867 = vunpack.c.l.b16 %v200
  %v868 = vunpack.c.h.b16 %v200
  %v869 = vunpack.c.l.b16 %v201
  %v870 = vunpack.c.h.b16 %v201
  %v871 = vunpack.c.l.b16 %v202
  %v872 = vunpack.c.h.b16 %v202
  %v873 = vunpack.c.l.b16 %v203
  %v874 = vunpack.c.h.b16 %v203
  %v875 = vunpack.c.l.b16 %v204
  %v876 = vunpack.c.h.b16 %v204
  %v877 = vunpack.c.l.b16 %v205
  %v878 = vunpack.c.h.b16 %v205
  %v879 = vunpack.c.l.b16 %v206
  %v880 = vunpack.c.h.b16 %v206
  %v881 = vunpack.c.l.b16 %v207
  %v882 = vunpack.c.h.b16 %v207
  %v883 = vunpack.c.l.b16 %v208
  %v884 = vunpack.c.h.b16 %v208
  %v885 = vunpack.c.l.b16 %v209
  %v886 = vunpack.c.h.b16 %v209
  %v887 = vunpack.c.l.b16 %v210
  %v888 = vunpack.c.h.b16 %v210
  %v889 = vunpack.c.l.b16 %v211
  %v890 = vunpack.c.h.b16 %v211
  %v891 = vunpack.c.l.b16 %v212
  %v892 = vunpack.c.h.b16 %v212
  %v893 = vunpack.c.l.b16 %v213
  %v894 = vunpack.c.h.b16 %v213
  %v895 = vunpack.c.l.b16 %v214
  %v896 = vunpack.c.h.b16 %v214
  %v897 = vunpack.c.l.b16 %v215
  %v898 = vunpack.c.h.b16 %v215
  %v899 = vunpack.c.l.b16 %v216
  %v900 = vunpack.c.h.b16 %v216
  %v901 = vunpack.c.l.b16 %v217
  %v902 = vunpack.c.h.b16 %v217
  %v903 = vunpack.c.l.b16 %v218
  %v904 = vunpack.c.h.b16 %v218
  %v905 = vunpack.c.l.b16 %v219
  %v906 = vunpack.c.h.b16 %v219
  %v907 = vunpack.c.l.b16 %v220
  %v908 = vunpack.c.h.b16 %v220
  %v909 = vpack.c.b16 %v593, %v589
  %v910 = vpack.c.b16 %v594, %v590
  %v911 = vpack.c.b16 %v595, %v591
  %v912 = vpack.c.b16 %v596, %v592
  %v913 = vpack.c.b16 %v601, %v597
  %v914 = vpack.c.b16 %v602, %v598
  %v915 = vpack.c.b16 %v603, %v599
  %v916 = vpack.c.b16 %v604, %v600
  %v917 = vpack.c.b16 %v609, %v605
  %v918 = vpack.c.b16 %v610, %v606
  %v919 = vpack.c.b16 %v611, %v607
  %v920 = vpack.c.b16 %v612, %v608
  %v921 = vpack.c.b16 %v617, %v613
  %v922 = vpack.c.b16 %v618, %v614
  %v923 = vpack.c.b16 %v619, %v615
  %v924 = vpack.c.b16 %v620, %v616
  %v925 = vpack.c.b16 %v625, %v621
  %v926 = vpack.c.b16 %v626, %v622
  %v927 = vpack.c.b16 %v627, %v623
  %v928 = vpack.c.b16 %v628, %v624
  %v929 = vpack.c.b16 %v633, %v629
  %v930 = vpack.c.b16 %v634, %v630
  %v931 = vpack.c.b16 %v635, %v631
  %v932 = vpack.c.b16 %v636, %v632
  %v933 = vpack.c.b16 %v641, %v637
  %v934 = vpack.c.b16 %v642, %v638
  %v935 = vpack.c.b16 %v643, %v639
  %v936 = vpack.c.b16 %v644, %v640
  %v937 = vpack.c.b16 %v649, %v645
  %v938 = vpack.c.b16 %v650, %v646
  %v939 = vpack.c.b16 %v651, %v647
  %v940 = vpack.c.b16 %v652, %v648
  %v941 = vpack.c.b16 %v657, %v653
  %v942 = vpack.c.b16 %v658, %v654
  %v943 = vpack.c.b16 %v659, %v655
  %v944 = vpack.c.b16 %v660, %v656
  %v945 = vpack.c.b16 %v665, %v661
  %v946 = vpack.c.b16 %v666, %v662
  %v947 = vpack.c.b16 %v667, %v663
  %v948 = vpack.c.b16 %v668, %v664
  %v949 = vpack.c.b16 %v673, %v669
  %v950 = vpack.c.b16 %v674, %v670
  %v951 = vpack.c.b16 %v675, %v671
  %v952 = vpack.c.b16 %v676, %v672
  %v953 = vpack.c.b16 %v681, %v677
  %v954 = vpack.c.b16 %v682, %v678
  %v955 = vpack.c.b16 %v683, %v679
  %v956 = vpack.c.b16 %v684, %v680
  %v957 = vpack.c.b16 %v689, %v685
  %v958 = vpack.c.b16 %v690, %v686
  %v959 = vpack.c.b16 %v691, %v687
  %v960 = vpack.c.b16 %v692, %v688
  %v961 = vpack.c.b16 %v697, %v693
  %v962 = vpack.c.b16 %v698, %v694
  %v963 = vpack.c.b16 %v699, %v695
  %v964 = vpack.c.b16 %v700, %v696
  %v965 = vpack.c.b16 %v705, %v701
  %v966 = vpack.c.b16 %v706, %v702
  %v967 = vpack.c.b16 %v707, %v703
  %v968 = vpack.c.b16 %v708, %v704
  %v969 = vpack.c.b16 %v713, %v709
  %v970 = vpack.c.b16 %v714, %v710
  %v971 = vpack.c.b16 %v715, %v711
  %v972 = vpack.c.b16 %v716, %v712
  %v973 = vpack.c.b16 %v721, %v717
  %v974 = vpack.c.b16 %v722, %v718
  %v975 = vpack.c.b16 %v723, %v719
  %v976 = vpack.c.b16 %v724, %v720
  %v977 = vpack.c.b16 %v729, %v725
  %v978 = vpack.c.b16 %v730, %v726
  %v979 = vpack.c.b16 %v731, %v727
  %v980 = vpack.c.b16 %v732, %v728
  %v981 = vpack.c.b16 %v737, %v733
  %v982 = vpack.c.b16 %v738, %v734
  %v983 = vpack.c.b16 %v739, %v735
  %v984 = vpack.c.b16 %v740, %v736
  %v985 = vpack.c.b16 %v745, %v741
  %v986 = vpack.c.b16 %v746, %v742
  %v987 = vpack.c.b16 %v747, %v743
  %v988 = vpack.c.b16 %v748, %v744
  %v989 = vpack.c.b16 %v753, %v749
  %v990 = vpack.c.b16 %v754, %v750
  %v991 = vpack.c.b16 %v755, %v751
  %v992 = vpack.c.b16 %v756, %v752
  %v993 = vpack.c.b16 %v761, %v757
  %v994 = vpack.c.b16 %v762, %v758
  %v995 = vpack.c.b16 %v763, %v759
  %v996 = vpack.c.b16 %v764, %v760
  %v997 = vpack.c.b16 %v769, %v765
  %v998 = vpack.c.b16 %v770, %v766
  %v999 = vpack.c.b16 %v771, %v767
  %v1000 = vpack.c.b16 %v772, %v768
  %v1001 = vpack.c.b16 %v777, %v773
  %v1002 = vpack.c.b16 %v778, %v774
  %v1003 = vpack.c.b16 %v779, %v775
  %v1004 = vpack.c.b16 %v780, %v776
  %v1005 = vpack.c.b16 %v785, %v781
  %v1006 = vpack.c.b16 %v786, %v782
  %v1007 = vpack.c.b16 %v787, %v783
  %v1008 = vpack.c.b16 %v788, %v784
  %v1009 = vpack.c.b16 %v793, %v789
  %v1010 = vpack.c.b16 %v794, %v790
  %v1011 = vpack.c.b16 %v795, %v791
  %v1012 = vpack.c.b16 %v796, %v792
  %v1013 = vpack.c.b16 %v801, %v797
  %v1014 = vpack.c.b16 %v802, %v798
  %v1015 = vpack.c.b16 %v803, %v799
  %v1016 = vpack.c.b16 %v804, %v800
  %v1017 = vpack.c.b16 %v809, %v805
  %v1018 = vpack.c.b16 %v810, %v806
  %v1019 = vpack.c.b16 %v811, %v807
  %v1020 = vpack.c.b16 %v812, %v808
  %v1021 = vpack.c.b16 %v817, %v813
  %v1022 = vpack.c.b16 %v818, %v814
  %v1023 = vpack.c.b16 %v819, %v815
  %v1024 = vpack.c.b16 %v820, %v816
  %v1025 = vpack.c.b16 %v825, %v821
  %v1026 = vpack.c.b16 %v826, %v822
  %v1027 = vpack.c.b16 %v827, %v823
  %v1028 = vpack.c.b16 %v828, %v824
  %v1029 = vpack.c.b16 %v833, %v829
  %v1030 = vpack.c.b16 %v834, %v830
  %v1031 = vpack.c.b16 %v835, %v831
  %v1032 = vpack.c.b16 %v836, %v832
  %v1033 = vpack.c.b16 %v841, %v837
  %v1034 = vpack.c.b16 %v842, %v838
  %v1035 = vpack.c.b16 %v843, %v839
  %v1036 = vpack.c.b16 %v844, %v840
  %v1037 = vpack.c.b16 %v849, %v845
  %v1038 = vpack.c.b16 %v850, %v846
  %v1039 = vpack.c.b16 %v851, %v847
  %v1040 = vpack.c.b16 %v852, %v848
  %v1041 = vpack.c.b16 %v857, %v853
  %v1042 = vpack.c.b16 %v858, %v854
  %v1043 = vpack.c.b16 %v859, %v855
  %v1044 = vpack.c.b16 %v860, %v856
  %v1045 = vpack.c.b16 %v865, %v861
  %v1046 = vpack.c.b16 %v866, %v862
  %v1047 = vpack.c.b16 %v867, %v863
  %v1048 = vpack.c.b16 %v868, %v864
  %v1049 = vpack.c.b16 %v873, %v869
  %v1050 = vpack.c.b16 %v874, %v870
  %v1051 = vpack.c.b16 %v875, %v871
  %v1052 = vpack.c.b16 %v876, %v872
  %v1053 = vpack.c.b16 %v881, %v877
  %v1054 = vpack.c.b16 %v882, %v878
  %v1055 = vpack.c.b16 %v883, %v879
  %v1056 = vpack.c.b16 %v884, %v880
  %v1057 = vpack.c.b16 %v889, %v885
  %v1058 = vpack.c.b16 %v890, %v886
  %v1059 = vpack.c.b16 %v891, %v887
  %v1060 = vpack.c.b16 %v892, %v888
  %v1061 = vpack.c.b16 %v897, %v893
  %v1062 = vpack.c.b16 %v898, %v894
  %v1063 = vpack.c.b16 %v899, %v895
  %v1064 = vpack.c.b16 %v900, %v896
  %v1065 = vpack.c.b16 %v905, %v901
  %v1066 = vpack.c.b16 %v906, %v902
  %v1067 = vpack.c.b16 %v907, %v903
  %v1068 = vpack.c.b16 %v908, %v904
  %1229 = vmatpush.bf16.msra.mxu0 %v937
  %1230 = vmatpush.bf16.msra.mxu0 %v933
  %1231 = vmatpush.bf16.msra.mxu0 %v929
  %1232 = vmatpush.bf16.msra.mxu0 %v925
  %1233 = vmatpush.bf16.msra.mxu0 %v921
  %1234 = vmatpush.bf16.msra.mxu0 %v917
  %1235 = vmatpush.bf16.msra.mxu0 %v913
  %1236 = vmatpush.bf16.msra.mxu0 %v909
  %1237 = vmatmul.bf16.gmra.mxu0 %v349
  %v1238 = vpop.f32.mrf.mxu0
  %v1239 = vadd.f32 0.0, %v1238
  %v1240 = vpop.f32.mrf.mxu0
  %v1241 = vadd.f32 0.0, %v1240
  %1242 = vmatmul.bf16.gmra.mxu0 %v354
  %v1243 = vpop.f32.mrf.mxu0
  %v1244 = vadd.f32 0.0, %v1243
  %v1245 = vpop.f32.mrf.mxu0
  %v1246 = vadd.f32 0.0, %v1245
  %1247 = vmatmul.bf16.gmra.mxu0 %v359
  %v1248 = vpop.f32.mrf.mxu0
  %v1249 = vadd.f32 0.0, %v1248
  %v1250 = vpop.f32.mrf.mxu0
  %v1251 = vadd.f32 0.0, %v1250
  %1252 = vmatmul.bf16.gmra.mxu0 %v364
  %v1253 = vpop.f32.mrf.mxu0
  %v1254 = vadd.f32 0.0, %v1253
  %v1255 = vpop.f32.mrf.mxu0
  %v1256 = vadd.f32 0.0, %v1255
  %1257 = vmatmul.bf16.gmra.mxu0 %v369
  %v1258 = vpop.f32.mrf.mxu0
  %v1259 = vadd.f32 0.0, %v1258
  %v1260 = vpop.f32.mrf.mxu0
  %v1261 = vadd.f32 0.0, %v1260
  %1262 = vmatmul.bf16.gmra.mxu0 %v374
  %v1263 = vpop.f32.mrf.mxu0
  %v1264 = vadd.f32 0.0, %v1263
  %v1265 = vpop.f32.mrf.mxu0
  %v1266 = vadd.f32 0.0, %v1265
  %1267 = vmatmul.bf16.gmra.mxu0 %v379
  %v1268 = vpop.f32.mrf.mxu0
  %v1269 = vadd.f32 0.0, %v1268
  %v1270 = vpop.f32.mrf.mxu0
  %v1271 = vadd.f32 0.0, %v1270
  %1272 = vmatmul.bf16.gmra.mxu0 %v384
  %v1273 = vpop.f32.mrf.mxu0
  %v1274 = vadd.f32 0.0, %v1273
  %v1275 = vpop.f32.mrf.mxu0
  %v1276 = vadd.f32 0.0, %v1275
  %1277 = vdwg.mxu0
  %1278 = vmatpush.bf16.msra.mxu0 %v969
  %1279 = vmatpush.bf16.msra.mxu0 %v965
  %1280 = vmatpush.bf16.msra.mxu0 %v961
  %1281 = vmatpush.bf16.msra.mxu0 %v957
  %1282 = vmatpush.bf16.msra.mxu0 %v953
  %1283 = vmatpush.bf16.msra.mxu0 %v949
  %1284 = vmatpush.bf16.msra.mxu0 %v945
  %1285 = vmatpush.bf16.msra.mxu0 %v941
  %1286 = vmatmul.bf16.gmra.mxu0 %v350
  %v1287 = vpop.f32.mrf.mxu0
  %v1288 = vadd.f32 %v1239, %v1287
  %v1289 = vpop.f32.mrf.mxu0
  %v1290 = vadd.f32 %v1241, %v1289
  %1291 = vmatmul.bf16.gmra.mxu0 %v355
  %v1292 = vpop.f32.mrf.mxu0
  %v1293 = vadd.f32 %v1244, %v1292
  %v1294 = vpop.f32.mrf.mxu0
  %v1295 = vadd.f32 %v1246, %v1294
  %1296 = vmatmul.bf16.gmra.mxu0 %v360
  %v1297 = vpop.f32.mrf.mxu0
  %v1298 = vadd.f32 %v1249, %v1297
  %v1299 = vpop.f32.mrf.mxu0
  %v1300 = vadd.f32 %v1251, %v1299
  %1301 = vmatmul.bf16.gmra.mxu0 %v365
  %v1302 = vpop.f32.mrf.mxu0
  %v1303 = vadd.f32 %v1254, %v1302
  %v1304 = vpop.f32.mrf.mxu0
  %v1305 = vadd.f32 %v1256, %v1304
  %1306 = vmatmul.bf16.gmra.mxu0 %v370
  %v1307 = vpop.f32.mrf.mxu0
  %v1308 = vadd.f32 %v1259, %v1307
  %v1309 = vpop.f32.mrf.mxu0
  %v1310 = vadd.f32 %v1261, %v1309
  %1311 = vmatmul.bf16.gmra.mxu0 %v375
  %v1312 = vpop.f32.mrf.mxu0
  %v1313 = vadd.f32 %v1264, %v1312
  %v1314 = vpop.f32.mrf.mxu0
  %v1315 = vadd.f32 %v1266, %v1314
  %1316 = vmatmul.bf16.gmra.mxu0 %v380
  %v1317 = vpop.f32.mrf.mxu0
  %v1318 = vadd.f32 %v1269, %v1317
  %v1319 = vpop.f32.mrf.mxu0
  %v1320 = vadd.f32 %v1271, %v1319
  %1321 = vmatmul.bf16.gmra.mxu0 %v385
  %v1322 = vpop.f32.mrf.mxu0
  %v1323 = vadd.f32 %v1274, %v1322
  %v1324 = vpop.f32.mrf.mxu0
  %v1325 = vadd.f32 %v1276, %v1324
  %1326 = vdwg.mxu0
  %1327 = vmatpush.bf16.msra.mxu0 %v1001
  %1328 = vmatpush.bf16.msra.mxu0 %v997
  %1329 = vmatpush.bf16.msra.mxu0 %v993
  %1330 = vmatpush.bf16.msra.mxu0 %v989
  %1331 = vmatpush.bf16.msra.mxu0 %v985
  %1332 = vmatpush.bf16.msra.mxu0 %v981
  %1333 = vmatpush.bf16.msra.mxu0 %v977
  %1334 = vmatpush.bf16.msra.mxu0 %v973
  %1335 = vmatmul.bf16.gmra.mxu0 %v351
  %v1336 = vpop.f32.mrf.mxu0
  %v1337 = vadd.f32 %v1288, %v1336
  %v1338 = vpop.f32.mrf.mxu0
  %v1339 = vadd.f32 %v1290, %v1338
  %1340 = vmatmul.bf16.gmra.mxu0 %v356
  %v1341 = vpop.f32.mrf.mxu0
  %v1342 = vadd.f32 %v1293, %v1341
  %v1343 = vpop.f32.mrf.mxu0
  %v1344 = vadd.f32 %v1295, %v1343
  %1345 = vmatmul.bf16.gmra.mxu0 %v361
  %v1346 = vpop.f32.mrf.mxu0
  %v1347 = vadd.f32 %v1298, %v1346
  %v1348 = vpop.f32.mrf.mxu0
  %v1349 = vadd.f32 %v1300, %v1348
  %1350 = vmatmul.bf16.gmra.mxu0 %v366
  %v1351 = vpop.f32.mrf.mxu0
  %v1352 = vadd.f32 %v1303, %v1351
  %v1353 = vpop.f32.mrf.mxu0
  %v1354 = vadd.f32 %v1305, %v1353
  %1355 = vmatmul.bf16.gmra.mxu0 %v371
  %v1356 = vpop.f32.mrf.mxu0
  %v1357 = vadd.f32 %v1308, %v1356
  %v1358 = vpop.f32.mrf.mxu0
  %v1359 = vadd.f32 %v1310, %v1358
  %1360 = vmatmul.bf16.gmra.mxu0 %v376
  %v1361 = vpop.f32.mrf.mxu0
  %v1362 = vadd.f32 %v1313, %v1361
  %v1363 = vpop.f32.mrf.mxu0
  %v1364 = vadd.f32 %v1315, %v1363
  %1365 = vmatmul.bf16.gmra.mxu0 %v381
  %v1366 = vpop.f32.mrf.mxu0
  %v1367 = vadd.f32 %v1318, %v1366
  %v1368 = vpop.f32.mrf.mxu0
  %v1369 = vadd.f32 %v1320, %v1368
  %1370 = vmatmul.bf16.gmra.mxu0 %v386
  %v1371 = vpop.f32.mrf.mxu0
  %v1372 = vadd.f32 %v1323, %v1371
  %v1373 = vpop.f32.mrf.mxu0
  %v1374 = vadd.f32 %v1325, %v1373
  %1375 = vdwg.mxu0
  %1376 = vmatpush.bf16.msra.mxu0 %v1033
  %1377 = vmatpush.bf16.msra.mxu0 %v1029
  %1378 = vmatpush.bf16.msra.mxu0 %v1025
  %1379 = vmatpush.bf16.msra.mxu0 %v1021
  %1380 = vmatpush.bf16.msra.mxu0 %v1017
  %1381 = vmatpush.bf16.msra.mxu0 %v1013
  %1382 = vmatpush.bf16.msra.mxu0 %v1009
  %1383 = vmatpush.bf16.msra.mxu0 %v1005
  %1384 = vmatmul.bf16.gmra.mxu0 %v352
  %v1385 = vpop.f32.mrf.mxu0
  %v1386 = vadd.f32 %v1337, %v1385
  %v1387 = vpop.f32.mrf.mxu0
  %v1388 = vadd.f32 %v1339, %v1387
  %1389 = vmatmul.bf16.gmra.mxu0 %v357
  %v1390 = vpop.f32.mrf.mxu0
  %v1391 = vadd.f32 %v1342, %v1390
  %v1392 = vpop.f32.mrf.mxu0
  %v1393 = vadd.f32 %v1344, %v1392
  %1394 = vmatmul.bf16.gmra.mxu0 %v362
  %v1395 = vpop.f32.mrf.mxu0
  %v1396 = vadd.f32 %v1347, %v1395
  %v1397 = vpop.f32.mrf.mxu0
  %v1398 = vadd.f32 %v1349, %v1397
  %1399 = vmatmul.bf16.gmra.mxu0 %v367
  %v1400 = vpop.f32.mrf.mxu0
  %v1401 = vadd.f32 %v1352, %v1400
  %v1402 = vpop.f32.mrf.mxu0
  %v1403 = vadd.f32 %v1354, %v1402
  %1404 = vmatmul.bf16.gmra.mxu0 %v372
  %v1405 = vpop.f32.mrf.mxu0
  %v1406 = vadd.f32 %v1357, %v1405
  %v1407 = vpop.f32.mrf.mxu0
  %v1408 = vadd.f32 %v1359, %v1407
  %1409 = vmatmul.bf16.gmra.mxu0 %v377
  %v1410 = vpop.f32.mrf.mxu0
  %v1411 = vadd.f32 %v1362, %v1410
  %v1412 = vpop.f32.mrf.mxu0
  %v1413 = vadd.f32 %v1364, %v1412
  %1414 = vmatmul.bf16.gmra.mxu0 %v382
  %v1415 = vpop.f32.mrf.mxu0
  %v1416 = vadd.f32 %v1367, %v1415
  %v1417 = vpop.f32.mrf.mxu0
  %v1418 = vadd.f32 %v1369, %v1417
  %1419 = vmatmul.bf16.gmra.mxu0 %v387
  %v1420 = vpop.f32.mrf.mxu0
  %v1421 = vadd.f32 %v1372, %v1420
  %v1422 = vpop.f32.mrf.mxu0
  %v1423 = vadd.f32 %v1374, %v1422
  %1424 = vdwg.mxu0
  %1425 = vmatpush.bf16.msra.mxu0 %v1065
  %1426 = vmatpush.bf16.msra.mxu0 %v1061
  %1427 = vmatpush.bf16.msra.mxu0 %v1057
  %1428 = vmatpush.bf16.msra.mxu0 %v1053
  %1429 = vmatpush.bf16.msra.mxu0 %v1049
  %1430 = vmatpush.bf16.msra.mxu0 %v1045
  %1431 = vmatpush.bf16.msra.mxu0 %v1041
  %1432 = vmatpush.bf16.msra.mxu0 %v1037
  %1433 = vmatmul.bf16.gmra.mxu0 %v353
  %v1434 = vpop.f32.mrf.mxu0
  %v1435 = vadd.f32 %v1386, %v1434
  %v1436 = vpop.f32.mrf.mxu0
  %v1437 = vadd.f32 %v1388, %v1436
  %1438 = vmatmul.bf16.gmra.mxu0 %v358
  %v1439 = vpop.f32.mrf.mxu0
  %v1440 = vadd.f32 %v1391, %v1439
  %v1441 = vpop.f32.mrf.mxu0
  %v1442 = vadd.f32 %v1393, %v1441
  %1443 = vmatmul.bf16.gmra.mxu0 %v363
  %v1444 = vpop.f32.mrf.mxu0
  %v1445 = vadd.f32 %v1396, %v1444
  %v1446 = vpop.f32.mrf.mxu0
  %v1447 = vadd.f32 %v1398, %v1446
  %1448 = vmatmul.bf16.gmra.mxu0 %v368
  %v1449 = vpop.f32.mrf.mxu0
  %v1450 = vadd.f32 %v1401, %v1449
  %v1451 = vpop.f32.mrf.mxu0
  %v1452 = vadd.f32 %v1403, %v1451
  %1453 = vmatmul.bf16.gmra.mxu0 %v373
  %v1454 = vpop.f32.mrf.mxu0
  %v1455 = vadd.f32 %v1406, %v1454
  %v1456 = vpop.f32.mrf.mxu0
  %v1457 = vadd.f32 %v1408, %v1456
  %1458 = vmatmul.bf16.gmra.mxu0 %v378
  %v1459 = vpop.f32.mrf.mxu0
  %v1460 = vadd.f32 %v1411, %v1459
  %v1461 = vpop.f32.mrf.mxu0
  %v1462 = vadd.f32 %v1413, %v1461
  %1463 = vmatmul.bf16.gmra.mxu0 %v383
  %v1464 = vpop.f32.mrf.mxu0
  %v1465 = vadd.f32 %v1416, %v1464
  %v1466 = vpop.f32.mrf.mxu0
  %v1467 = vadd.f32 %v1418, %v1466
  %1468 = vmatmul.bf16.gmra.mxu0 %v388
  %v1469 = vpop.f32.mrf.mxu0
  %v1470 = vadd.f32 %v1421, %v1469
  %v1471 = vpop.f32.mrf.mxu0
  %v1472 = vadd.f32 %v1423, %v1471
  %1473 = vdwg.mxu0
  %1474 = vmatpush.bf16.msra.mxu0 %v938
  %1475 = vmatpush.bf16.msra.mxu0 %v934
  %1476 = vmatpush.bf16.msra.mxu0 %v930
  %1477 = vmatpush.bf16.msra.mxu0 %v926
  %1478 = vmatpush.bf16.msra.mxu0 %v922
  %1479 = vmatpush.bf16.msra.mxu0 %v918
  %1480 = vmatpush.bf16.msra.mxu0 %v914
  %1481 = vmatpush.bf16.msra.mxu0 %v910
  %1482 = vmatmul.bf16.gmra.mxu0 %v349
  %v1483 = vpop.f32.mrf.mxu0
  %v1484 = vadd.f32 0.0, %v1483
  %v1485 = vpop.f32.mrf.mxu0
  %v1486 = vadd.f32 0.0, %v1485
  %1487 = vmatmul.bf16.gmra.mxu0 %v354
  %v1488 = vpop.f32.mrf.mxu0
  %v1489 = vadd.f32 0.0, %v1488
  %v1490 = vpop.f32.mrf.mxu0
  %v1491 = vadd.f32 0.0, %v1490
  %1492 = vmatmul.bf16.gmra.mxu0 %v359
  %v1493 = vpop.f32.mrf.mxu0
  %v1494 = vadd.f32 0.0, %v1493
  %v1495 = vpop.f32.mrf.mxu0
  %v1496 = vadd.f32 0.0, %v1495
  %1497 = vmatmul.bf16.gmra.mxu0 %v364
  %v1498 = vpop.f32.mrf.mxu0
  %v1499 = vadd.f32 0.0, %v1498
  %v1500 = vpop.f32.mrf.mxu0
  %v1501 = vadd.f32 0.0, %v1500
  %1502 = vmatmul.bf16.gmra.mxu0 %v369
  %v1503 = vpop.f32.mrf.mxu0
  %v1504 = vadd.f32 0.0, %v1503
  %v1505 = vpop.f32.mrf.mxu0
  %v1506 = vadd.f32 0.0, %v1505
  %1507 = vmatmul.bf16.gmra.mxu0 %v374
  %v1508 = vpop.f32.mrf.mxu0
  %v1509 = vadd.f32 0.0, %v1508
  %v1510 = vpop.f32.mrf.mxu0
  %v1511 = vadd.f32 0.0, %v1510
  %1512 = vmatmul.bf16.gmra.mxu0 %v379
  %v1513 = vpop.f32.mrf.mxu0
  %v1514 = vadd.f32 0.0, %v1513
  %v1515 = vpop.f32.mrf.mxu0
  %v1516 = vadd.f32 0.0, %v1515
  %1517 = vmatmul.bf16.gmra.mxu0 %v384
  %v1518 = vpop.f32.mrf.mxu0
  %v1519 = vadd.f32 0.0, %v1518
  %v1520 = vpop.f32.mrf.mxu0
  %v1521 = vadd.f32 0.0, %v1520
  %1522 = vdwg.mxu0
  %1523 = vmatpush.bf16.msra.mxu0 %v970
  %1524 = vmatpush.bf16.msra.mxu0 %v966
  %1525 = vmatpush.bf16.msra.mxu0 %v962
  %1526 = vmatpush.bf16.msra.mxu0 %v958
  %1527 = vmatpush.bf16.msra.mxu0 %v954
  %1528 = vmatpush.bf16.msra.mxu0 %v950
  %1529 = vmatpush.bf16.msra.mxu0 %v946
  %1530 = vmatpush.bf16.msra.mxu0 %v942
  %1531 = vmatmul.bf16.gmra.mxu0 %v350
  %v1532 = vpop.f32.mrf.mxu0
  %v1533 = vadd.f32 %v1484, %v1532
  %v1534 = vpop.f32.mrf.mxu0
  %v1535 = vadd.f32 %v1486, %v1534
  %1536 = vmatmul.bf16.gmra.mxu0 %v355
  %v1537 = vpop.f32.mrf.mxu0
  %v1538 = vadd.f32 %v1489, %v1537
  %v1539 = vpop.f32.mrf.mxu0
  %v1540 = vadd.f32 %v1491, %v1539
  %1541 = vmatmul.bf16.gmra.mxu0 %v360
  %v1542 = vpop.f32.mrf.mxu0
  %v1543 = vadd.f32 %v1494, %v1542
  %v1544 = vpop.f32.mrf.mxu0
  %v1545 = vadd.f32 %v1496, %v1544
  %1546 = vmatmul.bf16.gmra.mxu0 %v365
  %v1547 = vpop.f32.mrf.mxu0
  %v1548 = vadd.f32 %v1499, %v1547
  %v1549 = vpop.f32.mrf.mxu0
  %v1550 = vadd.f32 %v1501, %v1549
  %1551 = vmatmul.bf16.gmra.mxu0 %v370
  %v1552 = vpop.f32.mrf.mxu0
  %v1553 = vadd.f32 %v1504, %v1552
  %v1554 = vpop.f32.mrf.mxu0
  %v1555 = vadd.f32 %v1506, %v1554
  %1556 = vmatmul.bf16.gmra.mxu0 %v375
  %v1557 = vpop.f32.mrf.mxu0
  %v1558 = vadd.f32 %v1509, %v1557
  %v1559 = vpop.f32.mrf.mxu0
  %v1560 = vadd.f32 %v1511, %v1559
  %1561 = vmatmul.bf16.gmra.mxu0 %v380
  %v1562 = vpop.f32.mrf.mxu0
  %v1563 = vadd.f32 %v1514, %v1562
  %v1564 = vpop.f32.mrf.mxu0
  %v1565 = vadd.f32 %v1516, %v1564
  %1566 = vmatmul.bf16.gmra.mxu0 %v385
  %v1567 = vpop.f32.mrf.mxu0
  %v1568 = vadd.f32 %v1519, %v1567
  %v1569 = vpop.f32.mrf.mxu0
  %v1570 = vadd.f32 %v1521, %v1569
  %1571 = vdwg.mxu0
  %1572 = vmatpush.bf16.msra.mxu0 %v1002
  %1573 = vmatpush.bf16.msra.mxu0 %v998
  %1574 = vmatpush.bf16.msra.mxu0 %v994
  %1575 = vmatpush.bf16.msra.mxu0 %v990
  %1576 = vmatpush.bf16.msra.mxu0 %v986
  %1577 = vmatpush.bf16.msra.mxu0 %v982
  %1578 = vmatpush.bf16.msra.mxu0 %v978
  %1579 = vmatpush.bf16.msra.mxu0 %v974
  %1580 = vmatmul.bf16.gmra.mxu0 %v351
  %v1581 = vpop.f32.mrf.mxu0
  %v1582 = vadd.f32 %v1533, %v1581
  %v1583 = vpop.f32.mrf.mxu0
  %v1584 = vadd.f32 %v1535, %v1583
  %1585 = vmatmul.bf16.gmra.mxu0 %v356
  %v1586 = vpop.f32.mrf.mxu0
  %v1587 = vadd.f32 %v1538, %v1586
  %v1588 = vpop.f32.mrf.mxu0
  %v1589 = vadd.f32 %v1540, %v1588
  %1590 = vmatmul.bf16.gmra.mxu0 %v361
  %v1591 = vpop.f32.mrf.mxu0
  %v1592 = vadd.f32 %v1543, %v1591
  %v1593 = vpop.f32.mrf.mxu0
  %v1594 = vadd.f32 %v1545, %v1593
  %1595 = vmatmul.bf16.gmra.mxu0 %v366
  %v1596 = vpop.f32.mrf.mxu0
  %v1597 = vadd.f32 %v1548, %v1596
  %v1598 = vpop.f32.mrf.mxu0
  %v1599 = vadd.f32 %v1550, %v1598
  %1600 = vmatmul.bf16.gmra.mxu0 %v371
  %v1601 = vpop.f32.mrf.mxu0
  %v1602 = vadd.f32 %v1553, %v1601
  %v1603 = vpop.f32.mrf.mxu0
  %v1604 = vadd.f32 %v1555, %v1603
  %1605 = vmatmul.bf16.gmra.mxu0 %v376
  %v1606 = vpop.f32.mrf.mxu0
  %v1607 = vadd.f32 %v1558, %v1606
  %v1608 = vpop.f32.mrf.mxu0
  %v1609 = vadd.f32 %v1560, %v1608
  %1610 = vmatmul.bf16.gmra.mxu0 %v381
  %v1611 = vpop.f32.mrf.mxu0
  %v1612 = vadd.f32 %v1563, %v1611
  %v1613 = vpop.f32.mrf.mxu0
  %v1614 = vadd.f32 %v1565, %v1613
  %1615 = vmatmul.bf16.gmra.mxu0 %v386
  %v1616 = vpop.f32.mrf.mxu0
  %v1617 = vadd.f32 %v1568, %v1616
  %v1618 = vpop.f32.mrf.mxu0
  %v1619 = vadd.f32 %v1570, %v1618
  %1620 = vdwg.mxu0
  %1621 = vmatpush.bf16.msra.mxu0 %v1034
  %1622 = vmatpush.bf16.msra.mxu0 %v1030
  %1623 = vmatpush.bf16.msra.mxu0 %v1026
  %1624 = vmatpush.bf16.msra.mxu0 %v1022
  %1625 = vmatpush.bf16.msra.mxu0 %v1018
  %1626 = vmatpush.bf16.msra.mxu0 %v1014
  %1627 = vmatpush.bf16.msra.mxu0 %v1010
  %1628 = vmatpush.bf16.msra.mxu0 %v1006
  %1629 = vmatmul.bf16.gmra.mxu0 %v352
  %v1630 = vpop.f32.mrf.mxu0
  %v1631 = vadd.f32 %v1582, %v1630
  %v1632 = vpop.f32.mrf.mxu0
  %v1633 = vadd.f32 %v1584, %v1632
  %1634 = vmatmul.bf16.gmra.mxu0 %v357
  %v1635 = vpop.f32.mrf.mxu0
  %v1636 = vadd.f32 %v1587, %v1635
  %v1637 = vpop.f32.mrf.mxu0
  %v1638 = vadd.f32 %v1589, %v1637
  %1639 = vmatmul.bf16.gmra.mxu0 %v362
  %v1640 = vpop.f32.mrf.mxu0
  %v1641 = vadd.f32 %v1592, %v1640
  %v1642 = vpop.f32.mrf.mxu0
  %v1643 = vadd.f32 %v1594, %v1642
  %1644 = vmatmul.bf16.gmra.mxu0 %v367
  %v1645 = vpop.f32.mrf.mxu0
  %v1646 = vadd.f32 %v1597, %v1645
  %v1647 = vpop.f32.mrf.mxu0
  %v1648 = vadd.f32 %v1599, %v1647
  %1649 = vmatmul.bf16.gmra.mxu0 %v372
  %v1650 = vpop.f32.mrf.mxu0
  %v1651 = vadd.f32 %v1602, %v1650
  %v1652 = vpop.f32.mrf.mxu0
  %v1653 = vadd.f32 %v1604, %v1652
  %1654 = vmatmul.bf16.gmra.mxu0 %v377
  %v1655 = vpop.f32.mrf.mxu0
  %v1656 = vadd.f32 %v1607, %v1655
  %v1657 = vpop.f32.mrf.mxu0
  %v1658 = vadd.f32 %v1609, %v1657
  %1659 = vmatmul.bf16.gmra.mxu0 %v382
  %v1660 = vpop.f32.mrf.mxu0
  %v1661 = vadd.f32 %v1612, %v1660
  %v1662 = vpop.f32.mrf.mxu0
  %v1663 = vadd.f32 %v1614, %v1662
  %1664 = vmatmul.bf16.gmra.mxu0 %v387
  %v1665 = vpop.f32.mrf.mxu0
  %v1666 = vadd.f32 %v1617, %v1665
  %v1667 = vpop.f32.mrf.mxu0
  %v1668 = vadd.f32 %v1619, %v1667
  %1669 = vdwg.mxu0
  %1670 = vmatpush.bf16.msra.mxu0 %v1066
  %1671 = vmatpush.bf16.msra.mxu0 %v1062
  %1672 = vmatpush.bf16.msra.mxu0 %v1058
  %1673 = vmatpush.bf16.msra.mxu0 %v1054
  %1674 = vmatpush.bf16.msra.mxu0 %v1050
  %1675 = vmatpush.bf16.msra.mxu0 %v1046
  %1676 = vmatpush.bf16.msra.mxu0 %v1042
  %1677 = vmatpush.bf16.msra.mxu0 %v1038
  %1678 = vmatmul.bf16.gmra.mxu0 %v353
  %v1679 = vpop.f32.mrf.mxu0
  %v1680 = vadd.f32 %v1631, %v1679
  %v1681 = vpop.f32.mrf.mxu0
  %v1682 = vadd.f32 %v1633, %v1681
  %1683 = vmatmul.bf16.gmra.mxu0 %v358
  %v1684 = vpop.f32.mrf.mxu0
  %v1685 = vadd.f32 %v1636, %v1684
  %v1686 = vpop.f32.mrf.mxu0
  %v1687 = vadd.f32 %v1638, %v1686
  %1688 = vmatmul.bf16.gmra.mxu0 %v363
  %v1689 = vpop.f32.mrf.mxu0
  %v1690 = vadd.f32 %v1641, %v1689
  %v1691 = vpop.f32.mrf.mxu0
  %v1692 = vadd.f32 %v1643, %v1691
  %1693 = vmatmul.bf16.gmra.mxu0 %v368
  %v1694 = vpop.f32.mrf.mxu0
  %v1695 = vadd.f32 %v1646, %v1694
  %v1696 = vpop.f32.mrf.mxu0
  %v1697 = vadd.f32 %v1648, %v1696
  %1698 = vmatmul.bf16.gmra.mxu0 %v373
  %v1699 = vpop.f32.mrf.mxu0
  %v1700 = vadd.f32 %v1651, %v1699
  %v1701 = vpop.f32.mrf.mxu0
  %v1702 = vadd.f32 %v1653, %v1701
  %1703 = vmatmul.bf16.gmra.mxu0 %v378
  %v1704 = vpop.f32.mrf.mxu0
  %v1705 = vadd.f32 %v1656, %v1704
  %v1706 = vpop.f32.mrf.mxu0
  %v1707 = vadd.f32 %v1658, %v1706
  %1708 = vmatmul.bf16.gmra.mxu0 %v383
  %v1709 = vpop.f32.mrf.mxu0
  %v1710 = vadd.f32 %v1661, %v1709
  %v1711 = vpop.f32.mrf.mxu0
  %v1712 = vadd.f32 %v1663, %v1711
  %1713 = vmatmul.bf16.gmra.mxu0 %v388
  %v1714 = vpop.f32.mrf.mxu0
  %v1715 = vadd.f32 %v1666, %v1714
  %v1716 = vpop.f32.mrf.mxu0
  %v1717 = vadd.f32 %v1668, %v1716
  %1718 = vdwg.mxu0
  %1719 = vmatpush.bf16.msra.mxu0 %v939
  %1720 = vmatpush.bf16.msra.mxu0 %v935
  %1721 = vmatpush.bf16.msra.mxu0 %v931
  %1722 = vmatpush.bf16.msra.mxu0 %v927
  %1723 = vmatpush.bf16.msra.mxu0 %v923
  %1724 = vmatpush.bf16.msra.mxu0 %v919
  %1725 = vmatpush.bf16.msra.mxu0 %v915
  %1726 = vmatpush.bf16.msra.mxu0 %v911
  %1727 = vmatmul.bf16.gmra.mxu0 %v349
  %v1728 = vpop.f32.mrf.mxu0
  %v1729 = vadd.f32 0.0, %v1728
  %v1730 = vpop.f32.mrf.mxu0
  %v1731 = vadd.f32 0.0, %v1730
  %1732 = vmatmul.bf16.gmra.mxu0 %v354
  %v1733 = vpop.f32.mrf.mxu0
  %v1734 = vadd.f32 0.0, %v1733
  %v1735 = vpop.f32.mrf.mxu0
  %v1736 = vadd.f32 0.0, %v1735
  %1737 = vmatmul.bf16.gmra.mxu0 %v359
  %v1738 = vpop.f32.mrf.mxu0
  %v1739 = vadd.f32 0.0, %v1738
  %v1740 = vpop.f32.mrf.mxu0
  %v1741 = vadd.f32 0.0, %v1740
  %1742 = vmatmul.bf16.gmra.mxu0 %v364
  %v1743 = vpop.f32.mrf.mxu0
  %v1744 = vadd.f32 0.0, %v1743
  %v1745 = vpop.f32.mrf.mxu0
  %v1746 = vadd.f32 0.0, %v1745
  %1747 = vmatmul.bf16.gmra.mxu0 %v369
  %v1748 = vpop.f32.mrf.mxu0
  %v1749 = vadd.f32 0.0, %v1748
  %v1750 = vpop.f32.mrf.mxu0
  %v1751 = vadd.f32 0.0, %v1750
  %1752 = vmatmul.bf16.gmra.mxu0 %v374
  %v1753 = vpop.f32.mrf.mxu0
  %v1754 = vadd.f32 0.0, %v1753
  %v1755 = vpop.f32.mrf.mxu0
  %v1756 = vadd.f32 0.0, %v1755
  %1757 = vmatmul.bf16.gmra.mxu0 %v379
  %v1758 = vpop.f32.mrf.mxu0
  %v1759 = vadd.f32 0.0, %v1758
  %v1760 = vpop.f32.mrf.mxu0
  %v1761 = vadd.f32 0.0, %v1760
  %1762 = vmatmul.bf16.gmra.mxu0 %v384
  %v1763 = vpop.f32.mrf.mxu0
  %v1764 = vadd.f32 0.0, %v1763
  %v1765 = vpop.f32.mrf.mxu0
  %v1766 = vadd.f32 0.0, %v1765
  %1767 = vdwg.mxu0
  %1768 = vmatpush.bf16.msra.mxu0 %v971
  %1769 = vmatpush.bf16.msra.mxu0 %v967
  %1770 = vmatpush.bf16.msra.mxu0 %v963
  %1771 = vmatpush.bf16.msra.mxu0 %v959
  %1772 = vmatpush.bf16.msra.mxu0 %v955
  %1773 = vmatpush.bf16.msra.mxu0 %v951
  %1774 = vmatpush.bf16.msra.mxu0 %v947
  %1775 = vmatpush.bf16.msra.mxu0 %v943
  %1776 = vmatmul.bf16.gmra.mxu0 %v350
  %v1777 = vpop.f32.mrf.mxu0
  %v1778 = vadd.f32 %v1729, %v1777
  %v1779 = vpop.f32.mrf.mxu0
  %v1780 = vadd.f32 %v1731, %v1779
  %1781 = vmatmul.bf16.gmra.mxu0 %v355
  %v1782 = vpop.f32.mrf.mxu0
  %v1783 = vadd.f32 %v1734, %v1782
  %v1784 = vpop.f32.mrf.mxu0
  %v1785 = vadd.f32 %v1736, %v1784
  %1786 = vmatmul.bf16.gmra.mxu0 %v360
  %v1787 = vpop.f32.mrf.mxu0
  %v1788 = vadd.f32 %v1739, %v1787
  %v1789 = vpop.f32.mrf.mxu0
  %v1790 = vadd.f32 %v1741, %v1789
  %1791 = vmatmul.bf16.gmra.mxu0 %v365
  %v1792 = vpop.f32.mrf.mxu0
  %v1793 = vadd.f32 %v1744, %v1792
  %v1794 = vpop.f32.mrf.mxu0
  %v1795 = vadd.f32 %v1746, %v1794
  %1796 = vmatmul.bf16.gmra.mxu0 %v370
  %v1797 = vpop.f32.mrf.mxu0
  %v1798 = vadd.f32 %v1749, %v1797
  %v1799 = vpop.f32.mrf.mxu0
  %v1800 = vadd.f32 %v1751, %v1799
  %1801 = vmatmul.bf16.gmra.mxu0 %v375
  %v1802 = vpop.f32.mrf.mxu0
  %v1803 = vadd.f32 %v1754, %v1802
  %v1804 = vpop.f32.mrf.mxu0
  %v1805 = vadd.f32 %v1756, %v1804
  %1806 = vmatmul.bf16.gmra.mxu0 %v380
  %v1807 = vpop.f32.mrf.mxu0
  %v1808 = vadd.f32 %v1759, %v1807
  %v1809 = vpop.f32.mrf.mxu0
  %v1810 = vadd.f32 %v1761, %v1809
  %1811 = vmatmul.bf16.gmra.mxu0 %v385
  %v1812 = vpop.f32.mrf.mxu0
  %v1813 = vadd.f32 %v1764, %v1812
  %v1814 = vpop.f32.mrf.mxu0
  %v1815 = vadd.f32 %v1766, %v1814
  %1816 = vdwg.mxu0
  %1817 = vmatpush.bf16.msra.mxu0 %v1003
  %1818 = vmatpush.bf16.msra.mxu0 %v999
  %1819 = vmatpush.bf16.msra.mxu0 %v995
  %1820 = vmatpush.bf16.msra.mxu0 %v991
  %1821 = vmatpush.bf16.msra.mxu0 %v987
  %1822 = vmatpush.bf16.msra.mxu0 %v983
  %1823 = vmatpush.bf16.msra.mxu0 %v979
  %1824 = vmatpush.bf16.msra.mxu0 %v975
  %1825 = vmatmul.bf16.gmra.mxu0 %v351
  %v1826 = vpop.f32.mrf.mxu0
  %v1827 = vadd.f32 %v1778, %v1826
  %v1828 = vpop.f32.mrf.mxu0
  %v1829 = vadd.f32 %v1780, %v1828
  %1830 = vmatmul.bf16.gmra.mxu0 %v356
  %v1831 = vpop.f32.mrf.mxu0
  %v1832 = vadd.f32 %v1783, %v1831
  %v1833 = vpop.f32.mrf.mxu0
  %v1834 = vadd.f32 %v1785, %v1833
  %1835 = vmatmul.bf16.gmra.mxu0 %v361
  %v1836 = vpop.f32.mrf.mxu0
  %v1837 = vadd.f32 %v1788, %v1836
  %v1838 = vpop.f32.mrf.mxu0
  %v1839 = vadd.f32 %v1790, %v1838
  %1840 = vmatmul.bf16.gmra.mxu0 %v366
  %v1841 = vpop.f32.mrf.mxu0
  %v1842 = vadd.f32 %v1793, %v1841
  %v1843 = vpop.f32.mrf.mxu0
  %v1844 = vadd.f32 %v1795, %v1843
  %1845 = vmatmul.bf16.gmra.mxu0 %v371
  %v1846 = vpop.f32.mrf.mxu0
  %v1847 = vadd.f32 %v1798, %v1846
  %v1848 = vpop.f32.mrf.mxu0
  %v1849 = vadd.f32 %v1800, %v1848
  %1850 = vmatmul.bf16.gmra.mxu0 %v376
  %v1851 = vpop.f32.mrf.mxu0
  %v1852 = vadd.f32 %v1803, %v1851
  %v1853 = vpop.f32.mrf.mxu0
  %v1854 = vadd.f32 %v1805, %v1853
  %1855 = vmatmul.bf16.gmra.mxu0 %v381
  %v1856 = vpop.f32.mrf.mxu0
  %v1857 = vadd.f32 %v1808, %v1856
  %v1858 = vpop.f32.mrf.mxu0
  %v1859 = vadd.f32 %v1810, %v1858
  %1860 = vmatmul.bf16.gmra.mxu0 %v386
  %v1861 = vpop.f32.mrf.mxu0
  %v1862 = vadd.f32 %v1813, %v1861
  %v1863 = vpop.f32.mrf.mxu0
  %v1864 = vadd.f32 %v1815, %v1863
  %1865 = vdwg.mxu0
  %1866 = vmatpush.bf16.msra.mxu0 %v1035
  %1867 = vmatpush.bf16.msra.mxu0 %v1031
  %1868 = vmatpush.bf16.msra.mxu0 %v1027
  %1869 = vmatpush.bf16.msra.mxu0 %v1023
  %1870 = vmatpush.bf16.msra.mxu0 %v1019
  %1871 = vmatpush.bf16.msra.mxu0 %v1015
  %1872 = vmatpush.bf16.msra.mxu0 %v1011
  %1873 = vmatpush.bf16.msra.mxu0 %v1007
  %1874 = vmatmul.bf16.gmra.mxu0 %v352
  %v1875 = vpop.f32.mrf.mxu0
  %v1876 = vadd.f32 %v1827, %v1875
  %v1877 = vpop.f32.mrf.mxu0
  %v1878 = vadd.f32 %v1829, %v1877
  %1879 = vmatmul.bf16.gmra.mxu0 %v357
  %v1880 = vpop.f32.mrf.mxu0
  %v1881 = vadd.f32 %v1832, %v1880
  %v1882 = vpop.f32.mrf.mxu0
  %v1883 = vadd.f32 %v1834, %v1882
  %1884 = vmatmul.bf16.gmra.mxu0 %v362
  %v1885 = vpop.f32.mrf.mxu0
  %v1886 = vadd.f32 %v1837, %v1885
  %v1887 = vpop.f32.mrf.mxu0
  %v1888 = vadd.f32 %v1839, %v1887
  %1889 = vmatmul.bf16.gmra.mxu0 %v367
  %v1890 = vpop.f32.mrf.mxu0
  %v1891 = vadd.f32 %v1842, %v1890
  %v1892 = vpop.f32.mrf.mxu0
  %v1893 = vadd.f32 %v1844, %v1892
  %1894 = vmatmul.bf16.gmra.mxu0 %v372
  %v1895 = vpop.f32.mrf.mxu0
  %v1896 = vadd.f32 %v1847, %v1895
  %v1897 = vpop.f32.mrf.mxu0
  %v1898 = vadd.f32 %v1849, %v1897
  %1899 = vmatmul.bf16.gmra.mxu0 %v377
  %v1900 = vpop.f32.mrf.mxu0
  %v1901 = vadd.f32 %v1852, %v1900
  %v1902 = vpop.f32.mrf.mxu0
  %v1903 = vadd.f32 %v1854, %v1902
  %1904 = vmatmul.bf16.gmra.mxu0 %v382
  %v1905 = vpop.f32.mrf.mxu0
  %v1906 = vadd.f32 %v1857, %v1905
  %v1907 = vpop.f32.mrf.mxu0
  %v1908 = vadd.f32 %v1859, %v1907
  %1909 = vmatmul.bf16.gmra.mxu0 %v387
  %v1910 = vpop.f32.mrf.mxu0
  %v1911 = vadd.f32 %v1862, %v1910
  %v1912 = vpop.f32.mrf.mxu0
  %v1913 = vadd.f32 %v1864, %v1912
  %1914 = vdwg.mxu0
  %1915 = vmatpush.bf16.msra.mxu0 %v1067
  %1916 = vmatpush.bf16.msra.mxu0 %v1063
  %1917 = vmatpush.bf16.msra.mxu0 %v1059
  %1918 = vmatpush.bf16.msra.mxu0 %v1055
  %1919 = vmatpush.bf16.msra.mxu0 %v1051
  %1920 = vmatpush.bf16.msra.mxu0 %v1047
  %1921 = vmatpush.bf16.msra.mxu0 %v1043
  %1922 = vmatpush.bf16.msra.mxu0 %v1039
  %1923 = vmatmul.bf16.gmra.mxu0 %v353
  %v1924 = vpop.f32.mrf.mxu0
  %v1925 = vadd.f32 %v1876, %v1924
  %v1926 = vpop.f32.mrf.mxu0
  %v1927 = vadd.f32 %v1878, %v1926
  %1928 = vmatmul.bf16.gmra.mxu0 %v358
  %v1929 = vpop.f32.mrf.mxu0
  %v1930 = vadd.f32 %v1881, %v1929
  %v1931 = vpop.f32.mrf.mxu0
  %v1932 = vadd.f32 %v1883, %v1931
  %1933 = vmatmul.bf16.gmra.mxu0 %v363
  %v1934 = vpop.f32.mrf.mxu0
  %v1935 = vadd.f32 %v1886, %v1934
  %v1936 = vpop.f32.mrf.mxu0
  %v1937 = vadd.f32 %v1888, %v1936
  %1938 = vmatmul.bf16.gmra.mxu0 %v368
  %v1939 = vpop.f32.mrf.mxu0
  %v1940 = vadd.f32 %v1891, %v1939
  %v1941 = vpop.f32.mrf.mxu0
  %v1942 = vadd.f32 %v1893, %v1941
  %1943 = vmatmul.bf16.gmra.mxu0 %v373
  %v1944 = vpop.f32.mrf.mxu0
  %v1945 = vadd.f32 %v1896, %v1944
  %v1946 = vpop.f32.mrf.mxu0
  %v1947 = vadd.f32 %v1898, %v1946
  %1948 = vmatmul.bf16.gmra.mxu0 %v378
  %v1949 = vpop.f32.mrf.mxu0
  %v1950 = vadd.f32 %v1901, %v1949
  %v1951 = vpop.f32.mrf.mxu0
  %v1952 = vadd.f32 %v1903, %v1951
  %1953 = vmatmul.bf16.gmra.mxu0 %v383
  %v1954 = vpop.f32.mrf.mxu0
  %v1955 = vadd.f32 %v1906, %v1954
  %v1956 = vpop.f32.mrf.mxu0
  %v1957 = vadd.f32 %v1908, %v1956
  %1958 = vmatmul.bf16.gmra.mxu0 %v388
  %v1959 = vpop.f32.mrf.mxu0
  %v1960 = vadd.f32 %v1911, %v1959
  %v1961 = vpop.f32.mrf.mxu0
  %v1962 = vadd.f32 %v1913, %v1961
  %1963 = vdwg.mxu0
  %1964 = vmatpush.bf16.msra.mxu0 %v940
  %1965 = vmatpush.bf16.msra.mxu0 %v936
  %1966 = vmatpush.bf16.msra.mxu0 %v932
  %1967 = vmatpush.bf16.msra.mxu0 %v928
  %1968 = vmatpush.bf16.msra.mxu0 %v924
  %1969 = vmatpush.bf16.msra.mxu0 %v920
  %1970 = vmatpush.bf16.msra.mxu0 %v916
  %1971 = vmatpush.bf16.msra.mxu0 %v912
  %1972 = vmatmul.bf16.gmra.mxu0 %v349
  %v1973 = vpop.f32.mrf.mxu0
  %v1974 = vadd.f32 0.0, %v1973
  %v1975 = vpop.f32.mrf.mxu0
  %v1976 = vadd.f32 0.0, %v1975
  %1977 = vmatmul.bf16.gmra.mxu0 %v354
  %v1978 = vpop.f32.mrf.mxu0
  %v1979 = vadd.f32 0.0, %v1978
  %v1980 = vpop.f32.mrf.mxu0
  %v1981 = vadd.f32 0.0, %v1980
  %1982 = vmatmul.bf16.gmra.mxu0 %v359
  %v1983 = vpop.f32.mrf.mxu0
  %v1984 = vadd.f32 0.0, %v1983
  %v1985 = vpop.f32.mrf.mxu0
  %v1986 = vadd.f32 0.0, %v1985
  %1987 = vmatmul.bf16.gmra.mxu0 %v364
  %v1988 = vpop.f32.mrf.mxu0
  %v1989 = vadd.f32 0.0, %v1988
  %v1990 = vpop.f32.mrf.mxu0
  %v1991 = vadd.f32 0.0, %v1990
  %1992 = vmatmul.bf16.gmra.mxu0 %v369
  %v1993 = vpop.f32.mrf.mxu0
  %v1994 = vadd.f32 0.0, %v1993
  %v1995 = vpop.f32.mrf.mxu0
  %v1996 = vadd.f32 0.0, %v1995
  %1997 = vmatmul.bf16.gmra.mxu0 %v374
  %v1998 = vpop.f32.mrf.mxu0
  %v1999 = vadd.f32 0.0, %v1998
  %v2000 = vpop.f32.mrf.mxu0
  %v2001 = vadd.f32 0.0, %v2000
  %2002 = vmatmul.bf16.gmra.mxu0 %v379
  %v2003 = vpop.f32.mrf.mxu0
  %v2004 = vadd.f32 0.0, %v2003
  %v2005 = vpop.f32.mrf.mxu0
  %v2006 = vadd.f32 0.0, %v2005
  %2007 = vmatmul.bf16.gmra.mxu0 %v384
  %v2008 = vpop.f32.mrf.mxu0
  %v2009 = vadd.f32 0.0, %v2008
  %v2010 = vpop.f32.mrf.mxu0
  %v2011 = vadd.f32 0.0, %v2010
  %2012 = vdwg.mxu0
  %2013 = vmatpush.bf16.msra.mxu0 %v972
  %2014 = vmatpush.bf16.msra.mxu0 %v968
  %2015 = vmatpush.bf16.msra.mxu0 %v964
  %2016 = vmatpush.bf16.msra.mxu0 %v960
  %2017 = vmatpush.bf16.msra.mxu0 %v956
  %2018 = vmatpush.bf16.msra.mxu0 %v952
  %2019 = vmatpush.bf16.msra.mxu0 %v948
  %2020 = vmatpush.bf16.msra.mxu0 %v944
  %2021 = vmatmul.bf16.gmra.mxu0 %v350
  %v2022 = vpop.f32.mrf.mxu0
  %v2023 = vadd.f32 %v1974, %v2022
  %v2024 = vpop.f32.mrf.mxu0
  %v2025 = vadd.f32 %v1976, %v2024
  %2026 = vmatmul.bf16.gmra.mxu0 %v355
  %v2027 = vpop.f32.mrf.mxu0
  %v2028 = vadd.f32 %v1979, %v2027
  %v2029 = vpop.f32.mrf.mxu0
  %v2030 = vadd.f32 %v1981, %v2029
  %2031 = vmatmul.bf16.gmra.mxu0 %v360
  %v2032 = vpop.f32.mrf.mxu0
  %v2033 = vadd.f32 %v1984, %v2032
  %v2034 = vpop.f32.mrf.mxu0
  %v2035 = vadd.f32 %v1986, %v2034
  %2036 = vmatmul.bf16.gmra.mxu0 %v365
  %v2037 = vpop.f32.mrf.mxu0
  %v2038 = vadd.f32 %v1989, %v2037
  %v2039 = vpop.f32.mrf.mxu0
  %v2040 = vadd.f32 %v1991, %v2039
  %2041 = vmatmul.bf16.gmra.mxu0 %v370
  %v2042 = vpop.f32.mrf.mxu0
  %v2043 = vadd.f32 %v1994, %v2042
  %v2044 = vpop.f32.mrf.mxu0
  %v2045 = vadd.f32 %v1996, %v2044
  %2046 = vmatmul.bf16.gmra.mxu0 %v375
  %v2047 = vpop.f32.mrf.mxu0
  %v2048 = vadd.f32 %v1999, %v2047
  %v2049 = vpop.f32.mrf.mxu0
  %v2050 = vadd.f32 %v2001, %v2049
  %2051 = vmatmul.bf16.gmra.mxu0 %v380
  %v2052 = vpop.f32.mrf.mxu0
  %v2053 = vadd.f32 %v2004, %v2052
  %v2054 = vpop.f32.mrf.mxu0
  %v2055 = vadd.f32 %v2006, %v2054
  %2056 = vmatmul.bf16.gmra.mxu0 %v385
  %v2057 = vpop.f32.mrf.mxu0
  %v2058 = vadd.f32 %v2009, %v2057
  %v2059 = vpop.f32.mrf.mxu0
  %v2060 = vadd.f32 %v2011, %v2059
  %2061 = vdwg.mxu0
  %2062 = vmatpush.bf16.msra.mxu0 %v1004
  %2063 = vmatpush.bf16.msra.mxu0 %v1000
  %2064 = vmatpush.bf16.msra.mxu0 %v996
  %2065 = vmatpush.bf16.msra.mxu0 %v992
  %2066 = vmatpush.bf16.msra.mxu0 %v988
  %2067 = vmatpush.bf16.msra.mxu0 %v984
  %2068 = vmatpush.bf16.msra.mxu0 %v980
  %2069 = vmatpush.bf16.msra.mxu0 %v976
  %2070 = vmatmul.bf16.gmra.mxu0 %v351
  %v2071 = vpop.f32.mrf.mxu0
  %v2072 = vadd.f32 %v2023, %v2071
  %v2073 = vpop.f32.mrf.mxu0
  %v2074 = vadd.f32 %v2025, %v2073
  %2075 = vmatmul.bf16.gmra.mxu0 %v356
  %v2076 = vpop.f32.mrf.mxu0
  %v2077 = vadd.f32 %v2028, %v2076
  %v2078 = vpop.f32.mrf.mxu0
  %v2079 = vadd.f32 %v2030, %v2078
  %2080 = vmatmul.bf16.gmra.mxu0 %v361
  %v2081 = vpop.f32.mrf.mxu0
  %v2082 = vadd.f32 %v2033, %v2081
  %v2083 = vpop.f32.mrf.mxu0
  %v2084 = vadd.f32 %v2035, %v2083
  %2085 = vmatmul.bf16.gmra.mxu0 %v366
  %v2086 = vpop.f32.mrf.mxu0
  %v2087 = vadd.f32 %v2038, %v2086
  %v2088 = vpop.f32.mrf.mxu0
  %v2089 = vadd.f32 %v2040, %v2088
  %2090 = vmatmul.bf16.gmra.mxu0 %v371
  %v2091 = vpop.f32.mrf.mxu0
  %v2092 = vadd.f32 %v2043, %v2091
  %v2093 = vpop.f32.mrf.mxu0
  %v2094 = vadd.f32 %v2045, %v2093
  %2095 = vmatmul.bf16.gmra.mxu0 %v376
  %v2096 = vpop.f32.mrf.mxu0
  %v2097 = vadd.f32 %v2048, %v2096
  %v2098 = vpop.f32.mrf.mxu0
  %v2099 = vadd.f32 %v2050, %v2098
  %2100 = vmatmul.bf16.gmra.mxu0 %v381
  %v2101 = vpop.f32.mrf.mxu0
  %v2102 = vadd.f32 %v2053, %v2101
  %v2103 = vpop.f32.mrf.mxu0
  %v2104 = vadd.f32 %v2055, %v2103
  %2105 = vmatmul.bf16.gmra.mxu0 %v386
  %v2106 = vpop.f32.mrf.mxu0
  %v2107 = vadd.f32 %v2058, %v2106
  %v2108 = vpop.f32.mrf.mxu0
  %v2109 = vadd.f32 %v2060, %v2108
  %2110 = vdwg.mxu0
  %2111 = vmatpush.bf16.msra.mxu0 %v1036
  %2112 = vmatpush.bf16.msra.mxu0 %v1032
  %2113 = vmatpush.bf16.msra.mxu0 %v1028
  %2114 = vmatpush.bf16.msra.mxu0 %v1024
  %2115 = vmatpush.bf16.msra.mxu0 %v1020
  %2116 = vmatpush.bf16.msra.mxu0 %v1016
  %2117 = vmatpush.bf16.msra.mxu0 %v1012
  %2118 = vmatpush.bf16.msra.mxu0 %v1008
  %2119 = vmatmul.bf16.gmra.mxu0 %v352
  %v2120 = vpop.f32.mrf.mxu0
  %v2121 = vadd.f32 %v2072, %v2120
  %v2122 = vpop.f32.mrf.mxu0
  %v2123 = vadd.f32 %v2074, %v2122
  %2124 = vmatmul.bf16.gmra.mxu0 %v357
  %v2125 = vpop.f32.mrf.mxu0
  %v2126 = vadd.f32 %v2077, %v2125
  %v2127 = vpop.f32.mrf.mxu0
  %v2128 = vadd.f32 %v2079, %v2127
  %2129 = vmatmul.bf16.gmra.mxu0 %v362
  %v2130 = vpop.f32.mrf.mxu0
  %v2131 = vadd.f32 %v2082, %v2130
  %v2132 = vpop.f32.mrf.mxu0
  %v2133 = vadd.f32 %v2084, %v2132
  %2134 = vmatmul.bf16.gmra.mxu0 %v367
  %v2135 = vpop.f32.mrf.mxu0
  %v2136 = vadd.f32 %v2087, %v2135
  %v2137 = vpop.f32.mrf.mxu0
  %v2138 = vadd.f32 %v2089, %v2137
  %2139 = vmatmul.bf16.gmra.mxu0 %v372
  %v2140 = vpop.f32.mrf.mxu0
  %v2141 = vadd.f32 %v2092, %v2140
  %v2142 = vpop.f32.mrf.mxu0
  %v2143 = vadd.f32 %v2094, %v2142
  %2144 = vmatmul.bf16.gmra.mxu0 %v377
  %v2145 = vpop.f32.mrf.mxu0
  %v2146 = vadd.f32 %v2097, %v2145
  %v2147 = vpop.f32.mrf.mxu0
  %v2148 = vadd.f32 %v2099, %v2147
  %2149 = vmatmul.bf16.gmra.mxu0 %v382
  %v2150 = vpop.f32.mrf.mxu0
  %v2151 = vadd.f32 %v2102, %v2150
  %v2152 = vpop.f32.mrf.mxu0
  %v2153 = vadd.f32 %v2104, %v2152
  %2154 = vmatmul.bf16.gmra.mxu0 %v387
  %v2155 = vpop.f32.mrf.mxu0
  %v2156 = vadd.f32 %v2107, %v2155
  %v2157 = vpop.f32.mrf.mxu0
  %v2158 = vadd.f32 %v2109, %v2157
  %2159 = vdwg.mxu0
  %2160 = vmatpush.bf16.msra.mxu0 %v1068
  %2161 = vmatpush.bf16.msra.mxu0 %v1064
  %2162 = vmatpush.bf16.msra.mxu0 %v1060
  %2163 = vmatpush.bf16.msra.mxu0 %v1056
  %2164 = vmatpush.bf16.msra.mxu0 %v1052
  %2165 = vmatpush.bf16.msra.mxu0 %v1048
  %2166 = vmatpush.bf16.msra.mxu0 %v1044
  %2167 = vmatpush.bf16.msra.mxu0 %v1040
  %2168 = vmatmul.bf16.gmra.mxu0 %v353
  %v2169 = vpop.f32.mrf.mxu0
  %v2170 = vadd.f32 %v2121, %v2169
  %v2171 = vpop.f32.mrf.mxu0
  %v2172 = vadd.f32 %v2123, %v2171
  %2173 = vmatmul.bf16.gmra.mxu0 %v358
  %v2174 = vpop.f32.mrf.mxu0
  %v2175 = vadd.f32 %v2126, %v2174
  %v2176 = vpop.f32.mrf.mxu0
  %v2177 = vadd.f32 %v2128, %v2176
  %2178 = vmatmul.bf16.gmra.mxu0 %v363
  %v2179 = vpop.f32.mrf.mxu0
  %v2180 = vadd.f32 %v2131, %v2179
  %v2181 = vpop.f32.mrf.mxu0
  %v2182 = vadd.f32 %v2133, %v2181
  %2183 = vmatmul.bf16.gmra.mxu0 %v368
  %v2184 = vpop.f32.mrf.mxu0
  %v2185 = vadd.f32 %v2136, %v2184
  %v2186 = vpop.f32.mrf.mxu0
  %v2187 = vadd.f32 %v2138, %v2186
  %2188 = vmatmul.bf16.gmra.mxu0 %v373
  %v2189 = vpop.f32.mrf.mxu0
  %v2190 = vadd.f32 %v2141, %v2189
  %v2191 = vpop.f32.mrf.mxu0
  %v2192 = vadd.f32 %v2143, %v2191
  %2193 = vmatmul.bf16.gmra.mxu0 %v378
  %v2194 = vpop.f32.mrf.mxu0
  %v2195 = vadd.f32 %v2146, %v2194
  %v2196 = vpop.f32.mrf.mxu0
  %v2197 = vadd.f32 %v2148, %v2196
  %2198 = vmatmul.bf16.gmra.mxu0 %v383
  %v2199 = vpop.f32.mrf.mxu0
  %v2200 = vadd.f32 %v2151, %v2199
  %v2201 = vpop.f32.mrf.mxu0
  %v2202 = vadd.f32 %v2153, %v2201
  %2203 = vmatmul.bf16.gmra.mxu0 %v388
  %v2204 = vpop.f32.mrf.mxu0
  %v2205 = vadd.f32 %v2156, %v2204
  %v2206 = vpop.f32.mrf.mxu0
  %v2207 = vadd.f32 %v2158, %v2206
  %2208 = vdwg.mxu0
  %v2209 = vpack.c.bf16 %v1680, %v1435
  %v2210 = vpack.c.bf16 %v2170, %v1925
  %v2211 = vpack.c.bf16 %v1682, %v1437
  %v2212 = vpack.c.bf16 %v2172, %v1927
  %v2213 = vpack.c.bf16 %v1685, %v1440
  %v2214 = vpack.c.bf16 %v2175, %v1930
  %v2215 = vpack.c.bf16 %v1687, %v1442
  %v2216 = vpack.c.bf16 %v2177, %v1932
  %v2217 = vpack.c.bf16 %v1690, %v1445
  %v2218 = vpack.c.bf16 %v2180, %v1935
  %v2219 = vpack.c.bf16 %v1692, %v1447
  %v2220 = vpack.c.bf16 %v2182, %v1937
  %v2221 = vpack.c.bf16 %v1695, %v1450
  %v2222 = vpack.c.bf16 %v2185, %v1940
  %v2223 = vpack.c.bf16 %v1697, %v1452
  %v2224 = vpack.c.bf16 %v2187, %v1942
  %v2225 = vpack.c.bf16 %v1700, %v1455
  %v2226 = vpack.c.bf16 %v2190, %v1945
  %v2227 = vpack.c.bf16 %v1702, %v1457
  %v2228 = vpack.c.bf16 %v2192, %v1947
  %v2229 = vpack.c.bf16 %v1705, %v1460
  %v2230 = vpack.c.bf16 %v2195, %v1950
  %v2231 = vpack.c.bf16 %v1707, %v1462
  %v2232 = vpack.c.bf16 %v2197, %v1952
  %v2233 = vpack.c.bf16 %v1710, %v1465
  %v2234 = vpack.c.bf16 %v2200, %v1955
  %v2235 = vpack.c.bf16 %v1712, %v1467
  %v2236 = vpack.c.bf16 %v2202, %v1957
  %v2237 = vpack.c.bf16 %v1715, %v1470
  %v2238 = vpack.c.bf16 %v2205, %v1960
  %v2239 = vpack.c.bf16 %v1717, %v1472
  %v2240 = vpack.c.bf16 %v2207, %v1962
  %2241 = vst [vmem:[%s2] sm:$0xff] %v2209
  %2242 = vst [vmem:[%s2 + $0x8] sm:$0xff] %v2210
  %2243 = vst [vmem:[%s2 + $0x10] sm:$0xff] %v2211
  %2244 = vst [vmem:[%s2 + $0x18] sm:$0xff] %v2212
  %2245 = vst [vmem:[%s2 + $0x20] sm:$0xff] %v2213
  %2246 = vst [vmem:[%s2 + $0x28] sm:$0xff] %v2214
  %2247 = vst [vmem:[%s2 + $0x30] sm:$0xff] %v2215
  %2248 = vst [vmem:[%s2 + $0x38] sm:$0xff] %v2216
  %2249 = vst [vmem:[%s2 + $0x40] sm:$0xff] %v2217
  %2250 = vst [vmem:[%s2 + $0x48] sm:$0xff] %v2218
  %2251 = vst [vmem:[%s2 + $0x50] sm:$0xff] %v2219
  %2252 = vst [vmem:[%s2 + $0x58] sm:$0xff] %v2220
  %2253 = vst [vmem:[%s2 + $0x60] sm:$0xff] %v2221
  %2254 = vst [vmem:[%s2 + $0x68] sm:$0xff] %v2222
  %2255 = vst [vmem:[%s2 + $0x70] sm:$0xff] %v2223
  %2256 = vst [vmem:[%s2 + $0x78] sm:$0xff] %v2224
  %2257 = vst [vmem:[%s2 + $0x80] sm:$0xff] %v2225
  %2258 = vst [vmem:[%s2 + $0x88] sm:$0xff] %v2226
  %2259 = vst [vmem:[%s2 + $0x90] sm:$0xff] %v2227
  %2260 = vst [vmem:[%s2 + $0x98] sm:$0xff] %v2228
  %2261 = vst [vmem:[%s2 + $0xa0] sm:$0xff] %v2229
  %2262 = vst [vmem:[%s2 + $0xa8] sm:$0xff] %v2230
  %2263 = vst [vmem:[%s2 + $0xb0] sm:$0xff] %v2231
  %2264 = vst [vmem:[%s2 + $0xb8] sm:$0xff] %v2232
  %2265 = vst [vmem:[%s2 + $0xc0] sm:$0xff] %v2233
  %2266 = vst [vmem:[%s2 + $0xc8] sm:$0xff] %v2234
  %2267 = vst [vmem:[%s2 + $0xd0] sm:$0xff] %v2235
  %2268 = vst [vmem:[%s2 + $0xd8] sm:$0xff] %v2236
  %2269 = vst [vmem:[%s2 + $0xe0] sm:$0xff] %v2237
  %2270 = vst [vmem:[%s2 + $0xe8] sm:$0xff] %v2238
  %2271 = vst [vmem:[%s2 + $0xf0] sm:$0xff] %v2239
  %2272 = vst [vmem:[%s2 + $0xf8] sm:$0xff] %v2240
  %2273 = vst [vmem:[%s3] sm:$0xff] 0.0
  %2274 = vst [vmem:[%s3 + $0x8] sm:$0xff] 0.0
  %2275 = vst [vmem:[%s3 + $0x10] sm:$0xff] 0.0
  %2276 = vst [vmem:[%s3 + $0x18] sm:$0xff] 0.0
  %v2277 = vadd.f32 %v1435, %v1437
  %v2278 = vadd.f32 %v2277, %v1440
  %v2279 = vadd.f32 %v2278, %v1442
  %v2280 = vadd.f32 %v2279, %v1445
  %v2281 = vadd.f32 %v2280, %v1447
  %v2282 = vadd.f32 %v2281, %v1450
  %v2283 = vadd.f32 %v2282, %v1452
  %v2284 = vadd.f32 %v2283, %v1455
  %v2285 = vadd.f32 %v2284, %v1457
  %v2286 = vadd.f32 %v2285, %v1460
  %v2287 = vadd.f32 %v2286, %v1462
  %v2288 = vadd.f32 %v2287, %v1465
  %v2289 = vadd.f32 %v2288, %v1467
  %v2290 = vadd.f32 %v2289, %v1470
  %v2291 = vadd.f32 %v2290, %v1472
  %v2292 = vrot.slane %v2291, 4
  %v2293 = vadd.f32 %v2291, %v2292
  %v2294 = vrot.slane %v2293, 2
  %v2295 = vadd.f32 %v2293, %v2294
  %v2296 = vrot.slane %v2295, 1
  %v2297 = vadd.f32 %v2295, %v2296
  %v2298 = vadd.f32 %v1680, %v1682
  %v2299 = vadd.f32 %v2298, %v1685
  %v2300 = vadd.f32 %v2299, %v1687
  %v2301 = vadd.f32 %v2300, %v1690
  %v2302 = vadd.f32 %v2301, %v1692
  %v2303 = vadd.f32 %v2302, %v1695
  %v2304 = vadd.f32 %v2303, %v1697
  %v2305 = vadd.f32 %v2304, %v1700
  %v2306 = vadd.f32 %v2305, %v1702
  %v2307 = vadd.f32 %v2306, %v1705
  %v2308 = vadd.f32 %v2307, %v1707
  %v2309 = vadd.f32 %v2308, %v1710
  %v2310 = vadd.f32 %v2309, %v1712
  %v2311 = vadd.f32 %v2310, %v1715
  %v2312 = vadd.f32 %v2311, %v1717
  %v2313 = vrot.slane %v2312, 4
  %v2314 = vadd.f32 %v2312, %v2313
  %v2315 = vrot.slane %v2314, 2
  %v2316 = vadd.f32 %v2314, %v2315
  %v2317 = vrot.slane %v2316, 1
  %v2318 = vadd.f32 %v2316, %v2317
  %v2319 = vadd.f32 %v1925, %v1927
  %v2320 = vadd.f32 %v2319, %v1930
  %v2321 = vadd.f32 %v2320, %v1932
  %v2322 = vadd.f32 %v2321, %v1935
  %v2323 = vadd.f32 %v2322, %v1937
  %v2324 = vadd.f32 %v2323, %v1940
  %v2325 = vadd.f32 %v2324, %v1942
  %v2326 = vadd.f32 %v2325, %v1945
  %v2327 = vadd.f32 %v2326, %v1947
  %v2328 = vadd.f32 %v2327, %v1950
  %v2329 = vadd.f32 %v2328, %v1952
  %v2330 = vadd.f32 %v2329, %v1955
  %v2331 = vadd.f32 %v2330, %v1957
  %v2332 = vadd.f32 %v2331, %v1960
  %v2333 = vadd.f32 %v2332, %v1962
  %v2334 = vrot.slane %v2333, 4
  %v2335 = vadd.f32 %v2333, %v2334
  %v2336 = vrot.slane %v2335, 2
  %v2337 = vadd.f32 %v2335, %v2336
  %v2338 = vrot.slane %v2337, 1
  %v2339 = vadd.f32 %v2337, %v2338
  %v2340 = vadd.f32 %v2170, %v2172
  %v2341 = vadd.f32 %v2340, %v2175
  %v2342 = vadd.f32 %v2341, %v2177
  %v2343 = vadd.f32 %v2342, %v2180
  %v2344 = vadd.f32 %v2343, %v2182
  %v2345 = vadd.f32 %v2344, %v2185
  %v2346 = vadd.f32 %v2345, %v2187
  %v2347 = vadd.f32 %v2346, %v2190
  %v2348 = vadd.f32 %v2347, %v2192
  %v2349 = vadd.f32 %v2348, %v2195
  %v2350 = vadd.f32 %v2349, %v2197
  %v2351 = vadd.f32 %v2350, %v2200
  %v2352 = vadd.f32 %v2351, %v2202
  %v2353 = vadd.f32 %v2352, %v2205
  %v2354 = vadd.f32 %v2353, %v2207
  %v2355 = vrot.slane %v2354, 4
  %v2356 = vadd.f32 %v2354, %v2355
  %v2357 = vrot.slane %v2356, 2
  %v2358 = vadd.f32 %v2356, %v2357
  %v2359 = vrot.slane %v2358, 1
  %v2360 = vadd.f32 %v2358, %v2359
  %v2365 = vrot.slane %v2318, 7
  %v2366 = vrot.slane %v2339, 6
  %v2367 = vrot.slane %v2360, 5
  %vm2368 = vcmask 1040384
  %v2369 = vsel %vm2368, %v2297, %v2365
  %vm2370 = vcmask 1042434
  %v2371 = vsel %vm2370, %v2366, %v2367
  %vm2372 = vcmask 1041408
  %v2373 = vsel %vm2372, %v2369, %v2371
  %v2375 = vlaneseq
  %vm2376 = vcmp.ge.s32.totalorder %v2375, 0
  %vm2377 = vcmp.lt.s32.totalorder %v2375, 512
  %vm2378 = vmand %vm2376, %vm2377
  %2379 = vst.msk [vmem:[%s3] ss:$8 sm:$0xf] %vm2378, %v2373
  %2380 = vst.msk [vmem:[%s3] ss:$8 sm:$0x0] %vm2378, %v2373
  %v2381 = vmul.f32 %v1435, %v1435
  %v2382 = vmul.f32 %v1680, %v1680
  %v2383 = vmul.f32 %v1925, %v1925
  %v2384 = vmul.f32 %v2170, %v2170
  %v2385 = vmul.f32 %v1437, %v1437
  %v2386 = vmul.f32 %v1682, %v1682
  %v2387 = vmul.f32 %v1927, %v1927
  %v2388 = vmul.f32 %v2172, %v2172
  %v2389 = vmul.f32 %v1440, %v1440
  %v2390 = vmul.f32 %v1685, %v1685
  %v2391 = vmul.f32 %v1930, %v1930
  %v2392 = vmul.f32 %v2175, %v2175
  %v2393 = vmul.f32 %v1442, %v1442
  %v2394 = vmul.f32 %v1687, %v1687
  %v2395 = vmul.f32 %v1932, %v1932
  %v2396 = vmul.f32 %v2177, %v2177
  %v2397 = vmul.f32 %v1445, %v1445
  %v2398 = vmul.f32 %v1690, %v1690
  %v2399 = vmul.f32 %v1935, %v1935
  %v2400 = vmul.f32 %v2180, %v2180
  %v2401 = vmul.f32 %v1447, %v1447
  %v2402 = vmul.f32 %v1692, %v1692
  %v2403 = vmul.f32 %v1937, %v1937
  %v2404 = vmul.f32 %v2182, %v2182
  %v2405 = vmul.f32 %v1450, %v1450
  %v2406 = vmul.f32 %v1695, %v1695
  %v2407 = vmul.f32 %v1940, %v1940
  %v2408 = vmul.f32 %v2185, %v2185
  %v2409 = vmul.f32 %v1452, %v1452
  %v2410 = vmul.f32 %v1697, %v1697
  %v2411 = vmul.f32 %v1942, %v1942
  %v2412 = vmul.f32 %v2187, %v2187
  %v2413 = vmul.f32 %v1455, %v1455
  %v2414 = vmul.f32 %v1700, %v1700
  %v2415 = vmul.f32 %v1945, %v1945
  %v2416 = vmul.f32 %v2190, %v2190
  %v2417 = vmul.f32 %v1457, %v1457
  %v2418 = vmul.f32 %v1702, %v1702
  %v2419 = vmul.f32 %v1947, %v1947
  %v2420 = vmul.f32 %v2192, %v2192
  %v2421 = vmul.f32 %v1460, %v1460
  %v2422 = vmul.f32 %v1705, %v1705
  %v2423 = vmul.f32 %v1950, %v1950
  %v2424 = vmul.f32 %v2195, %v2195
  %v2425 = vmul.f32 %v1462, %v1462
  %v2426 = vmul.f32 %v1707, %v1707
  %v2427 = vmul.f32 %v1952, %v1952
  %v2428 = vmul.f32 %v2197, %v2197
  %v2429 = vmul.f32 %v1465, %v1465
  %v2430 = vmul.f32 %v1710, %v1710
  %v2431 = vmul.f32 %v1955, %v1955
  %v2432 = vmul.f32 %v2200, %v2200
  %v2433 = vmul.f32 %v1467, %v1467
  %v2434 = vmul.f32 %v1712, %v1712
  %v2435 = vmul.f32 %v1957, %v1957
  %v2436 = vmul.f32 %v2202, %v2202
  %v2437 = vmul.f32 %v1470, %v1470
  %v2438 = vmul.f32 %v1715, %v1715
  %v2439 = vmul.f32 %v1960, %v1960
  %v2440 = vmul.f32 %v2205, %v2205
  %v2441 = vmul.f32 %v1472, %v1472
  %v2442 = vmul.f32 %v1717, %v1717
  %v2443 = vmul.f32 %v1962, %v1962
  %v2444 = vmul.f32 %v2207, %v2207
  %v2445 = vadd.f32 %v2381, %v2385
  %v2446 = vadd.f32 %v2445, %v2389
  %v2447 = vadd.f32 %v2446, %v2393
  %v2448 = vadd.f32 %v2447, %v2397
  %v2449 = vadd.f32 %v2448, %v2401
  %v2450 = vadd.f32 %v2449, %v2405
  %v2451 = vadd.f32 %v2450, %v2409
  %v2452 = vadd.f32 %v2451, %v2413
  %v2453 = vadd.f32 %v2452, %v2417
  %v2454 = vadd.f32 %v2453, %v2421
  %v2455 = vadd.f32 %v2454, %v2425
  %v2456 = vadd.f32 %v2455, %v2429
  %v2457 = vadd.f32 %v2456, %v2433
  %v2458 = vadd.f32 %v2457, %v2437
  %v2459 = vadd.f32 %v2458, %v2441
  %v2460 = vrot.slane %v2459, 4
  %v2461 = vadd.f32 %v2459, %v2460
  %v2462 = vrot.slane %v2461, 2
  %v2463 = vadd.f32 %v2461, %v2462
  %v2464 = vrot.slane %v2463, 1
  %v2465 = vadd.f32 %v2463, %v2464
  %v2466 = vadd.f32 %v2382, %v2386
  %v2467 = vadd.f32 %v2466, %v2390
  %v2468 = vadd.f32 %v2467, %v2394
  %v2469 = vadd.f32 %v2468, %v2398
  %v2470 = vadd.f32 %v2469, %v2402
  %v2471 = vadd.f32 %v2470, %v2406
  %v2472 = vadd.f32 %v2471, %v2410
  %v2473 = vadd.f32 %v2472, %v2414
  %v2474 = vadd.f32 %v2473, %v2418
  %v2475 = vadd.f32 %v2474, %v2422
  %v2476 = vadd.f32 %v2475, %v2426
  %v2477 = vadd.f32 %v2476, %v2430
  %v2478 = vadd.f32 %v2477, %v2434
  %v2479 = vadd.f32 %v2478, %v2438
  %v2480 = vadd.f32 %v2479, %v2442
  %v2481 = vrot.slane %v2480, 4
  %v2482 = vadd.f32 %v2480, %v2481
  %v2483 = vrot.slane %v2482, 2
  %v2484 = vadd.f32 %v2482, %v2483
  %v2485 = vrot.slane %v2484, 1
  %v2486 = vadd.f32 %v2484, %v2485
  %v2487 = vadd.f32 %v2383, %v2387
  %v2488 = vadd.f32 %v2487, %v2391
  %v2489 = vadd.f32 %v2488, %v2395
  %v2490 = vadd.f32 %v2489, %v2399
  %v2491 = vadd.f32 %v2490, %v2403
  %v2492 = vadd.f32 %v2491, %v2407
  %v2493 = vadd.f32 %v2492, %v2411
  %v2494 = vadd.f32 %v2493, %v2415
  %v2495 = vadd.f32 %v2494, %v2419
  %v2496 = vadd.f32 %v2495, %v2423
  %v2497 = vadd.f32 %v2496, %v2427
  %v2498 = vadd.f32 %v2497, %v2431
  %v2499 = vadd.f32 %v2498, %v2435
  %v2500 = vadd.f32 %v2499, %v2439
  %v2501 = vadd.f32 %v2500, %v2443
  %v2502 = vrot.slane %v2501, 4
  %v2503 = vadd.f32 %v2501, %v2502
  %v2504 = vrot.slane %v2503, 2
  %v2505 = vadd.f32 %v2503, %v2504
  %v2506 = vrot.slane %v2505, 1
  %v2507 = vadd.f32 %v2505, %v2506
  %v2508 = vadd.f32 %v2384, %v2388
  %v2509 = vadd.f32 %v2508, %v2392
  %v2510 = vadd.f32 %v2509, %v2396
  %v2511 = vadd.f32 %v2510, %v2400
  %v2512 = vadd.f32 %v2511, %v2404
  %v2513 = vadd.f32 %v2512, %v2408
  %v2514 = vadd.f32 %v2513, %v2412
  %v2515 = vadd.f32 %v2514, %v2416
  %v2516 = vadd.f32 %v2515, %v2420
  %v2517 = vadd.f32 %v2516, %v2424
  %v2518 = vadd.f32 %v2517, %v2428
  %v2519 = vadd.f32 %v2518, %v2432
  %v2520 = vadd.f32 %v2519, %v2436
  %v2521 = vadd.f32 %v2520, %v2440
  %v2522 = vadd.f32 %v2521, %v2444
  %v2523 = vrot.slane %v2522, 4
  %v2524 = vadd.f32 %v2522, %v2523
  %v2525 = vrot.slane %v2524, 2
  %v2526 = vadd.f32 %v2524, %v2525
  %v2527 = vrot.slane %v2526, 1
  %v2528 = vadd.f32 %v2526, %v2527
  %v2533 = vrot.slane %v2486, 7
  %v2534 = vrot.slane %v2507, 6
  %v2535 = vrot.slane %v2528, 5
  %v2536 = vsel %vm2368, %v2465, %v2533
  %v2537 = vsel %vm2370, %v2534, %v2535
  %v2538 = vsel %vm2372, %v2536, %v2537
  %s2540 = scalar_lea.vmem %s3, 1
  %2541 = vst.msk [vmem:[%s2540] ss:$8 sm:$0xf] %vm2378, %v2538
  %2542 = vst.msk [vmem:[%s2540] ss:$8 sm:$0x0] %vm2378, %v2538
  // Predicated region
  $region10: #{generator_forward.11} parent=0 // pred_check
    _
  $region11: #{generator_forward.11} parent=0 // pred_check_branch
    %2544 = sbr.rel (0) target = $region13
  $region12: #{generator_forward.11} parent=0 // pred_region
    _
  $region13: #{generator_forward.11} parent=0 // pred_fallthru
    _
  // Predicated region
  $region14: #{generator_forward.11} parent=0 // pred_check
    _
  $region15: #{generator_forward.11} parent=0 // pred_check_branch
    %2546 = sbr.rel (0) target = $region17
  $region16: #{generator_forward.11} parent=0 // pred_region
    _
  $region17: #{generator_forward.11} parent=0 // pred_fallthru
    _
  // Predicated region
  $region18: #{generator_forward.11} parent=0 // pred_check
    _
  $region19: #{generator_forward.11} parent=0 // pred_check_branch
    %2548 = sbr.rel (0) target = $region21
  $region20: #{generator_forward.11} parent=0 // pred_region
    _
  $region21: #{generator_forward.11} parent=0 // pred_fallthru
    _
  // Predicated region
  $region22: #{generator_forward.11} parent=0 // pred_check
    _
  $region23: #{generator_forward.11} parent=0 // pred_check_branch
    %2550 = sbr.rel (0) target = $region25
  $region24: #{generator_forward.11} parent=0 // pred_region
    _
  $region25: #{generator_forward.11} parent=0 // pred_fallthru
    _

// kernel: generator_forward.12
$region0: #{generator_forward.12}
  #allocation0 [shape = 'u32[]', space=smem, size = 0x4, offset = 0x4, fixed_abs, tag = 'smem constant byte address 0x4 - core index']
  #allocation1 [shape = 'u32[72,128]{1,0:T(1,128)}', space=vmem, size = 0x9000, scoped, tag = 'internal scratch']
  %s0 = inlined_call_operand.vmem [shape: bf16[128,512], index: 0, kind: input, shape index: {}]
  %s1 = inlined_call_operand.vmem [shape: f32[8,512], index: 1, kind: input, shape index: {}]
  %s2 = inlined_call_operand.vmem [shape: bf16[128,512], index: 2, kind: output, shape index: {}]
  %s3 = sld [smem:[#allocation0]]
  $region18: #{generator_forward.12} parent=0
    _
  %s5 = ssub.s32 1, %s3
  %s6 = scalar_select 0, %s5, %s3
  // Predicated region
  $region2: #{generator_forward.12} parent=0 // pred_check
    _
  $region3: #{generator_forward.12} parent=0 // pred_check_branch
    %8 = sbr.rel (0) target = $region5
  $region4: #{generator_forward.12} parent=0 // pred_region
    _
  $region5: #{generator_forward.12} parent=0 // pred_fallthru
    _
  // Predicated region
  $region6: #{generator_forward.12} parent=0 // pred_check
    _
  $region7: #{generator_forward.12} parent=0 // pred_check_branch
    %10 = sbr.rel (0) target = $region9
  $region8: #{generator_forward.12} parent=0 // pred_region
    _
  $region9: #{generator_forward.12} parent=0 // pred_fallthru
    _
  %v11 = vld [vmem:[%s0] sm:$0xff]
  %v12 = vld [vmem:[%s0 + $0x8] sm:$0xff]
  %v13 = vld [vmem:[%s0 + $0x10] sm:$0xff]
  %v14 = vld [vmem:[%s0 + $0x18] sm:$0xff]
  %v15 = vld [vmem:[%s0 + $0x20] sm:$0xff]
  %v16 = vld [vmem:[%s0 + $0x28] sm:$0xff]
  %v17 = vld [vmem:[%s0 + $0x30] sm:$0xff]
  %v18 = vld [vmem:[%s0 + $0x38] sm:$0xff]
  %v19 = vld [vmem:[%s0 + $0x40] sm:$0xff]
  %v20 = vld [vmem:[%s0 + $0x48] sm:$0xff]
  %v21 = vld [vmem:[%s0 + $0x50] sm:$0xff]
  %v22 = vld [vmem:[%s0 + $0x58] sm:$0xff]
  %v23 = vld [vmem:[%s0 + $0x60] sm:$0xff]
  %v24 = vld [vmem:[%s0 + $0x68] sm:$0xff]
  %v25 = vld [vmem:[%s0 + $0x70] sm:$0xff]
  %v26 = vld [vmem:[%s0 + $0x78] sm:$0xff]
  %v27 = vld [vmem:[%s0 + $0x80] sm:$0xff]
  %v28 = vld [vmem:[%s0 + $0x88] sm:$0xff]
  %v29 = vld [vmem:[%s0 + $0x90] sm:$0xff]
  %v30 = vld [vmem:[%s0 + $0x98] sm:$0xff]
  %v31 = vld [vmem:[%s0 + $0xa0] sm:$0xff]
  %v32 = vld [vmem:[%s0 + $0xa8] sm:$0xff]
  %v33 = vld [vmem:[%s0 + $0xb0] sm:$0xff]
  %v34 = vld [vmem:[%s0 + $0xb8] sm:$0xff]
  %v35 = vld [vmem:[%s0 + $0xc0] sm:$0xff]
  %v36 = vld [vmem:[%s0 + $0xc8] sm:$0xff]
  %v37 = vld [vmem:[%s0 + $0xd0] sm:$0xff]
  %v38 = vld [vmem:[%s0 + $0xd8] sm:$0xff]
  %v39 = vld [vmem:[%s0 + $0xe0] sm:$0xff]
  %v40 = vld [vmem:[%s0 + $0xe8] sm:$0xff]
  %v41 = vld [vmem:[%s0 + $0xf0] sm:$0xff]
  %v42 = vld [vmem:[%s0 + $0xf8] sm:$0xff]
  %v43 = vunpack.c.l.bf16 %v11
  %v44 = vunpack.c.h.bf16 %v11
  %v45 = vunpack.c.l.bf16 %v12
  %v46 = vunpack.c.h.bf16 %v12
  %v47 = vunpack.c.l.bf16 %v13
  %v48 = vunpack.c.h.bf16 %v13
  %v49 = vunpack.c.l.bf16 %v14
  %v50 = vunpack.c.h.bf16 %v14
  %v51 = vunpack.c.l.bf16 %v15
  %v52 = vunpack.c.h.bf16 %v15
  %v53 = vunpack.c.l.bf16 %v16
  %v54 = vunpack.c.h.bf16 %v16
  %v55 = vunpack.c.l.bf16 %v17
  %v56 = vunpack.c.h.bf16 %v17
  %v57 = vunpack.c.l.bf16 %v18
  %v58 = vunpack.c.h.bf16 %v18
  %v59 = vunpack.c.l.bf16 %v19
  %v60 = vunpack.c.h.bf16 %v19
  %v61 = vunpack.c.l.bf16 %v20
  %v62 = vunpack.c.h.bf16 %v20
  %v63 = vunpack.c.l.bf16 %v21
  %v64 = vunpack.c.h.bf16 %v21
  %v65 = vunpack.c.l.bf16 %v22
  %v66 = vunpack.c.h.bf16 %v22
  %v67 = vunpack.c.l.bf16 %v23
  %v68 = vunpack.c.h.bf16 %v23
  %v69 = vunpack.c.l.bf16 %v24
  %v70 = vunpack.c.h.bf16 %v24
  %v71 = vunpack.c.l.bf16 %v25
  %v72 = vunpack.c.h.bf16 %v25
  %v73 = vunpack.c.l.bf16 %v26
  %v74 = vunpack.c.h.bf16 %v26
  %v75 = vunpack.c.l.bf16 %v27
  %v76 = vunpack.c.h.bf16 %v27
  %v77 = vunpack.c.l.bf16 %v28
  %v78 = vunpack.c.h.bf16 %v28
  %v79 = vunpack.c.l.bf16 %v29
  %v80 = vunpack.c.h.bf16 %v29
  %v81 = vunpack.c.l.bf16 %v30
  %v82 = vunpack.c.h.bf16 %v30
  %v83 = vunpack.c.l.bf16 %v31
  %v84 = vunpack.c.h.bf16 %v31
  %v85 = vunpack.c.l.bf16 %v32
  %v86 = vunpack.c.h.bf16 %v32
  %v87 = vunpack.c.l.bf16 %v33
  %v88 = vunpack.c.h.bf16 %v33
  %v89 = vunpack.c.l.bf16 %v34
  %v90 = vunpack.c.h.bf16 %v34
  %v91 = vunpack.c.l.bf16 %v35
  %v92 = vunpack.c.h.bf16 %v35
  %v93 = vunpack.c.l.bf16 %v36
  %v94 = vunpack.c.h.bf16 %v36
  %v95 = vunpack.c.l.bf16 %v37
  %v96 = vunpack.c.h.bf16 %v37
  %v97 = vunpack.c.l.bf16 %v38
  %v98 = vunpack.c.h.bf16 %v38
  %v99 = vunpack.c.l.bf16 %v39
  %v100 = vunpack.c.h.bf16 %v39
  %v101 = vunpack.c.l.bf16 %v40
  %v102 = vunpack.c.h.bf16 %v40
  %v103 = vunpack.c.l.bf16 %v41
  %v104 = vunpack.c.h.bf16 %v41
  %v105 = vunpack.c.l.bf16 %v42
  %v106 = vunpack.c.h.bf16 %v42
  %v107 = vld [vmem:[%s1] ss:$8 sm:$0xf]
  %s108 = scalar_lea.vmem %s1, 1
  %v109 = vld [vmem:[%s108] ss:$8 sm:$0xf]
  %v111 = vperm.slane %v107, 0
  %v112 = vperm.slane %v107, 1
  %v113 = vperm.slane %v107, 2
  %v114 = vperm.slane %v107, 3
  %v119 = vmul.f32 %v43, %v111
  %v120 = vmul.f32 %v44, %v112
  %v121 = vmul.f32 %v45, %v113
  %v122 = vmul.f32 %v46, %v114
  %v123 = vmul.f32 %v47, %v111
  %v124 = vmul.f32 %v48, %v112
  %v125 = vmul.f32 %v49, %v113
  %v126 = vmul.f32 %v50, %v114
  %v127 = vmul.f32 %v51, %v111
  %v128 = vmul.f32 %v52, %v112
  %v129 = vmul.f32 %v53, %v113
  %v130 = vmul.f32 %v54, %v114
  %v131 = vmul.f32 %v55, %v111
  %v132 = vmul.f32 %v56, %v112
  %v133 = vmul.f32 %v57, %v113
  %v134 = vmul.f32 %v58, %v114
  %v135 = vmul.f32 %v59, %v111
  %v136 = vmul.f32 %v60, %v112
  %v137 = vmul.f32 %v61, %v113
  %v138 = vmul.f32 %v62, %v114
  %v139 = vmul.f32 %v63, %v111
  %v140 = vmul.f32 %v64, %v112
  %v141 = vmul.f32 %v65, %v113
  %v142 = vmul.f32 %v66, %v114
  %v143 = vmul.f32 %v67, %v111
  %v144 = vmul.f32 %v68, %v112
  %v145 = vmul.f32 %v69, %v113
  %v146 = vmul.f32 %v70, %v114
  %v147 = vmul.f32 %v71, %v111
  %v148 = vmul.f32 %v72, %v112
  %v149 = vmul.f32 %v73, %v113
  %v150 = vmul.f32 %v74, %v114
  %v151 = vmul.f32 %v75, %v111
  %v152 = vmul.f32 %v76, %v112
  %v153 = vmul.f32 %v77, %v113
  %v154 = vmul.f32 %v78, %v114
  %v155 = vmul.f32 %v79, %v111
  %v156 = vmul.f32 %v80, %v112
  %v157 = vmul.f32 %v81, %v113
  %v158 = vmul.f32 %v82, %v114
  %v159 = vmul.f32 %v83, %v111
  %v160 = vmul.f32 %v84, %v112
  %v161 = vmul.f32 %v85, %v113
  %v162 = vmul.f32 %v86, %v114
  %v163 = vmul.f32 %v87, %v111
  %v164 = vmul.f32 %v88, %v112
  %v165 = vmul.f32 %v89, %v113
  %v166 = vmul.f32 %v90, %v114
  %v167 = vmul.f32 %v91, %v111
  %v168 = vmul.f32 %v92, %v112
  %v169 = vmul.f32 %v93, %v113
  %v170 = vmul.f32 %v94, %v114
  %v171 = vmul.f32 %v95, %v111
  %v172 = vmul.f32 %v96, %v112
  %v173 = vmul.f32 %v97, %v113
  %v174 = vmul.f32 %v98, %v114
  %v175 = vmul.f32 %v99, %v111
  %v176 = vmul.f32 %v100, %v112
  %v177 = vmul.f32 %v101, %v113
  %v178 = vmul.f32 %v102, %v114
  %v179 = vmul.f32 %v103, %v111
  %v180 = vmul.f32 %v104, %v112
  %v181 = vmul.f32 %v105, %v113
  %v182 = vmul.f32 %v106, %v114
  %v184 = vperm.slane %v109, 0
  %v185 = vperm.slane %v109, 1
  %v186 = vperm.slane %v109, 2
  %v187 = vperm.slane %v109, 3
  %v192 = vadd.f32 %v119, %v184
  %v193 = vadd.f32 %v120, %v185
  %v194 = vadd.f32 %v121, %v186
  %v195 = vadd.f32 %v122, %v187
  %v196 = vadd.f32 %v123, %v184
  %v197 = vadd.f32 %v124, %v185
  %v198 = vadd.f32 %v125, %v186
  %v199 = vadd.f32 %v126, %v187
  %v200 = vadd.f32 %v127, %v184
  %v201 = vadd.f32 %v128, %v185
  %v202 = vadd.f32 %v129, %v186
  %v203 = vadd.f32 %v130, %v187
  %v204 = vadd.f32 %v131, %v184
  %v205 = vadd.f32 %v132, %v185
  %v206 = vadd.f32 %v133, %v186
  %v207 = vadd.f32 %v134, %v187
  %v208 = vadd.f32 %v135, %v184
  %v209 = vadd.f32 %v136, %v185
  %v210 = vadd.f32 %v137, %v186
  %v211 = vadd.f32 %v138, %v187
  %v212 = vadd.f32 %v139, %v184
  %v213 = vadd.f32 %v140, %v185
  %v214 = vadd.f32 %v141, %v186
  %v215 = vadd.f32 %v142, %v187
  %v216 = vadd.f32 %v143, %v184
  %v217 = vadd.f32 %v144, %v185
  %v218 = vadd.f32 %v145, %v186
  %v219 = vadd.f32 %v146, %v187
  %v220 = vadd.f32 %v147, %v184
  %v221 = vadd.f32 %v148, %v185
  %v222 = vadd.f32 %v149, %v186
  %v223 = vadd.f32 %v150, %v187
  %v224 = vadd.f32 %v151, %v184
  %v225 = vadd.f32 %v152, %v185
  %v226 = vadd.f32 %v153, %v186
  %v227 = vadd.f32 %v154, %v187
  %v228 = vadd.f32 %v155, %v184
  %v229 = vadd.f32 %v156, %v185
  %v230 = vadd.f32 %v157, %v186
  %v231 = vadd.f32 %v158, %v187
  %v232 = vadd.f32 %v159, %v184
  %v233 = vadd.f32 %v160, %v185
  %v234 = vadd.f32 %v161, %v186
  %v235 = vadd.f32 %v162, %v187
  %v236 = vadd.f32 %v163, %v184
  %v237 = vadd.f32 %v164, %v185
  %v238 = vadd.f32 %v165, %v186
  %v239 = vadd.f32 %v166, %v187
  %v240 = vadd.f32 %v167, %v184
  %v241 = vadd.f32 %v168, %v185
  %v242 = vadd.f32 %v169, %v186
  %v243 = vadd.f32 %v170, %v187
  %v244 = vadd.f32 %v171, %v184
  %v245 = vadd.f32 %v172, %v185
  %v246 = vadd.f32 %v173, %v186
  %v247 = vadd.f32 %v174, %v187
  %v248 = vadd.f32 %v175, %v184
  %v249 = vadd.f32 %v176, %v185
  %v250 = vadd.f32 %v177, %v186
  %v251 = vadd.f32 %v178, %v187
  %v252 = vadd.f32 %v179, %v184
  %v253 = vadd.f32 %v180, %v185
  %v254 = vadd.f32 %v181, %v186
  %v255 = vadd.f32 %v182, %v187
  %v256 = vmax.f32 %v192, 0.0
  %v257 = vmax.f32 %v193, 0.0
  %v258 = vmax.f32 %v194, 0.0
  %v259 = vmax.f32 %v195, 0.0
  %v260 = vmax.f32 %v196, 0.0
  %v261 = vmax.f32 %v197, 0.0
  %v262 = vmax.f32 %v198, 0.0
  %v263 = vmax.f32 %v199, 0.0
  %v264 = vmax.f32 %v200, 0.0
  %v265 = vmax.f32 %v201, 0.0
  %v266 = vmax.f32 %v202, 0.0
  %v267 = vmax.f32 %v203, 0.0
  %v268 = vmax.f32 %v204, 0.0
  %v269 = vmax.f32 %v205, 0.0
  %v270 = vmax.f32 %v206, 0.0
  %v271 = vmax.f32 %v207, 0.0
  %v272 = vmax.f32 %v208, 0.0
  %v273 = vmax.f32 %v209, 0.0
  %v274 = vmax.f32 %v210, 0.0
  %v275 = vmax.f32 %v211, 0.0
  %v276 = vmax.f32 %v212, 0.0
  %v277 = vmax.f32 %v213, 0.0
  %v278 = vmax.f32 %v214, 0.0
  %v279 = vmax.f32 %v215, 0.0
  %v280 = vmax.f32 %v216, 0.0
  %v281 = vmax.f32 %v217, 0.0
  %v282 = vmax.f32 %v218, 0.0
  %v283 = vmax.f32 %v219, 0.0
  %v284 = vmax.f32 %v220, 0.0
  %v285 = vmax.f32 %v221, 0.0
  %v286 = vmax.f32 %v222, 0.0
  %v287 = vmax.f32 %v223, 0.0
  %v288 = vmax.f32 %v224, 0.0
  %v289 = vmax.f32 %v225, 0.0
  %v290 = vmax.f32 %v226, 0.0
  %v291 = vmax.f32 %v227, 0.0
  %v292 = vmax.f32 %v228, 0.0
  %v293 = vmax.f32 %v229, 0.0
  %v294 = vmax.f32 %v230, 0.0
  %v295 = vmax.f32 %v231, 0.0
  %v296 = vmax.f32 %v232, 0.0
  %v297 = vmax.f32 %v233, 0.0
  %v298 = vmax.f32 %v234, 0.0
  %v299 = vmax.f32 %v235, 0.0
  %v300 = vmax.f32 %v236, 0.0
  %v301 = vmax.f32 %v237, 0.0
  %v302 = vmax.f32 %v238, 0.0
  %v303 = vmax.f32 %v239, 0.0
  %v304 = vmax.f32 %v240, 0.0
  %v305 = vmax.f32 %v241, 0.0
  %v306 = vmax.f32 %v242, 0.0
  %v307 = vmax.f32 %v243, 0.0
  %v308 = vmax.f32 %v244, 0.0
  %v309 = vmax.f32 %v245, 0.0
  %v310 = vmax.f32 %v246, 0.0
  %v311 = vmax.f32 %v247, 0.0
  %v312 = vmax.f32 %v248, 0.0
  %v313 = vmax.f32 %v249, 0.0
  %v314 = vmax.f32 %v250, 0.0
  %v315 = vmax.f32 %v251, 0.0
  %v316 = vmax.f32 %v252, 0.0
  %v317 = vmax.f32 %v253, 0.0
  %v318 = vmax.f32 %v254, 0.0
  %v319 = vmax.f32 %v255, 0.0
  %v320 = vpack.c.bf16 %v257, %v256
  %v321 = vpack.c.bf16 %v259, %v258
  %v322 = vpack.c.bf16 %v261, %v260
  %v323 = vpack.c.bf16 %v263, %v262
  %v324 = vpack.c.bf16 %v265, %v264
  %v325 = vpack.c.bf16 %v267, %v266
  %v326 = vpack.c.bf16 %v269, %v268
  %v327 = vpack.c.bf16 %v271, %v270
  %v328 = vpack.c.bf16 %v273, %v272
  %v329 = vpack.c.bf16 %v275, %v274
  %v330 = vpack.c.bf16 %v277, %v276
  %v331 = vpack.c.bf16 %v279, %v278
  %v332 = vpack.c.bf16 %v281, %v280
  %v333 = vpack.c.bf16 %v283, %v282
  %v334 = vpack.c.bf16 %v285, %v284
  %v335 = vpack.c.bf16 %v287, %v286
  %v336 = vpack.c.bf16 %v289, %v288
  %v337 = vpack.c.bf16 %v291, %v290
  %v338 = vpack.c.bf16 %v293, %v292
  %v339 = vpack.c.bf16 %v295, %v294
  %v340 = vpack.c.bf16 %v297, %v296
  %v341 = vpack.c.bf16 %v299, %v298
  %v342 = vpack.c.bf16 %v301, %v300
  %v343 = vpack.c.bf16 %v303, %v302
  %v344 = vpack.c.bf16 %v305, %v304
  %v345 = vpack.c.bf16 %v307, %v306
  %v346 = vpack.c.bf16 %v309, %v308
  %v347 = vpack.c.bf16 %v311, %v310
  %v348 = vpack.c.bf16 %v313, %v312
  %v349 = vpack.c.bf16 %v315, %v314
  %v350 = vpack.c.bf16 %v317, %v316
  %v351 = vpack.c.bf16 %v319, %v318
  %352 = vst [vmem:[%s2] sm:$0xff] %v320
  %353 = vst [vmem:[%s2 + $0x8] sm:$0xff] %v321
  %354 = vst [vmem:[%s2 + $0x10] sm:$0xff] %v322
  %355 = vst [vmem:[%s2 + $0x18] sm:$0xff] %v323
  %356 = vst [vmem:[%s2 + $0x20] sm:$0xff] %v324
  %357 = vst [vmem:[%s2 + $0x28] sm:$0xff] %v325
  %358 = vst [vmem:[%s2 + $0x30] sm:$0xff] %v326
  %359 = vst [vmem:[%s2 + $0x38] sm:$0xff] %v327
  %360 = vst [vmem:[%s2 + $0x40] sm:$0xff] %v328
  %361 = vst [vmem:[%s2 + $0x48] sm:$0xff] %v329
  %362 = vst [vmem:[%s2 + $0x50] sm:$0xff] %v330
  %363 = vst [vmem:[%s2 + $0x58] sm:$0xff] %v331
  %364 = vst [vmem:[%s2 + $0x60] sm:$0xff] %v332
  %365 = vst [vmem:[%s2 + $0x68] sm:$0xff] %v333
  %366 = vst [vmem:[%s2 + $0x70] sm:$0xff] %v334
  %367 = vst [vmem:[%s2 + $0x78] sm:$0xff] %v335
  %368 = vst [vmem:[%s2 + $0x80] sm:$0xff] %v336
  %369 = vst [vmem:[%s2 + $0x88] sm:$0xff] %v337
  %370 = vst [vmem:[%s2 + $0x90] sm:$0xff] %v338
  %371 = vst [vmem:[%s2 + $0x98] sm:$0xff] %v339
  %372 = vst [vmem:[%s2 + $0xa0] sm:$0xff] %v340
  %373 = vst [vmem:[%s2 + $0xa8] sm:$0xff] %v341
  %374 = vst [vmem:[%s2 + $0xb0] sm:$0xff] %v342
  %375 = vst [vmem:[%s2 + $0xb8] sm:$0xff] %v343
  %376 = vst [vmem:[%s2 + $0xc0] sm:$0xff] %v344
  %377 = vst [vmem:[%s2 + $0xc8] sm:$0xff] %v345
  %378 = vst [vmem:[%s2 + $0xd0] sm:$0xff] %v346
  %379 = vst [vmem:[%s2 + $0xd8] sm:$0xff] %v347
  %380 = vst [vmem:[%s2 + $0xe0] sm:$0xff] %v348
  %381 = vst [vmem:[%s2 + $0xe8] sm:$0xff] %v349
  %382 = vst [vmem:[%s2 + $0xf0] sm:$0xff] %v350
  %383 = vst [vmem:[%s2 + $0xf8] sm:$0xff] %v351
  // Predicated region
  $region10: #{generator_forward.12} parent=0 // pred_check
    _
  $region11: #{generator_forward.12} parent=0 // pred_check_branch
    %385 = sbr.rel (0) target = $region13
  $region12: #{generator_forward.12} parent=0 // pred_region
    _
  $region13: #{generator_forward.12} parent=0 // pred_fallthru
    _
  // Predicated region
  $region14: #{generator_forward.12} parent=0 // pred_check
    _
  $region15: #{generator_forward.12} parent=0 // pred_check_branch
    %387 = sbr.rel (0) target = $region17
  $region16: #{generator_forward.12} parent=0 // pred_region
    _
  $region17: #{generator_forward.12} parent=0 // pred_fallthru
    _

// kernel: tile.68
$region0: #{tile.68}
  #allocation0 [shape = 's32[1]{0}', space=sflag, size = 0x4, scoped, tag = 'scoped memory for tile.68']
  %s0 = inlined_call_operand.vmem [shape: f32[32], index: 0, kind: input, shape index: {}]
  %s1 = inlined_call_operand.vmem [shape: f32[4,32], index: 1, kind: output, shape index: {}]
  // Predicated region
  $region2: #{tile.68} parent=0 // pred_check
    _
  $region3: #{tile.68} parent=0 // pred_check_branch
    %3 = sbr.rel (0) target = $region5
  $region4: #{tile.68} parent=0 // pred_region
    _
  $region5: #{tile.68} parent=0 // pred_fallthru
    _
  %v4 = vld [vmem:[%s0] ss:$0 sm:$0xff]
  %5 = vst [vmem:[%s1] sm:$0xf] %v4

// kernel: tile.69
$region0: #{tile.69}
  %s0 = inlined_call_operand.vmem [shape: f32[4,32], index: 0, kind: input, shape index: {}]
  %s1 = inlined_call_operand.vmem [shape: f32[1,128], index: 1, kind: output, shape index: {}]
  $region1: #{tile.69} parent=0
    #allocation0 [shape = 'u8[4096]{0}', space=vmem, size = 0x1000, scoped, tag = 'scoped mem for output reshape']
    #allocation1 [shape = 'u8[4096]{0}', space=vmem, size = 0x1000, scoped, tag = 'scoped mem for input reshape']
    %s3 = ssub.s32 16, 1
    %v4 = vld [vmem:[%s0] sm:%s3]
    %5 = vst [vmem:[#allocation1] sm:%s3] %v4
    %v6 = vld [vmem:[#allocation1] sm:$0x1]
    %vm7 = vcmask 261120
    %8 = vst.msk [vmem:[#allocation0] sm:$0x1] %vm7, %v6
    %s9 = scalar_lea.vmem [#allocation1], 3
    %v10 = vld [vmem:[%s9] sm:$0x1]
    %11 = vrot.lane.b32.xlu0 %v10, 96
    %v12 = vpop.permute.xlu0 %11
    %vm13 = vcmask 1048320
    %14 = vst.msk [vmem:[#allocation0] sm:$0x1] %vm13, %v12
    %s15 = scalar_lea.vmem [#allocation1], 2
    %v16 = vld [vmem:[%s15] sm:$0x1]
    %17 = vrot.lane.b32.xlu0 %v16, 64
    %v18 = vpop.permute.xlu0 %17
    %vm19 = vcmask 785920
    %20 = vst.msk [vmem:[#allocation0] sm:$0x1] %vm19, %v18
    %s21 = scalar_lea.vmem [#allocation1], 1
    %v22 = vld [vmem:[%s21] sm:$0x1]
    %23 = vrot.lane.b32.xlu0 %v22, 32
    %v24 = vpop.permute.xlu0 %23
    %vm25 = vcmask 523520
    %26 = vst.msk [vmem:[#allocation0] sm:$0x1] %vm25, %v24
    %s28 = ssub.s32 2, 1
    %v29 = vld [vmem:[#allocation0] sm:%s28]
    %s31 = ssub.s32 2, 1
    %32 = vst [vmem:[%s1] sm:%s31] %v29

// kernel: generator_forward.13
$region0: #{generator_forward.13}
  #allocation0 [shape = 'u32[]', space=smem, size = 0x4, offset = 0x4, fixed_abs, tag = 'smem constant byte address 0x4 - core index']
  #allocation1 [shape = 'u32[72,128]{1,0:T(1,128)}', space=vmem, size = 0x9000, scoped, tag = 'internal scratch']
  %s0 = inlined_call_operand.vmem [shape: bf16[512,384], index: 0, kind: input, shape index: {}]
  %s1 = inlined_call_operand.vmem [shape: bf16[384,128], index: 1, kind: input, shape index: {}]
  %s2 = inlined_call_operand.vmem [shape: f32[1,128], index: 2, kind: input, shape index: {}]
  %s3 = inlined_call_operand.vmem [shape: f32[512,128], index: 3, kind: output, shape index: {}]
  %s4 = sld [smem:[#allocation0]]
  $region22: #{generator_forward.13} parent=0
    _
  %s6 = ssub.s32 1, %s4
  %s7 = scalar_select 0, %s6, %s4
  // Predicated region
  $region2: #{generator_forward.13} parent=0 // pred_check
    _
  $region3: #{generator_forward.13} parent=0 // pred_check_branch
    %9 = sbr.rel (0) target = $region5
  $region4: #{generator_forward.13} parent=0 // pred_region
    _
  $region5: #{generator_forward.13} parent=0 // pred_fallthru
    _
  // Predicated region
  $region6: #{generator_forward.13} parent=0 // pred_check
    _
  $region7: #{generator_forward.13} parent=0 // pred_check_branch
    %11 = sbr.rel (0) target = $region9
  $region8: #{generator_forward.13} parent=0 // pred_region
    _
  $region9: #{generator_forward.13} parent=0 // pred_fallthru
    _
  // Predicated region
  $region10: #{generator_forward.13} parent=0 // pred_check
    _
  $region11: #{generator_forward.13} parent=0 // pred_check_branch
    %13 = sbr.rel (0) target = $region13
  $region12: #{generator_forward.13} parent=0 // pred_region
    _
  $region13: #{generator_forward.13} parent=0 // pred_fallthru
    _
  %v14 = vld [vmem:[%s0] sm:$0xff]
  %v15 = vld [vmem:[%s0 + $0x8] sm:$0xf]
  %v16 = vld [vmem:[%s0 + $0xc] sm:$0xff]
  %v17 = vld [vmem:[%s0 + $0x14] sm:$0xf]
  %v18 = vld [vmem:[%s0 + $0x18] sm:$0xff]
  %v19 = vld [vmem:[%s0 + $0x20] sm:$0xf]
  %v20 = vld [vmem:[%s0 + $0x24] sm:$0xff]
  %v21 = vld [vmem:[%s0 + $0x2c] sm:$0xf]
  %v22 = vld [vmem:[%s0 + $0x30] sm:$0xff]
  %v23 = vld [vmem:[%s0 + $0x38] sm:$0xf]
  %v24 = vld [vmem:[%s0 + $0x3c] sm:$0xff]
  %v25 = vld [vmem:[%s0 + $0x44] sm:$0xf]
  %v26 = vld [vmem:[%s0 + $0x48] sm:$0xff]
  %v27 = vld [vmem:[%s0 + $0x50] sm:$0xf]
  %v28 = vld [vmem:[%s0 + $0x54] sm:$0xff]
  %v29 = vld [vmem:[%s0 + $0x5c] sm:$0xf]
  %v30 = vld [vmem:[%s0 + $0x60] sm:$0xff]
  %v31 = vld [vmem:[%s0 + $0x68] sm:$0xf]
  %v32 = vld [vmem:[%s0 + $0x6c] sm:$0xff]
  %v33 = vld [vmem:[%s0 + $0x74] sm:$0xf]
  %v34 = vld [vmem:[%s0 + $0x78] sm:$0xff]
  %v35 = vld [vmem:[%s0 + $0x80] sm:$0xf]
  %v36 = vld [vmem:[%s0 + $0x84] sm:$0xff]
  %v37 = vld [vmem:[%s0 + $0x8c] sm:$0xf]
  %v38 = vld [vmem:[%s0 + $0x90] sm:$0xff]
  %v39 = vld [vmem:[%s0 + $0x98] sm:$0xf]
  %v40 = vld [vmem:[%s0 + $0x9c] sm:$0xff]
  %v41 = vld [vmem:[%s0 + $0xa4] sm:$0xf]
  %v42 = vld [vmem:[%s0 + $0xa8] sm:$0xff]
  %v43 = vld [vmem:[%s0 + $0xb0] sm:$0xf]
  %v44 = vld [vmem:[%s0 + $0xb4] sm:$0xff]
  %v45 = vld [vmem:[%s0 + $0xbc] sm:$0xf]
  %v46 = vld [vmem:[%s0 + $0xc0] sm:$0xff]
  %v47 = vld [vmem:[%s0 + $0xc8] sm:$0xf]
  %v48 = vld [vmem:[%s0 + $0xcc] sm:$0xff]
  %v49 = vld [vmem:[%s0 + $0xd4] sm:$0xf]
  %v50 = vld [vmem:[%s0 + $0xd8] sm:$0xff]
  %v51 = vld [vmem:[%s0 + $0xe0] sm:$0xf]
  %v52 = vld [vmem:[%s0 + $0xe4] sm:$0xff]
  %v53 = vld [vmem:[%s0 + $0xec] sm:$0xf]
  %v54 = vld [vmem:[%s0 + $0xf0] sm:$0xff]
  %v55 = vld [vmem:[%s0 + $0xf8] sm:$0xf]
  %v56 = vld [vmem:[%s0 + $0xfc] sm:$0xff]
  %v57 = vld [vmem:[%s0 + $0x104] sm:$0xf]
  %v58 = vld [vmem:[%s0 + $0x108] sm:$0xff]
  %v59 = vld [vmem:[%s0 + $0x110] sm:$0xf]
  %v60 = vld [vmem:[%s0 + $0x114] sm:$0xff]
  %v61 = vld [vmem:[%s0 + $0x11c] sm:$0xf]
  %v62 = vld [vmem:[%s0 + $0x120] sm:$0xff]
  %v63 = vld [vmem:[%s0 + $0x128] sm:$0xf]
  %v64 = vld [vmem:[%s0 + $0x12c] sm:$0xff]
  %v65 = vld [vmem:[%s0 + $0x134] sm:$0xf]
  %v66 = vld [vmem:[%s0 + $0x138] sm:$0xff]
  %v67 = vld [vmem:[%s0 + $0x140] sm:$0xf]
  %v68 = vld [vmem:[%s0 + $0x144] sm:$0xff]
  %v69 = vld [vmem:[%s0 + $0x14c] sm:$0xf]
  %v70 = vld [vmem:[%s0 + $0x150] sm:$0xff]
  %v71 = vld [vmem:[%s0 + $0x158] sm:$0xf]
  %v72 = vld [vmem:[%s0 + $0x15c] sm:$0xff]
  %v73 = vld [vmem:[%s0 + $0x164] sm:$0xf]
  %v74 = vld [vmem:[%s0 + $0x168] sm:$0xff]
  %v75 = vld [vmem:[%s0 + $0x170] sm:$0xf]
  %v76 = vld [vmem:[%s0 + $0x174] sm:$0xff]
  %v77 = vld [vmem:[%s0 + $0x17c] sm:$0xf]
  %v78 = vld [vmem:[%s0 + $0x180] sm:$0xff]
  %v79 = vld [vmem:[%s0 + $0x188] sm:$0xf]
  %v80 = vld [vmem:[%s0 + $0x18c] sm:$0xff]
  %v81 = vld [vmem:[%s0 + $0x194] sm:$0xf]
  %v82 = vld [vmem:[%s0 + $0x198] sm:$0xff]
  %v83 = vld [vmem:[%s0 + $0x1a0] sm:$0xf]
  %v84 = vld [vmem:[%s0 + $0x1a4] sm:$0xff]
  %v85 = vld [vmem:[%s0 + $0x1ac] sm:$0xf]
  %v86 = vld [vmem:[%s0 + $0x1b0] sm:$0xff]
  %v87 = vld [vmem:[%s0 + $0x1b8] sm:$0xf]
  %v88 = vld [vmem:[%s0 + $0x1bc] sm:$0xff]
  %v89 = vld [vmem:[%s0 + $0x1c4] sm:$0xf]
  %v90 = vld [vmem:[%s0 + $0x1c8] sm:$0xff]
  %v91 = vld [vmem:[%s0 + $0x1d0] sm:$0xf]
  %v92 = vld [vmem:[%s0 + $0x1d4] sm:$0xff]
  %v93 = vld [vmem:[%s0 + $0x1dc] sm:$0xf]
  %v94 = vld [vmem:[%s0 + $0x1e0] sm:$0xff]
  %v95 = vld [vmem:[%s0 + $0x1e8] sm:$0xf]
  %v96 = vld [vmem:[%s0 + $0x1ec] sm:$0xff]
  %v97 = vld [vmem:[%s0 + $0x1f4] sm:$0xf]
  %v98 = vld [vmem:[%s0 + $0x1f8] sm:$0xff]
  %v99 = vld [vmem:[%s0 + $0x200] sm:$0xf]
  %v100 = vld [vmem:[%s0 + $0x204] sm:$0xff]
  %v101 = vld [vmem:[%s0 + $0x20c] sm:$0xf]
  %v102 = vld [vmem:[%s0 + $0x210] sm:$0xff]
  %v103 = vld [vmem:[%s0 + $0x218] sm:$0xf]
  %v104 = vld [vmem:[%s0 + $0x21c] sm:$0xff]
  %v105 = vld [vmem:[%s0 + $0x224] sm:$0xf]
  %v106 = vld [vmem:[%s0 + $0x228] sm:$0xff]
  %v107 = vld [vmem:[%s0 + $0x230] sm:$0xf]
  %v108 = vld [vmem:[%s0 + $0x234] sm:$0xff]
  %v109 = vld [vmem:[%s0 + $0x23c] sm:$0xf]
  %v110 = vld [vmem:[%s0 + $0x240] sm:$0xff]
  %v111 = vld [vmem:[%s0 + $0x248] sm:$0xf]
  %v112 = vld [vmem:[%s0 + $0x24c] sm:$0xff]
  %v113 = vld [vmem:[%s0 + $0x254] sm:$0xf]
  %v114 = vld [vmem:[%s0 + $0x258] sm:$0xff]
  %v115 = vld [vmem:[%s0 + $0x260] sm:$0xf]
  %v116 = vld [vmem:[%s0 + $0x264] sm:$0xff]
  %v117 = vld [vmem:[%s0 + $0x26c] sm:$0xf]
  %v118 = vld [vmem:[%s0 + $0x270] sm:$0xff]
  %v119 = vld [vmem:[%s0 + $0x278] sm:$0xf]
  %v120 = vld [vmem:[%s0 + $0x27c] sm:$0xff]
  %v121 = vld [vmem:[%s0 + $0x284] sm:$0xf]
  %v122 = vld [vmem:[%s0 + $0x288] sm:$0xff]
  %v123 = vld [vmem:[%s0 + $0x290] sm:$0xf]
  %v124 = vld [vmem:[%s0 + $0x294] sm:$0xff]
  %v125 = vld [vmem:[%s0 + $0x29c] sm:$0xf]
  %v126 = vld [vmem:[%s0 + $0x2a0] sm:$0xff]
  %v127 = vld [vmem:[%s0 + $0x2a8] sm:$0xf]
  %v128 = vld [vmem:[%s0 + $0x2ac] sm:$0xff]
  %v129 = vld [vmem:[%s0 + $0x2b4] sm:$0xf]
  %v130 = vld [vmem:[%s0 + $0x2b8] sm:$0xff]
  %v131 = vld [vmem:[%s0 + $0x2c0] sm:$0xf]
  %v132 = vld [vmem:[%s0 + $0x2c4] sm:$0xff]
  %v133 = vld [vmem:[%s0 + $0x2cc] sm:$0xf]
  %v134 = vld [vmem:[%s0 + $0x2d0] sm:$0xff]
  %v135 = vld [vmem:[%s0 + $0x2d8] sm:$0xf]
  %v136 = vld [vmem:[%s0 + $0x2dc] sm:$0xff]
  %v137 = vld [vmem:[%s0 + $0x2e4] sm:$0xf]
  %v138 = vld [vmem:[%s0 + $0x2e8] sm:$0xff]
  %v139 = vld [vmem:[%s0 + $0x2f0] sm:$0xf]
  %v140 = vld [vmem:[%s0 + $0x2f4] sm:$0xff]
  %v141 = vld [vmem:[%s0 + $0x2fc] sm:$0xf]
  %v142 = vld [vmem:[%s1] sm:$0xf]
  %v143 = vld [vmem:[%s1 + $0x4] sm:$0xf]
  %v144 = vld [vmem:[%s1 + $0x8] sm:$0xf]
  %v145 = vld [vmem:[%s1 + $0xc] sm:$0xf]
  %v146 = vld [vmem:[%s1 + $0x10] sm:$0xf]
  %v147 = vld [vmem:[%s1 + $0x14] sm:$0xf]
  %v148 = vld [vmem:[%s1 + $0x18] sm:$0xf]
  %v149 = vld [vmem:[%s1 + $0x1c] sm:$0xf]
  %v150 = vld [vmem:[%s1 + $0x20] sm:$0xf]
  %v151 = vld [vmem:[%s1 + $0x24] sm:$0xf]
  %v152 = vld [vmem:[%s1 + $0x28] sm:$0xf]
  %v153 = vld [vmem:[%s1 + $0x2c] sm:$0xf]
  %v154 = vld [vmem:[%s1 + $0x30] sm:$0xf]
  %v155 = vld [vmem:[%s1 + $0x34] sm:$0xf]
  %v156 = vld [vmem:[%s1 + $0x38] sm:$0xf]
  %v157 = vld [vmem:[%s1 + $0x3c] sm:$0xf]
  %v158 = vld [vmem:[%s1 + $0x40] sm:$0xf]
  %v159 = vld [vmem:[%s1 + $0x44] sm:$0xf]
  %v160 = vld [vmem:[%s1 + $0x48] sm:$0xf]
  %v161 = vld [vmem:[%s1 + $0x4c] sm:$0xf]
  %v162 = vld [vmem:[%s1 + $0x50] sm:$0xf]
  %v163 = vld [vmem:[%s1 + $0x54] sm:$0xf]
  %v164 = vld [vmem:[%s1 + $0x58] sm:$0xf]
  %v165 = vld [vmem:[%s1 + $0x5c] sm:$0xf]
  %v166 = vld [vmem:[%s1 + $0x60] sm:$0xf]
  %v167 = vld [vmem:[%s1 + $0x64] sm:$0xf]
  %v168 = vld [vmem:[%s1 + $0x68] sm:$0xf]
  %v169 = vld [vmem:[%s1 + $0x6c] sm:$0xf]
  %v170 = vld [vmem:[%s1 + $0x70] sm:$0xf]
  %v171 = vld [vmem:[%s1 + $0x74] sm:$0xf]
  %v172 = vld [vmem:[%s1 + $0x78] sm:$0xf]
  %v173 = vld [vmem:[%s1 + $0x7c] sm:$0xf]
  %v174 = vld [vmem:[%s1 + $0x80] sm:$0xf]
  %v175 = vld [vmem:[%s1 + $0x84] sm:$0xf]
  %v176 = vld [vmem:[%s1 + $0x88] sm:$0xf]
  %v177 = vld [vmem:[%s1 + $0x8c] sm:$0xf]
  %v178 = vld [vmem:[%s1 + $0x90] sm:$0xf]
  %v179 = vld [vmem:[%s1 + $0x94] sm:$0xf]
  %v180 = vld [vmem:[%s1 + $0x98] sm:$0xf]
  %v181 = vld [vmem:[%s1 + $0x9c] sm:$0xf]
  %v182 = vld [vmem:[%s1 + $0xa0] sm:$0xf]
  %v183 = vld [vmem:[%s1 + $0xa4] sm:$0xf]
  %v184 = vld [vmem:[%s1 + $0xa8] sm:$0xf]
  %v185 = vld [vmem:[%s1 + $0xac] sm:$0xf]
  %v186 = vld [vmem:[%s1 + $0xb0] sm:$0xf]
  %v187 = vld [vmem:[%s1 + $0xb4] sm:$0xf]
  %v188 = vld [vmem:[%s1 + $0xb8] sm:$0xf]
  %v189 = vld [vmem:[%s1 + $0xbc] sm:$0xf]
  %v190 = vld [vmem:[%s2] sm:$0x1]
  %v192 = vperm.slane %v190, 0
  %v322 = vunpack.c.l.b16 %v14
  %v323 = vunpack.c.h.b16 %v14
  %v324 = vunpack.c.l.b16 %v15
  %v325 = vunpack.c.l.b16 %v16
  %v326 = vunpack.c.h.b16 %v16
  %v327 = vunpack.c.l.b16 %v17
  %v328 = vunpack.c.l.b16 %v18
  %v329 = vunpack.c.h.b16 %v18
  %v330 = vunpack.c.l.b16 %v19
  %v331 = vunpack.c.l.b16 %v20
  %v332 = vunpack.c.h.b16 %v20
  %v333 = vunpack.c.l.b16 %v21
  %v334 = vunpack.c.l.b16 %v22
  %v335 = vunpack.c.h.b16 %v22
  %v336 = vunpack.c.l.b16 %v23
  %v337 = vunpack.c.l.b16 %v24
  %v338 = vunpack.c.h.b16 %v24
  %v339 = vunpack.c.l.b16 %v25
  %v340 = vunpack.c.l.b16 %v26
  %v341 = vunpack.c.h.b16 %v26
  %v342 = vunpack.c.l.b16 %v27
  %v343 = vunpack.c.l.b16 %v28
  %v344 = vunpack.c.h.b16 %v28
  %v345 = vunpack.c.l.b16 %v29
  %v346 = vunpack.c.l.b16 %v30
  %v347 = vunpack.c.h.b16 %v30
  %v348 = vunpack.c.l.b16 %v31
  %v349 = vunpack.c.l.b16 %v32
  %v350 = vunpack.c.h.b16 %v32
  %v351 = vunpack.c.l.b16 %v33
  %v352 = vunpack.c.l.b16 %v34
  %v353 = vunpack.c.h.b16 %v34
  %v354 = vunpack.c.l.b16 %v35
  %v355 = vunpack.c.l.b16 %v36
  %v356 = vunpack.c.h.b16 %v36
  %v357 = vunpack.c.l.b16 %v37
  %v358 = vunpack.c.l.b16 %v38
  %v359 = vunpack.c.h.b16 %v38
  %v360 = vunpack.c.l.b16 %v39
  %v361 = vunpack.c.l.b16 %v40
  %v362 = vunpack.c.h.b16 %v40
  %v363 = vunpack.c.l.b16 %v41
  %v364 = vunpack.c.l.b16 %v42
  %v365 = vunpack.c.h.b16 %v42
  %v366 = vunpack.c.l.b16 %v43
  %v367 = vunpack.c.l.b16 %v44
  %v368 = vunpack.c.h.b16 %v44
  %v369 = vunpack.c.l.b16 %v45
  %v370 = vunpack.c.l.b16 %v46
  %v371 = vunpack.c.h.b16 %v46
  %v372 = vunpack.c.l.b16 %v47
  %v373 = vunpack.c.l.b16 %v48
  %v374 = vunpack.c.h.b16 %v48
  %v375 = vunpack.c.l.b16 %v49
  %v376 = vunpack.c.l.b16 %v50
  %v377 = vunpack.c.h.b16 %v50
  %v378 = vunpack.c.l.b16 %v51
  %v379 = vunpack.c.l.b16 %v52
  %v380 = vunpack.c.h.b16 %v52
  %v381 = vunpack.c.l.b16 %v53
  %v382 = vunpack.c.l.b16 %v54
  %v383 = vunpack.c.h.b16 %v54
  %v384 = vunpack.c.l.b16 %v55
  %v385 = vunpack.c.l.b16 %v56
  %v386 = vunpack.c.h.b16 %v56
  %v387 = vunpack.c.l.b16 %v57
  %v388 = vunpack.c.l.b16 %v58
  %v389 = vunpack.c.h.b16 %v58
  %v390 = vunpack.c.l.b16 %v59
  %v391 = vunpack.c.l.b16 %v60
  %v392 = vunpack.c.h.b16 %v60
  %v393 = vunpack.c.l.b16 %v61
  %v394 = vunpack.c.l.b16 %v62
  %v395 = vunpack.c.h.b16 %v62
  %v396 = vunpack.c.l.b16 %v63
  %v397 = vunpack.c.l.b16 %v64
  %v398 = vunpack.c.h.b16 %v64
  %v399 = vunpack.c.l.b16 %v65
  %v400 = vunpack.c.l.b16 %v66
  %v401 = vunpack.c.h.b16 %v66
  %v402 = vunpack.c.l.b16 %v67
  %v403 = vunpack.c.l.b16 %v68
  %v404 = vunpack.c.h.b16 %v68
  %v405 = vunpack.c.l.b16 %v69
  %v406 = vunpack.c.l.b16 %v70
  %v407 = vunpack.c.h.b16 %v70
  %v408 = vunpack.c.l.b16 %v71
  %v409 = vunpack.c.l.b16 %v72
  %v410 = vunpack.c.h.b16 %v72
  %v411 = vunpack.c.l.b16 %v73
  %v412 = vunpack.c.l.b16 %v74
  %v413 = vunpack.c.h.b16 %v74
  %v414 = vunpack.c.l.b16 %v75
  %v415 = vunpack.c.l.b16 %v76
  %v416 = vunpack.c.h.b16 %v76
  %v417 = vunpack.c.l.b16 %v77
  %v418 = vunpack.c.l.b16 %v78
  %v419 = vunpack.c.h.b16 %v78
  %v420 = vunpack.c.l.b16 %v79
  %v421 = vunpack.c.l.b16 %v80
  %v422 = vunpack.c.h.b16 %v80
  %v423 = vunpack.c.l.b16 %v81
  %v424 = vunpack.c.l.b16 %v82
  %v425 = vunpack.c.h.b16 %v82
  %v426 = vunpack.c.l.b16 %v83
  %v427 = vunpack.c.l.b16 %v84
  %v428 = vunpack.c.h.b16 %v84
  %v429 = vunpack.c.l.b16 %v85
  %v430 = vunpack.c.l.b16 %v86
  %v431 = vunpack.c.h.b16 %v86
  %v432 = vunpack.c.l.b16 %v87
  %v433 = vunpack.c.l.b16 %v88
  %v434 = vunpack.c.h.b16 %v88
  %v435 = vunpack.c.l.b16 %v89
  %v436 = vunpack.c.l.b16 %v90
  %v437 = vunpack.c.h.b16 %v90
  %v438 = vunpack.c.l.b16 %v91
  %v439 = vunpack.c.l.b16 %v92
  %v440 = vunpack.c.h.b16 %v92
  %v441 = vunpack.c.l.b16 %v93
  %v442 = vunpack.c.l.b16 %v94
  %v443 = vunpack.c.h.b16 %v94
  %v444 = vunpack.c.l.b16 %v95
  %v445 = vunpack.c.l.b16 %v96
  %v446 = vunpack.c.h.b16 %v96
  %v447 = vunpack.c.l.b16 %v97
  %v448 = vunpack.c.l.b16 %v98
  %v449 = vunpack.c.h.b16 %v98
  %v450 = vunpack.c.l.b16 %v99
  %v451 = vunpack.c.l.b16 %v100
  %v452 = vunpack.c.h.b16 %v100
  %v453 = vunpack.c.l.b16 %v101
  %v454 = vunpack.c.l.b16 %v102
  %v455 = vunpack.c.h.b16 %v102
  %v456 = vunpack.c.l.b16 %v103
  %v457 = vunpack.c.l.b16 %v104
  %v458 = vunpack.c.h.b16 %v104
  %v459 = vunpack.c.l.b16 %v105
  %v460 = vunpack.c.l.b16 %v106
  %v461 = vunpack.c.h.b16 %v106
  %v462 = vunpack.c.l.b16 %v107
  %v463 = vunpack.c.l.b16 %v108
  %v464 = vunpack.c.h.b16 %v108
  %v465 = vunpack.c.l.b16 %v109
  %v466 = vunpack.c.l.b16 %v110
  %v467 = vunpack.c.h.b16 %v110
  %v468 = vunpack.c.l.b16 %v111
  %v469 = vunpack.c.l.b16 %v112
  %v470 = vunpack.c.h.b16 %v112
  %v471 = vunpack.c.l.b16 %v113
  %v472 = vunpack.c.l.b16 %v114
  %v473 = vunpack.c.h.b16 %v114
  %v474 = vunpack.c.l.b16 %v115
  %v475 = vunpack.c.l.b16 %v116
  %v476 = vunpack.c.h.b16 %v116
  %v477 = vunpack.c.l.b16 %v117
  %v478 = vunpack.c.l.b16 %v118
  %v479 = vunpack.c.h.b16 %v118
  %v480 = vunpack.c.l.b16 %v119
  %v481 = vunpack.c.l.b16 %v120
  %v482 = vunpack.c.h.b16 %v120
  %v483 = vunpack.c.l.b16 %v121
  %v484 = vunpack.c.l.b16 %v122
  %v485 = vunpack.c.h.b16 %v122
  %v486 = vunpack.c.l.b16 %v123
  %v487 = vunpack.c.l.b16 %v124
  %v488 = vunpack.c.h.b16 %v124
  %v489 = vunpack.c.l.b16 %v125
  %v490 = vunpack.c.l.b16 %v126
  %v491 = vunpack.c.h.b16 %v126
  %v492 = vunpack.c.l.b16 %v127
  %v493 = vunpack.c.l.b16 %v128
  %v494 = vunpack.c.h.b16 %v128
  %v495 = vunpack.c.l.b16 %v129
  %v496 = vunpack.c.l.b16 %v130
  %v497 = vunpack.c.h.b16 %v130
  %v498 = vunpack.c.l.b16 %v131
  %v499 = vunpack.c.l.b16 %v132
  %v500 = vunpack.c.h.b16 %v132
  %v501 = vunpack.c.l.b16 %v133
  %v502 = vunpack.c.l.b16 %v134
  %v503 = vunpack.c.h.b16 %v134
  %v504 = vunpack.c.l.b16 %v135
  %v505 = vunpack.c.l.b16 %v136
  %v506 = vunpack.c.h.b16 %v136
  %v507 = vunpack.c.l.b16 %v137
  %v508 = vunpack.c.l.b16 %v138
  %v509 = vunpack.c.h.b16 %v138
  %v510 = vunpack.c.l.b16 %v139
  %v511 = vunpack.c.l.b16 %v140
  %v512 = vunpack.c.h.b16 %v140
  %v513 = vunpack.c.l.b16 %v141
  %v514 = vpack.c.b16 %v325, %v322
  %v515 = vpack.c.b16 %v326, %v323
  %v516 = vpack.c.b16 %v327, %v324
  %v517 = vpack.c.b16 %v331, %v328
  %v518 = vpack.c.b16 %v332, %v329
  %v519 = vpack.c.b16 %v333, %v330
  %v520 = vpack.c.b16 %v337, %v334
  %v521 = vpack.c.b16 %v338, %v335
  %v522 = vpack.c.b16 %v339, %v336
  %v523 = vpack.c.b16 %v343, %v340
  %v524 = vpack.c.b16 %v344, %v341
  %v525 = vpack.c.b16 %v345, %v342
  %v526 = vpack.c.b16 %v349, %v346
  %v527 = vpack.c.b16 %v350, %v347
  %v528 = vpack.c.b16 %v351, %v348
  %v529 = vpack.c.b16 %v355, %v352
  %v530 = vpack.c.b16 %v356, %v353
  %v531 = vpack.c.b16 %v357, %v354
  %v532 = vpack.c.b16 %v361, %v358
  %v533 = vpack.c.b16 %v362, %v359
  %v534 = vpack.c.b16 %v363, %v360
  %v535 = vpack.c.b16 %v367, %v364
  %v536 = vpack.c.b16 %v368, %v365
  %v537 = vpack.c.b16 %v369, %v366
  %v538 = vpack.c.b16 %v373, %v370
  %v539 = vpack.c.b16 %v374, %v371
  %v540 = vpack.c.b16 %v375, %v372
  %v541 = vpack.c.b16 %v379, %v376
  %v542 = vpack.c.b16 %v380, %v377
  %v543 = vpack.c.b16 %v381, %v378
  %v544 = vpack.c.b16 %v385, %v382
  %v545 = vpack.c.b16 %v386, %v383
  %v546 = vpack.c.b16 %v387, %v384
  %v547 = vpack.c.b16 %v391, %v388
  %v548 = vpack.c.b16 %v392, %v389
  %v549 = vpack.c.b16 %v393, %v390
  %v550 = vpack.c.b16 %v397, %v394
  %v551 = vpack.c.b16 %v398, %v395
  %v552 = vpack.c.b16 %v399, %v396
  %v553 = vpack.c.b16 %v403, %v400
  %v554 = vpack.c.b16 %v404, %v401
  %v555 = vpack.c.b16 %v405, %v402
  %v556 = vpack.c.b16 %v409, %v406
  %v557 = vpack.c.b16 %v410, %v407
  %v558 = vpack.c.b16 %v411, %v408
  %v559 = vpack.c.b16 %v415, %v412
  %v560 = vpack.c.b16 %v416, %v413
  %v561 = vpack.c.b16 %v417, %v414
  %v562 = vpack.c.b16 %v421, %v418
  %v563 = vpack.c.b16 %v422, %v419
  %v564 = vpack.c.b16 %v423, %v420
  %v565 = vpack.c.b16 %v427, %v424
  %v566 = vpack.c.b16 %v428, %v425
  %v567 = vpack.c.b16 %v429, %v426
  %v568 = vpack.c.b16 %v433, %v430
  %v569 = vpack.c.b16 %v434, %v431
  %v570 = vpack.c.b16 %v435, %v432
  %v571 = vpack.c.b16 %v439, %v436
  %v572 = vpack.c.b16 %v440, %v437
  %v573 = vpack.c.b16 %v441, %v438
  %v574 = vpack.c.b16 %v445, %v442
  %v575 = vpack.c.b16 %v446, %v443
  %v576 = vpack.c.b16 %v447, %v444
  %v577 = vpack.c.b16 %v451, %v448
  %v578 = vpack.c.b16 %v452, %v449
  %v579 = vpack.c.b16 %v453, %v450
  %v580 = vpack.c.b16 %v457, %v454
  %v581 = vpack.c.b16 %v458, %v455
  %v582 = vpack.c.b16 %v459, %v456
  %v583 = vpack.c.b16 %v463, %v460
  %v584 = vpack.c.b16 %v464, %v461
  %v585 = vpack.c.b16 %v465, %v462
  %v586 = vpack.c.b16 %v469, %v466
  %v587 = vpack.c.b16 %v470, %v467
  %v588 = vpack.c.b16 %v471, %v468
  %v589 = vpack.c.b16 %v475, %v472
  %v590 = vpack.c.b16 %v476, %v473
  %v591 = vpack.c.b16 %v477, %v474
  %v592 = vpack.c.b16 %v481, %v478
  %v593 = vpack.c.b16 %v482, %v479
  %v594 = vpack.c.b16 %v483, %v480
  %v595 = vpack.c.b16 %v487, %v484
  %v596 = vpack.c.b16 %v488, %v485
  %v597 = vpack.c.b16 %v489, %v486
  %v598 = vpack.c.b16 %v493, %v490
  %v599 = vpack.c.b16 %v494, %v491
  %v600 = vpack.c.b16 %v495, %v492
  %v601 = vpack.c.b16 %v499, %v496
  %v602 = vpack.c.b16 %v500, %v497
  %v603 = vpack.c.b16 %v501, %v498
  %v604 = vpack.c.b16 %v505, %v502
  %v605 = vpack.c.b16 %v506, %v503
  %v606 = vpack.c.b16 %v507, %v504
  %v607 = vpack.c.b16 %v511, %v508
  %v608 = vpack.c.b16 %v512, %v509
  %v609 = vpack.c.b16 %v513, %v510
  %v754 = vunpack.c.l.b16 %v142
  %v755 = vunpack.c.l.b16 %v143
  %v756 = vunpack.c.l.b16 %v144
  %v757 = vunpack.c.l.b16 %v145
  %v758 = vunpack.c.l.b16 %v146
  %v759 = vunpack.c.l.b16 %v147
  %v760 = vunpack.c.l.b16 %v148
  %v761 = vunpack.c.l.b16 %v149
  %v762 = vunpack.c.l.b16 %v150
  %v763 = vunpack.c.l.b16 %v151
  %v764 = vunpack.c.l.b16 %v152
  %v765 = vunpack.c.l.b16 %v153
  %v766 = vunpack.c.l.b16 %v154
  %v767 = vunpack.c.l.b16 %v155
  %v768 = vunpack.c.l.b16 %v156
  %v769 = vunpack.c.l.b16 %v157
  %v770 = vunpack.c.l.b16 %v158
  %v771 = vunpack.c.l.b16 %v159
  %v772 = vunpack.c.l.b16 %v160
  %v773 = vunpack.c.l.b16 %v161
  %v774 = vunpack.c.l.b16 %v162
  %v775 = vunpack.c.l.b16 %v163
  %v776 = vunpack.c.l.b16 %v164
  %v777 = vunpack.c.l.b16 %v165
  %v778 = vunpack.c.l.b16 %v166
  %v779 = vunpack.c.l.b16 %v167
  %v780 = vunpack.c.l.b16 %v168
  %v781 = vunpack.c.l.b16 %v169
  %v782 = vunpack.c.l.b16 %v170
  %v783 = vunpack.c.l.b16 %v171
  %v784 = vunpack.c.l.b16 %v172
  %v785 = vunpack.c.l.b16 %v173
  %v786 = vunpack.c.l.b16 %v174
  %v787 = vunpack.c.l.b16 %v175
  %v788 = vunpack.c.l.b16 %v176
  %v789 = vunpack.c.l.b16 %v177
  %v790 = vunpack.c.l.b16 %v178
  %v791 = vunpack.c.l.b16 %v179
  %v792 = vunpack.c.l.b16 %v180
  %v793 = vunpack.c.l.b16 %v181
  %v794 = vunpack.c.l.b16 %v182
  %v795 = vunpack.c.l.b16 %v183
  %v796 = vunpack.c.l.b16 %v184
  %v797 = vunpack.c.l.b16 %v185
  %v798 = vunpack.c.l.b16 %v186
  %v799 = vunpack.c.l.b16 %v187
  %v800 = vunpack.c.l.b16 %v188
  %v801 = vunpack.c.l.b16 %v189
  %v802 = vpack.c.b16 %v755, %v754
  %v803 = vpack.c.b16 %v757, %v756
  %v804 = vpack.c.b16 %v759, %v758
  %v805 = vpack.c.b16 %v761, %v760
  %v806 = vpack.c.b16 %v763, %v762
  %v807 = vpack.c.b16 %v765, %v764
  %v808 = vpack.c.b16 %v767, %v766
  %v809 = vpack.c.b16 %v769, %v768
  %v810 = vpack.c.b16 %v771, %v770
  %v811 = vpack.c.b16 %v773, %v772
  %v812 = vpack.c.b16 %v775, %v774
  %v813 = vpack.c.b16 %v777, %v776
  %v814 = vpack.c.b16 %v779, %v778
  %v815 = vpack.c.b16 %v781, %v780
  %v816 = vpack.c.b16 %v783, %v782
  %v817 = vpack.c.b16 %v785, %v784
  %v818 = vpack.c.b16 %v787, %v786
  %v819 = vpack.c.b16 %v789, %v788
  %v820 = vpack.c.b16 %v791, %v790
  %v821 = vpack.c.b16 %v793, %v792
  %v822 = vpack.c.b16 %v795, %v794
  %v823 = vpack.c.b16 %v797, %v796
  %v824 = vpack.c.b16 %v799, %v798
  %v825 = vpack.c.b16 %v801, %v800
  %850 = vmatpush.bf16.msra.mxu0 %v809
  %851 = vmatpush.bf16.msra.mxu0 %v808
  %852 = vmatpush.bf16.msra.mxu0 %v807
  %853 = vmatpush.bf16.msra.mxu0 %v806
  %854 = vmatpush.bf16.msra.mxu0 %v805
  %855 = vmatpush.bf16.msra.mxu0 %v804
  %856 = vmatpush.bf16.msra.mxu0 %v803
  %857 = vmatpush.bf16.msra.mxu0 %v802
  %858 = vmatmul.bf16.gmra.mxu0 %v514
  %v859 = vpop.f32.mrf.mxu0
  %v860 = vadd.f32 %v192, %v859
  %v861 = vpop.f32.mrf.mxu0
  %v862 = vadd.f32 %v192, %v861
  %863 = vmatmul.bf16.gmra.mxu0 %v517
  %v864 = vpop.f32.mrf.mxu0
  %v865 = vadd.f32 %v192, %v864
  %v866 = vpop.f32.mrf.mxu0
  %v867 = vadd.f32 %v192, %v866
  %868 = vmatmul.bf16.gmra.mxu0 %v520
  %v869 = vpop.f32.mrf.mxu0
  %v870 = vadd.f32 %v192, %v869
  %v871 = vpop.f32.mrf.mxu0
  %v872 = vadd.f32 %v192, %v871
  %873 = vmatmul.bf16.gmra.mxu0 %v523
  %v874 = vpop.f32.mrf.mxu0
  %v875 = vadd.f32 %v192, %v874
  %v876 = vpop.f32.mrf.mxu0
  %v877 = vadd.f32 %v192, %v876
  %878 = vmatmul.bf16.gmra.mxu0 %v526
  %v879 = vpop.f32.mrf.mxu0
  %v880 = vadd.f32 %v192, %v879
  %v881 = vpop.f32.mrf.mxu0
  %v882 = vadd.f32 %v192, %v881
  %883 = vmatmul.bf16.gmra.mxu0 %v529
  %v884 = vpop.f32.mrf.mxu0
  %v885 = vadd.f32 %v192, %v884
  %v886 = vpop.f32.mrf.mxu0
  %v887 = vadd.f32 %v192, %v886
  %888 = vmatmul.bf16.gmra.mxu0 %v532
  %v889 = vpop.f32.mrf.mxu0
  %v890 = vadd.f32 %v192, %v889
  %v891 = vpop.f32.mrf.mxu0
  %v892 = vadd.f32 %v192, %v891
  %893 = vmatmul.bf16.gmra.mxu0 %v535
  %v894 = vpop.f32.mrf.mxu0
  %v895 = vadd.f32 %v192, %v894
  %v896 = vpop.f32.mrf.mxu0
  %v897 = vadd.f32 %v192, %v896
  %898 = vmatmul.bf16.gmra.mxu0 %v538
  %v899 = vpop.f32.mrf.mxu0
  %v900 = vadd.f32 %v192, %v899
  %v901 = vpop.f32.mrf.mxu0
  %v902 = vadd.f32 %v192, %v901
  %903 = vmatmul.bf16.gmra.mxu0 %v541
  %v904 = vpop.f32.mrf.mxu0
  %v905 = vadd.f32 %v192, %v904
  %v906 = vpop.f32.mrf.mxu0
  %v907 = vadd.f32 %v192, %v906
  %908 = vmatmul.bf16.gmra.mxu0 %v544
  %v909 = vpop.f32.mrf.mxu0
  %v910 = vadd.f32 %v192, %v909
  %v911 = vpop.f32.mrf.mxu0
  %v912 = vadd.f32 %v192, %v911
  %913 = vmatmul.bf16.gmra.mxu0 %v547
  %v914 = vpop.f32.mrf.mxu0
  %v915 = vadd.f32 %v192, %v914
  %v916 = vpop.f32.mrf.mxu0
  %v917 = vadd.f32 %v192, %v916
  %918 = vmatmul.bf16.gmra.mxu0 %v550
  %v919 = vpop.f32.mrf.mxu0
  %v920 = vadd.f32 %v192, %v919
  %v921 = vpop.f32.mrf.mxu0
  %v922 = vadd.f32 %v192, %v921
  %923 = vmatmul.bf16.gmra.mxu0 %v553
  %v924 = vpop.f32.mrf.mxu0
  %v925 = vadd.f32 %v192, %v924
  %v926 = vpop.f32.mrf.mxu0
  %v927 = vadd.f32 %v192, %v926
  %928 = vmatmul.bf16.gmra.mxu0 %v556
  %v929 = vpop.f32.mrf.mxu0
  %v930 = vadd.f32 %v192, %v929
  %v931 = vpop.f32.mrf.mxu0
  %v932 = vadd.f32 %v192, %v931
  %933 = vmatmul.bf16.gmra.mxu0 %v559
  %v934 = vpop.f32.mrf.mxu0
  %v935 = vadd.f32 %v192, %v934
  %v936 = vpop.f32.mrf.mxu0
  %v937 = vadd.f32 %v192, %v936
  %938 = vmatmul.bf16.gmra.mxu0 %v562
  %v939 = vpop.f32.mrf.mxu0
  %v940 = vadd.f32 %v192, %v939
  %v941 = vpop.f32.mrf.mxu0
  %v942 = vadd.f32 %v192, %v941
  %943 = vmatmul.bf16.gmra.mxu0 %v565
  %v944 = vpop.f32.mrf.mxu0
  %v945 = vadd.f32 %v192, %v944
  %v946 = vpop.f32.mrf.mxu0
  %v947 = vadd.f32 %v192, %v946
  %948 = vmatmul.bf16.gmra.mxu0 %v568
  %v949 = vpop.f32.mrf.mxu0
  %v950 = vadd.f32 %v192, %v949
  %v951 = vpop.f32.mrf.mxu0
  %v952 = vadd.f32 %v192, %v951
  %953 = vmatmul.bf16.gmra.mxu0 %v571
  %v954 = vpop.f32.mrf.mxu0
  %v955 = vadd.f32 %v192, %v954
  %v956 = vpop.f32.mrf.mxu0
  %v957 = vadd.f32 %v192, %v956
  %958 = vmatmul.bf16.gmra.mxu0 %v574
  %v959 = vpop.f32.mrf.mxu0
  %v960 = vadd.f32 %v192, %v959
  %v961 = vpop.f32.mrf.mxu0
  %v962 = vadd.f32 %v192, %v961
  %963 = vmatmul.bf16.gmra.mxu0 %v577
  %v964 = vpop.f32.mrf.mxu0
  %v965 = vadd.f32 %v192, %v964
  %v966 = vpop.f32.mrf.mxu0
  %v967 = vadd.f32 %v192, %v966
  %968 = vmatmul.bf16.gmra.mxu0 %v580
  %v969 = vpop.f32.mrf.mxu0
  %v970 = vadd.f32 %v192, %v969
  %v971 = vpop.f32.mrf.mxu0
  %v972 = vadd.f32 %v192, %v971
  %973 = vmatmul.bf16.gmra.mxu0 %v583
  %v974 = vpop.f32.mrf.mxu0
  %v975 = vadd.f32 %v192, %v974
  %v976 = vpop.f32.mrf.mxu0
  %v977 = vadd.f32 %v192, %v976
  %978 = vmatmul.bf16.gmra.mxu0 %v586
  %v979 = vpop.f32.mrf.mxu0
  %v980 = vadd.f32 %v192, %v979
  %v981 = vpop.f32.mrf.mxu0
  %v982 = vadd.f32 %v192, %v981
  %983 = vmatmul.bf16.gmra.mxu0 %v589
  %v984 = vpop.f32.mrf.mxu0
  %v985 = vadd.f32 %v192, %v984
  %v986 = vpop.f32.mrf.mxu0
  %v987 = vadd.f32 %v192, %v986
  %988 = vmatmul.bf16.gmra.mxu0 %v592
  %v989 = vpop.f32.mrf.mxu0
  %v990 = vadd.f32 %v192, %v989
  %v991 = vpop.f32.mrf.mxu0
  %v992 = vadd.f32 %v192, %v991
  %993 = vmatmul.bf16.gmra.mxu0 %v595
  %v994 = vpop.f32.mrf.mxu0
  %v995 = vadd.f32 %v192, %v994
  %v996 = vpop.f32.mrf.mxu0
  %v997 = vadd.f32 %v192, %v996
  %998 = vmatmul.bf16.gmra.mxu0 %v598
  %v999 = vpop.f32.mrf.mxu0
  %v1000 = vadd.f32 %v192, %v999
  %v1001 = vpop.f32.mrf.mxu0
  %v1002 = vadd.f32 %v192, %v1001
  %1003 = vmatmul.bf16.gmra.mxu0 %v601
  %v1004 = vpop.f32.mrf.mxu0
  %v1005 = vadd.f32 %v192, %v1004
  %v1006 = vpop.f32.mrf.mxu0
  %v1007 = vadd.f32 %v192, %v1006
  %1008 = vmatmul.bf16.gmra.mxu0 %v604
  %v1009 = vpop.f32.mrf.mxu0
  %v1010 = vadd.f32 %v192, %v1009
  %v1011 = vpop.f32.mrf.mxu0
  %v1012 = vadd.f32 %v192, %v1011
  %1013 = vmatmul.bf16.gmra.mxu0 %v607
  %v1014 = vpop.f32.mrf.mxu0
  %v1015 = vadd.f32 %v192, %v1014
  %v1016 = vpop.f32.mrf.mxu0
  %v1017 = vadd.f32 %v192, %v1016
  %1018 = vdwg.mxu0
  %1019 = vmatpush.bf16.msra.mxu0 %v817
  %1020 = vmatpush.bf16.msra.mxu0 %v816
  %1021 = vmatpush.bf16.msra.mxu0 %v815
  %1022 = vmatpush.bf16.msra.mxu0 %v814
  %1023 = vmatpush.bf16.msra.mxu0 %v813
  %1024 = vmatpush.bf16.msra.mxu0 %v812
  %1025 = vmatpush.bf16.msra.mxu0 %v811
  %1026 = vmatpush.bf16.msra.mxu0 %v810
  %1027 = vmatmul.bf16.gmra.mxu0 %v515
  %v1028 = vpop.f32.mrf.mxu0
  %v1029 = vadd.f32 %v860, %v1028
  %v1030 = vpop.f32.mrf.mxu0
  %v1031 = vadd.f32 %v862, %v1030
  %1032 = vmatmul.bf16.gmra.mxu0 %v518
  %v1033 = vpop.f32.mrf.mxu0
  %v1034 = vadd.f32 %v865, %v1033
  %v1035 = vpop.f32.mrf.mxu0
  %v1036 = vadd.f32 %v867, %v1035
  %1037 = vmatmul.bf16.gmra.mxu0 %v521
  %v1038 = vpop.f32.mrf.mxu0
  %v1039 = vadd.f32 %v870, %v1038
  %v1040 = vpop.f32.mrf.mxu0
  %v1041 = vadd.f32 %v872, %v1040
  %1042 = vmatmul.bf16.gmra.mxu0 %v524
  %v1043 = vpop.f32.mrf.mxu0
  %v1044 = vadd.f32 %v875, %v1043
  %v1045 = vpop.f32.mrf.mxu0
  %v1046 = vadd.f32 %v877, %v1045
  %1047 = vmatmul.bf16.gmra.mxu0 %v527
  %v1048 = vpop.f32.mrf.mxu0
  %v1049 = vadd.f32 %v880, %v1048
  %v1050 = vpop.f32.mrf.mxu0
  %v1051 = vadd.f32 %v882, %v1050
  %1052 = vmatmul.bf16.gmra.mxu0 %v530
  %v1053 = vpop.f32.mrf.mxu0
  %v1054 = vadd.f32 %v885, %v1053
  %v1055 = vpop.f32.mrf.mxu0
  %v1056 = vadd.f32 %v887, %v1055
  %1057 = vmatmul.bf16.gmra.mxu0 %v533
  %v1058 = vpop.f32.mrf.mxu0
  %v1059 = vadd.f32 %v890, %v1058
  %v1060 = vpop.f32.mrf.mxu0
  %v1061 = vadd.f32 %v892, %v1060
  %1062 = vmatmul.bf16.gmra.mxu0 %v536
  %v1063 = vpop.f32.mrf.mxu0
  %v1064 = vadd.f32 %v895, %v1063
  %v1065 = vpop.f32.mrf.mxu0
  %v1066 = vadd.f32 %v897, %v1065
  %1067 = vmatmul.bf16.gmra.mxu0 %v539
  %v1068 = vpop.f32.mrf.mxu0
  %v1069 = vadd.f32 %v900, %v1068
  %v1070 = vpop.f32.mrf.mxu0
  %v1071 = vadd.f32 %v902, %v1070
  %1072 = vmatmul.bf16.gmra.mxu0 %v542
  %v1073 = vpop.f32.mrf.mxu0
  %v1074 = vadd.f32 %v905, %v1073
  %v1075 = vpop.f32.mrf.mxu0
  %v1076 = vadd.f32 %v907, %v1075
  %1077 = vmatmul.bf16.gmra.mxu0 %v545
  %v1078 = vpop.f32.mrf.mxu0
  %v1079 = vadd.f32 %v910, %v1078
  %v1080 = vpop.f32.mrf.mxu0
  %v1081 = vadd.f32 %v912, %v1080
  %1082 = vmatmul.bf16.gmra.mxu0 %v548
  %v1083 = vpop.f32.mrf.mxu0
  %v1084 = vadd.f32 %v915, %v1083
  %v1085 = vpop.f32.mrf.mxu0
  %v1086 = vadd.f32 %v917, %v1085
  %1087 = vmatmul.bf16.gmra.mxu0 %v551
  %v1088 = vpop.f32.mrf.mxu0
  %v1089 = vadd.f32 %v920, %v1088
  %v1090 = vpop.f32.mrf.mxu0
  %v1091 = vadd.f32 %v922, %v1090
  %1092 = vmatmul.bf16.gmra.mxu0 %v554
  %v1093 = vpop.f32.mrf.mxu0
  %v1094 = vadd.f32 %v925, %v1093
  %v1095 = vpop.f32.mrf.mxu0
  %v1096 = vadd.f32 %v927, %v1095
  %1097 = vmatmul.bf16.gmra.mxu0 %v557
  %v1098 = vpop.f32.mrf.mxu0
  %v1099 = vadd.f32 %v930, %v1098
  %v1100 = vpop.f32.mrf.mxu0
  %v1101 = vadd.f32 %v932, %v1100
  %1102 = vmatmul.bf16.gmra.mxu0 %v560
  %v1103 = vpop.f32.mrf.mxu0
  %v1104 = vadd.f32 %v935, %v1103
  %v1105 = vpop.f32.mrf.mxu0
  %v1106 = vadd.f32 %v937, %v1105
  %1107 = vmatmul.bf16.gmra.mxu0 %v563
  %v1108 = vpop.f32.mrf.mxu0
  %v1109 = vadd.f32 %v940, %v1108
  %v1110 = vpop.f32.mrf.mxu0
  %v1111 = vadd.f32 %v942, %v1110
  %1112 = vmatmul.bf16.gmra.mxu0 %v566
  %v1113 = vpop.f32.mrf.mxu0
  %v1114 = vadd.f32 %v945, %v1113
  %v1115 = vpop.f32.mrf.mxu0
  %v1116 = vadd.f32 %v947, %v1115
  %1117 = vmatmul.bf16.gmra.mxu0 %v569
  %v1118 = vpop.f32.mrf.mxu0
  %v1119 = vadd.f32 %v950, %v1118
  %v1120 = vpop.f32.mrf.mxu0
  %v1121 = vadd.f32 %v952, %v1120
  %1122 = vmatmul.bf16.gmra.mxu0 %v572
  %v1123 = vpop.f32.mrf.mxu0
  %v1124 = vadd.f32 %v955, %v1123
  %v1125 = vpop.f32.mrf.mxu0
  %v1126 = vadd.f32 %v957, %v1125
  %1127 = vmatmul.bf16.gmra.mxu0 %v575
  %v1128 = vpop.f32.mrf.mxu0
  %v1129 = vadd.f32 %v960, %v1128
  %v1130 = vpop.f32.mrf.mxu0
  %v1131 = vadd.f32 %v962, %v1130
  %1132 = vmatmul.bf16.gmra.mxu0 %v578
  %v1133 = vpop.f32.mrf.mxu0
  %v1134 = vadd.f32 %v965, %v1133
  %v1135 = vpop.f32.mrf.mxu0
  %v1136 = vadd.f32 %v967, %v1135
  %1137 = vmatmul.bf16.gmra.mxu0 %v581
  %v1138 = vpop.f32.mrf.mxu0
  %v1139 = vadd.f32 %v970, %v1138
  %v1140 = vpop.f32.mrf.mxu0
  %v1141 = vadd.f32 %v972, %v1140
  %1142 = vmatmul.bf16.gmra.mxu0 %v584
  %v1143 = vpop.f32.mrf.mxu0
  %v1144 = vadd.f32 %v975, %v1143
  %v1145 = vpop.f32.mrf.mxu0
  %v1146 = vadd.f32 %v977, %v1145
  %1147 = vmatmul.bf16.gmra.mxu0 %v587
  %v1148 = vpop.f32.mrf.mxu0
  %v1149 = vadd.f32 %v980, %v1148
  %v1150 = vpop.f32.mrf.mxu0
  %v1151 = vadd.f32 %v982, %v1150
  %1152 = vmatmul.bf16.gmra.mxu0 %v590
  %v1153 = vpop.f32.mrf.mxu0
  %v1154 = vadd.f32 %v985, %v1153
  %v1155 = vpop.f32.mrf.mxu0
  %v1156 = vadd.f32 %v987, %v1155
  %1157 = vmatmul.bf16.gmra.mxu0 %v593
  %v1158 = vpop.f32.mrf.mxu0
  %v1159 = vadd.f32 %v990, %v1158
  %v1160 = vpop.f32.mrf.mxu0
  %v1161 = vadd.f32 %v992, %v1160
  %1162 = vmatmul.bf16.gmra.mxu0 %v596
  %v1163 = vpop.f32.mrf.mxu0
  %v1164 = vadd.f32 %v995, %v1163
  %v1165 = vpop.f32.mrf.mxu0
  %v1166 = vadd.f32 %v997, %v1165
  %1167 = vmatmul.bf16.gmra.mxu0 %v599
  %v1168 = vpop.f32.mrf.mxu0
  %v1169 = vadd.f32 %v1000, %v1168
  %v1170 = vpop.f32.mrf.mxu0
  %v1171 = vadd.f32 %v1002, %v1170
  %1172 = vmatmul.bf16.gmra.mxu0 %v602
  %v1173 = vpop.f32.mrf.mxu0
  %v1174 = vadd.f32 %v1005, %v1173
  %v1175 = vpop.f32.mrf.mxu0
  %v1176 = vadd.f32 %v1007, %v1175
  %1177 = vmatmul.bf16.gmra.mxu0 %v605
  %v1178 = vpop.f32.mrf.mxu0
  %v1179 = vadd.f32 %v1010, %v1178
  %v1180 = vpop.f32.mrf.mxu0
  %v1181 = vadd.f32 %v1012, %v1180
  %1182 = vmatmul.bf16.gmra.mxu0 %v608
  %v1183 = vpop.f32.mrf.mxu0
  %v1184 = vadd.f32 %v1015, %v1183
  %v1185 = vpop.f32.mrf.mxu0
  %v1186 = vadd.f32 %v1017, %v1185
  %1187 = vdwg.mxu0
  %1188 = vmatpush.bf16.msra.mxu0 %v825
  %1189 = vmatpush.bf16.msra.mxu0 %v824
  %1190 = vmatpush.bf16.msra.mxu0 %v823
  %1191 = vmatpush.bf16.msra.mxu0 %v822
  %1192 = vmatpush.bf16.msra.mxu0 %v821
  %1193 = vmatpush.bf16.msra.mxu0 %v820
  %1194 = vmatpush.bf16.msra.mxu0 %v819
  %1195 = vmatpush.bf16.msra.mxu0 %v818
  %1196 = vmatmul.bf16.gmra.mxu0 %v516
  %v1197 = vpop.f32.mrf.mxu0
  %v1198 = vadd.f32 %v1029, %v1197
  %v1199 = vpop.f32.mrf.mxu0
  %v1200 = vadd.f32 %v1031, %v1199
  %1201 = vmatmul.bf16.gmra.mxu0 %v519
  %v1202 = vpop.f32.mrf.mxu0
  %v1203 = vadd.f32 %v1034, %v1202
  %v1204 = vpop.f32.mrf.mxu0
  %v1205 = vadd.f32 %v1036, %v1204
  %1206 = vmatmul.bf16.gmra.mxu0 %v522
  %v1207 = vpop.f32.mrf.mxu0
  %v1208 = vadd.f32 %v1039, %v1207
  %v1209 = vpop.f32.mrf.mxu0
  %v1210 = vadd.f32 %v1041, %v1209
  %1211 = vmatmul.bf16.gmra.mxu0 %v525
  %v1212 = vpop.f32.mrf.mxu0
  %v1213 = vadd.f32 %v1044, %v1212
  %v1214 = vpop.f32.mrf.mxu0
  %v1215 = vadd.f32 %v1046, %v1214
  %1216 = vmatmul.bf16.gmra.mxu0 %v528
  %v1217 = vpop.f32.mrf.mxu0
  %v1218 = vadd.f32 %v1049, %v1217
  %v1219 = vpop.f32.mrf.mxu0
  %v1220 = vadd.f32 %v1051, %v1219
  %1221 = vmatmul.bf16.gmra.mxu0 %v531
  %v1222 = vpop.f32.mrf.mxu0
  %v1223 = vadd.f32 %v1054, %v1222
  %v1224 = vpop.f32.mrf.mxu0
  %v1225 = vadd.f32 %v1056, %v1224
  %1226 = vmatmul.bf16.gmra.mxu0 %v534
  %v1227 = vpop.f32.mrf.mxu0
  %v1228 = vadd.f32 %v1059, %v1227
  %v1229 = vpop.f32.mrf.mxu0
  %v1230 = vadd.f32 %v1061, %v1229
  %1231 = vmatmul.bf16.gmra.mxu0 %v537
  %v1232 = vpop.f32.mrf.mxu0
  %v1233 = vadd.f32 %v1064, %v1232
  %v1234 = vpop.f32.mrf.mxu0
  %v1235 = vadd.f32 %v1066, %v1234
  %1236 = vmatmul.bf16.gmra.mxu0 %v540
  %v1237 = vpop.f32.mrf.mxu0
  %v1238 = vadd.f32 %v1069, %v1237
  %v1239 = vpop.f32.mrf.mxu0
  %v1240 = vadd.f32 %v1071, %v1239
  %1241 = vmatmul.bf16.gmra.mxu0 %v543
  %v1242 = vpop.f32.mrf.mxu0
  %v1243 = vadd.f32 %v1074, %v1242
  %v1244 = vpop.f32.mrf.mxu0
  %v1245 = vadd.f32 %v1076, %v1244
  %1246 = vmatmul.bf16.gmra.mxu0 %v546
  %v1247 = vpop.f32.mrf.mxu0
  %v1248 = vadd.f32 %v1079, %v1247
  %v1249 = vpop.f32.mrf.mxu0
  %v1250 = vadd.f32 %v1081, %v1249
  %1251 = vmatmul.bf16.gmra.mxu0 %v549
  %v1252 = vpop.f32.mrf.mxu0
  %v1253 = vadd.f32 %v1084, %v1252
  %v1254 = vpop.f32.mrf.mxu0
  %v1255 = vadd.f32 %v1086, %v1254
  %1256 = vmatmul.bf16.gmra.mxu0 %v552
  %v1257 = vpop.f32.mrf.mxu0
  %v1258 = vadd.f32 %v1089, %v1257
  %v1259 = vpop.f32.mrf.mxu0
  %v1260 = vadd.f32 %v1091, %v1259
  %1261 = vmatmul.bf16.gmra.mxu0 %v555
  %v1262 = vpop.f32.mrf.mxu0
  %v1263 = vadd.f32 %v1094, %v1262
  %v1264 = vpop.f32.mrf.mxu0
  %v1265 = vadd.f32 %v1096, %v1264
  %1266 = vmatmul.bf16.gmra.mxu0 %v558
  %v1267 = vpop.f32.mrf.mxu0
  %v1268 = vadd.f32 %v1099, %v1267
  %v1269 = vpop.f32.mrf.mxu0
  %v1270 = vadd.f32 %v1101, %v1269
  %1271 = vmatmul.bf16.gmra.mxu0 %v561
  %v1272 = vpop.f32.mrf.mxu0
  %v1273 = vadd.f32 %v1104, %v1272
  %v1274 = vpop.f32.mrf.mxu0
  %v1275 = vadd.f32 %v1106, %v1274
  %1276 = vmatmul.bf16.gmra.mxu0 %v564
  %v1277 = vpop.f32.mrf.mxu0
  %v1278 = vadd.f32 %v1109, %v1277
  %v1279 = vpop.f32.mrf.mxu0
  %v1280 = vadd.f32 %v1111, %v1279
  %1281 = vmatmul.bf16.gmra.mxu0 %v567
  %v1282 = vpop.f32.mrf.mxu0
  %v1283 = vadd.f32 %v1114, %v1282
  %v1284 = vpop.f32.mrf.mxu0
  %v1285 = vadd.f32 %v1116, %v1284
  %1286 = vmatmul.bf16.gmra.mxu0 %v570
  %v1287 = vpop.f32.mrf.mxu0
  %v1288 = vadd.f32 %v1119, %v1287
  %v1289 = vpop.f32.mrf.mxu0
  %v1290 = vadd.f32 %v1121, %v1289
  %1291 = vmatmul.bf16.gmra.mxu0 %v573
  %v1292 = vpop.f32.mrf.mxu0
  %v1293 = vadd.f32 %v1124, %v1292
  %v1294 = vpop.f32.mrf.mxu0
  %v1295 = vadd.f32 %v1126, %v1294
  %1296 = vmatmul.bf16.gmra.mxu0 %v576
  %v1297 = vpop.f32.mrf.mxu0
  %v1298 = vadd.f32 %v1129, %v1297
  %v1299 = vpop.f32.mrf.mxu0
  %v1300 = vadd.f32 %v1131, %v1299
  %1301 = vmatmul.bf16.gmra.mxu0 %v579
  %v1302 = vpop.f32.mrf.mxu0
  %v1303 = vadd.f32 %v1134, %v1302
  %v1304 = vpop.f32.mrf.mxu0
  %v1305 = vadd.f32 %v1136, %v1304
  %1306 = vmatmul.bf16.gmra.mxu0 %v582
  %v1307 = vpop.f32.mrf.mxu0
  %v1308 = vadd.f32 %v1139, %v1307
  %v1309 = vpop.f32.mrf.mxu0
  %v1310 = vadd.f32 %v1141, %v1309
  %1311 = vmatmul.bf16.gmra.mxu0 %v585
  %v1312 = vpop.f32.mrf.mxu0
  %v1313 = vadd.f32 %v1144, %v1312
  %v1314 = vpop.f32.mrf.mxu0
  %v1315 = vadd.f32 %v1146, %v1314
  %1316 = vmatmul.bf16.gmra.mxu0 %v588
  %v1317 = vpop.f32.mrf.mxu0
  %v1318 = vadd.f32 %v1149, %v1317
  %v1319 = vpop.f32.mrf.mxu0
  %v1320 = vadd.f32 %v1151, %v1319
  %1321 = vmatmul.bf16.gmra.mxu0 %v591
  %v1322 = vpop.f32.mrf.mxu0
  %v1323 = vadd.f32 %v1154, %v1322
  %v1324 = vpop.f32.mrf.mxu0
  %v1325 = vadd.f32 %v1156, %v1324
  %1326 = vmatmul.bf16.gmra.mxu0 %v594
  %v1327 = vpop.f32.mrf.mxu0
  %v1328 = vadd.f32 %v1159, %v1327
  %v1329 = vpop.f32.mrf.mxu0
  %v1330 = vadd.f32 %v1161, %v1329
  %1331 = vmatmul.bf16.gmra.mxu0 %v597
  %v1332 = vpop.f32.mrf.mxu0
  %v1333 = vadd.f32 %v1164, %v1332
  %v1334 = vpop.f32.mrf.mxu0
  %v1335 = vadd.f32 %v1166, %v1334
  %1336 = vmatmul.bf16.gmra.mxu0 %v600
  %v1337 = vpop.f32.mrf.mxu0
  %v1338 = vadd.f32 %v1169, %v1337
  %v1339 = vpop.f32.mrf.mxu0
  %v1340 = vadd.f32 %v1171, %v1339
  %1341 = vmatmul.bf16.gmra.mxu0 %v603
  %v1342 = vpop.f32.mrf.mxu0
  %v1343 = vadd.f32 %v1174, %v1342
  %v1344 = vpop.f32.mrf.mxu0
  %v1345 = vadd.f32 %v1176, %v1344
  %1346 = vmatmul.bf16.gmra.mxu0 %v606
  %v1347 = vpop.f32.mrf.mxu0
  %v1348 = vadd.f32 %v1179, %v1347
  %v1349 = vpop.f32.mrf.mxu0
  %v1350 = vadd.f32 %v1181, %v1349
  %1351 = vmatmul.bf16.gmra.mxu0 %v609
  %v1352 = vpop.f32.mrf.mxu0
  %v1353 = vadd.f32 %v1184, %v1352
  %v1354 = vpop.f32.mrf.mxu0
  %v1355 = vadd.f32 %v1186, %v1354
  %1356 = vdwg.mxu0
  %v1357 = vtanh.pop %v1198
  %v1358 = vtanh.pop %v1200
  %v1359 = vtanh.pop %v1203
  %v1360 = vtanh.pop %v1205
  %v1361 = vtanh.pop %v1208
  %v1362 = vtanh.pop %v1210
  %v1363 = vtanh.pop %v1213
  %v1364 = vtanh.pop %v1215
  %v1365 = vtanh.pop %v1218
  %v1366 = vtanh.pop %v1220
  %v1367 = vtanh.pop %v1223
  %v1368 = vtanh.pop %v1225
  %v1369 = vtanh.pop %v1228
  %v1370 = vtanh.pop %v1230
  %v1371 = vtanh.pop %v1233
  %v1372 = vtanh.pop %v1235
  %v1373 = vtanh.pop %v1238
  %v1374 = vtanh.pop %v1240
  %v1375 = vtanh.pop %v1243
  %v1376 = vtanh.pop %v1245
  %v1377 = vtanh.pop %v1248
  %v1378 = vtanh.pop %v1250
  %v1379 = vtanh.pop %v1253
  %v1380 = vtanh.pop %v1255
  %v1381 = vtanh.pop %v1258
  %v1382 = vtanh.pop %v1260
  %v1383 = vtanh.pop %v1263
  %v1384 = vtanh.pop %v1265
  %v1385 = vtanh.pop %v1268
  %v1386 = vtanh.pop %v1270
  %v1387 = vtanh.pop %v1273
  %v1388 = vtanh.pop %v1275
  %v1389 = vtanh.pop %v1278
  %v1390 = vtanh.pop %v1280
  %v1391 = vtanh.pop %v1283
  %v1392 = vtanh.pop %v1285
  %v1393 = vtanh.pop %v1288
  %v1394 = vtanh.pop %v1290
  %v1395 = vtanh.pop %v1293
  %v1396 = vtanh.pop %v1295
  %v1397 = vtanh.pop %v1298
  %v1398 = vtanh.pop %v1300
  %v1399 = vtanh.pop %v1303
  %v1400 = vtanh.pop %v1305
  %v1401 = vtanh.pop %v1308
  %v1402 = vtanh.pop %v1310
  %v1403 = vtanh.pop %v1313
  %v1404 = vtanh.pop %v1315
  %v1405 = vtanh.pop %v1318
  %v1406 = vtanh.pop %v1320
  %v1407 = vtanh.pop %v1323
  %v1408 = vtanh.pop %v1325
  %v1409 = vtanh.pop %v1328
  %v1410 = vtanh.pop %v1330
  %v1411 = vtanh.pop %v1333
  %v1412 = vtanh.pop %v1335
  %v1413 = vtanh.pop %v1338
  %v1414 = vtanh.pop %v1340
  %v1415 = vtanh.pop %v1343
  %v1416 = vtanh.pop %v1345
  %v1417 = vtanh.pop %v1348
  %v1418 = vtanh.pop %v1350
  %v1419 = vtanh.pop %v1353
  %v1420 = vtanh.pop %v1355
  %1421 = vst [vmem:[%s3] sm:$0xff] %v1357
  %1422 = vst [vmem:[%s3 + $0x8] sm:$0xff] %v1358
  %1423 = vst [vmem:[%s3 + $0x10] sm:$0xff] %v1359
  %1424 = vst [vmem:[%s3 + $0x18] sm:$0xff] %v1360
  %1425 = vst [vmem:[%s3 + $0x20] sm:$0xff] %v1361
  %1426 = vst [vmem:[%s3 + $0x28] sm:$0xff] %v1362
  %1427 = vst [vmem:[%s3 + $0x30] sm:$0xff] %v1363
  %1428 = vst [vmem:[%s3 + $0x38] sm:$0xff] %v1364
  %1429 = vst [vmem:[%s3 + $0x40] sm:$0xff] %v1365
  %1430 = vst [vmem:[%s3 + $0x48] sm:$0xff] %v1366
  %1431 = vst [vmem:[%s3 + $0x50] sm:$0xff] %v1367
  %1432 = vst [vmem:[%s3 + $0x58] sm:$0xff] %v1368
  %1433 = vst [vmem:[%s3 + $0x60] sm:$0xff] %v1369
  %1434 = vst [vmem:[%s3 + $0x68] sm:$0xff] %v1370
  %1435 = vst [vmem:[%s3 + $0x70] sm:$0xff] %v1371
  %1436 = vst [vmem:[%s3 + $0x78] sm:$0xff] %v1372
  %1437 = vst [vmem:[%s3 + $0x80] sm:$0xff] %v1373
  %1438 = vst [vmem:[%s3 + $0x88] sm:$0xff] %v1374
  %1439 = vst [vmem:[%s3 + $0x90] sm:$0xff] %v1375
  %1440 = vst [vmem:[%s3 + $0x98] sm:$0xff] %v1376
  %1441 = vst [vmem:[%s3 + $0xa0] sm:$0xff] %v1377
  %1442 = vst [vmem:[%s3 + $0xa8] sm:$0xff] %v1378
  %1443 = vst [vmem:[%s3 + $0xb0] sm:$0xff] %v1379
  %1444 = vst [vmem:[%s3 + $0xb8] sm:$0xff] %v1380
  %1445 = vst [vmem:[%s3 + $0xc0] sm:$0xff] %v1381
  %1446 = vst [vmem:[%s3 + $0xc8] sm:$0xff] %v1382
  %1447 = vst [vmem:[%s3 + $0xd0] sm:$0xff] %v1383
  %1448 = vst [vmem:[%s3 + $0xd8] sm:$0xff] %v1384
  %1449 = vst [vmem:[%s3 + $0xe0] sm:$0xff] %v1385
  %1450 = vst [vmem:[%s3 + $0xe8] sm:$0xff] %v1386
  %1451 = vst [vmem:[%s3 + $0xf0] sm:$0xff] %v1387
  %1452 = vst [vmem:[%s3 + $0xf8] sm:$0xff] %v1388
  %1453 = vst [vmem:[%s3 + $0x100] sm:$0xff] %v1389
  %1454 = vst [vmem:[%s3 + $0x108] sm:$0xff] %v1390
  %1455 = vst [vmem:[%s3 + $0x110] sm:$0xff] %v1391
  %1456 = vst [vmem:[%s3 + $0x118] sm:$0xff] %v1392
  %1457 = vst [vmem:[%s3 + $0x120] sm:$0xff] %v1393
  %1458 = vst [vmem:[%s3 + $0x128] sm:$0xff] %v1394
  %1459 = vst [vmem:[%s3 + $0x130] sm:$0xff] %v1395
  %1460 = vst [vmem:[%s3 + $0x138] sm:$0xff] %v1396
  %1461 = vst [vmem:[%s3 + $0x140] sm:$0xff] %v1397
  %1462 = vst [vmem:[%s3 + $0x148] sm:$0xff] %v1398
  %1463 = vst [vmem:[%s3 + $0x150] sm:$0xff] %v1399
  %1464 = vst [vmem:[%s3 + $0x158] sm:$0xff] %v1400
  %1465 = vst [vmem:[%s3 + $0x160] sm:$0xff] %v1401
  %1466 = vst [vmem:[%s3 + $0x168] sm:$0xff] %v1402
  %1467 = vst [vmem:[%s3 + $0x170] sm:$0xff] %v1403
  %1468 = vst [vmem:[%s3 + $0x178] sm:$0xff] %v1404
  %1469 = vst [vmem:[%s3 + $0x180] sm:$0xff] %v1405
  %1470 = vst [vmem:[%s3 + $0x188] sm:$0xff] %v1406
  %1471 = vst [vmem:[%s3 + $0x190] sm:$0xff] %v1407
  %1472 = vst [vmem:[%s3 + $0x198] sm:$0xff] %v1408
  %1473 = vst [vmem:[%s3 + $0x1a0] sm:$0xff] %v1409
  %1474 = vst [vmem:[%s3 + $0x1a8] sm:$0xff] %v1410
  %1475 = vst [vmem:[%s3 + $0x1b0] sm:$0xff] %v1411
  %1476 = vst [vmem:[%s3 + $0x1b8] sm:$0xff] %v1412
  %1477 = vst [vmem:[%s3 + $0x1c0] sm:$0xff] %v1413
  %1478 = vst [vmem:[%s3 + $0x1c8] sm:$0xff] %v1414
  %1479 = vst [vmem:[%s3 + $0x1d0] sm:$0xff] %v1415
  %1480 = vst [vmem:[%s3 + $0x1d8] sm:$0xff] %v1416
  %1481 = vst [vmem:[%s3 + $0x1e0] sm:$0xff] %v1417
  %1482 = vst [vmem:[%s3 + $0x1e8] sm:$0xff] %v1418
  %1483 = vst [vmem:[%s3 + $0x1f0] sm:$0xff] %v1419
  %1484 = vst [vmem:[%s3 + $0x1f8] sm:$0xff] %v1420
  // Predicated region
  $region14: #{generator_forward.13} parent=0 // pred_check
    _
  $region15: #{generator_forward.13} parent=0 // pred_check_branch
    %1486 = sbr.rel (0) target = $region17
  $region16: #{generator_forward.13} parent=0 // pred_region
    _
  $region17: #{generator_forward.13} parent=0 // pred_fallthru
    _
  // Predicated region
  $region18: #{generator_forward.13} parent=0 // pred_check
    _
  $region19: #{generator_forward.13} parent=0 // pred_check_branch
    %1488 = sbr.rel (0) target = $region21
  $region20: #{generator_forward.13} parent=0 // pred_region
    _
  $region21: #{generator_forward.13} parent=0 // pred_fallthru
    _

</llo_original>
